<compile_context>
chip_gen: v5e
topology: v5e:2x2
jax: 0.10.0
libtpu: 0.0.40
codegen_flags: <defaults>
</compile_context>

<pallas_src>
import functools
import math

import jax
import jax.numpy as jnp
from jax.experimental import pallas as pl
from jax.experimental.pallas import tpu as pltpu

C_PAD = 128  # image channels (3) zero-padded to a full lane width (== C_STEM == C_MID)


# ----------------------------------------------------------------------------
# Fused per-image kernel
# ----------------------------------------------------------------------------
def encoder_fused_kernel(x_ref,
                         ws_ref, bs_ref,      # stem 3x3  (folded BN)
                         w1_ref, b1_ref,      # c1 1x1    (folded BN)
                         w2_ref, b2_ref,      # c2 3x3    (folded BN)
                         w3_ref, b3_ref,      # c3 1x1    (folded BN)
                         wd_ref, bd_ref,      # downsample 1x1 (folded BN)
                         we_ref, be_ref,      # embed Linear
                         o_ref,
                         halo_ref, patch_ref, stem_ref, acc_ref,
                         *, H, W):
    C = x_ref.shape[-1]          # lane-padded channel width (== C_MID)
    HW = H * W

    def pad_halo(x_hwc):
        # In-VMEM zero halo pad: (H, W, C) -> (H+2, W+2, C).
        zr = jnp.zeros((1, W, C), x_hwc.dtype)
        zc = jnp.zeros((H + 2, 1, C), x_hwc.dtype)
        y = jnp.concatenate([zr, x_hwc, zr], axis=0)
        return jnp.concatenate([zc, y, zc], axis=1)

    def im2col_from_halo():
        # One-time im2col into the (HW, 9*C) patch scratch; every column
        # block is lane-aligned (C == 128) so stores are unmasked.
        for t in range(9):
            dh, dw = divmod(t, 3)
            tap = halo_ref[dh:dh + H, dw:dw + W, :].reshape(HW, C)
            patch_ref[:, t * C:(t + 1) * C] = tap

    # ---- stem: 3x3 conv as a single K=9*C im2col GEMM (+bias, ReLU) ----
    halo_ref[...] = pad_halo(x_ref[...])
    im2col_from_halo()
    xs = jnp.dot(patch_ref[...], ws_ref[...], preferred_element_type=jnp.float32)
    stem_ref[...] = jnp.maximum(xs + bs_ref[...], 0.0).astype(jnp.bfloat16)

    # ---- bottleneck c1: 1x1 conv (single GEMM + ReLU) ----
    y1 = jnp.dot(stem_ref[...], w1_ref[...], preferred_element_type=jnp.float32)
    y1 = jnp.maximum(y1 + b1_ref[...], 0.0).astype(jnp.bfloat16)

    # ---- bottleneck c2: 3x3 conv as a single K=9*C im2col GEMM (+ReLU) ----
    halo_ref[...] = pad_halo(y1.reshape(H, W, C))     # halo/patch scratch reused
    im2col_from_halo()
    y2 = jnp.dot(patch_ref[...], w2_ref[...], preferred_element_type=jnp.float32)
    y2 = jnp.maximum(y2 + b2_ref[...], 0.0).astype(jnp.bfloat16)

    # ---- c3 (1x1) + downsample (1x1) accumulated into one f32 VMEM buffer ----
    acc_ref[...] = jnp.dot(y2, w3_ref[...], preferred_element_type=jnp.float32)
    acc_ref[...] += jnp.dot(stem_ref[...], wd_ref[...],
                            preferred_element_type=jnp.float32)

    # ---- residual epilogue (+biases, ReLU) + AdaptiveAvgPool2d((1,1)) ----
    z = jnp.maximum(acc_ref[...] + (b3_ref[...] + bd_ref[...]), 0.0)
    feat = jnp.mean(z, axis=0, keepdims=True)          # (1, feat) f32

    # ---- flatten + embed Linear (fused; only (1, embed) leaves VMEM) ----
    emb = jnp.dot(feat.astype(jnp.bfloat16), we_ref[...],
                  preferred_element_type=jnp.float32)
    o_ref[...] = emb + be_ref[...]


# ----------------------------------------------------------------------------
# Wrapper
# ----------------------------------------------------------------------------
def encoder_cnn_forward(images_nchw, params):
    B, cin, H, W = images_nchw.shape
    # NCHW -> NHWC, cast, lane-pad channels (tiny input-only op; halo pads are
    # done inside the kernel, not here).
    x = jnp.transpose(images_nchw, (0, 2, 3, 1)).astype(jnp.bfloat16)
    x = jnp.pad(x, ((0, 0), (0, 0), (0, 0), (0, C_PAD - cin)))

    ws, bs = params["stem"]
    w1, b1 = params["c1"]
    w2, b2 = params["c2"]
    w3, b3 = params["c3"]
    wd, bd = params["down"]
    we, be = params["embed_w"], params["embed_b"]

    c_stem = ws.shape[-1]
    c_mid = w2.shape[-1]
    feat_dim = w3.shape[-1]
    embed = we.shape[-1]
    # Halo / patch scratch reuse across stem and c2 requires equal widths.
    assert c_stem == C_PAD and c_mid == C_PAD

    def full(a):
        return pl.BlockSpec(a.shape, lambda b, _n=a.ndim: (0,) * _n)

    kern = functools.partial(encoder_fused_kernel, H=H, W=W)
    out = pl.pallas_call(
        kern,
        out_shape=jax.ShapeDtypeStruct((B, 1, embed), jnp.float32),
        grid=(B,),
        in_specs=[
            pl.BlockSpec((None, H, W, C_PAD), lambda b: (b, 0, 0, 0)),  # image
            full(ws), full(bs), full(w1), full(b1), full(w2), full(b2),
            full(w3), full(b3), full(wd), full(bd), full(we), full(be),
        ],
        out_specs=pl.BlockSpec((None, 1, embed), lambda b: (b, 0, 0)),
        scratch_shapes=[
            pltpu.VMEM((H + 2, W + 2, C_PAD), jnp.bfloat16),   # shared halo
            pltpu.VMEM((H * W, 9 * C_PAD), jnp.bfloat16),      # shared im2col patch
            pltpu.VMEM((H * W, c_stem), jnp.bfloat16),         # stem activations
            pltpu.VMEM((H * W, feat_dim), jnp.float32),        # c3+downsample acc
        ],
        compiler_params=pltpu.CompilerParams(
            dimension_semantics=("parallel",),
            vmem_limit_bytes=32 * 1024 * 1024),
    )(x, ws, bs, w1, b1, w2, b2, w3, b3, wd, bd, we, be)
    return out[:, 0, :]                                        # (B, embed)


# ----------------------------------------------------------------------------
# Parameter init (deterministic, synthetic; BN scale folded into weights)
# ----------------------------------------------------------------------------
def init_conv_bn_params(key, cin, cout, ksize):
    kw, kg, kb, km, kv = jax.random.split(key, 5)
    fan_in = cin * ksize * ksize
    w = jax.random.normal(kw, (ksize * ksize * cin, cout), jnp.float32)
    w = w * (1.0 / math.sqrt(fan_in))
    gamma = 1.0 + 0.1 * jax.random.normal(kg, (cout,), jnp.float32)
    beta = 0.1 * jax.random.normal(kb, (cout,), jnp.float32)
    mean = 0.1 * jax.random.normal(km, (cout,), jnp.float32)
    var = jax.random.uniform(kv, (cout,), jnp.float32, minval=0.5, maxval=1.5)
    scale = gamma * jax.lax.rsqrt(var + 1e-5)
    bias = (beta - mean * scale).reshape(1, cout)
    w = (w * scale[None, :]).astype(jnp.bfloat16)   # fold BN scale into weights
    return w, bias


def init_params(key, *, c_in, c_stem, c_mid, feat_dim, embed_size):
    ks = jax.random.split(key, 7)
    embed_w = (jax.random.normal(ks[5], (feat_dim, embed_size), jnp.float32)
               * (1.0 / math.sqrt(feat_dim))).astype(jnp.bfloat16)
    embed_b = (0.01 * jax.random.normal(ks[6], (embed_size,), jnp.float32)
               ).reshape(1, embed_size)
    return {
        "stem": init_conv_bn_params(ks[0], c_in, c_stem, 3),
        "c1":   init_conv_bn_params(ks[1], c_stem, c_mid, 1),
        "c2":   init_conv_bn_params(ks[2], c_mid, c_mid, 3),
        "c3":   init_conv_bn_params(ks[3], c_mid, feat_dim, 1),
        "down": init_conv_bn_params(ks[4], c_stem, feat_dim, 1),
        "embed_w": embed_w,
        "embed_b": embed_b,
    }


if __name__ == "__main__":
    B, CIN, HW = 2, 3, 16
    C_STEM, C_MID, FEAT_DIM, EMBED_SIZE = 128, 128, 256, 128   # lane-dense (x128)

    root = jax.random.PRNGKey(0)
    k_img, k_par = jax.random.split(root)
    images = jax.random.normal(k_img, (B, CIN, HW, HW), jnp.float32)
    params = init_params(k_par, c_in=C_PAD, c_stem=C_STEM, c_mid=C_MID,
                         feat_dim=FEAT_DIM, embed_size=EMBED_SIZE)

    fwd = jax.jit(encoder_cnn_forward)
    out = jax.block_until_ready(fwd(images, params))

    assert out.shape == (B, EMBED_SIZE), out.shape
    assert out.dtype == jnp.float32
    assert bool(jnp.all(jnp.isfinite(out)))
    print("KERNEL_OK")
</pallas_src>

<mosaic_0001>
module attributes {stable_mosaic.version = 11 : i64} {
  func.func @encoder_fused_kernel(%arg0: i32, %arg1: memref<1x16x16x128xbf16, #tpu.memory_space<vmem>>, %arg2: memref<1152x128xbf16, #tpu.memory_space<vmem>>, %arg3: memref<1x128xf32, #tpu.memory_space<vmem>>, %arg4: memref<128x128xbf16, #tpu.memory_space<vmem>>, %arg5: memref<1x128xf32, #tpu.memory_space<vmem>>, %arg6: memref<1152x128xbf16, #tpu.memory_space<vmem>>, %arg7: memref<1x128xf32, #tpu.memory_space<vmem>>, %arg8: memref<128x256xbf16, #tpu.memory_space<vmem>>, %arg9: memref<1x256xf32, #tpu.memory_space<vmem>>, %arg10: memref<128x256xbf16, #tpu.memory_space<vmem>>, %arg11: memref<1x256xf32, #tpu.memory_space<vmem>>, %arg12: memref<256x128xbf16, #tpu.memory_space<vmem>>, %arg13: memref<1x128xf32, #tpu.memory_space<vmem>>, %arg14: memref<1x1x128xf32, #tpu.memory_space<vmem>>, %arg15: memref<18x18x128xbf16, #tpu.memory_space<vmem>>, %arg16: memref<256x1152xbf16, #tpu.memory_space<vmem>>, %arg17: memref<256x128xbf16, #tpu.memory_space<vmem>>, %arg18: memref<256x256xf32, #tpu.memory_space<vmem>>) attributes {dimension_semantics = [#tpu.dimension_semantics<parallel>], iteration_bounds = array<i64: 2>, scalar_prefetch = 0 : i64, scratch_operands = 4 : i64, tpu.core_type = #tpu.core_type<tc>, window_params = [{transform_indices = @transform_0, window_bounds = array<i64: 1, 16, 16, 128>}, {pipeline_mode = #tpu.pipeline_mode<synchronous>, transform_indices = @transform_1, window_bounds = array<i64: 1152, 128>}, {pipeline_mode = #tpu.pipeline_mode<synchronous>, transform_indices = @transform_2, window_bounds = array<i64: 1, 128>}, {pipeline_mode = #tpu.pipeline_mode<synchronous>, transform_indices = @transform_3, window_bounds = array<i64: 128, 128>}, {pipeline_mode = #tpu.pipeline_mode<synchronous>, transform_indices = @transform_4, window_bounds = array<i64: 1, 128>}, {pipeline_mode = #tpu.pipeline_mode<synchronous>, transform_indices = @transform_5, window_bounds = array<i64: 1152, 128>}, {pipeline_mode = #tpu.pipeline_mode<synchronous>, transform_indices = @transform_6, window_bounds = array<i64: 1, 128>}, {pipeline_mode = #tpu.pipeline_mode<synchronous>, transform_indices = @transform_7, window_bounds = array<i64: 128, 256>}, {pipeline_mode = #tpu.pipeline_mode<synchronous>, transform_indices = @transform_8, window_bounds = array<i64: 1, 256>}, {pipeline_mode = #tpu.pipeline_mode<synchronous>, transform_indices = @transform_9, window_bounds = array<i64: 128, 256>}, {pipeline_mode = #tpu.pipeline_mode<synchronous>, transform_indices = @transform_10, window_bounds = array<i64: 1, 256>}, {pipeline_mode = #tpu.pipeline_mode<synchronous>, transform_indices = @transform_11, window_bounds = array<i64: 256, 128>}, {pipeline_mode = #tpu.pipeline_mode<synchronous>, transform_indices = @transform_12, window_bounds = array<i64: 1, 128>}, {transform_indices = @transform_13, window_bounds = array<i64: 1, 1, 128>}]} {
    %c0 = arith.constant 0 : index
    %c0_0 = arith.constant 0 : index
    %c0_1 = arith.constant 0 : index
    %c0_2 = arith.constant 0 : index
    %0 = vector.load %arg1[%c0, %c0_0, %c0_1, %c0_2] : memref<1x16x16x128xbf16, #tpu.memory_space<vmem>>, vector<1x16x16x128xbf16>
    %1 = vector.shape_cast %0 : vector<1x16x16x128xbf16> to vector<16x16x128xbf16>
    %cst = arith.constant 0.000000e+00 : bf16
    %2 = vector.broadcast %cst : bf16 to vector<1x16x128xbf16>
    %cst_3 = arith.constant 0.000000e+00 : bf16
    %3 = vector.broadcast %cst_3 : bf16 to vector<18x1x128xbf16>
    %4 = tpu.concatenate %2, %1, %2 in 0 : vector<1x16x128xbf16>, vector<16x16x128xbf16>, vector<1x16x128xbf16> -> vector<18x16x128xbf16>
    %5 = tpu.concatenate %3, %4, %3 in 1 : vector<18x1x128xbf16>, vector<18x16x128xbf16>, vector<18x1x128xbf16> -> vector<18x18x128xbf16>
    %c0_4 = arith.constant 0 : index
    %c0_5 = arith.constant 0 : index
    %c0_6 = arith.constant 0 : index
    %6 = vector.load %arg15[%c0_4, %c0_5, %c0_6] : memref<18x18x128xbf16, #tpu.memory_space<vmem>>, vector<18x18x128xbf16>
    tpu.vector_store %arg15[%c0_4, %c0_5, %c0_6], %5 {strides = array<i32>} : memref<18x18x128xbf16, #tpu.memory_space<vmem>>, vector<18x18x128xbf16>,
    %c0_7 = arith.constant 0 : index
    %c0_8 = arith.constant 0 : index
    %c0_9 = arith.constant 0 : index
    %7 = vector.load %arg15[%c0_7, %c0_8, %c0_9] : memref<18x18x128xbf16, #tpu.memory_space<vmem>>, vector<16x16x128xbf16>
    %8 = vector.shape_cast %7 : vector<16x16x128xbf16> to vector<256x128xbf16>
    %c0_10 = arith.constant 0 : index
    %c0_11 = arith.constant 0 : index
    %9 = vector.load %arg16[%c0_10, %c0_11] : memref<256x1152xbf16, #tpu.memory_space<vmem>>, vector<256x128xbf16>
    tpu.vector_store %arg16[%c0_10, %c0_11], %8 {strides = array<i32>} : memref<256x1152xbf16, #tpu.memory_space<vmem>>, vector<256x128xbf16>,
    %c0_12 = arith.constant 0 : index
    %c1 = arith.constant 1 : index
    %c0_13 = arith.constant 0 : index
    %10 = vector.load %arg15[%c0_12, %c1, %c0_13] : memref<18x18x128xbf16, #tpu.memory_space<vmem>>, vector<16x16x128xbf16>
    %11 = vector.shape_cast %10 : vector<16x16x128xbf16> to vector<256x128xbf16>
    %c0_14 = arith.constant 0 : index
    %c128 = arith.constant 128 : index
    %12 = vector.load %arg16[%c0_14, %c128] : memref<256x1152xbf16, #tpu.memory_space<vmem>>, vector<256x128xbf16>
    tpu.vector_store %arg16[%c0_14, %c128], %11 {strides = array<i32>} : memref<256x1152xbf16, #tpu.memory_space<vmem>>, vector<256x128xbf16>,
    %c0_15 = arith.constant 0 : index
    %c2 = arith.constant 2 : index
    %c0_16 = arith.constant 0 : index
    %13 = vector.load %arg15[%c0_15, %c2, %c0_16] : memref<18x18x128xbf16, #tpu.memory_space<vmem>>, vector<16x16x128xbf16>
    %14 = vector.shape_cast %13 : vector<16x16x128xbf16> to vector<256x128xbf16>
    %c0_17 = arith.constant 0 : index
    %c256 = arith.constant 256 : index
    %15 = vector.load %arg16[%c0_17, %c256] : memref<256x1152xbf16, #tpu.memory_space<vmem>>, vector<256x128xbf16>
    tpu.vector_store %arg16[%c0_17, %c256], %14 {strides = array<i32>} : memref<256x1152xbf16, #tpu.memory_space<vmem>>, vector<256x128xbf16>,
    %c1_18 = arith.constant 1 : index
    %c0_19 = arith.constant 0 : index
    %c0_20 = arith.constant 0 : index
    %16 = vector.load %arg15[%c1_18, %c0_19, %c0_20] : memref<18x18x128xbf16, #tpu.memory_space<vmem>>, vector<16x16x128xbf16>
    %17 = vector.shape_cast %16 : vector<16x16x128xbf16> to vector<256x128xbf16>
    %c0_21 = arith.constant 0 : index
    %c384 = arith.constant 384 : index
    %18 = vector.load %arg16[%c0_21, %c384] : memref<256x1152xbf16, #tpu.memory_space<vmem>>, vector<256x128xbf16>
    tpu.vector_store %arg16[%c0_21, %c384], %17 {strides = array<i32>} : memref<256x1152xbf16, #tpu.memory_space<vmem>>, vector<256x128xbf16>,
    %c1_22 = arith.constant 1 : index
    %c1_23 = arith.constant 1 : index
    %c0_24 = arith.constant 0 : index
    %19 = vector.load %arg15[%c1_22, %c1_23, %c0_24] : memref<18x18x128xbf16, #tpu.memory_space<vmem>>, vector<16x16x128xbf16>
    %20 = vector.shape_cast %19 : vector<16x16x128xbf16> to vector<256x128xbf16>
    %c0_25 = arith.constant 0 : index
    %c512 = arith.constant 512 : index
    %21 = vector.load %arg16[%c0_25, %c512] : memref<256x1152xbf16, #tpu.memory_space<vmem>>, vector<256x128xbf16>
    tpu.vector_store %arg16[%c0_25, %c512], %20 {strides = array<i32>} : memref<256x1152xbf16, #tpu.memory_space<vmem>>, vector<256x128xbf16>,
    %c1_26 = arith.constant 1 : index
    %c2_27 = arith.constant 2 : index
    %c0_28 = arith.constant 0 : index
    %22 = vector.load %arg15[%c1_26, %c2_27, %c0_28] : memref<18x18x128xbf16, #tpu.memory_space<vmem>>, vector<16x16x128xbf16>
    %23 = vector.shape_cast %22 : vector<16x16x128xbf16> to vector<256x128xbf16>
    %c0_29 = arith.constant 0 : index
    %c640 = arith.constant 640 : index
    %24 = vector.load %arg16[%c0_29, %c640] : memref<256x1152xbf16, #tpu.memory_space<vmem>>, vector<256x128xbf16>
    tpu.vector_store %arg16[%c0_29, %c640], %23 {strides = array<i32>} : memref<256x1152xbf16, #tpu.memory_space<vmem>>, vector<256x128xbf16>,
    %c2_30 = arith.constant 2 : index
    %c0_31 = arith.constant 0 : index
    %c0_32 = arith.constant 0 : index
    %25 = vector.load %arg15[%c2_30, %c0_31, %c0_32] : memref<18x18x128xbf16, #tpu.memory_space<vmem>>, vector<16x16x128xbf16>
    %26 = vector.shape_cast %25 : vector<16x16x128xbf16> to vector<256x128xbf16>
    %c0_33 = arith.constant 0 : index
    %c768 = arith.constant 768 : index
    %27 = vector.load %arg16[%c0_33, %c768] : memref<256x1152xbf16, #tpu.memory_space<vmem>>, vector<256x128xbf16>
    tpu.vector_store %arg16[%c0_33, %c768], %26 {strides = array<i32>} : memref<256x1152xbf16, #tpu.memory_space<vmem>>, vector<256x128xbf16>,
    %c2_34 = arith.constant 2 : index
    %c1_35 = arith.constant 1 : index
    %c0_36 = arith.constant 0 : index
    %28 = vector.load %arg15[%c2_34, %c1_35, %c0_36] : memref<18x18x128xbf16, #tpu.memory_space<vmem>>, vector<16x16x128xbf16>
    %29 = vector.shape_cast %28 : vector<16x16x128xbf16> to vector<256x128xbf16>
    %c0_37 = arith.constant 0 : index
    %c896 = arith.constant 896 : index
    %30 = vector.load %arg16[%c0_37, %c896] : memref<256x1152xbf16, #tpu.memory_space<vmem>>, vector<256x128xbf16>
    tpu.vector_store %arg16[%c0_37, %c896], %29 {strides = array<i32>} : memref<256x1152xbf16, #tpu.memory_space<vmem>>, vector<256x128xbf16>,
    %c2_38 = arith.constant 2 : index
    %c2_39 = arith.constant 2 : index
    %c0_40 = arith.constant 0 : index
    %31 = vector.load %arg15[%c2_38, %c2_39, %c0_40] : memref<18x18x128xbf16, #tpu.memory_space<vmem>>, vector<16x16x128xbf16>
    %32 = vector.shape_cast %31 : vector<16x16x128xbf16> to vector<256x128xbf16>
    %c0_41 = arith.constant 0 : index
    %c1024 = arith.constant 1024 : index
    %33 = vector.load %arg16[%c0_41, %c1024] : memref<256x1152xbf16, #tpu.memory_space<vmem>>, vector<256x128xbf16>
    tpu.vector_store %arg16[%c0_41, %c1024], %32 {strides = array<i32>} : memref<256x1152xbf16, #tpu.memory_space<vmem>>, vector<256x128xbf16>,
    %c0_42 = arith.constant 0 : index
    %c0_43 = arith.constant 0 : index
    %34 = vector.load %arg16[%c0_42, %c0_43] : memref<256x1152xbf16, #tpu.memory_space<vmem>>, vector<256x1152xbf16>
    %c0_44 = arith.constant 0 : index
    %c0_45 = arith.constant 0 : index
    %35 = vector.load %arg2[%c0_44, %c0_45] : memref<1152x128xbf16, #tpu.memory_space<vmem>>, vector<1152x128xbf16>
    %cst_46 = arith.constant dense<0.000000e+00> : vector<256x128xf32>
    %36 = tpu.matmul %34, %35, %cst_46 {dimension_numbers = #tpu.dot_dimension_numbers<[1], [0], [0], [1], [0, 0, 1, 1], [], []>} : vector<256x1152xbf16>, vector<1152x128xbf16>, vector<256x128xf32> -> vector<256x128xf32>
    %c0_47 = arith.constant 0 : index
    %c0_48 = arith.constant 0 : index
    %37 = vector.load %arg3[%c0_47, %c0_48] : memref<1x128xf32, #tpu.memory_space<vmem>>, vector<1x128xf32>
    %38 = vector.broadcast %37 : vector<1x128xf32> to vector<256x128xf32>
    %39 = arith.addf %36, %38 : vector<256x128xf32>
    %cst_49 = arith.constant 0.000000e+00 : f32
    %40 = vector.broadcast %cst_49 : f32 to vector<256x128xf32>
    %41 = arith.maximumf %39, %40 : vector<256x128xf32>
    %42 = arith.truncf %41 : vector<256x128xf32> to vector<256x128xbf16>
    %c0_50 = arith.constant 0 : index
    %c0_51 = arith.constant 0 : index
    %43 = vector.load %arg17[%c0_50, %c0_51] : memref<256x128xbf16, #tpu.memory_space<vmem>>, vector<256x128xbf16>
    tpu.vector_store %arg17[%c0_50, %c0_51], %42 {strides = array<i32>} : memref<256x128xbf16, #tpu.memory_space<vmem>>, vector<256x128xbf16>,
    %c0_52 = arith.constant 0 : index
    %c0_53 = arith.constant 0 : index
    %44 = vector.load %arg17[%c0_52, %c0_53] : memref<256x128xbf16, #tpu.memory_space<vmem>>, vector<256x128xbf16>
    %c0_54 = arith.constant 0 : index
    %c0_55 = arith.constant 0 : index
    %45 = vector.load %arg4[%c0_54, %c0_55] : memref<128x128xbf16, #tpu.memory_space<vmem>>, vector<128x128xbf16>
    %cst_56 = arith.constant dense<0.000000e+00> : vector<256x128xf32>
    %46 = tpu.matmul %44, %45, %cst_56 {dimension_numbers = #tpu.dot_dimension_numbers<[1], [0], [0], [1], [0, 0, 1, 1], [], []>} : vector<256x128xbf16>, vector<128x128xbf16>, vector<256x128xf32> -> vector<256x128xf32>
    %c0_57 = arith.constant 0 : index
    %c0_58 = arith.constant 0 : index
    %47 = vector.load %arg5[%c0_57, %c0_58] : memref<1x128xf32, #tpu.memory_space<vmem>>, vector<1x128xf32>
    %48 = vector.broadcast %47 : vector<1x128xf32> to vector<256x128xf32>
    %49 = arith.addf %46, %48 : vector<256x128xf32>
    %cst_59 = arith.constant 0.000000e+00 : f32
    %50 = vector.broadcast %cst_59 : f32 to vector<256x128xf32>
    %51 = arith.maximumf %49, %50 : vector<256x128xf32>
    %52 = arith.truncf %51 : vector<256x128xf32> to vector<256x128xbf16>
    %53 = vector.shape_cast %52 : vector<256x128xbf16> to vector<16x16x128xbf16>
    %cst_60 = arith.constant 0.000000e+00 : bf16
    %54 = vector.broadcast %cst_60 : bf16 to vector<1x16x128xbf16>
    %cst_61 = arith.constant 0.000000e+00 : bf16
    %55 = vector.broadcast %cst_61 : bf16 to vector<18x1x128xbf16>
    %56 = tpu.concatenate %54, %53, %54 in 0 : vector<1x16x128xbf16>, vector<16x16x128xbf16>, vector<1x16x128xbf16> -> vector<18x16x128xbf16>
    %57 = tpu.concatenate %55, %56, %55 in 1 : vector<18x1x128xbf16>, vector<18x16x128xbf16>, vector<18x1x128xbf16> -> vector<18x18x128xbf16>
    %c0_62 = arith.constant 0 : index
    %c0_63 = arith.constant 0 : index
    %c0_64 = arith.constant 0 : index
    %58 = vector.load %arg15[%c0_62, %c0_63, %c0_64] : memref<18x18x128xbf16, #tpu.memory_space<vmem>>, vector<18x18x128xbf16>
    tpu.vector_store %arg15[%c0_62, %c0_63, %c0_64], %57 {strides = array<i32>} : memref<18x18x128xbf16, #tpu.memory_space<vmem>>, vector<18x18x128xbf16>,
    %c0_65 = arith.constant 0 : index
    %c0_66 = arith.constant 0 : index
    %c0_67 = arith.constant 0 : index
    %59 = vector.load %arg15[%c0_65, %c0_66, %c0_67] : memref<18x18x128xbf16, #tpu.memory_space<vmem>>, vector<16x16x128xbf16>
    %60 = vector.shape_cast %59 : vector<16x16x128xbf16> to vector<256x128xbf16>
    %c0_68 = arith.constant 0 : index
    %c0_69 = arith.constant 0 : index
    %61 = vector.load %arg16[%c0_68, %c0_69] : memref<256x1152xbf16, #tpu.memory_space<vmem>>, vector<256x128xbf16>
    tpu.vector_store %arg16[%c0_68, %c0_69], %60 {strides = array<i32>} : memref<256x1152xbf16, #tpu.memory_space<vmem>>, vector<256x128xbf16>,
    %c0_70 = arith.constant 0 : index
    %c1_71 = arith.constant 1 : index
    %c0_72 = arith.constant 0 : index
    %62 = vector.load %arg15[%c0_70, %c1_71, %c0_72] : memref<18x18x128xbf16, #tpu.memory_space<vmem>>, vector<16x16x128xbf16>
    %63 = vector.shape_cast %62 : vector<16x16x128xbf16> to vector<256x128xbf16>
    %c0_73 = arith.constant 0 : index
    %c128_74 = arith.constant 128 : index
    %64 = vector.load %arg16[%c0_73, %c128_74] : memref<256x1152xbf16, #tpu.memory_space<vmem>>, vector<256x128xbf16>
    tpu.vector_store %arg16[%c0_73, %c128_74], %63 {strides = array<i32>} : memref<256x1152xbf16, #tpu.memory_space<vmem>>, vector<256x128xbf16>,
    %c0_75 = arith.constant 0 : index
    %c2_76 = arith.constant 2 : index
    %c0_77 = arith.constant 0 : index
    %65 = vector.load %arg15[%c0_75, %c2_76, %c0_77] : memref<18x18x128xbf16, #tpu.memory_space<vmem>>, vector<16x16x128xbf16>
    %66 = vector.shape_cast %65 : vector<16x16x128xbf16> to vector<256x128xbf16>
    %c0_78 = arith.constant 0 : index
    %c256_79 = arith.constant 256 : index
    %67 = vector.load %arg16[%c0_78, %c256_79] : memref<256x1152xbf16, #tpu.memory_space<vmem>>, vector<256x128xbf16>
    tpu.vector_store %arg16[%c0_78, %c256_79], %66 {strides = array<i32>} : memref<256x1152xbf16, #tpu.memory_space<vmem>>, vector<256x128xbf16>,
    %c1_80 = arith.constant 1 : index
    %c0_81 = arith.constant 0 : index
    %c0_82 = arith.constant 0 : index
    %68 = vector.load %arg15[%c1_80, %c0_81, %c0_82] : memref<18x18x128xbf16, #tpu.memory_space<vmem>>, vector<16x16x128xbf16>
    %69 = vector.shape_cast %68 : vector<16x16x128xbf16> to vector<256x128xbf16>
    %c0_83 = arith.constant 0 : index
    %c384_84 = arith.constant 384 : index
    %70 = vector.load %arg16[%c0_83, %c384_84] : memref<256x1152xbf16, #tpu.memory_space<vmem>>, vector<256x128xbf16>
    tpu.vector_store %arg16[%c0_83, %c384_84], %69 {strides = array<i32>} : memref<256x1152xbf16, #tpu.memory_space<vmem>>, vector<256x128xbf16>,
    %c1_85 = arith.constant 1 : index
    %c1_86 = arith.constant 1 : index
    %c0_87 = arith.constant 0 : index
    %71 = vector.load %arg15[%c1_85, %c1_86, %c0_87] : memref<18x18x128xbf16, #tpu.memory_space<vmem>>, vector<16x16x128xbf16>
    %72 = vector.shape_cast %71 : vector<16x16x128xbf16> to vector<256x128xbf16>
    %c0_88 = arith.constant 0 : index
    %c512_89 = arith.constant 512 : index
    %73 = vector.load %arg16[%c0_88, %c512_89] : memref<256x1152xbf16, #tpu.memory_space<vmem>>, vector<256x128xbf16>
    tpu.vector_store %arg16[%c0_88, %c512_89], %72 {strides = array<i32>} : memref<256x1152xbf16, #tpu.memory_space<vmem>>, vector<256x128xbf16>,
    %c1_90 = arith.constant 1 : index
    %c2_91 = arith.constant 2 : index
    %c0_92 = arith.constant 0 : index
    %74 = vector.load %arg15[%c1_90, %c2_91, %c0_92] : memref<18x18x128xbf16, #tpu.memory_space<vmem>>, vector<16x16x128xbf16>
    %75 = vector.shape_cast %74 : vector<16x16x128xbf16> to vector<256x128xbf16>
    %c0_93 = arith.constant 0 : index
    %c640_94 = arith.constant 640 : index
    %76 = vector.load %arg16[%c0_93, %c640_94] : memref<256x1152xbf16, #tpu.memory_space<vmem>>, vector<256x128xbf16>
    tpu.vector_store %arg16[%c0_93, %c640_94], %75 {strides = array<i32>} : memref<256x1152xbf16, #tpu.memory_space<vmem>>, vector<256x128xbf16>,
    %c2_95 = arith.constant 2 : index
    %c0_96 = arith.constant 0 : index
    %c0_97 = arith.constant 0 : index
    %77 = vector.load %arg15[%c2_95, %c0_96, %c0_97] : memref<18x18x128xbf16, #tpu.memory_space<vmem>>, vector<16x16x128xbf16>
    %78 = vector.shape_cast %77 : vector<16x16x128xbf16> to vector<256x128xbf16>
    %c0_98 = arith.constant 0 : index
    %c768_99 = arith.constant 768 : index
    %79 = vector.load %arg16[%c0_98, %c768_99] : memref<256x1152xbf16, #tpu.memory_space<vmem>>, vector<256x128xbf16>
    tpu.vector_store %arg16[%c0_98, %c768_99], %78 {strides = array<i32>} : memref<256x1152xbf16, #tpu.memory_space<vmem>>, vector<256x128xbf16>,
    %c2_100 = arith.constant 2 : index
    %c1_101 = arith.constant 1 : index
    %c0_102 = arith.constant 0 : index
    %80 = vector.load %arg15[%c2_100, %c1_101, %c0_102] : memref<18x18x128xbf16, #tpu.memory_space<vmem>>, vector<16x16x128xbf16>
    %81 = vector.shape_cast %80 : vector<16x16x128xbf16> to vector<256x128xbf16>
    %c0_103 = arith.constant 0 : index
    %c896_104 = arith.constant 896 : index
    %82 = vector.load %arg16[%c0_103, %c896_104] : memref<256x1152xbf16, #tpu.memory_space<vmem>>, vector<256x128xbf16>
    tpu.vector_store %arg16[%c0_103, %c896_104], %81 {strides = array<i32>} : memref<256x1152xbf16, #tpu.memory_space<vmem>>, vector<256x128xbf16>,
    %c2_105 = arith.constant 2 : index
    %c2_106 = arith.constant 2 : index
    %c0_107 = arith.constant 0 : index
    %83 = vector.load %arg15[%c2_105, %c2_106, %c0_107] : memref<18x18x128xbf16, #tpu.memory_space<vmem>>, vector<16x16x128xbf16>
    %84 = vector.shape_cast %83 : vector<16x16x128xbf16> to vector<256x128xbf16>
    %c0_108 = arith.constant 0 : index
    %c1024_109 = arith.constant 1024 : index
    %85 = vector.load %arg16[%c0_108, %c1024_109] : memref<256x1152xbf16, #tpu.memory_space<vmem>>, vector<256x128xbf16>
    tpu.vector_store %arg16[%c0_108, %c1024_109], %84 {strides = array<i32>} : memref<256x1152xbf16, #tpu.memory_space<vmem>>, vector<256x128xbf16>,
    %c0_110 = arith.constant 0 : index
    %c0_111 = arith.constant 0 : index
    %86 = vector.load %arg16[%c0_110, %c0_111] : memref<256x1152xbf16, #tpu.memory_space<vmem>>, vector<256x1152xbf16>
    %c0_112 = arith.constant 0 : index
    %c0_113 = arith.constant 0 : index
    %87 = vector.load %arg6[%c0_112, %c0_113] : memref<1152x128xbf16, #tpu.memory_space<vmem>>, vector<1152x128xbf16>
    %cst_114 = arith.constant dense<0.000000e+00> : vector<256x128xf32>
    %88 = tpu.matmul %86, %87, %cst_114 {dimension_numbers = #tpu.dot_dimension_numbers<[1], [0], [0], [1], [0, 0, 1, 1], [], []>} : vector<256x1152xbf16>, vector<1152x128xbf16>, vector<256x128xf32> -> vector<256x128xf32>
    %c0_115 = arith.constant 0 : index
    %c0_116 = arith.constant 0 : index
    %89 = vector.load %arg7[%c0_115, %c0_116] : memref<1x128xf32, #tpu.memory_space<vmem>>, vector<1x128xf32>
    %90 = vector.broadcast %89 : vector<1x128xf32> to vector<256x128xf32>
    %91 = arith.addf %88, %90 : vector<256x128xf32>
    %cst_117 = arith.constant 0.000000e+00 : f32
    %92 = vector.broadcast %cst_117 : f32 to vector<256x128xf32>
    %93 = arith.maximumf %91, %92 : vector<256x128xf32>
    %94 = arith.truncf %93 : vector<256x128xf32> to vector<256x128xbf16>
    %c0_118 = arith.constant 0 : index
    %c0_119 = arith.constant 0 : index
    %95 = vector.load %arg8[%c0_118, %c0_119] : memref<128x256xbf16, #tpu.memory_space<vmem>>, vector<128x256xbf16>
    %cst_120 = arith.constant dense<0.000000e+00> : vector<256x256xf32>
    %96 = tpu.matmul %94, %95, %cst_120 {dimension_numbers = #tpu.dot_dimension_numbers<[1], [0], [0], [1], [0, 0, 1, 1], [], []>} : vector<256x128xbf16>, vector<128x256xbf16>, vector<256x256xf32> -> vector<256x256xf32>
    %c0_121 = arith.constant 0 : index
    %c0_122 = arith.constant 0 : index
    %97 = vector.load %arg18[%c0_121, %c0_122] : memref<256x256xf32, #tpu.memory_space<vmem>>, vector<256x256xf32>
    tpu.vector_store %arg18[%c0_121, %c0_122], %96 {strides = array<i32>} : memref<256x256xf32, #tpu.memory_space<vmem>>, vector<256x256xf32>,
    %c0_123 = arith.constant 0 : index
    %c0_124 = arith.constant 0 : index
    %98 = vector.load %arg18[%c0_123, %c0_124] : memref<256x256xf32, #tpu.memory_space<vmem>>, vector<256x256xf32>
    %c0_125 = arith.constant 0 : index
    %c0_126 = arith.constant 0 : index
    %99 = vector.load %arg17[%c0_125, %c0_126] : memref<256x128xbf16, #tpu.memory_space<vmem>>, vector<256x128xbf16>
    %c0_127 = arith.constant 0 : index
    %c0_128 = arith.constant 0 : index
    %100 = vector.load %arg10[%c0_127, %c0_128] : memref<128x256xbf16, #tpu.memory_space<vmem>>, vector<128x256xbf16>
    %cst_129 = arith.constant dense<0.000000e+00> : vector<256x256xf32>
    %101 = tpu.matmul %99, %100, %cst_129 {dimension_numbers = #tpu.dot_dimension_numbers<[1], [0], [0], [1], [0, 0, 1, 1], [], []>} : vector<256x128xbf16>, vector<128x256xbf16>, vector<256x256xf32> -> vector<256x256xf32>
    %102 = arith.addf %98, %101 : vector<256x256xf32>
    %c0_130 = arith.constant 0 : index
    %c0_131 = arith.constant 0 : index
    %103 = vector.load %arg18[%c0_130, %c0_131] : memref<256x256xf32, #tpu.memory_space<vmem>>, vector<256x256xf32>
    tpu.vector_store %arg18[%c0_130, %c0_131], %102 {strides = array<i32>} : memref<256x256xf32, #tpu.memory_space<vmem>>, vector<256x256xf32>,
    %c0_132 = arith.constant 0 : index
    %c0_133 = arith.constant 0 : index
    %104 = vector.load %arg18[%c0_132, %c0_133] : memref<256x256xf32, #tpu.memory_space<vmem>>, vector<256x256xf32>
    %c0_134 = arith.constant 0 : index
    %c0_135 = arith.constant 0 : index
    %105 = vector.load %arg9[%c0_134, %c0_135] : memref<1x256xf32, #tpu.memory_space<vmem>>, vector<1x256xf32>
    %c0_136 = arith.constant 0 : index
    %c0_137 = arith.constant 0 : index
    %106 = vector.load %arg11[%c0_136, %c0_137] : memref<1x256xf32, #tpu.memory_space<vmem>>, vector<1x256xf32>
    %107 = arith.addf %105, %106 : vector<1x256xf32>
    %108 = vector.broadcast %107 : vector<1x256xf32> to vector<256x256xf32>
    %109 = arith.addf %104, %108 : vector<256x256xf32>
    %cst_138 = arith.constant 0.000000e+00 : f32
    %110 = vector.broadcast %cst_138 : f32 to vector<256x256xf32>
    %111 = arith.maximumf %109, %110 : vector<256x256xf32>
    %cst_139 = arith.constant dense<0.000000e+00> : vector<256xf32>
    %112 = vector.multi_reduction <add>, %111, %cst_139 [0] : vector<256x256xf32> to vector<256xf32>
    %113 = vector.shape_cast %112 : vector<256xf32> to vector<1x256xf32>
    %cst_140 = arith.constant 2.560000e+02 : f32
    %114 = vector.broadcast %cst_140 : f32 to vector<1x256xf32>
    %115 = arith.divf %113, %114 : vector<1x256xf32>
    %116 = arith.truncf %115 : vector<1x256xf32> to vector<1x256xbf16>
    %c0_141 = arith.constant 0 : index
    %c0_142 = arith.constant 0 : index
    %117 = vector.load %arg12[%c0_141, %c0_142] : memref<256x128xbf16, #tpu.memory_space<vmem>>, vector<256x128xbf16>
    %cst_143 = arith.constant dense<0.000000e+00> : vector<1x128xf32>
    %118 = tpu.matmul %116, %117, %cst_143 {dimension_numbers = #tpu.dot_dimension_numbers<[1], [0], [0], [1], [0, 0, 1, 1], [], []>} : vector<1x256xbf16>, vector<256x128xbf16>, vector<1x128xf32> -> vector<1x128xf32>
    %c0_144 = arith.constant 0 : index
    %c0_145 = arith.constant 0 : index
    %119 = vector.load %arg13[%c0_144, %c0_145] : memref<1x128xf32, #tpu.memory_space<vmem>>, vector<1x128xf32>
    %120 = arith.addf %118, %119 : vector<1x128xf32>
    %c0_146 = arith.constant 0 : index
    %c0_147 = arith.constant 0 : index
    %c0_148 = arith.constant 0 : index
    %121 = vector.load %arg14[%c0_146, %c0_147, %c0_148] : memref<1x1x128xf32, #tpu.memory_space<vmem>>, vector<1x1x128xf32>
    %122 = vector.shape_cast %121 : vector<1x1x128xf32> to vector<1x128xf32>
    %123 = vector.shape_cast %120 : vector<1x128xf32> to vector<1x1x128xf32>
    tpu.vector_store %arg14[%c0_146, %c0_147, %c0_148], %123 {strides = array<i32>} : memref<1x1x128xf32, #tpu.memory_space<vmem>>, vector<1x1x128xf32>,
    return
  }
  func.func @transform_0(%arg0: i32) -> (i32, i32, i32, i32) {
    %c0_i32 = arith.constant 0 : i32
    %c0_i32_0 = arith.constant 0 : i32
    %c0_i32_1 = arith.constant 0 : i32
    %c0_i32_2 = arith.constant 0 : i32
    return %arg0, %c0_i32, %c0_i32_0, %c0_i32_1 : i32, i32, i32, i32
  }
  func.func @transform_1(%arg0: i32) -> (i32, i32) {
    %c0_i32 = arith.constant 0 : i32
    %c0_i32_0 = arith.constant 0 : i32
    %c0_i32_1 = arith.constant 0 : i32
    return %c0_i32, %c0_i32_0 : i32, i32
  }
  func.func @transform_2(%arg0: i32) -> (i32, i32) {
    %c0_i32 = arith.constant 0 : i32
    %c0_i32_0 = arith.constant 0 : i32
    %c0_i32_1 = arith.constant 0 : i32
    return %c0_i32, %c0_i32_0 : i32, i32
  }
  func.func @transform_3(%arg0: i32) -> (i32, i32) {
    %c0_i32 = arith.constant 0 : i32
    %c0_i32_0 = arith.constant 0 : i32
    %c0_i32_1 = arith.constant 0 : i32
    return %c0_i32, %c0_i32_0 : i32, i32
  }
  func.func @transform_4(%arg0: i32) -> (i32, i32) {
    %c0_i32 = arith.constant 0 : i32
    %c0_i32_0 = arith.constant 0 : i32
    %c0_i32_1 = arith.constant 0 : i32
    return %c0_i32, %c0_i32_0 : i32, i32
  }
  func.func @transform_5(%arg0: i32) -> (i32, i32) {
    %c0_i32 = arith.constant 0 : i32
    %c0_i32_0 = arith.constant 0 : i32
    %c0_i32_1 = arith.constant 0 : i32
    return %c0_i32, %c0_i32_0 : i32, i32
  }
  func.func @transform_6(%arg0: i32) -> (i32, i32) {
    %c0_i32 = arith.constant 0 : i32
    %c0_i32_0 = arith.constant 0 : i32
    %c0_i32_1 = arith.constant 0 : i32
    return %c0_i32, %c0_i32_0 : i32, i32
  }
  func.func @transform_7(%arg0: i32) -> (i32, i32) {
    %c0_i32 = arith.constant 0 : i32
    %c0_i32_0 = arith.constant 0 : i32
    %c0_i32_1 = arith.constant 0 : i32
    return %c0_i32, %c0_i32_0 : i32, i32
  }
  func.func @transform_8(%arg0: i32) -> (i32, i32) {
    %c0_i32 = arith.constant 0 : i32
    %c0_i32_0 = arith.constant 0 : i32
    %c0_i32_1 = arith.constant 0 : i32
    return %c0_i32, %c0_i32_0 : i32, i32
  }
  func.func @transform_9(%arg0: i32) -> (i32, i32) {
    %c0_i32 = arith.constant 0 : i32
    %c0_i32_0 = arith.constant 0 : i32
    %c0_i32_1 = arith.constant 0 : i32
    return %c0_i32, %c0_i32_0 : i32, i32
  }
  func.func @transform_10(%arg0: i32) -> (i32, i32) {
    %c0_i32 = arith.constant 0 : i32
    %c0_i32_0 = arith.constant 0 : i32
    %c0_i32_1 = arith.constant 0 : i32
    return %c0_i32, %c0_i32_0 : i32, i32
  }
  func.func @transform_11(%arg0: i32) -> (i32, i32) {
    %c0_i32 = arith.constant 0 : i32
    %c0_i32_0 = arith.constant 0 : i32
    %c0_i32_1 = arith.constant 0 : i32
    return %c0_i32, %c0_i32_0 : i32, i32
  }
  func.func @transform_12(%arg0: i32) -> (i32, i32) {
    %c0_i32 = arith.constant 0 : i32
    %c0_i32_0 = arith.constant 0 : i32
    %c0_i32_1 = arith.constant 0 : i32
    return %c0_i32, %c0_i32_0 : i32, i32
  }
  func.func @transform_13(%arg0: i32) -> (i32, i32, i32) {
    %c0_i32 = arith.constant 0 : i32
    %c0_i32_0 = arith.constant 0 : i32
    %c0_i32_1 = arith.constant 0 : i32
    return %arg0, %c0_i32, %c0_i32_0 : i32, i32, i32
  }
}

</mosaic_0001>

<llo_original>
// kernel: encoder_cnn_forward.1
$region0: #{encoder_cnn_forward.1}
  #allocation0 [shape = 'u32[]', space=smem, size = 0x4, offset = 0x4, fixed_abs, tag = 'smem constant byte address 0x4 - core index']
  #allocation1 [shape = 'u32[72,128]{1,0:T(1,128)}', space=vmem, size = 0x9000, scoped, tag = 'internal scratch']
  #allocation2 [shape = 'bf16[18,18,128]{2,1,0:T(8,128)(2,1)}', space=vmem, size = 0x1b000, scoped, tag = 'scratch operand']
  #allocation3 [shape = 'bf16[256,1152]{1,0:T(8,128)(2,1)}', space=vmem, size = 0x90000, scoped, tag = 'scratch operand']
  #allocation4 [shape = 'bf16[256,128]{1,0:T(8,128)(2,1)}', space=vmem, size = 0x10000, scoped, tag = 'scratch operand']
  #allocation5 [shape = 'f32[256,256]{1,0:T(8,128)}', space=vmem, size = 0x40000, scoped, tag = 'scratch operand']
  %s0 = inlined_call_operand.vmem [shape: bf16[2,16,16,128], index: 0, kind: input, shape index: {}]
  %s1 = inlined_call_operand.vmem [shape: bf16[1152,128], index: 1, kind: input, shape index: {}]
  %s2 = inlined_call_operand.vmem [shape: f32[1,128], index: 2, kind: input, shape index: {}]
  %s3 = inlined_call_operand.hbm [shape: bf16[128,128], index: 3, kind: input, shape index: {}]
  %s4 = inlined_call_operand.vmem [shape: f32[1,128], index: 4, kind: input, shape index: {}]
  %s5 = inlined_call_operand.hbm [shape: bf16[1152,128], index: 5, kind: input, shape index: {}]
  %s6 = inlined_call_operand.vmem [shape: f32[1,128], index: 6, kind: input, shape index: {}]
  %s7 = inlined_call_operand.vmem [shape: bf16[128,256], index: 7, kind: input, shape index: {}]
  %s8 = inlined_call_operand.vmem [shape: f32[1,256], index: 8, kind: input, shape index: {}]
  %s9 = inlined_call_operand.vmem [shape: bf16[128,256], index: 9, kind: input, shape index: {}]
  %s10 = inlined_call_operand.vmem [shape: f32[1,256], index: 10, kind: input, shape index: {}]
  %s11 = inlined_call_operand.vmem [shape: bf16[256,128], index: 11, kind: input, shape index: {}]
  %s12 = inlined_call_operand.vmem [shape: f32[1,128], index: 12, kind: input, shape index: {}]
  %s13 = inlined_call_operand.hbm [shape: f32[2,1,128], index: 13, kind: output, shape index: {}]
  %s14 = sld [smem:[#allocation0]]
  $region93: #{encoder_cnn_forward.1} parent=0
    _
  %s16 = ssub.s32 1, %s14
  %s17 = scalar_select 0, %s16, %s14
  $region1: #{encoder_cnn_forward.1} parent=0
    #allocation6 [shape = 'u8[32768]{0}', space=vmem, size = 0x8000, scoped, tag = 'input window, operand 3, single buffered']
    #allocation7 [shape = 's32[2]{0}', space=sflag, size = 0x8, scoped, tag = 'scoped memory for encoder_cnn_forward.1']
    #allocation8 [shape = 's32[2]{0}', space=sflag, size = 0x8, scoped, tag = 'scoped memory for encoder_cnn_forward.1']
    #allocation9 [shape = 'u8[294912]{0}', space=vmem, size = 0x48000, scoped, tag = 'input window, operand 5, single buffered']
    #allocation10 [shape = 's32[1]{0}', space=sflag, size = 0x4, scoped, tag = 'scoped memory for encoder_cnn_forward.1']
    #allocation11 [shape = 'u8[1024]{0}', space=vmem, size = 0x400, scoped, tag = 'output window, operand 0']
    %18 = vsyncpa [#allocation7], 0
    %19 = vsyncpa [#allocation10], 0
    %20 = vsyncpa [#allocation8], 0
    %s21 = scalar_lea.sflag [#allocation8], 1
    %22 = vsyncpa %s21, 0
    loop: start=0, step=1, limit=4
    $region2: #{encoder_cnn_forward.1} parent=1 // loop_pre_header
      _
    $region3: #{encoder_cnn_forward.1} parent=1 // loop_header
      %s24 = sphi 0, %s28
      %p25 = scmp.ge.s32.totalorder %s24, 4
      %s34 = sphi 0, %s36
      %s37 = sphi 0, %s34
      %s38 = sphi 0, %s37
      %s54 = sphi 0, %s38
      %s58 = sphi 0, %s58
      %s60 = sphi 0, %s58
      %s61 = sphi 0, %s60
      %s75 = sphi 0, %s61
      %s79 = sphi 0, %s79
      %s81 = sphi 0, %s79
      %s82 = sphi 0, %s81
      %s96 = sphi 0, %s82
      %s100 = sphi 0, %s100
      %s102 = sphi 0, %s100
      %s103 = sphi 0, %s102
      %s117 = sphi 0, %s103
      %s121 = sphi 0, %s121
      %s123 = sphi 0, %s121
      %s124 = sphi 0, %s123
      %s138 = sphi 0, %s124
      %s142 = sphi 0, %s142
      %s144 = sphi 0, %s142
      %s145 = sphi 0, %s144
      %s159 = sphi 0, %s145
      %s163 = sphi 0, %s163
      %s165 = sphi 0, %s163
      %s166 = sphi 0, %s165
      %s180 = sphi 0, %s166
      %s184 = sphi 0, %s184
      %s186 = sphi 0, %s184
      %s187 = sphi 0, %s186
      %s201 = sphi 0, %s187
      %s205 = sphi 0, %s205
      %s207 = sphi 0, %s205
      %s208 = sphi 0, %s207
      %s222 = sphi 0, %s208
      %s226 = sphi 0, %s226
      %s228 = sphi 0, %s226
      %s229 = sphi 0, %s228
      %s243 = sphi 0, %s229
      %s247 = sphi 0, %s247
      %s249 = sphi 0, %s247
      %s250 = sphi 0, %s249
      %s264 = sphi 0, %s250
      %s268 = sphi 0, %s268
      %s270 = sphi 0, %s268
      %s271 = sphi 0, %s270
      %s285 = sphi 0, %s271
      %s289 = sphi 0, %s289
      %s291 = sphi 0, %s289
      %s292 = sphi 0, %s291
      %s306 = sphi 0, %s292
      %s312 = sphi 0, %s314
      %s315 = sphi 0, %s312
      %s316 = sphi 0, %s315
      %s332 = sphi 0, %s316
    $region4: #{encoder_cnn_forward.1} parent=1 // loop_header_branch
      %27 = sbr.rel (%p25) target = $region8
    $region5: #{encoder_cnn_forward.1} parent=1 // loop_body
      %s29 = ssub.s32 %s24, 1
      %s30 = ssub.s32 %s24, 2
      %s31 = sadd.s32 %s24, 1
      %s32 = ssub.s32 %s24, %s31
      %p33 = scmp.eq.s32.totalorder %s32, 0
      %s35 = sadd.s32 %s34, 1
      %s36 = scalar_select %p33, %s34, %s35
      %p39 = pneg %p33
      %p40 = scmp.eq.s32.totalorder %s24, 1
      %p41 = por %p39, %p40
      %p42 = scmp.ne.s32.totalorder %s34, %s37
      %p43 = scmp.eq.s32.totalorder %s24, 0
      %p44 = por %p42, %p43
      %p45 = scmp.ne.s32.totalorder %s34, %s37
      %p46 = scmp.eq.s32.totalorder %s29, 1
      %p47 = por %p45, %p46
      %p48 = scmp.ne.s32.totalorder %s37, %s38
      %p49 = scmp.eq.s32.totalorder %s29, 0
      %p50 = por %p48, %p49
      %p51 = scmp.ne.s32.totalorder %s37, %s38
      %p52 = scmp.eq.s32.totalorder %s30, 1
      %p53 = por %p51, %p52
      %p55 = scmp.ne.s32.totalorder %s38, %s54
      %p56 = scmp.eq.s32.totalorder %s30, 0
      %p57 = por %p55, %p56
      %s59 = sadd.s32 %s58, 1
      %p62 = scmp.eq.s32.totalorder %s24, 1
      %p63 = scmp.ne.s32.totalorder %s58, %s60
      %p64 = scmp.eq.s32.totalorder %s24, 0
      %p65 = por %p63, %p64
      %p66 = scmp.ne.s32.totalorder %s58, %s60
      %p67 = scmp.eq.s32.totalorder %s29, 1
      %p68 = por %p66, %p67
      %p69 = scmp.ne.s32.totalorder %s60, %s61
      %p70 = scmp.eq.s32.totalorder %s29, 0
      %p71 = por %p69, %p70
      %p72 = scmp.ne.s32.totalorder %s60, %s61
      %p73 = scmp.eq.s32.totalorder %s30, 1
      %p74 = por %p72, %p73
      %p76 = scmp.ne.s32.totalorder %s61, %s75
      %p77 = scmp.eq.s32.totalorder %s30, 0
      %p78 = por %p76, %p77
      %s80 = sadd.s32 %s79, 1
      %p83 = scmp.eq.s32.totalorder %s24, 1
      %p84 = scmp.ne.s32.totalorder %s79, %s81
      %p85 = scmp.eq.s32.totalorder %s24, 0
      %p86 = por %p84, %p85
      %p87 = scmp.ne.s32.totalorder %s79, %s81
      %p88 = scmp.eq.s32.totalorder %s29, 1
      %p89 = por %p87, %p88
      %p90 = scmp.ne.s32.totalorder %s81, %s82
      %p91 = scmp.eq.s32.totalorder %s29, 0
      %p92 = por %p90, %p91
      %p93 = scmp.ne.s32.totalorder %s81, %s82
      %p94 = scmp.eq.s32.totalorder %s30, 1
      %p95 = por %p93, %p94
      %p97 = scmp.ne.s32.totalorder %s82, %s96
      %p98 = scmp.eq.s32.totalorder %s30, 0
      %p99 = por %p97, %p98
      %s101 = sadd.s32 %s100, 1
      %p104 = scmp.eq.s32.totalorder %s24, 1
      %p105 = scmp.ne.s32.totalorder %s100, %s102
      %p106 = scmp.eq.s32.totalorder %s24, 0
      %p107 = por %p105, %p106
      %p108 = scmp.ne.s32.totalorder %s100, %s102
      %p109 = scmp.eq.s32.totalorder %s29, 1
      %p110 = por %p108, %p109
      %p111 = scmp.ne.s32.totalorder %s102, %s103
      %p112 = scmp.eq.s32.totalorder %s29, 0
      %p113 = por %p111, %p112
      %p114 = scmp.ne.s32.totalorder %s102, %s103
      %p115 = scmp.eq.s32.totalorder %s30, 1
      %p116 = por %p114, %p115
      %p118 = scmp.ne.s32.totalorder %s103, %s117
      %p119 = scmp.eq.s32.totalorder %s30, 0
      %p120 = por %p118, %p119
      %s122 = sadd.s32 %s121, 1
      %p125 = scmp.eq.s32.totalorder %s24, 1
      %p126 = scmp.ne.s32.totalorder %s121, %s123
      %p127 = scmp.eq.s32.totalorder %s24, 0
      %p128 = por %p126, %p127
      %p129 = scmp.ne.s32.totalorder %s121, %s123
      %p130 = scmp.eq.s32.totalorder %s29, 1
      %p131 = por %p129, %p130
      %p132 = scmp.ne.s32.totalorder %s123, %s124
      %p133 = scmp.eq.s32.totalorder %s29, 0
      %p134 = por %p132, %p133
      %p135 = scmp.ne.s32.totalorder %s123, %s124
      %p136 = scmp.eq.s32.totalorder %s30, 1
      %p137 = por %p135, %p136
      %p139 = scmp.ne.s32.totalorder %s124, %s138
      %p140 = scmp.eq.s32.totalorder %s30, 0
      %p141 = por %p139, %p140
      %s143 = sadd.s32 %s142, 1
      %p146 = scmp.eq.s32.totalorder %s24, 1
      %p147 = scmp.ne.s32.totalorder %s142, %s144
      %p148 = scmp.eq.s32.totalorder %s24, 0
      %p149 = por %p147, %p148
      %p150 = scmp.ne.s32.totalorder %s142, %s144
      %p151 = scmp.eq.s32.totalorder %s29, 1
      %p152 = por %p150, %p151
      %p153 = scmp.ne.s32.totalorder %s144, %s145
      %p154 = scmp.eq.s32.totalorder %s29, 0
      %p155 = por %p153, %p154
      %p156 = scmp.ne.s32.totalorder %s144, %s145
      %p157 = scmp.eq.s32.totalorder %s30, 1
      %p158 = por %p156, %p157
      %p160 = scmp.ne.s32.totalorder %s145, %s159
      %p161 = scmp.eq.s32.totalorder %s30, 0
      %p162 = por %p160, %p161
      %s164 = sadd.s32 %s163, 1
      %p167 = scmp.eq.s32.totalorder %s24, 1
      %p168 = scmp.ne.s32.totalorder %s163, %s165
      %p169 = scmp.eq.s32.totalorder %s24, 0
      %p170 = por %p168, %p169
      %p171 = scmp.ne.s32.totalorder %s163, %s165
      %p172 = scmp.eq.s32.totalorder %s29, 1
      %p173 = por %p171, %p172
      %p174 = scmp.ne.s32.totalorder %s165, %s166
      %p175 = scmp.eq.s32.totalorder %s29, 0
      %p176 = por %p174, %p175
      %p177 = scmp.ne.s32.totalorder %s165, %s166
      %p178 = scmp.eq.s32.totalorder %s30, 1
      %p179 = por %p177, %p178
      %p181 = scmp.ne.s32.totalorder %s166, %s180
      %p182 = scmp.eq.s32.totalorder %s30, 0
      %p183 = por %p181, %p182
      %s185 = sadd.s32 %s184, 1
      %p188 = scmp.eq.s32.totalorder %s24, 1
      %p189 = scmp.ne.s32.totalorder %s184, %s186
      %p190 = scmp.eq.s32.totalorder %s24, 0
      %p191 = por %p189, %p190
      %p192 = scmp.ne.s32.totalorder %s184, %s186
      %p193 = scmp.eq.s32.totalorder %s29, 1
      %p194 = por %p192, %p193
      %p195 = scmp.ne.s32.totalorder %s186, %s187
      %p196 = scmp.eq.s32.totalorder %s29, 0
      %p197 = por %p195, %p196
      %p198 = scmp.ne.s32.totalorder %s186, %s187
      %p199 = scmp.eq.s32.totalorder %s30, 1
      %p200 = por %p198, %p199
      %p202 = scmp.ne.s32.totalorder %s187, %s201
      %p203 = scmp.eq.s32.totalorder %s30, 0
      %p204 = por %p202, %p203
      %s206 = sadd.s32 %s205, 1
      %p209 = scmp.eq.s32.totalorder %s24, 1
      %p210 = scmp.ne.s32.totalorder %s205, %s207
      %p211 = scmp.eq.s32.totalorder %s24, 0
      %p212 = por %p210, %p211
      %p213 = scmp.ne.s32.totalorder %s205, %s207
      %p214 = scmp.eq.s32.totalorder %s29, 1
      %p215 = por %p213, %p214
      %p216 = scmp.ne.s32.totalorder %s207, %s208
      %p217 = scmp.eq.s32.totalorder %s29, 0
      %p218 = por %p216, %p217
      %p219 = scmp.ne.s32.totalorder %s207, %s208
      %p220 = scmp.eq.s32.totalorder %s30, 1
      %p221 = por %p219, %p220
      %p223 = scmp.ne.s32.totalorder %s208, %s222
      %p224 = scmp.eq.s32.totalorder %s30, 0
      %p225 = por %p223, %p224
      %s227 = sadd.s32 %s226, 1
      %p230 = scmp.eq.s32.totalorder %s24, 1
      %p231 = scmp.ne.s32.totalorder %s226, %s228
      %p232 = scmp.eq.s32.totalorder %s24, 0
      %p233 = por %p231, %p232
      %p234 = scmp.ne.s32.totalorder %s226, %s228
      %p235 = scmp.eq.s32.totalorder %s29, 1
      %p236 = por %p234, %p235
      %p237 = scmp.ne.s32.totalorder %s228, %s229
      %p238 = scmp.eq.s32.totalorder %s29, 0
      %p239 = por %p237, %p238
      %p240 = scmp.ne.s32.totalorder %s228, %s229
      %p241 = scmp.eq.s32.totalorder %s30, 1
      %p242 = por %p240, %p241
      %p244 = scmp.ne.s32.totalorder %s229, %s243
      %p245 = scmp.eq.s32.totalorder %s30, 0
      %p246 = por %p244, %p245
      %s248 = sadd.s32 %s247, 1
      %p251 = scmp.eq.s32.totalorder %s24, 1
      %p252 = scmp.ne.s32.totalorder %s247, %s249
      %p253 = scmp.eq.s32.totalorder %s24, 0
      %p254 = por %p252, %p253
      %p255 = scmp.ne.s32.totalorder %s247, %s249
      %p256 = scmp.eq.s32.totalorder %s29, 1
      %p257 = por %p255, %p256
      %p258 = scmp.ne.s32.totalorder %s249, %s250
      %p259 = scmp.eq.s32.totalorder %s29, 0
      %p260 = por %p258, %p259
      %p261 = scmp.ne.s32.totalorder %s249, %s250
      %p262 = scmp.eq.s32.totalorder %s30, 1
      %p263 = por %p261, %p262
      %p265 = scmp.ne.s32.totalorder %s250, %s264
      %p266 = scmp.eq.s32.totalorder %s30, 0
      %p267 = por %p265, %p266
      %s269 = sadd.s32 %s268, 1
      %p272 = scmp.eq.s32.totalorder %s24, 1
      %p273 = scmp.ne.s32.totalorder %s268, %s270
      %p274 = scmp.eq.s32.totalorder %s24, 0
      %p275 = por %p273, %p274
      %p276 = scmp.ne.s32.totalorder %s268, %s270
      %p277 = scmp.eq.s32.totalorder %s29, 1
      %p278 = por %p276, %p277
      %p279 = scmp.ne.s32.totalorder %s270, %s271
      %p280 = scmp.eq.s32.totalorder %s29, 0
      %p281 = por %p279, %p280
      %p282 = scmp.ne.s32.totalorder %s270, %s271
      %p283 = scmp.eq.s32.totalorder %s30, 1
      %p284 = por %p282, %p283
      %p286 = scmp.ne.s32.totalorder %s271, %s285
      %p287 = scmp.eq.s32.totalorder %s30, 0
      %p288 = por %p286, %p287
      %s290 = sadd.s32 %s289, 1
      %p293 = scmp.eq.s32.totalorder %s24, 1
      %p294 = scmp.ne.s32.totalorder %s289, %s291
      %p295 = scmp.eq.s32.totalorder %s24, 0
      %p296 = por %p294, %p295
      %p297 = scmp.ne.s32.totalorder %s289, %s291
      %p298 = scmp.eq.s32.totalorder %s29, 1
      %p299 = por %p297, %p298
      %p300 = scmp.ne.s32.totalorder %s291, %s292
      %p301 = scmp.eq.s32.totalorder %s29, 0
      %p302 = por %p300, %p301
      %p303 = scmp.ne.s32.totalorder %s291, %s292
      %p304 = scmp.eq.s32.totalorder %s30, 1
      %p305 = por %p303, %p304
      %p307 = scmp.ne.s32.totalorder %s292, %s306
      %p308 = scmp.eq.s32.totalorder %s30, 0
      %p309 = por %p307, %p308
      %s310 = ssub.s32 %s24, %s31
      %p311 = scmp.eq.s32.totalorder %s310, 0
      %s313 = sadd.s32 %s312, 1
      %s314 = scalar_select %p311, %s312, %s313
      %p317 = pneg %p311
      %p318 = scmp.eq.s32.totalorder %s24, 1
      %p319 = por %p317, %p318
      %p320 = scmp.ne.s32.totalorder %s312, %s315
      %p321 = scmp.eq.s32.totalorder %s24, 0
      %p322 = por %p320, %p321
      %p323 = scmp.ne.s32.totalorder %s312, %s315
      %p324 = scmp.eq.s32.totalorder %s29, 1
      %p325 = por %p323, %p324
      %p326 = scmp.ne.s32.totalorder %s315, %s316
      %p327 = scmp.eq.s32.totalorder %s29, 0
      %p328 = por %p326, %p327
      %p329 = scmp.ne.s32.totalorder %s315, %s316
      %p330 = scmp.eq.s32.totalorder %s30, 1
      %p331 = por %p329, %p330
      %p333 = scmp.ne.s32.totalorder %s316, %s332
      %p334 = scmp.eq.s32.totalorder %s30, 0
      %p335 = por %p333, %p334
      %p336 = scmp.le.s32.totalorder 1, %s24
      %p337 = scmp.lt.s32.totalorder %s24, 3
      %p338 = pnand %p336, %p337
      %p339 = pneg %p338
      // Predicated region
      $region9: #{encoder_cnn_forward.1} parent=5 // pred_check
        _
      $region10: #{encoder_cnn_forward.1} parent=5 // pred_check_branch
        %341 = sbr.rel (%p338) target = $region12
      $region11: #{encoder_cnn_forward.1} parent=5 // pred_region
        %s342 = ssub.s32 %s24, 1
        // Predicated region
        $region13: #{encoder_cnn_forward.1} parent=11 // pred_check
          %p343 = pneg %p71
        $region14: #{encoder_cnn_forward.1} parent=11 // pred_check_branch
          %345 = sbr.rel (%p343) target = $region16
        $region15: #{encoder_cnn_forward.1} parent=11 // pred_region
          _
        $region16: #{encoder_cnn_forward.1} parent=11 // pred_fallthru
          _
        // Predicated region
        $region17: #{encoder_cnn_forward.1} parent=11 // pred_check
          %p346 = pneg %p92
        $region18: #{encoder_cnn_forward.1} parent=11 // pred_check_branch
          %348 = sbr.rel (%p346) target = $region20
        $region19: #{encoder_cnn_forward.1} parent=11 // pred_region
          _
        $region20: #{encoder_cnn_forward.1} parent=11 // pred_fallthru
          _
        // Predicated region
        $region21: #{encoder_cnn_forward.1} parent=11 // pred_check
          %p349 = pneg %p113
        $region22: #{encoder_cnn_forward.1} parent=11 // pred_check_branch
          %351 = sbr.rel (%p349) target = $region24
        $region23: #{encoder_cnn_forward.1} parent=11 // pred_region
          %353 = vsyncadd [#allocation7], 0
          %s354 = sshll.u32 %s3, 4
          %s355 = int_to_ptr.hbm [resolvable:$true] %s354
          %s356 = sshll.u32 [#allocation6], 4
          %s357 = int_to_ptr.vmem [resolvable:$true] %s356
          %362 = dma.hbm_to_vmem [thread:$0]  %s355, 1024, %s357, [#allocation7], 64, 64, 4
        $region24: #{encoder_cnn_forward.1} parent=11 // pred_fallthru
          _
        // Predicated region
        $region25: #{encoder_cnn_forward.1} parent=11 // pred_check
          %p363 = pneg %p134
        $region26: #{encoder_cnn_forward.1} parent=11 // pred_check_branch
          %365 = sbr.rel (%p363) target = $region28
        $region27: #{encoder_cnn_forward.1} parent=11 // pred_region
          _
        $region28: #{encoder_cnn_forward.1} parent=11 // pred_fallthru
          _
        // Predicated region
        $region29: #{encoder_cnn_forward.1} parent=11 // pred_check
          %p366 = pneg %p155
        $region30: #{encoder_cnn_forward.1} parent=11 // pred_check_branch
          %368 = sbr.rel (%p366) target = $region32
        $region31: #{encoder_cnn_forward.1} parent=11 // pred_region
          %370 = vsyncadd [#allocation10], 0
          %s371 = sshll.u32 %s5, 4
          %s372 = int_to_ptr.hbm [resolvable:$true] %s371
          %s373 = sshll.u32 [#allocation9], 4
          %s374 = int_to_ptr.vmem [resolvable:$true] %s373
          %379 = dma.hbm_to_vmem [thread:$0]  %s372, 9216, %s374, [#allocation10], 64, 64, 4
        $region32: #{encoder_cnn_forward.1} parent=11 // pred_fallthru
          _
        // Predicated region
        $region33: #{encoder_cnn_forward.1} parent=11 // pred_check
          %p380 = pneg %p176
        $region34: #{encoder_cnn_forward.1} parent=11 // pred_check_branch
          %382 = sbr.rel (%p380) target = $region36
        $region35: #{encoder_cnn_forward.1} parent=11 // pred_region
          _
        $region36: #{encoder_cnn_forward.1} parent=11 // pred_fallthru
          _
        // Predicated region
        $region37: #{encoder_cnn_forward.1} parent=11 // pred_check
          %p383 = pneg %p197
        $region38: #{encoder_cnn_forward.1} parent=11 // pred_check_branch
          %385 = sbr.rel (%p383) target = $region40
        $region39: #{encoder_cnn_forward.1} parent=11 // pred_region
          _
        $region40: #{encoder_cnn_forward.1} parent=11 // pred_fallthru
          _
        // Predicated region
        $region41: #{encoder_cnn_forward.1} parent=11 // pred_check
          %p386 = pneg %p218
        $region42: #{encoder_cnn_forward.1} parent=11 // pred_check_branch
          %388 = sbr.rel (%p386) target = $region44
        $region43: #{encoder_cnn_forward.1} parent=11 // pred_region
          _
        $region44: #{encoder_cnn_forward.1} parent=11 // pred_fallthru
          _
        // Predicated region
        $region45: #{encoder_cnn_forward.1} parent=11 // pred_check
          %p389 = pneg %p239
        $region46: #{encoder_cnn_forward.1} parent=11 // pred_check_branch
          %391 = sbr.rel (%p389) target = $region48
        $region47: #{encoder_cnn_forward.1} parent=11 // pred_region
          _
        $region48: #{encoder_cnn_forward.1} parent=11 // pred_fallthru
          _
        // Predicated region
        $region49: #{encoder_cnn_forward.1} parent=11 // pred_check
          %p392 = pneg %p260
        $region50: #{encoder_cnn_forward.1} parent=11 // pred_check_branch
          %394 = sbr.rel (%p392) target = $region52
        $region51: #{encoder_cnn_forward.1} parent=11 // pred_region
          _
        $region52: #{encoder_cnn_forward.1} parent=11 // pred_fallthru
          _
        // Predicated region
        $region53: #{encoder_cnn_forward.1} parent=11 // pred_check
          %p395 = pneg %p281
        $region54: #{encoder_cnn_forward.1} parent=11 // pred_check_branch
          %397 = sbr.rel (%p395) target = $region56
        $region55: #{encoder_cnn_forward.1} parent=11 // pred_region
          _
        $region56: #{encoder_cnn_forward.1} parent=11 // pred_fallthru
          _
        // Predicated region
        $region57: #{encoder_cnn_forward.1} parent=11 // pred_check
          %p398 = pneg %p302
        $region58: #{encoder_cnn_forward.1} parent=11 // pred_check_branch
          %400 = sbr.rel (%p398) target = $region60
        $region59: #{encoder_cnn_forward.1} parent=11 // pred_region
          _
        $region60: #{encoder_cnn_forward.1} parent=11 // pred_fallthru
          _
      $region12: #{encoder_cnn_forward.1} parent=5 // pred_fallthru
        _
      %p401 = scmp.lt.s32.totalorder %s24, 2
      // Predicated region
      $region61: #{encoder_cnn_forward.1} parent=5 // pred_check
        %p402 = pneg %p401
      $region62: #{encoder_cnn_forward.1} parent=5 // pred_check_branch
        %404 = sbr.rel (%p402) target = $region64
      $region63: #{encoder_cnn_forward.1} parent=5 // pred_region
        // Predicated region
        $region65: #{encoder_cnn_forward.1} parent=63 // pred_check
          %p405 = pneg %p44
        $region66: #{encoder_cnn_forward.1} parent=63 // pred_check_branch
          %407 = sbr.rel (%p405) target = $region68
        $region67: #{encoder_cnn_forward.1} parent=63 // pred_region
          %p408 = scmp.lt.s32.totalorder %s24, 1
          %s409 = scalar_select %p408, %s24, 1
          %s410 = smul.addr %s409, 32
          %s411 = smul.addr %s410, 4
          %s412 = scalar_lea.vmem %s0, %s411
        $region68: #{encoder_cnn_forward.1} parent=63 // pred_fallthru
          _
      $region64: #{encoder_cnn_forward.1} parent=5 // pred_fallthru
        _
      %p413 = scmp.le.s32.totalorder 1, %s24
      %p414 = scmp.lt.s32.totalorder %s24, 3
      %p415 = pnand %p413, %p414
      %p416 = pneg %p415
      // Predicated region
      $region69: #{encoder_cnn_forward.1} parent=5 // pred_check
        _
      $region70: #{encoder_cnn_forward.1} parent=5 // pred_check_branch
        %418 = sbr.rel (%p415) target = $region72
      $region71: #{encoder_cnn_forward.1} parent=5 // pred_region
        %s419 = ssub.s32 %s24, 1
        // Predicated region
        $region73: #{encoder_cnn_forward.1} parent=71 // pred_check
          %p420 = pneg %p113
        $region74: #{encoder_cnn_forward.1} parent=71 // pred_check_branch
          %422 = sbr.rel (%p420) target = $region76
        $region75: #{encoder_cnn_forward.1} parent=71 // pred_region
          %424 = dma.done [#allocation7], 1024
        $region76: #{encoder_cnn_forward.1} parent=71 // pred_fallthru
          _
        // Predicated region
        $region77: #{encoder_cnn_forward.1} parent=71 // pred_check
          %p425 = pneg %p155
        $region78: #{encoder_cnn_forward.1} parent=71 // pred_check_branch
          %427 = sbr.rel (%p425) target = $region80
        $region79: #{encoder_cnn_forward.1} parent=71 // pred_region
          %429 = dma.done [#allocation10], 9216
        $region80: #{encoder_cnn_forward.1} parent=71 // pred_fallthru
          _
        %p430 = scmp.lt.s32.totalorder %s29, 1
        %s431 = scalar_select %p430, %s29, 1
        %s432 = smul.addr %s431, 32
        %s433 = smul.addr %s432, 4
        %s434 = scalar_lea.vmem %s0, %s433
        %p435 = pneg %p50
        %p436 = pneg %p47
        %p437 = pneg %p71
        %p438 = pneg %p68
        %p439 = pneg %p92
        %p440 = pneg %p89
        %p441 = pneg %p113
        %p442 = pneg %p110
        %p443 = pneg %p134
        %p444 = pneg %p131
        %p445 = pneg %p155
        %p446 = pneg %p152
        %p447 = pneg %p176
        %p448 = pneg %p173
        %p449 = pneg %p197
        %p450 = pneg %p194
        %p451 = pneg %p218
        %p452 = pneg %p215
        %p453 = pneg %p239
        %p454 = pneg %p236
        %p455 = pneg %p260
        %p456 = pneg %p257
        %p457 = pneg %p281
        %p458 = pneg %p278
        %p459 = pneg %p302
        %p460 = pneg %p299
        %p461 = pneg %p328
        %p462 = pneg %p325
        %s463 = sand.u32 %s315, 1
        %s464 = scalar_lea.sflag [#allocation8], %s463
        %s465 = sand.u32 %s315, 1
        %s466 = scalar_lea.vmem [#allocation11], %s465
        %p467 = scmp.lt.s32.totalorder %s29, 1
        %s468 = scalar_select %p467, %s29, 1
        %s469 = smul.addr %s468, 32
        %s470 = smul.addr %s469, 4
        %s471 = scalar_lea.vmem %s0, %s470
        %v473 = vld [vmem:[%s471] sm:$0xf]
        %v474 = vld [vmem:[%s471 + $0x4] sm:$0xf]
        %v475 = vld [vmem:[%s471 + $0x8] sm:$0xf]
        %v476 = vld [vmem:[%s471 + $0xc] sm:$0xf]
        %v477 = vld [vmem:[%s471 + $0x10] sm:$0xf]
        %v478 = vld [vmem:[%s471 + $0x14] sm:$0xf]
        %v479 = vld [vmem:[%s471 + $0x18] sm:$0xf]
        %v480 = vld [vmem:[%s471 + $0x1c] sm:$0xf]
        %v481 = vld [vmem:[%s471 + $0x20] sm:$0xf]
        %v482 = vld [vmem:[%s471 + $0x24] sm:$0xf]
        %v483 = vld [vmem:[%s471 + $0x28] sm:$0xf]
        %v484 = vld [vmem:[%s471 + $0x2c] sm:$0xf]
        %v485 = vld [vmem:[%s471 + $0x30] sm:$0xf]
        %v486 = vld [vmem:[%s471 + $0x34] sm:$0xf]
        %v487 = vld [vmem:[%s471 + $0x38] sm:$0xf]
        %v488 = vld [vmem:[%s471 + $0x3c] sm:$0xf]
        %v489 = vld [vmem:[%s471 + $0x40] sm:$0xf]
        %v490 = vld [vmem:[%s471 + $0x44] sm:$0xf]
        %v491 = vld [vmem:[%s471 + $0x48] sm:$0xf]
        %v492 = vld [vmem:[%s471 + $0x4c] sm:$0xf]
        %v493 = vld [vmem:[%s471 + $0x50] sm:$0xf]
        %v494 = vld [vmem:[%s471 + $0x54] sm:$0xf]
        %v495 = vld [vmem:[%s471 + $0x58] sm:$0xf]
        %v496 = vld [vmem:[%s471 + $0x5c] sm:$0xf]
        %v497 = vld [vmem:[%s471 + $0x60] sm:$0xf]
        %v498 = vld [vmem:[%s471 + $0x64] sm:$0xf]
        %v499 = vld [vmem:[%s471 + $0x68] sm:$0xf]
        %v500 = vld [vmem:[%s471 + $0x6c] sm:$0xf]
        %v501 = vld [vmem:[%s471 + $0x70] sm:$0xf]
        %v502 = vld [vmem:[%s471 + $0x74] sm:$0xf]
        %v503 = vld [vmem:[%s471 + $0x78] sm:$0xf]
        %v504 = vld [vmem:[%s471 + $0x7c] sm:$0xf]
        %v537 = vunpack.c.l.b16 %v473
        %v538 = vunpack.c.l.b16 %v474
        %v539 = vunpack.c.l.b16 %v475
        %v540 = vunpack.c.l.b16 %v476
        %v541 = vunpack.c.l.b16 %v477
        %v542 = vunpack.c.l.b16 %v478
        %v543 = vunpack.c.l.b16 %v479
        %v544 = vunpack.c.l.b16 %v480
        %v545 = vunpack.c.l.b16 %v481
        %v546 = vunpack.c.l.b16 %v482
        %v547 = vunpack.c.l.b16 %v483
        %v548 = vunpack.c.l.b16 %v484
        %v549 = vunpack.c.l.b16 %v485
        %v550 = vunpack.c.l.b16 %v486
        %v551 = vunpack.c.l.b16 %v487
        %v552 = vunpack.c.l.b16 %v488
        %v553 = vunpack.c.l.b16 %v489
        %v554 = vunpack.c.l.b16 %v490
        %v555 = vunpack.c.l.b16 %v491
        %v556 = vunpack.c.l.b16 %v492
        %v557 = vunpack.c.l.b16 %v493
        %v558 = vunpack.c.l.b16 %v494
        %v559 = vunpack.c.l.b16 %v495
        %v560 = vunpack.c.l.b16 %v496
        %v561 = vunpack.c.l.b16 %v497
        %v562 = vunpack.c.l.b16 %v498
        %v563 = vunpack.c.l.b16 %v499
        %v564 = vunpack.c.l.b16 %v500
        %v565 = vunpack.c.l.b16 %v501
        %v566 = vunpack.c.l.b16 %v502
        %v567 = vunpack.c.l.b16 %v503
        %v568 = vunpack.c.l.b16 %v504
        %v569 = vpack.c.b16 %v538, %v537
        %v570 = vpack.c.b16 %v540, %v539
        %v571 = vpack.c.b16 %v542, %v541
        %v572 = vpack.c.b16 %v544, %v543
        %v573 = vpack.c.b16 %v546, %v545
        %v574 = vpack.c.b16 %v548, %v547
        %v575 = vpack.c.b16 %v550, %v549
        %v576 = vpack.c.b16 %v552, %v551
        %v577 = vpack.c.b16 %v554, %v553
        %v578 = vpack.c.b16 %v556, %v555
        %v579 = vpack.c.b16 %v558, %v557
        %v580 = vpack.c.b16 %v560, %v559
        %v581 = vpack.c.b16 %v562, %v561
        %v582 = vpack.c.b16 %v564, %v563
        %v583 = vpack.c.b16 %v566, %v565
        %v584 = vpack.c.b16 %v568, %v567
        %v586 = vshrl.u32 0, 16
        %v588 = vrot.slane %v586, 7
        %v589 = vshll.u32 0, 16
        %v591 = vor.u32 %v588, %v589
        %v593 = vshrl.u32 %v569, 16
        %v595 = vrot.slane %v593, 7
        %v596 = vshll.u32 %v569, 16
        %v598 = vor.u32 %v595, %v596
        %v600 = vshrl.u32 %v570, 16
        %v602 = vrot.slane %v600, 7
        %v603 = vshll.u32 %v570, 16
        %v605 = vor.u32 %v602, %v603
        %v607 = vshrl.u32 %v571, 16
        %v609 = vrot.slane %v607, 7
        %v610 = vshll.u32 %v571, 16
        %v612 = vor.u32 %v609, %v610
        %v614 = vshrl.u32 %v572, 16
        %v616 = vrot.slane %v614, 7
        %v617 = vshll.u32 %v572, 16
        %v619 = vor.u32 %v616, %v617
        %v621 = vshrl.u32 %v573, 16
        %v623 = vrot.slane %v621, 7
        %v624 = vshll.u32 %v573, 16
        %v626 = vor.u32 %v623, %v624
        %v628 = vshrl.u32 %v574, 16
        %v630 = vrot.slane %v628, 7
        %v631 = vshll.u32 %v574, 16
        %v633 = vor.u32 %v630, %v631
        %v635 = vshrl.u32 %v575, 16
        %v637 = vrot.slane %v635, 7
        %v638 = vshll.u32 %v575, 16
        %v640 = vor.u32 %v637, %v638
        %v642 = vshrl.u32 %v576, 16
        %v644 = vrot.slane %v642, 7
        %v645 = vshll.u32 %v576, 16
        %v647 = vor.u32 %v644, %v645
        %v649 = vshrl.u32 %v577, 16
        %v651 = vrot.slane %v649, 7
        %v652 = vshll.u32 %v577, 16
        %v654 = vor.u32 %v651, %v652
        %v656 = vshrl.u32 %v578, 16
        %v658 = vrot.slane %v656, 7
        %v659 = vshll.u32 %v578, 16
        %v661 = vor.u32 %v658, %v659
        %v663 = vshrl.u32 %v579, 16
        %v665 = vrot.slane %v663, 7
        %v666 = vshll.u32 %v579, 16
        %v668 = vor.u32 %v665, %v666
        %v670 = vshrl.u32 %v580, 16
        %v672 = vrot.slane %v670, 7
        %v673 = vshll.u32 %v580, 16
        %v675 = vor.u32 %v672, %v673
        %v677 = vshrl.u32 %v581, 16
        %v679 = vrot.slane %v677, 7
        %v680 = vshll.u32 %v581, 16
        %v682 = vor.u32 %v679, %v680
        %v684 = vshrl.u32 %v582, 16
        %v686 = vrot.slane %v684, 7
        %v687 = vshll.u32 %v582, 16
        %v689 = vor.u32 %v686, %v687
        %v691 = vshrl.u32 %v583, 16
        %v693 = vrot.slane %v691, 7
        %v694 = vshll.u32 %v583, 16
        %v696 = vor.u32 %v693, %v694
        %v698 = vshrl.u32 %v584, 16
        %v700 = vrot.slane %v698, 7
        %v701 = vshll.u32 %v584, 16
        %v703 = vor.u32 %v700, %v701
        %vm738 = vcmask 1040384
        %vm739 = vsmask.f32 256
        %vm740 = vmand %vm738, %vm739
        %v741 = vsel %vm740, 0, %v591
        %v742 = vsel %vm740, 0, %v598
        %v743 = vsel %vm740, 0, %v605
        %v744 = vsel %vm740, 0, %v612
        %v745 = vsel %vm740, 0, %v619
        %v746 = vsel %vm740, 0, %v626
        %v747 = vsel %vm740, 0, %v633
        %v748 = vsel %vm740, 0, %v640
        %v749 = vsel %vm740, 0, %v647
        %v750 = vsel %vm740, 0, %v654
        %v751 = vsel %vm740, 0, %v661
        %v752 = vsel %vm740, 0, %v668
        %v753 = vsel %vm740, 0, %v675
        %v754 = vsel %vm740, 0, %v682
        %v755 = vsel %vm740, 0, %v689
        %v756 = vsel %vm740, 0, %v696
        %v757 = vsel %vm740, 0, %v703
        %v758 = vsel %vm740, %v588, 0
        %v759 = vsel %vm740, %v595, 0
        %v760 = vsel %vm740, %v602, 0
        %v761 = vsel %vm740, %v609, 0
        %v762 = vsel %vm740, %v616, 0
        %v763 = vsel %vm740, %v623, 0
        %v764 = vsel %vm740, %v630, 0
        %v765 = vsel %vm740, %v637, 0
        %v766 = vsel %vm740, %v644, 0
        %v767 = vsel %vm740, %v651, 0
        %v768 = vsel %vm740, %v658, 0
        %v769 = vsel %vm740, %v665, 0
        %v770 = vsel %vm740, %v672, 0
        %v771 = vsel %vm740, %v679, 0
        %v772 = vsel %vm740, %v686, 0
        %v773 = vsel %vm740, %v693, 0
        %v774 = vsel %vm740, %v700, 0
        %v809 = vunpack.c.l.b16 %v741
        %v810 = vunpack.c.h.b16 %v741
        %v811 = vunpack.c.l.b16 %v758
        %v812 = vunpack.c.l.b16 %v742
        %v813 = vunpack.c.h.b16 %v742
        %v814 = vunpack.c.l.b16 %v759
        %v815 = vunpack.c.l.b16 %v743
        %v816 = vunpack.c.h.b16 %v743
        %v817 = vunpack.c.l.b16 %v760
        %v818 = vunpack.c.l.b16 %v744
        %v819 = vunpack.c.h.b16 %v744
        %v820 = vunpack.c.l.b16 %v761
        %v821 = vunpack.c.l.b16 %v745
        %v822 = vunpack.c.h.b16 %v745
        %v823 = vunpack.c.l.b16 %v762
        %v824 = vunpack.c.l.b16 %v746
        %v825 = vunpack.c.h.b16 %v746
        %v826 = vunpack.c.l.b16 %v763
        %v827 = vunpack.c.l.b16 %v747
        %v828 = vunpack.c.h.b16 %v747
        %v829 = vunpack.c.l.b16 %v764
        %v830 = vunpack.c.l.b16 %v748
        %v831 = vunpack.c.h.b16 %v748
        %v832 = vunpack.c.l.b16 %v765
        %v833 = vunpack.c.l.b16 %v749
        %v834 = vunpack.c.h.b16 %v749
        %v835 = vunpack.c.l.b16 %v766
        %v836 = vunpack.c.l.b16 %v750
        %v837 = vunpack.c.h.b16 %v750
        %v838 = vunpack.c.l.b16 %v767
        %v839 = vunpack.c.l.b16 %v751
        %v840 = vunpack.c.h.b16 %v751
        %v841 = vunpack.c.l.b16 %v768
        %v842 = vunpack.c.l.b16 %v752
        %v843 = vunpack.c.h.b16 %v752
        %v844 = vunpack.c.l.b16 %v769
        %v845 = vunpack.c.l.b16 %v753
        %v846 = vunpack.c.h.b16 %v753
        %v847 = vunpack.c.l.b16 %v770
        %v848 = vunpack.c.l.b16 %v754
        %v849 = vunpack.c.h.b16 %v754
        %v850 = vunpack.c.l.b16 %v771
        %v851 = vunpack.c.l.b16 %v755
        %v852 = vunpack.c.h.b16 %v755
        %v853 = vunpack.c.l.b16 %v772
        %v854 = vunpack.c.l.b16 %v756
        %v855 = vunpack.c.h.b16 %v756
        %v856 = vunpack.c.l.b16 %v773
        %v857 = vunpack.c.l.b16 %v757
        %v858 = vunpack.c.h.b16 %v757
        %v859 = vunpack.c.l.b16 %v774
        %v860 = vpack.c.b16 %v809, %v809
        %v861 = vpack.c.b16 %v810, %v810
        %v862 = vpack.c.b16 %v811, %v811
        %v863 = vpack.c.b16 %v812, %v812
        %v864 = vpack.c.b16 %v813, %v813
        %v865 = vpack.c.b16 %v814, %v814
        %v866 = vpack.c.b16 %v815, %v815
        %v867 = vpack.c.b16 %v816, %v816
        %v868 = vpack.c.b16 %v817, %v817
        %v869 = vpack.c.b16 %v818, %v818
        %v870 = vpack.c.b16 %v819, %v819
        %v871 = vpack.c.b16 %v820, %v820
        %v872 = vpack.c.b16 %v821, %v821
        %v873 = vpack.c.b16 %v822, %v822
        %v874 = vpack.c.b16 %v823, %v823
        %v875 = vpack.c.b16 %v824, %v824
        %v876 = vpack.c.b16 %v825, %v825
        %v877 = vpack.c.b16 %v826, %v826
        %v878 = vpack.c.b16 %v827, %v827
        %v879 = vpack.c.b16 %v828, %v828
        %v880 = vpack.c.b16 %v829, %v829
        %v881 = vpack.c.b16 %v830, %v830
        %v882 = vpack.c.b16 %v831, %v831
        %v883 = vpack.c.b16 %v832, %v832
        %v884 = vpack.c.b16 %v833, %v833
        %v885 = vpack.c.b16 %v834, %v834
        %v886 = vpack.c.b16 %v835, %v835
        %v887 = vpack.c.b16 %v836, %v836
        %v888 = vpack.c.b16 %v837, %v837
        %v889 = vpack.c.b16 %v838, %v838
        %v890 = vpack.c.b16 %v839, %v839
        %v891 = vpack.c.b16 %v840, %v840
        %v892 = vpack.c.b16 %v841, %v841
        %v893 = vpack.c.b16 %v842, %v842
        %v894 = vpack.c.b16 %v843, %v843
        %v895 = vpack.c.b16 %v844, %v844
        %v896 = vpack.c.b16 %v845, %v845
        %v897 = vpack.c.b16 %v846, %v846
        %v898 = vpack.c.b16 %v847, %v847
        %v899 = vpack.c.b16 %v848, %v848
        %v900 = vpack.c.b16 %v849, %v849
        %v901 = vpack.c.b16 %v850, %v850
        %v902 = vpack.c.b16 %v851, %v851
        %v903 = vpack.c.b16 %v852, %v852
        %v904 = vpack.c.b16 %v853, %v853
        %v905 = vpack.c.b16 %v854, %v854
        %v906 = vpack.c.b16 %v855, %v855
        %v907 = vpack.c.b16 %v856, %v856
        %v908 = vpack.c.b16 %v857, %v857
        %v909 = vpack.c.b16 %v858, %v858
        %v910 = vpack.c.b16 %v859, %v859
        %962 = vst [vmem:[#allocation2] sm:$0xf] %v860
        %963 = vst [vmem:[#allocation2 + $0x4] sm:$0xf] %v861
        %964 = vst [vmem:[#allocation2 + $0x8] sm:$0x1] %v862
        %965 = vst [vmem:[#allocation2 + $0xc] sm:$0xf] %v863
        %966 = vst [vmem:[#allocation2 + $0x10] sm:$0xf] %v864
        %967 = vst [vmem:[#allocation2 + $0x14] sm:$0x1] %v865
        %968 = vst [vmem:[#allocation2 + $0x18] sm:$0xf] %v866
        %969 = vst [vmem:[#allocation2 + $0x1c] sm:$0xf] %v867
        %970 = vst [vmem:[#allocation2 + $0x20] sm:$0x1] %v868
        %971 = vst [vmem:[#allocation2 + $0x24] sm:$0xf] %v869
        %972 = vst [vmem:[#allocation2 + $0x28] sm:$0xf] %v870
        %973 = vst [vmem:[#allocation2 + $0x2c] sm:$0x1] %v871
        %974 = vst [vmem:[#allocation2 + $0x30] sm:$0xf] %v872
        %975 = vst [vmem:[#allocation2 + $0x34] sm:$0xf] %v873
        %976 = vst [vmem:[#allocation2 + $0x38] sm:$0x1] %v874
        %977 = vst [vmem:[#allocation2 + $0x3c] sm:$0xf] %v875
        %978 = vst [vmem:[#allocation2 + $0x40] sm:$0xf] %v876
        %979 = vst [vmem:[#allocation2 + $0x44] sm:$0x1] %v877
        %980 = vst [vmem:[#allocation2 + $0x48] sm:$0xf] %v878
        %981 = vst [vmem:[#allocation2 + $0x4c] sm:$0xf] %v879
        %982 = vst [vmem:[#allocation2 + $0x50] sm:$0x1] %v880
        %983 = vst [vmem:[#allocation2 + $0x54] sm:$0xf] %v881
        %984 = vst [vmem:[#allocation2 + $0x58] sm:$0xf] %v882
        %985 = vst [vmem:[#allocation2 + $0x5c] sm:$0x1] %v883
        %986 = vst [vmem:[#allocation2 + $0x60] sm:$0xf] %v884
        %987 = vst [vmem:[#allocation2 + $0x64] sm:$0xf] %v885
        %988 = vst [vmem:[#allocation2 + $0x68] sm:$0x1] %v886
        %989 = vst [vmem:[#allocation2 + $0x6c] sm:$0xf] %v887
        %990 = vst [vmem:[#allocation2 + $0x70] sm:$0xf] %v888
        %991 = vst [vmem:[#allocation2 + $0x74] sm:$0x1] %v889
        %992 = vst [vmem:[#allocation2 + $0x78] sm:$0xf] %v890
        %993 = vst [vmem:[#allocation2 + $0x7c] sm:$0xf] %v891
        %994 = vst [vmem:[#allocation2 + $0x80] sm:$0x1] %v892
        %995 = vst [vmem:[#allocation2 + $0x84] sm:$0xf] %v893
        %996 = vst [vmem:[#allocation2 + $0x88] sm:$0xf] %v894
        %997 = vst [vmem:[#allocation2 + $0x8c] sm:$0x1] %v895
        %998 = vst [vmem:[#allocation2 + $0x90] sm:$0xf] %v896
        %999 = vst [vmem:[#allocation2 + $0x94] sm:$0xf] %v897
        %1000 = vst [vmem:[#allocation2 + $0x98] sm:$0x1] %v898
        %1001 = vst [vmem:[#allocation2 + $0x9c] sm:$0xf] %v899
        %1002 = vst [vmem:[#allocation2 + $0xa0] sm:$0xf] %v900
        %1003 = vst [vmem:[#allocation2 + $0xa4] sm:$0x1] %v901
        %1004 = vst [vmem:[#allocation2 + $0xa8] sm:$0xf] %v902
        %1005 = vst [vmem:[#allocation2 + $0xac] sm:$0xf] %v903
        %1006 = vst [vmem:[#allocation2 + $0xb0] sm:$0x1] %v904
        %1007 = vst [vmem:[#allocation2 + $0xb4] sm:$0xf] %v905
        %1008 = vst [vmem:[#allocation2 + $0xb8] sm:$0xf] %v906
        %1009 = vst [vmem:[#allocation2 + $0xbc] sm:$0x1] %v907
        %1010 = vst [vmem:[#allocation2 + $0xc0] sm:$0xf] %v908
        %1011 = vst [vmem:[#allocation2 + $0xc4] sm:$0xf] %v909
        %1012 = vst [vmem:[#allocation2 + $0xc8] sm:$0x1] %v910
        %1013 = vst [vmem:[#allocation2 + $0xcc] sm:$0xf] %v860
        %1014 = vst [vmem:[#allocation2 + $0xd0] sm:$0xf] %v861
        %1015 = vst [vmem:[#allocation2 + $0xd4] sm:$0x1] %v862
        %v1016 = vld [vmem:[#allocation2] sm:$0xf]
        %v1017 = vld [vmem:[#allocation2 + $0x4] sm:$0xf]
        %v1018 = vld [vmem:[#allocation2 + $0xc] sm:$0xf]
        %v1019 = vld [vmem:[#allocation2 + $0x10] sm:$0xf]
        %v1020 = vld [vmem:[#allocation2 + $0x18] sm:$0xf]
        %v1021 = vld [vmem:[#allocation2 + $0x1c] sm:$0xf]
        %v1022 = vld [vmem:[#allocation2 + $0x24] sm:$0xf]
        %v1023 = vld [vmem:[#allocation2 + $0x28] sm:$0xf]
        %v1024 = vld [vmem:[#allocation2 + $0x30] sm:$0xf]
        %v1025 = vld [vmem:[#allocation2 + $0x34] sm:$0xf]
        %v1026 = vld [vmem:[#allocation2 + $0x3c] sm:$0xf]
        %v1027 = vld [vmem:[#allocation2 + $0x40] sm:$0xf]
        %v1028 = vld [vmem:[#allocation2 + $0x48] sm:$0xf]
        %v1029 = vld [vmem:[#allocation2 + $0x4c] sm:$0xf]
        %v1030 = vld [vmem:[#allocation2 + $0x54] sm:$0xf]
        %v1031 = vld [vmem:[#allocation2 + $0x58] sm:$0xf]
        %v1032 = vld [vmem:[#allocation2 + $0x60] sm:$0xf]
        %v1033 = vld [vmem:[#allocation2 + $0x64] sm:$0xf]
        %v1034 = vld [vmem:[#allocation2 + $0x6c] sm:$0xf]
        %v1035 = vld [vmem:[#allocation2 + $0x70] sm:$0xf]
        %v1036 = vld [vmem:[#allocation2 + $0x78] sm:$0xf]
        %v1037 = vld [vmem:[#allocation2 + $0x7c] sm:$0xf]
        %v1038 = vld [vmem:[#allocation2 + $0x84] sm:$0xf]
        %v1039 = vld [vmem:[#allocation2 + $0x88] sm:$0xf]
        %v1040 = vld [vmem:[#allocation2 + $0x90] sm:$0xf]
        %v1041 = vld [vmem:[#allocation2 + $0x94] sm:$0xf]
        %v1042 = vld [vmem:[#allocation2 + $0x9c] sm:$0xf]
        %v1043 = vld [vmem:[#allocation2 + $0xa0] sm:$0xf]
        %v1044 = vld [vmem:[#allocation2 + $0xa8] sm:$0xf]
        %v1045 = vld [vmem:[#allocation2 + $0xac] sm:$0xf]
        %v1046 = vld [vmem:[#allocation2 + $0xb4] sm:$0xf]
        %v1047 = vld [vmem:[#allocation2 + $0xb8] sm:$0xf]
        %1048 = vst [vmem:[#allocation3] sm:$0xf] %v1016
        %1049 = vst [vmem:[#allocation3 + $0x24] sm:$0xf] %v1017
        %1050 = vst [vmem:[#allocation3 + $0x48] sm:$0xf] %v1018
        %1051 = vst [vmem:[#allocation3 + $0x6c] sm:$0xf] %v1019
        %1052 = vst [vmem:[#allocation3 + $0x90] sm:$0xf] %v1020
        %1053 = vst [vmem:[#allocation3 + $0xb4] sm:$0xf] %v1021
        %1054 = vst [vmem:[#allocation3 + $0xd8] sm:$0xf] %v1022
        %1055 = vst [vmem:[#allocation3 + $0xfc] sm:$0xf] %v1023
        %1056 = vst [vmem:[#allocation3 + $0x120] sm:$0xf] %v1024
        %1057 = vst [vmem:[#allocation3 + $0x144] sm:$0xf] %v1025
        %1058 = vst [vmem:[#allocation3 + $0x168] sm:$0xf] %v1026
        %1059 = vst [vmem:[#allocation3 + $0x18c] sm:$0xf] %v1027
        %1060 = vst [vmem:[#allocation3 + $0x1b0] sm:$0xf] %v1028
        %1061 = vst [vmem:[#allocation3 + $0x1d4] sm:$0xf] %v1029
        %1062 = vst [vmem:[#allocation3 + $0x1f8] sm:$0xf] %v1030
        %1063 = vst [vmem:[#allocation3 + $0x21c] sm:$0xf] %v1031
        %1064 = vst [vmem:[#allocation3 + $0x240] sm:$0xf] %v1032
        %1065 = vst [vmem:[#allocation3 + $0x264] sm:$0xf] %v1033
        %1066 = vst [vmem:[#allocation3 + $0x288] sm:$0xf] %v1034
        %1067 = vst [vmem:[#allocation3 + $0x2ac] sm:$0xf] %v1035
        %1068 = vst [vmem:[#allocation3 + $0x2d0] sm:$0xf] %v1036
        %1069 = vst [vmem:[#allocation3 + $0x2f4] sm:$0xf] %v1037
        %1070 = vst [vmem:[#allocation3 + $0x318] sm:$0xf] %v1038
        %1071 = vst [vmem:[#allocation3 + $0x33c] sm:$0xf] %v1039
        %1072 = vst [vmem:[#allocation3 + $0x360] sm:$0xf] %v1040
        %1073 = vst [vmem:[#allocation3 + $0x384] sm:$0xf] %v1041
        %1074 = vst [vmem:[#allocation3 + $0x3a8] sm:$0xf] %v1042
        %1075 = vst [vmem:[#allocation3 + $0x3cc] sm:$0xf] %v1043
        %1076 = vst [vmem:[#allocation3 + $0x3f0] sm:$0xf] %v1044
        %1077 = vst [vmem:[#allocation3 + $0x414] sm:$0xf] %v1045
        %1078 = vst [vmem:[#allocation3 + $0x438] sm:$0xf] %v1046
        %1079 = vst [vmem:[#allocation3 + $0x45c] sm:$0xf] %v1047
        %v1080 = vld [vmem:[#allocation2] sm:$0xf]
        %v1081 = vld [vmem:[#allocation2 + $0x4] sm:$0xf]
        %v1082 = vld [vmem:[#allocation2 + $0x8] sm:$0x1]
        %v1083 = vld [vmem:[#allocation2 + $0xc] sm:$0xf]
        %v1084 = vld [vmem:[#allocation2 + $0x10] sm:$0xf]
        %v1085 = vld [vmem:[#allocation2 + $0x14] sm:$0x1]
        %v1086 = vld [vmem:[#allocation2 + $0x18] sm:$0xf]
        %v1087 = vld [vmem:[#allocation2 + $0x1c] sm:$0xf]
        %v1088 = vld [vmem:[#allocation2 + $0x20] sm:$0x1]
        %v1089 = vld [vmem:[#allocation2 + $0x24] sm:$0xf]
        %v1090 = vld [vmem:[#allocation2 + $0x28] sm:$0xf]
        %v1091 = vld [vmem:[#allocation2 + $0x2c] sm:$0x1]
        %v1092 = vld [vmem:[#allocation2 + $0x30] sm:$0xf]
        %v1093 = vld [vmem:[#allocation2 + $0x34] sm:$0xf]
        %v1094 = vld [vmem:[#allocation2 + $0x38] sm:$0x1]
        %v1095 = vld [vmem:[#allocation2 + $0x3c] sm:$0xf]
        %v1096 = vld [vmem:[#allocation2 + $0x40] sm:$0xf]
        %v1097 = vld [vmem:[#allocation2 + $0x44] sm:$0x1]
        %v1098 = vld [vmem:[#allocation2 + $0x48] sm:$0xf]
        %v1099 = vld [vmem:[#allocation2 + $0x4c] sm:$0xf]
        %v1100 = vld [vmem:[#allocation2 + $0x50] sm:$0x1]
        %v1101 = vld [vmem:[#allocation2 + $0x54] sm:$0xf]
        %v1102 = vld [vmem:[#allocation2 + $0x58] sm:$0xf]
        %v1103 = vld [vmem:[#allocation2 + $0x5c] sm:$0x1]
        %v1104 = vld [vmem:[#allocation2 + $0x60] sm:$0xf]
        %v1105 = vld [vmem:[#allocation2 + $0x64] sm:$0xf]
        %v1106 = vld [vmem:[#allocation2 + $0x68] sm:$0x1]
        %v1107 = vld [vmem:[#allocation2 + $0x6c] sm:$0xf]
        %v1108 = vld [vmem:[#allocation2 + $0x70] sm:$0xf]
        %v1109 = vld [vmem:[#allocation2 + $0x74] sm:$0x1]
        %v1110 = vld [vmem:[#allocation2 + $0x78] sm:$0xf]
        %v1111 = vld [vmem:[#allocation2 + $0x7c] sm:$0xf]
        %v1112 = vld [vmem:[#allocation2 + $0x80] sm:$0x1]
        %v1113 = vld [vmem:[#allocation2 + $0x84] sm:$0xf]
        %v1114 = vld [vmem:[#allocation2 + $0x88] sm:$0xf]
        %v1115 = vld [vmem:[#allocation2 + $0x8c] sm:$0x1]
        %v1116 = vld [vmem:[#allocation2 + $0x90] sm:$0xf]
        %v1117 = vld [vmem:[#allocation2 + $0x94] sm:$0xf]
        %v1118 = vld [vmem:[#allocation2 + $0x98] sm:$0x1]
        %v1119 = vld [vmem:[#allocation2 + $0x9c] sm:$0xf]
        %v1120 = vld [vmem:[#allocation2 + $0xa0] sm:$0xf]
        %v1121 = vld [vmem:[#allocation2 + $0xa4] sm:$0x1]
        %v1122 = vld [vmem:[#allocation2 + $0xa8] sm:$0xf]
        %v1123 = vld [vmem:[#allocation2 + $0xac] sm:$0xf]
        %v1124 = vld [vmem:[#allocation2 + $0xb0] sm:$0x1]
        %v1125 = vld [vmem:[#allocation2 + $0xb4] sm:$0xf]
        %v1126 = vld [vmem:[#allocation2 + $0xb8] sm:$0xf]
        %v1127 = vld [vmem:[#allocation2 + $0xbc] sm:$0x1]
        %vm1128 = vsmask.f32 3328
        %vm1129 = vsmask.f32 7440
        %vm1130 = vmor %vm1128, %vm1129
        %v1132 = vshrl.u32 %v1080, 16
        %v1134 = vrot.slane %v1132, 4
        %v1135 = vshll.u32 %v1080, 16
        %v1137 = vrot.slane %v1135, 5
        %v1138 = vor.u32 %v1134, %v1137
        %v1139 = vrot.slane %v1138, 4
        %v1141 = vshll.u32 %v1081, 16
        %v1143 = vrot.slane %v1141, 5
        %v1144 = vsel %vm1130, %v1139, %v1143
        %v1145 = vshrl.u32 %v1081, 16
        %v1147 = vrot.slane %v1145, 4
        %v1148 = vor.u32 %v1147, %v1143
        %v1149 = vrot.slane %v1148, 4
        %v1151 = vshll.u32 %v1082, 16
        %v1153 = vrot.slane %v1151, 5
        %v1154 = vsel %vm1130, %v1149, %v1153
        %v1156 = vshrl.u32 %v1083, 16
        %v1158 = vrot.slane %v1156, 4
        %v1159 = vshll.u32 %v1083, 16
        %v1161 = vrot.slane %v1159, 5
        %v1162 = vor.u32 %v1158, %v1161
        %v1163 = vrot.slane %v1162, 4
        %v1165 = vshll.u32 %v1084, 16
        %v1167 = vrot.slane %v1165, 5
        %v1168 = vsel %vm1130, %v1163, %v1167
        %v1169 = vshrl.u32 %v1084, 16
        %v1171 = vrot.slane %v1169, 4
        %v1172 = vor.u32 %v1171, %v1167
        %v1173 = vrot.slane %v1172, 4
        %v1175 = vshll.u32 %v1085, 16
        %v1177 = vrot.slane %v1175, 5
        %v1178 = vsel %vm1130, %v1173, %v1177
        %v1180 = vshrl.u32 %v1086, 16
        %v1182 = vrot.slane %v1180, 4
        %v1183 = vshll.u32 %v1086, 16
        %v1185 = vrot.slane %v1183, 5
        %v1186 = vor.u32 %v1182, %v1185
        %v1187 = vrot.slane %v1186, 4
        %v1189 = vshll.u32 %v1087, 16
        %v1191 = vrot.slane %v1189, 5
        %v1192 = vsel %vm1130, %v1187, %v1191
        %v1193 = vshrl.u32 %v1087, 16
        %v1195 = vrot.slane %v1193, 4
        %v1196 = vor.u32 %v1195, %v1191
        %v1197 = vrot.slane %v1196, 4
        %v1199 = vshll.u32 %v1088, 16
        %v1201 = vrot.slane %v1199, 5
        %v1202 = vsel %vm1130, %v1197, %v1201
        %v1204 = vshrl.u32 %v1089, 16
        %v1206 = vrot.slane %v1204, 4
        %v1207 = vshll.u32 %v1089, 16
        %v1209 = vrot.slane %v1207, 5
        %v1210 = vor.u32 %v1206, %v1209
        %v1211 = vrot.slane %v1210, 4
        %v1213 = vshll.u32 %v1090, 16
        %v1215 = vrot.slane %v1213, 5
        %v1216 = vsel %vm1130, %v1211, %v1215
        %v1217 = vshrl.u32 %v1090, 16
        %v1219 = vrot.slane %v1217, 4
        %v1220 = vor.u32 %v1219, %v1215
        %v1221 = vrot.slane %v1220, 4
        %v1223 = vshll.u32 %v1091, 16
        %v1225 = vrot.slane %v1223, 5
        %v1226 = vsel %vm1130, %v1221, %v1225
        %v1228 = vshrl.u32 %v1092, 16
        %v1230 = vrot.slane %v1228, 4
        %v1231 = vshll.u32 %v1092, 16
        %v1233 = vrot.slane %v1231, 5
        %v1234 = vor.u32 %v1230, %v1233
        %v1235 = vrot.slane %v1234, 4
        %v1237 = vshll.u32 %v1093, 16
        %v1239 = vrot.slane %v1237, 5
        %v1240 = vsel %vm1130, %v1235, %v1239
        %v1241 = vshrl.u32 %v1093, 16
        %v1243 = vrot.slane %v1241, 4
        %v1244 = vor.u32 %v1243, %v1239
        %v1245 = vrot.slane %v1244, 4
        %v1247 = vshll.u32 %v1094, 16
        %v1249 = vrot.slane %v1247, 5
        %v1250 = vsel %vm1130, %v1245, %v1249
        %v1252 = vshrl.u32 %v1095, 16
        %v1254 = vrot.slane %v1252, 4
        %v1255 = vshll.u32 %v1095, 16
        %v1257 = vrot.slane %v1255, 5
        %v1258 = vor.u32 %v1254, %v1257
        %v1259 = vrot.slane %v1258, 4
        %v1261 = vshll.u32 %v1096, 16
        %v1263 = vrot.slane %v1261, 5
        %v1264 = vsel %vm1130, %v1259, %v1263
        %v1265 = vshrl.u32 %v1096, 16
        %v1267 = vrot.slane %v1265, 4
        %v1268 = vor.u32 %v1267, %v1263
        %v1269 = vrot.slane %v1268, 4
        %v1271 = vshll.u32 %v1097, 16
        %v1273 = vrot.slane %v1271, 5
        %v1274 = vsel %vm1130, %v1269, %v1273
        %v1276 = vshrl.u32 %v1098, 16
        %v1278 = vrot.slane %v1276, 4
        %v1279 = vshll.u32 %v1098, 16
        %v1281 = vrot.slane %v1279, 5
        %v1282 = vor.u32 %v1278, %v1281
        %v1283 = vrot.slane %v1282, 4
        %v1285 = vshll.u32 %v1099, 16
        %v1287 = vrot.slane %v1285, 5
        %v1288 = vsel %vm1130, %v1283, %v1287
        %v1289 = vshrl.u32 %v1099, 16
        %v1291 = vrot.slane %v1289, 4
        %v1292 = vor.u32 %v1291, %v1287
        %v1293 = vrot.slane %v1292, 4
        %v1295 = vshll.u32 %v1100, 16
        %v1297 = vrot.slane %v1295, 5
        %v1298 = vsel %vm1130, %v1293, %v1297
        %v1300 = vshrl.u32 %v1101, 16
        %v1302 = vrot.slane %v1300, 4
        %v1303 = vshll.u32 %v1101, 16
        %v1305 = vrot.slane %v1303, 5
        %v1306 = vor.u32 %v1302, %v1305
        %v1307 = vrot.slane %v1306, 4
        %v1309 = vshll.u32 %v1102, 16
        %v1311 = vrot.slane %v1309, 5
        %v1312 = vsel %vm1130, %v1307, %v1311
        %v1313 = vshrl.u32 %v1102, 16
        %v1315 = vrot.slane %v1313, 4
        %v1316 = vor.u32 %v1315, %v1311
        %v1317 = vrot.slane %v1316, 4
        %v1319 = vshll.u32 %v1103, 16
        %v1321 = vrot.slane %v1319, 5
        %v1322 = vsel %vm1130, %v1317, %v1321
        %v1324 = vshrl.u32 %v1104, 16
        %v1326 = vrot.slane %v1324, 4
        %v1327 = vshll.u32 %v1104, 16
        %v1329 = vrot.slane %v1327, 5
        %v1330 = vor.u32 %v1326, %v1329
        %v1331 = vrot.slane %v1330, 4
        %v1333 = vshll.u32 %v1105, 16
        %v1335 = vrot.slane %v1333, 5
        %v1336 = vsel %vm1130, %v1331, %v1335
        %v1337 = vshrl.u32 %v1105, 16
        %v1339 = vrot.slane %v1337, 4
        %v1340 = vor.u32 %v1339, %v1335
        %v1341 = vrot.slane %v1340, 4
        %v1343 = vshll.u32 %v1106, 16
        %v1345 = vrot.slane %v1343, 5
        %v1346 = vsel %vm1130, %v1341, %v1345
        %v1348 = vshrl.u32 %v1107, 16
        %v1350 = vrot.slane %v1348, 4
        %v1351 = vshll.u32 %v1107, 16
        %v1353 = vrot.slane %v1351, 5
        %v1354 = vor.u32 %v1350, %v1353
        %v1355 = vrot.slane %v1354, 4
        %v1357 = vshll.u32 %v1108, 16
        %v1359 = vrot.slane %v1357, 5
        %v1360 = vsel %vm1130, %v1355, %v1359
        %v1361 = vshrl.u32 %v1108, 16
        %v1363 = vrot.slane %v1361, 4
        %v1364 = vor.u32 %v1363, %v1359
        %v1365 = vrot.slane %v1364, 4
        %v1367 = vshll.u32 %v1109, 16
        %v1369 = vrot.slane %v1367, 5
        %v1370 = vsel %vm1130, %v1365, %v1369
        %v1372 = vshrl.u32 %v1110, 16
        %v1374 = vrot.slane %v1372, 4
        %v1375 = vshll.u32 %v1110, 16
        %v1377 = vrot.slane %v1375, 5
        %v1378 = vor.u32 %v1374, %v1377
        %v1379 = vrot.slane %v1378, 4
        %v1381 = vshll.u32 %v1111, 16
        %v1383 = vrot.slane %v1381, 5
        %v1384 = vsel %vm1130, %v1379, %v1383
        %v1385 = vshrl.u32 %v1111, 16
        %v1387 = vrot.slane %v1385, 4
        %v1388 = vor.u32 %v1387, %v1383
        %v1389 = vrot.slane %v1388, 4
        %v1391 = vshll.u32 %v1112, 16
        %v1393 = vrot.slane %v1391, 5
        %v1394 = vsel %vm1130, %v1389, %v1393
        %v1396 = vshrl.u32 %v1113, 16
        %v1398 = vrot.slane %v1396, 4
        %v1399 = vshll.u32 %v1113, 16
        %v1401 = vrot.slane %v1399, 5
        %v1402 = vor.u32 %v1398, %v1401
        %v1403 = vrot.slane %v1402, 4
        %v1405 = vshll.u32 %v1114, 16
        %v1407 = vrot.slane %v1405, 5
        %v1408 = vsel %vm1130, %v1403, %v1407
        %v1409 = vshrl.u32 %v1114, 16
        %v1411 = vrot.slane %v1409, 4
        %v1412 = vor.u32 %v1411, %v1407
        %v1413 = vrot.slane %v1412, 4
        %v1415 = vshll.u32 %v1115, 16
        %v1417 = vrot.slane %v1415, 5
        %v1418 = vsel %vm1130, %v1413, %v1417
        %v1420 = vshrl.u32 %v1116, 16
        %v1422 = vrot.slane %v1420, 4
        %v1423 = vshll.u32 %v1116, 16
        %v1425 = vrot.slane %v1423, 5
        %v1426 = vor.u32 %v1422, %v1425
        %v1427 = vrot.slane %v1426, 4
        %v1429 = vshll.u32 %v1117, 16
        %v1431 = vrot.slane %v1429, 5
        %v1432 = vsel %vm1130, %v1427, %v1431
        %v1433 = vshrl.u32 %v1117, 16
        %v1435 = vrot.slane %v1433, 4
        %v1436 = vor.u32 %v1435, %v1431
        %v1437 = vrot.slane %v1436, 4
        %v1439 = vshll.u32 %v1118, 16
        %v1441 = vrot.slane %v1439, 5
        %v1442 = vsel %vm1130, %v1437, %v1441
        %v1444 = vshrl.u32 %v1119, 16
        %v1446 = vrot.slane %v1444, 4
        %v1447 = vshll.u32 %v1119, 16
        %v1449 = vrot.slane %v1447, 5
        %v1450 = vor.u32 %v1446, %v1449
        %v1451 = vrot.slane %v1450, 4
        %v1453 = vshll.u32 %v1120, 16
        %v1455 = vrot.slane %v1453, 5
        %v1456 = vsel %vm1130, %v1451, %v1455
        %v1457 = vshrl.u32 %v1120, 16
        %v1459 = vrot.slane %v1457, 4
        %v1460 = vor.u32 %v1459, %v1455
        %v1461 = vrot.slane %v1460, 4
        %v1463 = vshll.u32 %v1121, 16
        %v1465 = vrot.slane %v1463, 5
        %v1466 = vsel %vm1130, %v1461, %v1465
        %v1468 = vshrl.u32 %v1122, 16
        %v1470 = vrot.slane %v1468, 4
        %v1471 = vshll.u32 %v1122, 16
        %v1473 = vrot.slane %v1471, 5
        %v1474 = vor.u32 %v1470, %v1473
        %v1475 = vrot.slane %v1474, 4
        %v1477 = vshll.u32 %v1123, 16
        %v1479 = vrot.slane %v1477, 5
        %v1480 = vsel %vm1130, %v1475, %v1479
        %v1481 = vshrl.u32 %v1123, 16
        %v1483 = vrot.slane %v1481, 4
        %v1484 = vor.u32 %v1483, %v1479
        %v1485 = vrot.slane %v1484, 4
        %v1487 = vshll.u32 %v1124, 16
        %v1489 = vrot.slane %v1487, 5
        %v1490 = vsel %vm1130, %v1485, %v1489
        %v1492 = vshrl.u32 %v1125, 16
        %v1494 = vrot.slane %v1492, 4
        %v1495 = vshll.u32 %v1125, 16
        %v1497 = vrot.slane %v1495, 5
        %v1498 = vor.u32 %v1494, %v1497
        %v1499 = vrot.slane %v1498, 4
        %v1501 = vshll.u32 %v1126, 16
        %v1503 = vrot.slane %v1501, 5
        %v1504 = vsel %vm1130, %v1499, %v1503
        %v1505 = vshrl.u32 %v1126, 16
        %v1507 = vrot.slane %v1505, 4
        %v1508 = vor.u32 %v1507, %v1503
        %v1509 = vrot.slane %v1508, 4
        %v1511 = vshll.u32 %v1127, 16
        %v1513 = vrot.slane %v1511, 5
        %v1514 = vsel %vm1130, %v1509, %v1513
        %1547 = vst [vmem:[#allocation3 + $0x4] sm:$0xf] %v1144
        %1548 = vst [vmem:[#allocation3 + $0x28] sm:$0xf] %v1154
        %1549 = vst [vmem:[#allocation3 + $0x4c] sm:$0xf] %v1168
        %1550 = vst [vmem:[#allocation3 + $0x70] sm:$0xf] %v1178
        %1551 = vst [vmem:[#allocation3 + $0x94] sm:$0xf] %v1192
        %1552 = vst [vmem:[#allocation3 + $0xb8] sm:$0xf] %v1202
        %1553 = vst [vmem:[#allocation3 + $0xdc] sm:$0xf] %v1216
        %1554 = vst [vmem:[#allocation3 + $0x100] sm:$0xf] %v1226
        %1555 = vst [vmem:[#allocation3 + $0x124] sm:$0xf] %v1240
        %1556 = vst [vmem:[#allocation3 + $0x148] sm:$0xf] %v1250
        %1557 = vst [vmem:[#allocation3 + $0x16c] sm:$0xf] %v1264
        %1558 = vst [vmem:[#allocation3 + $0x190] sm:$0xf] %v1274
        %1559 = vst [vmem:[#allocation3 + $0x1b4] sm:$0xf] %v1288
        %1560 = vst [vmem:[#allocation3 + $0x1d8] sm:$0xf] %v1298
        %1561 = vst [vmem:[#allocation3 + $0x1fc] sm:$0xf] %v1312
        %1562 = vst [vmem:[#allocation3 + $0x220] sm:$0xf] %v1322
        %1563 = vst [vmem:[#allocation3 + $0x244] sm:$0xf] %v1336
        %1564 = vst [vmem:[#allocation3 + $0x268] sm:$0xf] %v1346
        %1565 = vst [vmem:[#allocation3 + $0x28c] sm:$0xf] %v1360
        %1566 = vst [vmem:[#allocation3 + $0x2b0] sm:$0xf] %v1370
        %1567 = vst [vmem:[#allocation3 + $0x2d4] sm:$0xf] %v1384
        %1568 = vst [vmem:[#allocation3 + $0x2f8] sm:$0xf] %v1394
        %1569 = vst [vmem:[#allocation3 + $0x31c] sm:$0xf] %v1408
        %1570 = vst [vmem:[#allocation3 + $0x340] sm:$0xf] %v1418
        %1571 = vst [vmem:[#allocation3 + $0x364] sm:$0xf] %v1432
        %1572 = vst [vmem:[#allocation3 + $0x388] sm:$0xf] %v1442
        %1573 = vst [vmem:[#allocation3 + $0x3ac] sm:$0xf] %v1456
        %1574 = vst [vmem:[#allocation3 + $0x3d0] sm:$0xf] %v1466
        %1575 = vst [vmem:[#allocation3 + $0x3f4] sm:$0xf] %v1480
        %1576 = vst [vmem:[#allocation3 + $0x418] sm:$0xf] %v1490
        %1577 = vst [vmem:[#allocation3 + $0x43c] sm:$0xf] %v1504
        %1578 = vst [vmem:[#allocation3 + $0x460] sm:$0xf] %v1514
        %v1579 = vld [vmem:[#allocation2] sm:$0xe]
        %v1580 = vld [vmem:[#allocation2 + $0x4] sm:$0xf]
        %v1581 = vld [vmem:[#allocation2 + $0x8] sm:$0x1]
        %v1582 = vld [vmem:[#allocation2 + $0xc] sm:$0xe]
        %v1583 = vld [vmem:[#allocation2 + $0x10] sm:$0xf]
        %v1584 = vld [vmem:[#allocation2 + $0x14] sm:$0x1]
        %v1585 = vld [vmem:[#allocation2 + $0x18] sm:$0xe]
        %v1586 = vld [vmem:[#allocation2 + $0x1c] sm:$0xf]
        %v1587 = vld [vmem:[#allocation2 + $0x20] sm:$0x1]
        %v1588 = vld [vmem:[#allocation2 + $0x24] sm:$0xe]
        %v1589 = vld [vmem:[#allocation2 + $0x28] sm:$0xf]
        %v1590 = vld [vmem:[#allocation2 + $0x2c] sm:$0x1]
        %v1591 = vld [vmem:[#allocation2 + $0x30] sm:$0xe]
        %v1592 = vld [vmem:[#allocation2 + $0x34] sm:$0xf]
        %v1593 = vld [vmem:[#allocation2 + $0x38] sm:$0x1]
        %v1594 = vld [vmem:[#allocation2 + $0x3c] sm:$0xe]
        %v1595 = vld [vmem:[#allocation2 + $0x40] sm:$0xf]
        %v1596 = vld [vmem:[#allocation2 + $0x44] sm:$0x1]
        %v1597 = vld [vmem:[#allocation2 + $0x48] sm:$0xe]
        %v1598 = vld [vmem:[#allocation2 + $0x4c] sm:$0xf]
        %v1599 = vld [vmem:[#allocation2 + $0x50] sm:$0x1]
        %v1600 = vld [vmem:[#allocation2 + $0x54] sm:$0xe]
        %v1601 = vld [vmem:[#allocation2 + $0x58] sm:$0xf]
        %v1602 = vld [vmem:[#allocation2 + $0x5c] sm:$0x1]
        %v1603 = vld [vmem:[#allocation2 + $0x60] sm:$0xe]
        %v1604 = vld [vmem:[#allocation2 + $0x64] sm:$0xf]
        %v1605 = vld [vmem:[#allocation2 + $0x68] sm:$0x1]
        %v1606 = vld [vmem:[#allocation2 + $0x6c] sm:$0xe]
        %v1607 = vld [vmem:[#allocation2 + $0x70] sm:$0xf]
        %v1608 = vld [vmem:[#allocation2 + $0x74] sm:$0x1]
        %v1609 = vld [vmem:[#allocation2 + $0x78] sm:$0xe]
        %v1610 = vld [vmem:[#allocation2 + $0x7c] sm:$0xf]
        %v1611 = vld [vmem:[#allocation2 + $0x80] sm:$0x1]
        %v1612 = vld [vmem:[#allocation2 + $0x84] sm:$0xe]
        %v1613 = vld [vmem:[#allocation2 + $0x88] sm:$0xf]
        %v1614 = vld [vmem:[#allocation2 + $0x8c] sm:$0x1]
        %v1615 = vld [vmem:[#allocation2 + $0x90] sm:$0xe]
        %v1616 = vld [vmem:[#allocation2 + $0x94] sm:$0xf]
        %v1617 = vld [vmem:[#allocation2 + $0x98] sm:$0x1]
        %v1618 = vld [vmem:[#allocation2 + $0x9c] sm:$0xe]
        %v1619 = vld [vmem:[#allocation2 + $0xa0] sm:$0xf]
        %v1620 = vld [vmem:[#allocation2 + $0xa4] sm:$0x1]
        %v1621 = vld [vmem:[#allocation2 + $0xa8] sm:$0xe]
        %v1622 = vld [vmem:[#allocation2 + $0xac] sm:$0xf]
        %v1623 = vld [vmem:[#allocation2 + $0xb0] sm:$0x1]
        %v1624 = vld [vmem:[#allocation2 + $0xb4] sm:$0xe]
        %v1625 = vld [vmem:[#allocation2 + $0xb8] sm:$0xf]
        %v1626 = vld [vmem:[#allocation2 + $0xbc] sm:$0x1]
        %vm1675 = vcmask 1042432
        %vm1676 = vcmask 1046532
        %vm1677 = vmor %vm1675, %vm1676
        %v1678 = vrot.slane %v1579, 5
        %v1679 = vrot.slane %v1678, 4
        %v1680 = vrot.slane %v1580, 5
        %v1681 = vsel %vm1677, %v1679, %v1680
        %v1682 = vrot.slane %v1680, 4
        %v1683 = vrot.slane %v1581, 5
        %v1684 = vsel %vm1677, %v1682, %v1683
        %v1685 = vrot.slane %v1582, 5
        %v1686 = vrot.slane %v1685, 4
        %v1687 = vrot.slane %v1583, 5
        %v1688 = vsel %vm1677, %v1686, %v1687
        %v1689 = vrot.slane %v1687, 4
        %v1690 = vrot.slane %v1584, 5
        %v1691 = vsel %vm1677, %v1689, %v1690
        %v1692 = vrot.slane %v1585, 5
        %v1693 = vrot.slane %v1692, 4
        %v1694 = vrot.slane %v1586, 5
        %v1695 = vsel %vm1677, %v1693, %v1694
        %v1696 = vrot.slane %v1694, 4
        %v1697 = vrot.slane %v1587, 5
        %v1698 = vsel %vm1677, %v1696, %v1697
        %v1699 = vrot.slane %v1588, 5
        %v1700 = vrot.slane %v1699, 4
        %v1701 = vrot.slane %v1589, 5
        %v1702 = vsel %vm1677, %v1700, %v1701
        %v1703 = vrot.slane %v1701, 4
        %v1704 = vrot.slane %v1590, 5
        %v1705 = vsel %vm1677, %v1703, %v1704
        %v1706 = vrot.slane %v1591, 5
        %v1707 = vrot.slane %v1706, 4
        %v1708 = vrot.slane %v1592, 5
        %v1709 = vsel %vm1677, %v1707, %v1708
        %v1710 = vrot.slane %v1708, 4
        %v1711 = vrot.slane %v1593, 5
        %v1712 = vsel %vm1677, %v1710, %v1711
        %v1713 = vrot.slane %v1594, 5
        %v1714 = vrot.slane %v1713, 4
        %v1715 = vrot.slane %v1595, 5
        %v1716 = vsel %vm1677, %v1714, %v1715
        %v1717 = vrot.slane %v1715, 4
        %v1718 = vrot.slane %v1596, 5
        %v1719 = vsel %vm1677, %v1717, %v1718
        %v1720 = vrot.slane %v1597, 5
        %v1721 = vrot.slane %v1720, 4
        %v1722 = vrot.slane %v1598, 5
        %v1723 = vsel %vm1677, %v1721, %v1722
        %v1724 = vrot.slane %v1722, 4
        %v1725 = vrot.slane %v1599, 5
        %v1726 = vsel %vm1677, %v1724, %v1725
        %v1727 = vrot.slane %v1600, 5
        %v1728 = vrot.slane %v1727, 4
        %v1729 = vrot.slane %v1601, 5
        %v1730 = vsel %vm1677, %v1728, %v1729
        %v1731 = vrot.slane %v1729, 4
        %v1732 = vrot.slane %v1602, 5
        %v1733 = vsel %vm1677, %v1731, %v1732
        %v1734 = vrot.slane %v1603, 5
        %v1735 = vrot.slane %v1734, 4
        %v1736 = vrot.slane %v1604, 5
        %v1737 = vsel %vm1677, %v1735, %v1736
        %v1738 = vrot.slane %v1736, 4
        %v1739 = vrot.slane %v1605, 5
        %v1740 = vsel %vm1677, %v1738, %v1739
        %v1741 = vrot.slane %v1606, 5
        %v1742 = vrot.slane %v1741, 4
        %v1743 = vrot.slane %v1607, 5
        %v1744 = vsel %vm1677, %v1742, %v1743
        %v1745 = vrot.slane %v1743, 4
        %v1746 = vrot.slane %v1608, 5
        %v1747 = vsel %vm1677, %v1745, %v1746
        %v1748 = vrot.slane %v1609, 5
        %v1749 = vrot.slane %v1748, 4
        %v1750 = vrot.slane %v1610, 5
        %v1751 = vsel %vm1677, %v1749, %v1750
        %v1752 = vrot.slane %v1750, 4
        %v1753 = vrot.slane %v1611, 5
        %v1754 = vsel %vm1677, %v1752, %v1753
        %v1755 = vrot.slane %v1612, 5
        %v1756 = vrot.slane %v1755, 4
        %v1757 = vrot.slane %v1613, 5
        %v1758 = vsel %vm1677, %v1756, %v1757
        %v1759 = vrot.slane %v1757, 4
        %v1760 = vrot.slane %v1614, 5
        %v1761 = vsel %vm1677, %v1759, %v1760
        %v1762 = vrot.slane %v1615, 5
        %v1763 = vrot.slane %v1762, 4
        %v1764 = vrot.slane %v1616, 5
        %v1765 = vsel %vm1677, %v1763, %v1764
        %v1766 = vrot.slane %v1764, 4
        %v1767 = vrot.slane %v1617, 5
        %v1768 = vsel %vm1677, %v1766, %v1767
        %v1769 = vrot.slane %v1618, 5
        %v1770 = vrot.slane %v1769, 4
        %v1771 = vrot.slane %v1619, 5
        %v1772 = vsel %vm1677, %v1770, %v1771
        %v1773 = vrot.slane %v1771, 4
        %v1774 = vrot.slane %v1620, 5
        %v1775 = vsel %vm1677, %v1773, %v1774
        %v1776 = vrot.slane %v1621, 5
        %v1777 = vrot.slane %v1776, 4
        %v1778 = vrot.slane %v1622, 5
        %v1779 = vsel %vm1677, %v1777, %v1778
        %v1780 = vrot.slane %v1778, 4
        %v1781 = vrot.slane %v1623, 5
        %v1782 = vsel %vm1677, %v1780, %v1781
        %v1783 = vrot.slane %v1624, 5
        %v1784 = vrot.slane %v1783, 4
        %v1785 = vrot.slane %v1625, 5
        %v1786 = vsel %vm1677, %v1784, %v1785
        %v1787 = vrot.slane %v1785, 4
        %v1788 = vrot.slane %v1626, 5
        %v1789 = vsel %vm1677, %v1787, %v1788
        %1822 = vst [vmem:[#allocation3 + $0x8] sm:$0xf] %v1681
        %1823 = vst [vmem:[#allocation3 + $0x2c] sm:$0xf] %v1684
        %1824 = vst [vmem:[#allocation3 + $0x50] sm:$0xf] %v1688
        %1825 = vst [vmem:[#allocation3 + $0x74] sm:$0xf] %v1691
        %1826 = vst [vmem:[#allocation3 + $0x98] sm:$0xf] %v1695
        %1827 = vst [vmem:[#allocation3 + $0xbc] sm:$0xf] %v1698
        %1828 = vst [vmem:[#allocation3 + $0xe0] sm:$0xf] %v1702
        %1829 = vst [vmem:[#allocation3 + $0x104] sm:$0xf] %v1705
        %1830 = vst [vmem:[#allocation3 + $0x128] sm:$0xf] %v1709
        %1831 = vst [vmem:[#allocation3 + $0x14c] sm:$0xf] %v1712
        %1832 = vst [vmem:[#allocation3 + $0x170] sm:$0xf] %v1716
        %1833 = vst [vmem:[#allocation3 + $0x194] sm:$0xf] %v1719
        %1834 = vst [vmem:[#allocation3 + $0x1b8] sm:$0xf] %v1723
        %1835 = vst [vmem:[#allocation3 + $0x1dc] sm:$0xf] %v1726
        %1836 = vst [vmem:[#allocation3 + $0x200] sm:$0xf] %v1730
        %1837 = vst [vmem:[#allocation3 + $0x224] sm:$0xf] %v1733
        %1838 = vst [vmem:[#allocation3 + $0x248] sm:$0xf] %v1737
        %1839 = vst [vmem:[#allocation3 + $0x26c] sm:$0xf] %v1740
        %1840 = vst [vmem:[#allocation3 + $0x290] sm:$0xf] %v1744
        %1841 = vst [vmem:[#allocation3 + $0x2b4] sm:$0xf] %v1747
        %1842 = vst [vmem:[#allocation3 + $0x2d8] sm:$0xf] %v1751
        %1843 = vst [vmem:[#allocation3 + $0x2fc] sm:$0xf] %v1754
        %1844 = vst [vmem:[#allocation3 + $0x320] sm:$0xf] %v1758
        %1845 = vst [vmem:[#allocation3 + $0x344] sm:$0xf] %v1761
        %1846 = vst [vmem:[#allocation3 + $0x368] sm:$0xf] %v1765
        %1847 = vst [vmem:[#allocation3 + $0x38c] sm:$0xf] %v1768
        %1848 = vst [vmem:[#allocation3 + $0x3b0] sm:$0xf] %v1772
        %1849 = vst [vmem:[#allocation3 + $0x3d4] sm:$0xf] %v1775
        %1850 = vst [vmem:[#allocation3 + $0x3f8] sm:$0xf] %v1779
        %1851 = vst [vmem:[#allocation3 + $0x41c] sm:$0xf] %v1782
        %1852 = vst [vmem:[#allocation3 + $0x440] sm:$0xf] %v1786
        %1853 = vst [vmem:[#allocation3 + $0x464] sm:$0xf] %v1789
        %s1854 = scalar_lea.vmem [#allocation2], 12
        %v1855 = vld [vmem:[%s1854] sm:$0xf]
        %v1856 = vld [vmem:[%s1854 + $0x4] sm:$0xf]
        %v1857 = vld [vmem:[%s1854 + $0xc] sm:$0xf]
        %v1858 = vld [vmem:[%s1854 + $0x10] sm:$0xf]
        %v1859 = vld [vmem:[%s1854 + $0x18] sm:$0xf]
        %v1860 = vld [vmem:[%s1854 + $0x1c] sm:$0xf]
        %v1861 = vld [vmem:[%s1854 + $0x24] sm:$0xf]
        %v1862 = vld [vmem:[%s1854 + $0x28] sm:$0xf]
        %v1863 = vld [vmem:[%s1854 + $0x30] sm:$0xf]
        %v1864 = vld [vmem:[%s1854 + $0x34] sm:$0xf]
        %v1865 = vld [vmem:[%s1854 + $0x3c] sm:$0xf]
        %v1866 = vld [vmem:[%s1854 + $0x40] sm:$0xf]
        %v1867 = vld [vmem:[%s1854 + $0x48] sm:$0xf]
        %v1868 = vld [vmem:[%s1854 + $0x4c] sm:$0xf]
        %v1869 = vld [vmem:[%s1854 + $0x54] sm:$0xf]
        %v1870 = vld [vmem:[%s1854 + $0x58] sm:$0xf]
        %v1871 = vld [vmem:[%s1854 + $0x60] sm:$0xf]
        %v1872 = vld [vmem:[%s1854 + $0x64] sm:$0xf]
        %v1873 = vld [vmem:[%s1854 + $0x6c] sm:$0xf]
        %v1874 = vld [vmem:[%s1854 + $0x70] sm:$0xf]
        %v1875 = vld [vmem:[%s1854 + $0x78] sm:$0xf]
        %v1876 = vld [vmem:[%s1854 + $0x7c] sm:$0xf]
        %v1877 = vld [vmem:[%s1854 + $0x84] sm:$0xf]
        %v1878 = vld [vmem:[%s1854 + $0x88] sm:$0xf]
        %v1879 = vld [vmem:[%s1854 + $0x90] sm:$0xf]
        %v1880 = vld [vmem:[%s1854 + $0x94] sm:$0xf]
        %v1881 = vld [vmem:[%s1854 + $0x9c] sm:$0xf]
        %v1882 = vld [vmem:[%s1854 + $0xa0] sm:$0xf]
        %v1883 = vld [vmem:[%s1854 + $0xa8] sm:$0xf]
        %v1884 = vld [vmem:[%s1854 + $0xac] sm:$0xf]
        %v1885 = vld [vmem:[%s1854 + $0xb4] sm:$0xf]
        %v1886 = vld [vmem:[%s1854 + $0xb8] sm:$0xf]
        %1887 = vst [vmem:[#allocation3 + $0xc] sm:$0xf] %v1855
        %1888 = vst [vmem:[#allocation3 + $0x30] sm:$0xf] %v1856
        %1889 = vst [vmem:[#allocation3 + $0x54] sm:$0xf] %v1857
        %1890 = vst [vmem:[#allocation3 + $0x78] sm:$0xf] %v1858
        %1891 = vst [vmem:[#allocation3 + $0x9c] sm:$0xf] %v1859
        %1892 = vst [vmem:[#allocation3 + $0xc0] sm:$0xf] %v1860
        %1893 = vst [vmem:[#allocation3 + $0xe4] sm:$0xf] %v1861
        %1894 = vst [vmem:[#allocation3 + $0x108] sm:$0xf] %v1862
        %1895 = vst [vmem:[#allocation3 + $0x12c] sm:$0xf] %v1863
        %1896 = vst [vmem:[#allocation3 + $0x150] sm:$0xf] %v1864
        %1897 = vst [vmem:[#allocation3 + $0x174] sm:$0xf] %v1865
        %1898 = vst [vmem:[#allocation3 + $0x198] sm:$0xf] %v1866
        %1899 = vst [vmem:[#allocation3 + $0x1bc] sm:$0xf] %v1867
        %1900 = vst [vmem:[#allocation3 + $0x1e0] sm:$0xf] %v1868
        %1901 = vst [vmem:[#allocation3 + $0x204] sm:$0xf] %v1869
        %1902 = vst [vmem:[#allocation3 + $0x228] sm:$0xf] %v1870
        %1903 = vst [vmem:[#allocation3 + $0x24c] sm:$0xf] %v1871
        %1904 = vst [vmem:[#allocation3 + $0x270] sm:$0xf] %v1872
        %1905 = vst [vmem:[#allocation3 + $0x294] sm:$0xf] %v1873
        %1906 = vst [vmem:[#allocation3 + $0x2b8] sm:$0xf] %v1874
        %1907 = vst [vmem:[#allocation3 + $0x2dc] sm:$0xf] %v1875
        %1908 = vst [vmem:[#allocation3 + $0x300] sm:$0xf] %v1876
        %1909 = vst [vmem:[#allocation3 + $0x324] sm:$0xf] %v1877
        %1910 = vst [vmem:[#allocation3 + $0x348] sm:$0xf] %v1878
        %1911 = vst [vmem:[#allocation3 + $0x36c] sm:$0xf] %v1879
        %1912 = vst [vmem:[#allocation3 + $0x390] sm:$0xf] %v1880
        %1913 = vst [vmem:[#allocation3 + $0x3b4] sm:$0xf] %v1881
        %1914 = vst [vmem:[#allocation3 + $0x3d8] sm:$0xf] %v1882
        %1915 = vst [vmem:[#allocation3 + $0x3fc] sm:$0xf] %v1883
        %1916 = vst [vmem:[#allocation3 + $0x420] sm:$0xf] %v1884
        %1917 = vst [vmem:[#allocation3 + $0x444] sm:$0xf] %v1885
        %1918 = vst [vmem:[#allocation3 + $0x468] sm:$0xf] %v1886
        %v1919 = vld [vmem:[%s1854] sm:$0xf]
        %v1920 = vld [vmem:[%s1854 + $0x4] sm:$0xf]
        %v1921 = vld [vmem:[%s1854 + $0x8] sm:$0x1]
        %v1922 = vld [vmem:[%s1854 + $0xc] sm:$0xf]
        %v1923 = vld [vmem:[%s1854 + $0x10] sm:$0xf]
        %v1924 = vld [vmem:[%s1854 + $0x14] sm:$0x1]
        %v1925 = vld [vmem:[%s1854 + $0x18] sm:$0xf]
        %v1926 = vld [vmem:[%s1854 + $0x1c] sm:$0xf]
        %v1927 = vld [vmem:[%s1854 + $0x20] sm:$0x1]
        %v1928 = vld [vmem:[%s1854 + $0x24] sm:$0xf]
        %v1929 = vld [vmem:[%s1854 + $0x28] sm:$0xf]
        %v1930 = vld [vmem:[%s1854 + $0x2c] sm:$0x1]
        %v1931 = vld [vmem:[%s1854 + $0x30] sm:$0xf]
        %v1932 = vld [vmem:[%s1854 + $0x34] sm:$0xf]
        %v1933 = vld [vmem:[%s1854 + $0x38] sm:$0x1]
        %v1934 = vld [vmem:[%s1854 + $0x3c] sm:$0xf]
        %v1935 = vld [vmem:[%s1854 + $0x40] sm:$0xf]
        %v1936 = vld [vmem:[%s1854 + $0x44] sm:$0x1]
        %v1937 = vld [vmem:[%s1854 + $0x48] sm:$0xf]
        %v1938 = vld [vmem:[%s1854 + $0x4c] sm:$0xf]
        %v1939 = vld [vmem:[%s1854 + $0x50] sm:$0x1]
        %v1940 = vld [vmem:[%s1854 + $0x54] sm:$0xf]
        %v1941 = vld [vmem:[%s1854 + $0x58] sm:$0xf]
        %v1942 = vld [vmem:[%s1854 + $0x5c] sm:$0x1]
        %v1943 = vld [vmem:[%s1854 + $0x60] sm:$0xf]
        %v1944 = vld [vmem:[%s1854 + $0x64] sm:$0xf]
        %v1945 = vld [vmem:[%s1854 + $0x68] sm:$0x1]
        %v1946 = vld [vmem:[%s1854 + $0x6c] sm:$0xf]
        %v1947 = vld [vmem:[%s1854 + $0x70] sm:$0xf]
        %v1948 = vld [vmem:[%s1854 + $0x74] sm:$0x1]
        %v1949 = vld [vmem:[%s1854 + $0x78] sm:$0xf]
        %v1950 = vld [vmem:[%s1854 + $0x7c] sm:$0xf]
        %v1951 = vld [vmem:[%s1854 + $0x80] sm:$0x1]
        %v1952 = vld [vmem:[%s1854 + $0x84] sm:$0xf]
        %v1953 = vld [vmem:[%s1854 + $0x88] sm:$0xf]
        %v1954 = vld [vmem:[%s1854 + $0x8c] sm:$0x1]
        %v1955 = vld [vmem:[%s1854 + $0x90] sm:$0xf]
        %v1956 = vld [vmem:[%s1854 + $0x94] sm:$0xf]
        %v1957 = vld [vmem:[%s1854 + $0x98] sm:$0x1]
        %v1958 = vld [vmem:[%s1854 + $0x9c] sm:$0xf]
        %v1959 = vld [vmem:[%s1854 + $0xa0] sm:$0xf]
        %v1960 = vld [vmem:[%s1854 + $0xa4] sm:$0x1]
        %v1961 = vld [vmem:[%s1854 + $0xa8] sm:$0xf]
        %v1962 = vld [vmem:[%s1854 + $0xac] sm:$0xf]
        %v1963 = vld [vmem:[%s1854 + $0xb0] sm:$0x1]
        %v1964 = vld [vmem:[%s1854 + $0xb4] sm:$0xf]
        %v1965 = vld [vmem:[%s1854 + $0xb8] sm:$0xf]
        %v1966 = vld [vmem:[%s1854 + $0xbc] sm:$0x1]
        %v1968 = vshrl.u32 %v1919, 16
        %v1970 = vrot.slane %v1968, 4
        %v1971 = vshll.u32 %v1919, 16
        %v1973 = vrot.slane %v1971, 5
        %v1974 = vor.u32 %v1970, %v1973
        %v1975 = vrot.slane %v1974, 4
        %v1977 = vshll.u32 %v1920, 16
        %v1979 = vrot.slane %v1977, 5
        %v1980 = vsel %vm1130, %v1975, %v1979
        %v1981 = vshrl.u32 %v1920, 16
        %v1983 = vrot.slane %v1981, 4
        %v1984 = vor.u32 %v1983, %v1979
        %v1985 = vrot.slane %v1984, 4
        %v1987 = vshll.u32 %v1921, 16
        %v1989 = vrot.slane %v1987, 5
        %v1990 = vsel %vm1130, %v1985, %v1989
        %v1992 = vshrl.u32 %v1922, 16
        %v1994 = vrot.slane %v1992, 4
        %v1995 = vshll.u32 %v1922, 16
        %v1997 = vrot.slane %v1995, 5
        %v1998 = vor.u32 %v1994, %v1997
        %v1999 = vrot.slane %v1998, 4
        %v2001 = vshll.u32 %v1923, 16
        %v2003 = vrot.slane %v2001, 5
        %v2004 = vsel %vm1130, %v1999, %v2003
        %v2005 = vshrl.u32 %v1923, 16
        %v2007 = vrot.slane %v2005, 4
        %v2008 = vor.u32 %v2007, %v2003
        %v2009 = vrot.slane %v2008, 4
        %v2011 = vshll.u32 %v1924, 16
        %v2013 = vrot.slane %v2011, 5
        %v2014 = vsel %vm1130, %v2009, %v2013
        %v2016 = vshrl.u32 %v1925, 16
        %v2018 = vrot.slane %v2016, 4
        %v2019 = vshll.u32 %v1925, 16
        %v2021 = vrot.slane %v2019, 5
        %v2022 = vor.u32 %v2018, %v2021
        %v2023 = vrot.slane %v2022, 4
        %v2025 = vshll.u32 %v1926, 16
        %v2027 = vrot.slane %v2025, 5
        %v2028 = vsel %vm1130, %v2023, %v2027
        %v2029 = vshrl.u32 %v1926, 16
        %v2031 = vrot.slane %v2029, 4
        %v2032 = vor.u32 %v2031, %v2027
        %v2033 = vrot.slane %v2032, 4
        %v2035 = vshll.u32 %v1927, 16
        %v2037 = vrot.slane %v2035, 5
        %v2038 = vsel %vm1130, %v2033, %v2037
        %v2040 = vshrl.u32 %v1928, 16
        %v2042 = vrot.slane %v2040, 4
        %v2043 = vshll.u32 %v1928, 16
        %v2045 = vrot.slane %v2043, 5
        %v2046 = vor.u32 %v2042, %v2045
        %v2047 = vrot.slane %v2046, 4
        %v2049 = vshll.u32 %v1929, 16
        %v2051 = vrot.slane %v2049, 5
        %v2052 = vsel %vm1130, %v2047, %v2051
        %v2053 = vshrl.u32 %v1929, 16
        %v2055 = vrot.slane %v2053, 4
        %v2056 = vor.u32 %v2055, %v2051
        %v2057 = vrot.slane %v2056, 4
        %v2059 = vshll.u32 %v1930, 16
        %v2061 = vrot.slane %v2059, 5
        %v2062 = vsel %vm1130, %v2057, %v2061
        %v2064 = vshrl.u32 %v1931, 16
        %v2066 = vrot.slane %v2064, 4
        %v2067 = vshll.u32 %v1931, 16
        %v2069 = vrot.slane %v2067, 5
        %v2070 = vor.u32 %v2066, %v2069
        %v2071 = vrot.slane %v2070, 4
        %v2073 = vshll.u32 %v1932, 16
        %v2075 = vrot.slane %v2073, 5
        %v2076 = vsel %vm1130, %v2071, %v2075
        %v2077 = vshrl.u32 %v1932, 16
        %v2079 = vrot.slane %v2077, 4
        %v2080 = vor.u32 %v2079, %v2075
        %v2081 = vrot.slane %v2080, 4
        %v2083 = vshll.u32 %v1933, 16
        %v2085 = vrot.slane %v2083, 5
        %v2086 = vsel %vm1130, %v2081, %v2085
        %v2088 = vshrl.u32 %v1934, 16
        %v2090 = vrot.slane %v2088, 4
        %v2091 = vshll.u32 %v1934, 16
        %v2093 = vrot.slane %v2091, 5
        %v2094 = vor.u32 %v2090, %v2093
        %v2095 = vrot.slane %v2094, 4
        %v2097 = vshll.u32 %v1935, 16
        %v2099 = vrot.slane %v2097, 5
        %v2100 = vsel %vm1130, %v2095, %v2099
        %v2101 = vshrl.u32 %v1935, 16
        %v2103 = vrot.slane %v2101, 4
        %v2104 = vor.u32 %v2103, %v2099
        %v2105 = vrot.slane %v2104, 4
        %v2107 = vshll.u32 %v1936, 16
        %v2109 = vrot.slane %v2107, 5
        %v2110 = vsel %vm1130, %v2105, %v2109
        %v2112 = vshrl.u32 %v1937, 16
        %v2114 = vrot.slane %v2112, 4
        %v2115 = vshll.u32 %v1937, 16
        %v2117 = vrot.slane %v2115, 5
        %v2118 = vor.u32 %v2114, %v2117
        %v2119 = vrot.slane %v2118, 4
        %v2121 = vshll.u32 %v1938, 16
        %v2123 = vrot.slane %v2121, 5
        %v2124 = vsel %vm1130, %v2119, %v2123
        %v2125 = vshrl.u32 %v1938, 16
        %v2127 = vrot.slane %v2125, 4
        %v2128 = vor.u32 %v2127, %v2123
        %v2129 = vrot.slane %v2128, 4
        %v2131 = vshll.u32 %v1939, 16
        %v2133 = vrot.slane %v2131, 5
        %v2134 = vsel %vm1130, %v2129, %v2133
        %v2136 = vshrl.u32 %v1940, 16
        %v2138 = vrot.slane %v2136, 4
        %v2139 = vshll.u32 %v1940, 16
        %v2141 = vrot.slane %v2139, 5
        %v2142 = vor.u32 %v2138, %v2141
        %v2143 = vrot.slane %v2142, 4
        %v2145 = vshll.u32 %v1941, 16
        %v2147 = vrot.slane %v2145, 5
        %v2148 = vsel %vm1130, %v2143, %v2147
        %v2149 = vshrl.u32 %v1941, 16
        %v2151 = vrot.slane %v2149, 4
        %v2152 = vor.u32 %v2151, %v2147
        %v2153 = vrot.slane %v2152, 4
        %v2155 = vshll.u32 %v1942, 16
        %v2157 = vrot.slane %v2155, 5
        %v2158 = vsel %vm1130, %v2153, %v2157
        %v2160 = vshrl.u32 %v1943, 16
        %v2162 = vrot.slane %v2160, 4
        %v2163 = vshll.u32 %v1943, 16
        %v2165 = vrot.slane %v2163, 5
        %v2166 = vor.u32 %v2162, %v2165
        %v2167 = vrot.slane %v2166, 4
        %v2169 = vshll.u32 %v1944, 16
        %v2171 = vrot.slane %v2169, 5
        %v2172 = vsel %vm1130, %v2167, %v2171
        %v2173 = vshrl.u32 %v1944, 16
        %v2175 = vrot.slane %v2173, 4
        %v2176 = vor.u32 %v2175, %v2171
        %v2177 = vrot.slane %v2176, 4
        %v2179 = vshll.u32 %v1945, 16
        %v2181 = vrot.slane %v2179, 5
        %v2182 = vsel %vm1130, %v2177, %v2181
        %v2184 = vshrl.u32 %v1946, 16
        %v2186 = vrot.slane %v2184, 4
        %v2187 = vshll.u32 %v1946, 16
        %v2189 = vrot.slane %v2187, 5
        %v2190 = vor.u32 %v2186, %v2189
        %v2191 = vrot.slane %v2190, 4
        %v2193 = vshll.u32 %v1947, 16
        %v2195 = vrot.slane %v2193, 5
        %v2196 = vsel %vm1130, %v2191, %v2195
        %v2197 = vshrl.u32 %v1947, 16
        %v2199 = vrot.slane %v2197, 4
        %v2200 = vor.u32 %v2199, %v2195
        %v2201 = vrot.slane %v2200, 4
        %v2203 = vshll.u32 %v1948, 16
        %v2205 = vrot.slane %v2203, 5
        %v2206 = vsel %vm1130, %v2201, %v2205
        %v2208 = vshrl.u32 %v1949, 16
        %v2210 = vrot.slane %v2208, 4
        %v2211 = vshll.u32 %v1949, 16
        %v2213 = vrot.slane %v2211, 5
        %v2214 = vor.u32 %v2210, %v2213
        %v2215 = vrot.slane %v2214, 4
        %v2217 = vshll.u32 %v1950, 16
        %v2219 = vrot.slane %v2217, 5
        %v2220 = vsel %vm1130, %v2215, %v2219
        %v2221 = vshrl.u32 %v1950, 16
        %v2223 = vrot.slane %v2221, 4
        %v2224 = vor.u32 %v2223, %v2219
        %v2225 = vrot.slane %v2224, 4
        %v2227 = vshll.u32 %v1951, 16
        %v2229 = vrot.slane %v2227, 5
        %v2230 = vsel %vm1130, %v2225, %v2229
        %v2232 = vshrl.u32 %v1952, 16
        %v2234 = vrot.slane %v2232, 4
        %v2235 = vshll.u32 %v1952, 16
        %v2237 = vrot.slane %v2235, 5
        %v2238 = vor.u32 %v2234, %v2237
        %v2239 = vrot.slane %v2238, 4
        %v2241 = vshll.u32 %v1953, 16
        %v2243 = vrot.slane %v2241, 5
        %v2244 = vsel %vm1130, %v2239, %v2243
        %v2245 = vshrl.u32 %v1953, 16
        %v2247 = vrot.slane %v2245, 4
        %v2248 = vor.u32 %v2247, %v2243
        %v2249 = vrot.slane %v2248, 4
        %v2251 = vshll.u32 %v1954, 16
        %v2253 = vrot.slane %v2251, 5
        %v2254 = vsel %vm1130, %v2249, %v2253
        %v2256 = vshrl.u32 %v1955, 16
        %v2258 = vrot.slane %v2256, 4
        %v2259 = vshll.u32 %v1955, 16
        %v2261 = vrot.slane %v2259, 5
        %v2262 = vor.u32 %v2258, %v2261
        %v2263 = vrot.slane %v2262, 4
        %v2265 = vshll.u32 %v1956, 16
        %v2267 = vrot.slane %v2265, 5
        %v2268 = vsel %vm1130, %v2263, %v2267
        %v2269 = vshrl.u32 %v1956, 16
        %v2271 = vrot.slane %v2269, 4
        %v2272 = vor.u32 %v2271, %v2267
        %v2273 = vrot.slane %v2272, 4
        %v2275 = vshll.u32 %v1957, 16
        %v2277 = vrot.slane %v2275, 5
        %v2278 = vsel %vm1130, %v2273, %v2277
        %v2280 = vshrl.u32 %v1958, 16
        %v2282 = vrot.slane %v2280, 4
        %v2283 = vshll.u32 %v1958, 16
        %v2285 = vrot.slane %v2283, 5
        %v2286 = vor.u32 %v2282, %v2285
        %v2287 = vrot.slane %v2286, 4
        %v2289 = vshll.u32 %v1959, 16
        %v2291 = vrot.slane %v2289, 5
        %v2292 = vsel %vm1130, %v2287, %v2291
        %v2293 = vshrl.u32 %v1959, 16
        %v2295 = vrot.slane %v2293, 4
        %v2296 = vor.u32 %v2295, %v2291
        %v2297 = vrot.slane %v2296, 4
        %v2299 = vshll.u32 %v1960, 16
        %v2301 = vrot.slane %v2299, 5
        %v2302 = vsel %vm1130, %v2297, %v2301
        %v2304 = vshrl.u32 %v1961, 16
        %v2306 = vrot.slane %v2304, 4
        %v2307 = vshll.u32 %v1961, 16
        %v2309 = vrot.slane %v2307, 5
        %v2310 = vor.u32 %v2306, %v2309
        %v2311 = vrot.slane %v2310, 4
        %v2313 = vshll.u32 %v1962, 16
        %v2315 = vrot.slane %v2313, 5
        %v2316 = vsel %vm1130, %v2311, %v2315
        %v2317 = vshrl.u32 %v1962, 16
        %v2319 = vrot.slane %v2317, 4
        %v2320 = vor.u32 %v2319, %v2315
        %v2321 = vrot.slane %v2320, 4
        %v2323 = vshll.u32 %v1963, 16
        %v2325 = vrot.slane %v2323, 5
        %v2326 = vsel %vm1130, %v2321, %v2325
        %v2328 = vshrl.u32 %v1964, 16
        %v2330 = vrot.slane %v2328, 4
        %v2331 = vshll.u32 %v1964, 16
        %v2333 = vrot.slane %v2331, 5
        %v2334 = vor.u32 %v2330, %v2333
        %v2335 = vrot.slane %v2334, 4
        %v2337 = vshll.u32 %v1965, 16
        %v2339 = vrot.slane %v2337, 5
        %v2340 = vsel %vm1130, %v2335, %v2339
        %v2341 = vshrl.u32 %v1965, 16
        %v2343 = vrot.slane %v2341, 4
        %v2344 = vor.u32 %v2343, %v2339
        %v2345 = vrot.slane %v2344, 4
        %v2347 = vshll.u32 %v1966, 16
        %v2349 = vrot.slane %v2347, 5
        %v2350 = vsel %vm1130, %v2345, %v2349
        %2383 = vst [vmem:[#allocation3 + $0x10] sm:$0xf] %v1980
        %2384 = vst [vmem:[#allocation3 + $0x34] sm:$0xf] %v1990
        %2385 = vst [vmem:[#allocation3 + $0x58] sm:$0xf] %v2004
        %2386 = vst [vmem:[#allocation3 + $0x7c] sm:$0xf] %v2014
        %2387 = vst [vmem:[#allocation3 + $0xa0] sm:$0xf] %v2028
        %2388 = vst [vmem:[#allocation3 + $0xc4] sm:$0xf] %v2038
        %2389 = vst [vmem:[#allocation3 + $0xe8] sm:$0xf] %v2052
        %2390 = vst [vmem:[#allocation3 + $0x10c] sm:$0xf] %v2062
        %2391 = vst [vmem:[#allocation3 + $0x130] sm:$0xf] %v2076
        %2392 = vst [vmem:[#allocation3 + $0x154] sm:$0xf] %v2086
        %2393 = vst [vmem:[#allocation3 + $0x178] sm:$0xf] %v2100
        %2394 = vst [vmem:[#allocation3 + $0x19c] sm:$0xf] %v2110
        %2395 = vst [vmem:[#allocation3 + $0x1c0] sm:$0xf] %v2124
        %2396 = vst [vmem:[#allocation3 + $0x1e4] sm:$0xf] %v2134
        %2397 = vst [vmem:[#allocation3 + $0x208] sm:$0xf] %v2148
        %2398 = vst [vmem:[#allocation3 + $0x22c] sm:$0xf] %v2158
        %2399 = vst [vmem:[#allocation3 + $0x250] sm:$0xf] %v2172
        %2400 = vst [vmem:[#allocation3 + $0x274] sm:$0xf] %v2182
        %2401 = vst [vmem:[#allocation3 + $0x298] sm:$0xf] %v2196
        %2402 = vst [vmem:[#allocation3 + $0x2bc] sm:$0xf] %v2206
        %2403 = vst [vmem:[#allocation3 + $0x2e0] sm:$0xf] %v2220
        %2404 = vst [vmem:[#allocation3 + $0x304] sm:$0xf] %v2230
        %2405 = vst [vmem:[#allocation3 + $0x328] sm:$0xf] %v2244
        %2406 = vst [vmem:[#allocation3 + $0x34c] sm:$0xf] %v2254
        %2407 = vst [vmem:[#allocation3 + $0x370] sm:$0xf] %v2268
        %2408 = vst [vmem:[#allocation3 + $0x394] sm:$0xf] %v2278
        %2409 = vst [vmem:[#allocation3 + $0x3b8] sm:$0xf] %v2292
        %2410 = vst [vmem:[#allocation3 + $0x3dc] sm:$0xf] %v2302
        %2411 = vst [vmem:[#allocation3 + $0x400] sm:$0xf] %v2316
        %2412 = vst [vmem:[#allocation3 + $0x424] sm:$0xf] %v2326
        %2413 = vst [vmem:[#allocation3 + $0x448] sm:$0xf] %v2340
        %2414 = vst [vmem:[#allocation3 + $0x46c] sm:$0xf] %v2350
        %v2415 = vld [vmem:[%s1854] sm:$0xe]
        %v2416 = vld [vmem:[%s1854 + $0x4] sm:$0xf]
        %v2417 = vld [vmem:[%s1854 + $0x8] sm:$0x1]
        %v2418 = vld [vmem:[%s1854 + $0xc] sm:$0xe]
        %v2419 = vld [vmem:[%s1854 + $0x10] sm:$0xf]
        %v2420 = vld [vmem:[%s1854 + $0x14] sm:$0x1]
        %v2421 = vld [vmem:[%s1854 + $0x18] sm:$0xe]
        %v2422 = vld [vmem:[%s1854 + $0x1c] sm:$0xf]
        %v2423 = vld [vmem:[%s1854 + $0x20] sm:$0x1]
        %v2424 = vld [vmem:[%s1854 + $0x24] sm:$0xe]
        %v2425 = vld [vmem:[%s1854 + $0x28] sm:$0xf]
        %v2426 = vld [vmem:[%s1854 + $0x2c] sm:$0x1]
        %v2427 = vld [vmem:[%s1854 + $0x30] sm:$0xe]
        %v2428 = vld [vmem:[%s1854 + $0x34] sm:$0xf]
        %v2429 = vld [vmem:[%s1854 + $0x38] sm:$0x1]
        %v2430 = vld [vmem:[%s1854 + $0x3c] sm:$0xe]
        %v2431 = vld [vmem:[%s1854 + $0x40] sm:$0xf]
        %v2432 = vld [vmem:[%s1854 + $0x44] sm:$0x1]
        %v2433 = vld [vmem:[%s1854 + $0x48] sm:$0xe]
        %v2434 = vld [vmem:[%s1854 + $0x4c] sm:$0xf]
        %v2435 = vld [vmem:[%s1854 + $0x50] sm:$0x1]
        %v2436 = vld [vmem:[%s1854 + $0x54] sm:$0xe]
        %v2437 = vld [vmem:[%s1854 + $0x58] sm:$0xf]
        %v2438 = vld [vmem:[%s1854 + $0x5c] sm:$0x1]
        %v2439 = vld [vmem:[%s1854 + $0x60] sm:$0xe]
        %v2440 = vld [vmem:[%s1854 + $0x64] sm:$0xf]
        %v2441 = vld [vmem:[%s1854 + $0x68] sm:$0x1]
        %v2442 = vld [vmem:[%s1854 + $0x6c] sm:$0xe]
        %v2443 = vld [vmem:[%s1854 + $0x70] sm:$0xf]
        %v2444 = vld [vmem:[%s1854 + $0x74] sm:$0x1]
        %v2445 = vld [vmem:[%s1854 + $0x78] sm:$0xe]
        %v2446 = vld [vmem:[%s1854 + $0x7c] sm:$0xf]
        %v2447 = vld [vmem:[%s1854 + $0x80] sm:$0x1]
        %v2448 = vld [vmem:[%s1854 + $0x84] sm:$0xe]
        %v2449 = vld [vmem:[%s1854 + $0x88] sm:$0xf]
        %v2450 = vld [vmem:[%s1854 + $0x8c] sm:$0x1]
        %v2451 = vld [vmem:[%s1854 + $0x90] sm:$0xe]
        %v2452 = vld [vmem:[%s1854 + $0x94] sm:$0xf]
        %v2453 = vld [vmem:[%s1854 + $0x98] sm:$0x1]
        %v2454 = vld [vmem:[%s1854 + $0x9c] sm:$0xe]
        %v2455 = vld [vmem:[%s1854 + $0xa0] sm:$0xf]
        %v2456 = vld [vmem:[%s1854 + $0xa4] sm:$0x1]
        %v2457 = vld [vmem:[%s1854 + $0xa8] sm:$0xe]
        %v2458 = vld [vmem:[%s1854 + $0xac] sm:$0xf]
        %v2459 = vld [vmem:[%s1854 + $0xb0] sm:$0x1]
        %v2460 = vld [vmem:[%s1854 + $0xb4] sm:$0xe]
        %v2461 = vld [vmem:[%s1854 + $0xb8] sm:$0xf]
        %v2462 = vld [vmem:[%s1854 + $0xbc] sm:$0x1]
        %v2511 = vrot.slane %v2415, 5
        %v2512 = vrot.slane %v2511, 4
        %v2513 = vrot.slane %v2416, 5
        %v2514 = vsel %vm1677, %v2512, %v2513
        %v2515 = vrot.slane %v2513, 4
        %v2516 = vrot.slane %v2417, 5
        %v2517 = vsel %vm1677, %v2515, %v2516
        %v2518 = vrot.slane %v2418, 5
        %v2519 = vrot.slane %v2518, 4
        %v2520 = vrot.slane %v2419, 5
        %v2521 = vsel %vm1677, %v2519, %v2520
        %v2522 = vrot.slane %v2520, 4
        %v2523 = vrot.slane %v2420, 5
        %v2524 = vsel %vm1677, %v2522, %v2523
        %v2525 = vrot.slane %v2421, 5
        %v2526 = vrot.slane %v2525, 4
        %v2527 = vrot.slane %v2422, 5
        %v2528 = vsel %vm1677, %v2526, %v2527
        %v2529 = vrot.slane %v2527, 4
        %v2530 = vrot.slane %v2423, 5
        %v2531 = vsel %vm1677, %v2529, %v2530
        %v2532 = vrot.slane %v2424, 5
        %v2533 = vrot.slane %v2532, 4
        %v2534 = vrot.slane %v2425, 5
        %v2535 = vsel %vm1677, %v2533, %v2534
        %v2536 = vrot.slane %v2534, 4
        %v2537 = vrot.slane %v2426, 5
        %v2538 = vsel %vm1677, %v2536, %v2537
        %v2539 = vrot.slane %v2427, 5
        %v2540 = vrot.slane %v2539, 4
        %v2541 = vrot.slane %v2428, 5
        %v2542 = vsel %vm1677, %v2540, %v2541
        %v2543 = vrot.slane %v2541, 4
        %v2544 = vrot.slane %v2429, 5
        %v2545 = vsel %vm1677, %v2543, %v2544
        %v2546 = vrot.slane %v2430, 5
        %v2547 = vrot.slane %v2546, 4
        %v2548 = vrot.slane %v2431, 5
        %v2549 = vsel %vm1677, %v2547, %v2548
        %v2550 = vrot.slane %v2548, 4
        %v2551 = vrot.slane %v2432, 5
        %v2552 = vsel %vm1677, %v2550, %v2551
        %v2553 = vrot.slane %v2433, 5
        %v2554 = vrot.slane %v2553, 4
        %v2555 = vrot.slane %v2434, 5
        %v2556 = vsel %vm1677, %v2554, %v2555
        %v2557 = vrot.slane %v2555, 4
        %v2558 = vrot.slane %v2435, 5
        %v2559 = vsel %vm1677, %v2557, %v2558
        %v2560 = vrot.slane %v2436, 5
        %v2561 = vrot.slane %v2560, 4
        %v2562 = vrot.slane %v2437, 5
        %v2563 = vsel %vm1677, %v2561, %v2562
        %v2564 = vrot.slane %v2562, 4
        %v2565 = vrot.slane %v2438, 5
        %v2566 = vsel %vm1677, %v2564, %v2565
        %v2567 = vrot.slane %v2439, 5
        %v2568 = vrot.slane %v2567, 4
        %v2569 = vrot.slane %v2440, 5
        %v2570 = vsel %vm1677, %v2568, %v2569
        %v2571 = vrot.slane %v2569, 4
        %v2572 = vrot.slane %v2441, 5
        %v2573 = vsel %vm1677, %v2571, %v2572
        %v2574 = vrot.slane %v2442, 5
        %v2575 = vrot.slane %v2574, 4
        %v2576 = vrot.slane %v2443, 5
        %v2577 = vsel %vm1677, %v2575, %v2576
        %v2578 = vrot.slane %v2576, 4
        %v2579 = vrot.slane %v2444, 5
        %v2580 = vsel %vm1677, %v2578, %v2579
        %v2581 = vrot.slane %v2445, 5
        %v2582 = vrot.slane %v2581, 4
        %v2583 = vrot.slane %v2446, 5
        %v2584 = vsel %vm1677, %v2582, %v2583
        %v2585 = vrot.slane %v2583, 4
        %v2586 = vrot.slane %v2447, 5
        %v2587 = vsel %vm1677, %v2585, %v2586
        %v2588 = vrot.slane %v2448, 5
        %v2589 = vrot.slane %v2588, 4
        %v2590 = vrot.slane %v2449, 5
        %v2591 = vsel %vm1677, %v2589, %v2590
        %v2592 = vrot.slane %v2590, 4
        %v2593 = vrot.slane %v2450, 5
        %v2594 = vsel %vm1677, %v2592, %v2593
        %v2595 = vrot.slane %v2451, 5
        %v2596 = vrot.slane %v2595, 4
        %v2597 = vrot.slane %v2452, 5
        %v2598 = vsel %vm1677, %v2596, %v2597
        %v2599 = vrot.slane %v2597, 4
        %v2600 = vrot.slane %v2453, 5
        %v2601 = vsel %vm1677, %v2599, %v2600
        %v2602 = vrot.slane %v2454, 5
        %v2603 = vrot.slane %v2602, 4
        %v2604 = vrot.slane %v2455, 5
        %v2605 = vsel %vm1677, %v2603, %v2604
        %v2606 = vrot.slane %v2604, 4
        %v2607 = vrot.slane %v2456, 5
        %v2608 = vsel %vm1677, %v2606, %v2607
        %v2609 = vrot.slane %v2457, 5
        %v2610 = vrot.slane %v2609, 4
        %v2611 = vrot.slane %v2458, 5
        %v2612 = vsel %vm1677, %v2610, %v2611
        %v2613 = vrot.slane %v2611, 4
        %v2614 = vrot.slane %v2459, 5
        %v2615 = vsel %vm1677, %v2613, %v2614
        %v2616 = vrot.slane %v2460, 5
        %v2617 = vrot.slane %v2616, 4
        %v2618 = vrot.slane %v2461, 5
        %v2619 = vsel %vm1677, %v2617, %v2618
        %v2620 = vrot.slane %v2618, 4
        %v2621 = vrot.slane %v2462, 5
        %v2622 = vsel %vm1677, %v2620, %v2621
        %2655 = vst [vmem:[#allocation3 + $0x14] sm:$0xf] %v2514
        %2656 = vst [vmem:[#allocation3 + $0x38] sm:$0xf] %v2517
        %2657 = vst [vmem:[#allocation3 + $0x5c] sm:$0xf] %v2521
        %2658 = vst [vmem:[#allocation3 + $0x80] sm:$0xf] %v2524
        %2659 = vst [vmem:[#allocation3 + $0xa4] sm:$0xf] %v2528
        %2660 = vst [vmem:[#allocation3 + $0xc8] sm:$0xf] %v2531
        %2661 = vst [vmem:[#allocation3 + $0xec] sm:$0xf] %v2535
        %2662 = vst [vmem:[#allocation3 + $0x110] sm:$0xf] %v2538
        %2663 = vst [vmem:[#allocation3 + $0x134] sm:$0xf] %v2542
        %2664 = vst [vmem:[#allocation3 + $0x158] sm:$0xf] %v2545
        %2665 = vst [vmem:[#allocation3 + $0x17c] sm:$0xf] %v2549
        %2666 = vst [vmem:[#allocation3 + $0x1a0] sm:$0xf] %v2552
        %2667 = vst [vmem:[#allocation3 + $0x1c4] sm:$0xf] %v2556
        %2668 = vst [vmem:[#allocation3 + $0x1e8] sm:$0xf] %v2559
        %2669 = vst [vmem:[#allocation3 + $0x20c] sm:$0xf] %v2563
        %2670 = vst [vmem:[#allocation3 + $0x230] sm:$0xf] %v2566
        %2671 = vst [vmem:[#allocation3 + $0x254] sm:$0xf] %v2570
        %2672 = vst [vmem:[#allocation3 + $0x278] sm:$0xf] %v2573
        %2673 = vst [vmem:[#allocation3 + $0x29c] sm:$0xf] %v2577
        %2674 = vst [vmem:[#allocation3 + $0x2c0] sm:$0xf] %v2580
        %2675 = vst [vmem:[#allocation3 + $0x2e4] sm:$0xf] %v2584
        %2676 = vst [vmem:[#allocation3 + $0x308] sm:$0xf] %v2587
        %2677 = vst [vmem:[#allocation3 + $0x32c] sm:$0xf] %v2591
        %2678 = vst [vmem:[#allocation3 + $0x350] sm:$0xf] %v2594
        %2679 = vst [vmem:[#allocation3 + $0x374] sm:$0xf] %v2598
        %2680 = vst [vmem:[#allocation3 + $0x398] sm:$0xf] %v2601
        %2681 = vst [vmem:[#allocation3 + $0x3bc] sm:$0xf] %v2605
        %2682 = vst [vmem:[#allocation3 + $0x3e0] sm:$0xf] %v2608
        %2683 = vst [vmem:[#allocation3 + $0x404] sm:$0xf] %v2612
        %2684 = vst [vmem:[#allocation3 + $0x428] sm:$0xf] %v2615
        %2685 = vst [vmem:[#allocation3 + $0x44c] sm:$0xf] %v2619
        %2686 = vst [vmem:[#allocation3 + $0x470] sm:$0xf] %v2622
        %s2687 = scalar_lea.vmem [#allocation2], 24
        %v2688 = vld [vmem:[%s2687] sm:$0xf]
        %v2689 = vld [vmem:[%s2687 + $0x4] sm:$0xf]
        %v2690 = vld [vmem:[%s2687 + $0xc] sm:$0xf]
        %v2691 = vld [vmem:[%s2687 + $0x10] sm:$0xf]
        %v2692 = vld [vmem:[%s2687 + $0x18] sm:$0xf]
        %v2693 = vld [vmem:[%s2687 + $0x1c] sm:$0xf]
        %v2694 = vld [vmem:[%s2687 + $0x24] sm:$0xf]
        %v2695 = vld [vmem:[%s2687 + $0x28] sm:$0xf]
        %v2696 = vld [vmem:[%s2687 + $0x30] sm:$0xf]
        %v2697 = vld [vmem:[%s2687 + $0x34] sm:$0xf]
        %v2698 = vld [vmem:[%s2687 + $0x3c] sm:$0xf]
        %v2699 = vld [vmem:[%s2687 + $0x40] sm:$0xf]
        %v2700 = vld [vmem:[%s2687 + $0x48] sm:$0xf]
        %v2701 = vld [vmem:[%s2687 + $0x4c] sm:$0xf]
        %v2702 = vld [vmem:[%s2687 + $0x54] sm:$0xf]
        %v2703 = vld [vmem:[%s2687 + $0x58] sm:$0xf]
        %v2704 = vld [vmem:[%s2687 + $0x60] sm:$0xf]
        %v2705 = vld [vmem:[%s2687 + $0x64] sm:$0xf]
        %v2706 = vld [vmem:[%s2687 + $0x6c] sm:$0xf]
        %v2707 = vld [vmem:[%s2687 + $0x70] sm:$0xf]
        %v2708 = vld [vmem:[%s2687 + $0x78] sm:$0xf]
        %v2709 = vld [vmem:[%s2687 + $0x7c] sm:$0xf]
        %v2710 = vld [vmem:[%s2687 + $0x84] sm:$0xf]
        %v2711 = vld [vmem:[%s2687 + $0x88] sm:$0xf]
        %v2712 = vld [vmem:[%s2687 + $0x90] sm:$0xf]
        %v2713 = vld [vmem:[%s2687 + $0x94] sm:$0xf]
        %v2714 = vld [vmem:[%s2687 + $0x9c] sm:$0xf]
        %v2715 = vld [vmem:[%s2687 + $0xa0] sm:$0xf]
        %v2716 = vld [vmem:[%s2687 + $0xa8] sm:$0xf]
        %v2717 = vld [vmem:[%s2687 + $0xac] sm:$0xf]
        %v2718 = vld [vmem:[%s2687 + $0xb4] sm:$0xf]
        %v2719 = vld [vmem:[%s2687 + $0xb8] sm:$0xf]
        %2720 = vst [vmem:[#allocation3 + $0x18] sm:$0xf] %v2688
        %2721 = vst [vmem:[#allocation3 + $0x3c] sm:$0xf] %v2689
        %2722 = vst [vmem:[#allocation3 + $0x60] sm:$0xf] %v2690
        %2723 = vst [vmem:[#allocation3 + $0x84] sm:$0xf] %v2691
        %2724 = vst [vmem:[#allocation3 + $0xa8] sm:$0xf] %v2692
        %2725 = vst [vmem:[#allocation3 + $0xcc] sm:$0xf] %v2693
        %2726 = vst [vmem:[#allocation3 + $0xf0] sm:$0xf] %v2694
        %2727 = vst [vmem:[#allocation3 + $0x114] sm:$0xf] %v2695
        %2728 = vst [vmem:[#allocation3 + $0x138] sm:$0xf] %v2696
        %2729 = vst [vmem:[#allocation3 + $0x15c] sm:$0xf] %v2697
        %2730 = vst [vmem:[#allocation3 + $0x180] sm:$0xf] %v2698
        %2731 = vst [vmem:[#allocation3 + $0x1a4] sm:$0xf] %v2699
        %2732 = vst [vmem:[#allocation3 + $0x1c8] sm:$0xf] %v2700
        %2733 = vst [vmem:[#allocation3 + $0x1ec] sm:$0xf] %v2701
        %2734 = vst [vmem:[#allocation3 + $0x210] sm:$0xf] %v2702
        %2735 = vst [vmem:[#allocation3 + $0x234] sm:$0xf] %v2703
        %2736 = vst [vmem:[#allocation3 + $0x258] sm:$0xf] %v2704
        %2737 = vst [vmem:[#allocation3 + $0x27c] sm:$0xf] %v2705
        %2738 = vst [vmem:[#allocation3 + $0x2a0] sm:$0xf] %v2706
        %2739 = vst [vmem:[#allocation3 + $0x2c4] sm:$0xf] %v2707
        %2740 = vst [vmem:[#allocation3 + $0x2e8] sm:$0xf] %v2708
        %2741 = vst [vmem:[#allocation3 + $0x30c] sm:$0xf] %v2709
        %2742 = vst [vmem:[#allocation3 + $0x330] sm:$0xf] %v2710
        %2743 = vst [vmem:[#allocation3 + $0x354] sm:$0xf] %v2711
        %2744 = vst [vmem:[#allocation3 + $0x378] sm:$0xf] %v2712
        %2745 = vst [vmem:[#allocation3 + $0x39c] sm:$0xf] %v2713
        %2746 = vst [vmem:[#allocation3 + $0x3c0] sm:$0xf] %v2714
        %2747 = vst [vmem:[#allocation3 + $0x3e4] sm:$0xf] %v2715
        %2748 = vst [vmem:[#allocation3 + $0x408] sm:$0xf] %v2716
        %2749 = vst [vmem:[#allocation3 + $0x42c] sm:$0xf] %v2717
        %2750 = vst [vmem:[#allocation3 + $0x450] sm:$0xf] %v2718
        %2751 = vst [vmem:[#allocation3 + $0x474] sm:$0xf] %v2719
        %v2752 = vld [vmem:[%s2687] sm:$0xf]
        %v2753 = vld [vmem:[%s2687 + $0x4] sm:$0xf]
        %v2754 = vld [vmem:[%s2687 + $0x8] sm:$0x1]
        %v2755 = vld [vmem:[%s2687 + $0xc] sm:$0xf]
        %v2756 = vld [vmem:[%s2687 + $0x10] sm:$0xf]
        %v2757 = vld [vmem:[%s2687 + $0x14] sm:$0x1]
        %v2758 = vld [vmem:[%s2687 + $0x18] sm:$0xf]
        %v2759 = vld [vmem:[%s2687 + $0x1c] sm:$0xf]
        %v2760 = vld [vmem:[%s2687 + $0x20] sm:$0x1]
        %v2761 = vld [vmem:[%s2687 + $0x24] sm:$0xf]
        %v2762 = vld [vmem:[%s2687 + $0x28] sm:$0xf]
        %v2763 = vld [vmem:[%s2687 + $0x2c] sm:$0x1]
        %v2764 = vld [vmem:[%s2687 + $0x30] sm:$0xf]
        %v2765 = vld [vmem:[%s2687 + $0x34] sm:$0xf]
        %v2766 = vld [vmem:[%s2687 + $0x38] sm:$0x1]
        %v2767 = vld [vmem:[%s2687 + $0x3c] sm:$0xf]
        %v2768 = vld [vmem:[%s2687 + $0x40] sm:$0xf]
        %v2769 = vld [vmem:[%s2687 + $0x44] sm:$0x1]
        %v2770 = vld [vmem:[%s2687 + $0x48] sm:$0xf]
        %v2771 = vld [vmem:[%s2687 + $0x4c] sm:$0xf]
        %v2772 = vld [vmem:[%s2687 + $0x50] sm:$0x1]
        %v2773 = vld [vmem:[%s2687 + $0x54] sm:$0xf]
        %v2774 = vld [vmem:[%s2687 + $0x58] sm:$0xf]
        %v2775 = vld [vmem:[%s2687 + $0x5c] sm:$0x1]
        %v2776 = vld [vmem:[%s2687 + $0x60] sm:$0xf]
        %v2777 = vld [vmem:[%s2687 + $0x64] sm:$0xf]
        %v2778 = vld [vmem:[%s2687 + $0x68] sm:$0x1]
        %v2779 = vld [vmem:[%s2687 + $0x6c] sm:$0xf]
        %v2780 = vld [vmem:[%s2687 + $0x70] sm:$0xf]
        %v2781 = vld [vmem:[%s2687 + $0x74] sm:$0x1]
        %v2782 = vld [vmem:[%s2687 + $0x78] sm:$0xf]
        %v2783 = vld [vmem:[%s2687 + $0x7c] sm:$0xf]
        %v2784 = vld [vmem:[%s2687 + $0x80] sm:$0x1]
        %v2785 = vld [vmem:[%s2687 + $0x84] sm:$0xf]
        %v2786 = vld [vmem:[%s2687 + $0x88] sm:$0xf]
        %v2787 = vld [vmem:[%s2687 + $0x8c] sm:$0x1]
        %v2788 = vld [vmem:[%s2687 + $0x90] sm:$0xf]
        %v2789 = vld [vmem:[%s2687 + $0x94] sm:$0xf]
        %v2790 = vld [vmem:[%s2687 + $0x98] sm:$0x1]
        %v2791 = vld [vmem:[%s2687 + $0x9c] sm:$0xf]
        %v2792 = vld [vmem:[%s2687 + $0xa0] sm:$0xf]
        %v2793 = vld [vmem:[%s2687 + $0xa4] sm:$0x1]
        %v2794 = vld [vmem:[%s2687 + $0xa8] sm:$0xf]
        %v2795 = vld [vmem:[%s2687 + $0xac] sm:$0xf]
        %v2796 = vld [vmem:[%s2687 + $0xb0] sm:$0x1]
        %v2797 = vld [vmem:[%s2687 + $0xb4] sm:$0xf]
        %v2798 = vld [vmem:[%s2687 + $0xb8] sm:$0xf]
        %v2799 = vld [vmem:[%s2687 + $0xbc] sm:$0x1]
        %v2801 = vshrl.u32 %v2752, 16
        %v2803 = vrot.slane %v2801, 4
        %v2804 = vshll.u32 %v2752, 16
        %v2806 = vrot.slane %v2804, 5
        %v2807 = vor.u32 %v2803, %v2806
        %v2808 = vrot.slane %v2807, 4
        %v2810 = vshll.u32 %v2753, 16
        %v2812 = vrot.slane %v2810, 5
        %v2813 = vsel %vm1130, %v2808, %v2812
        %v2814 = vshrl.u32 %v2753, 16
        %v2816 = vrot.slane %v2814, 4
        %v2817 = vor.u32 %v2816, %v2812
        %v2818 = vrot.slane %v2817, 4
        %v2820 = vshll.u32 %v2754, 16
        %v2822 = vrot.slane %v2820, 5
        %v2823 = vsel %vm1130, %v2818, %v2822
        %v2825 = vshrl.u32 %v2755, 16
        %v2827 = vrot.slane %v2825, 4
        %v2828 = vshll.u32 %v2755, 16
        %v2830 = vrot.slane %v2828, 5
        %v2831 = vor.u32 %v2827, %v2830
        %v2832 = vrot.slane %v2831, 4
        %v2834 = vshll.u32 %v2756, 16
        %v2836 = vrot.slane %v2834, 5
        %v2837 = vsel %vm1130, %v2832, %v2836
        %v2838 = vshrl.u32 %v2756, 16
        %v2840 = vrot.slane %v2838, 4
        %v2841 = vor.u32 %v2840, %v2836
        %v2842 = vrot.slane %v2841, 4
        %v2844 = vshll.u32 %v2757, 16
        %v2846 = vrot.slane %v2844, 5
        %v2847 = vsel %vm1130, %v2842, %v2846
        %v2849 = vshrl.u32 %v2758, 16
        %v2851 = vrot.slane %v2849, 4
        %v2852 = vshll.u32 %v2758, 16
        %v2854 = vrot.slane %v2852, 5
        %v2855 = vor.u32 %v2851, %v2854
        %v2856 = vrot.slane %v2855, 4
        %v2858 = vshll.u32 %v2759, 16
        %v2860 = vrot.slane %v2858, 5
        %v2861 = vsel %vm1130, %v2856, %v2860
        %v2862 = vshrl.u32 %v2759, 16
        %v2864 = vrot.slane %v2862, 4
        %v2865 = vor.u32 %v2864, %v2860
        %v2866 = vrot.slane %v2865, 4
        %v2868 = vshll.u32 %v2760, 16
        %v2870 = vrot.slane %v2868, 5
        %v2871 = vsel %vm1130, %v2866, %v2870
        %v2873 = vshrl.u32 %v2761, 16
        %v2875 = vrot.slane %v2873, 4
        %v2876 = vshll.u32 %v2761, 16
        %v2878 = vrot.slane %v2876, 5
        %v2879 = vor.u32 %v2875, %v2878
        %v2880 = vrot.slane %v2879, 4
        %v2882 = vshll.u32 %v2762, 16
        %v2884 = vrot.slane %v2882, 5
        %v2885 = vsel %vm1130, %v2880, %v2884
        %v2886 = vshrl.u32 %v2762, 16
        %v2888 = vrot.slane %v2886, 4
        %v2889 = vor.u32 %v2888, %v2884
        %v2890 = vrot.slane %v2889, 4
        %v2892 = vshll.u32 %v2763, 16
        %v2894 = vrot.slane %v2892, 5
        %v2895 = vsel %vm1130, %v2890, %v2894
        %v2897 = vshrl.u32 %v2764, 16
        %v2899 = vrot.slane %v2897, 4
        %v2900 = vshll.u32 %v2764, 16
        %v2902 = vrot.slane %v2900, 5
        %v2903 = vor.u32 %v2899, %v2902
        %v2904 = vrot.slane %v2903, 4
        %v2906 = vshll.u32 %v2765, 16
        %v2908 = vrot.slane %v2906, 5
        %v2909 = vsel %vm1130, %v2904, %v2908
        %v2910 = vshrl.u32 %v2765, 16
        %v2912 = vrot.slane %v2910, 4
        %v2913 = vor.u32 %v2912, %v2908
        %v2914 = vrot.slane %v2913, 4
        %v2916 = vshll.u32 %v2766, 16
        %v2918 = vrot.slane %v2916, 5
        %v2919 = vsel %vm1130, %v2914, %v2918
        %v2921 = vshrl.u32 %v2767, 16
        %v2923 = vrot.slane %v2921, 4
        %v2924 = vshll.u32 %v2767, 16
        %v2926 = vrot.slane %v2924, 5
        %v2927 = vor.u32 %v2923, %v2926
        %v2928 = vrot.slane %v2927, 4
        %v2930 = vshll.u32 %v2768, 16
        %v2932 = vrot.slane %v2930, 5
        %v2933 = vsel %vm1130, %v2928, %v2932
        %v2934 = vshrl.u32 %v2768, 16
        %v2936 = vrot.slane %v2934, 4
        %v2937 = vor.u32 %v2936, %v2932
        %v2938 = vrot.slane %v2937, 4
        %v2940 = vshll.u32 %v2769, 16
        %v2942 = vrot.slane %v2940, 5
        %v2943 = vsel %vm1130, %v2938, %v2942
        %v2945 = vshrl.u32 %v2770, 16
        %v2947 = vrot.slane %v2945, 4
        %v2948 = vshll.u32 %v2770, 16
        %v2950 = vrot.slane %v2948, 5
        %v2951 = vor.u32 %v2947, %v2950
        %v2952 = vrot.slane %v2951, 4
        %v2954 = vshll.u32 %v2771, 16
        %v2956 = vrot.slane %v2954, 5
        %v2957 = vsel %vm1130, %v2952, %v2956
        %v2958 = vshrl.u32 %v2771, 16
        %v2960 = vrot.slane %v2958, 4
        %v2961 = vor.u32 %v2960, %v2956
        %v2962 = vrot.slane %v2961, 4
        %v2964 = vshll.u32 %v2772, 16
        %v2966 = vrot.slane %v2964, 5
        %v2967 = vsel %vm1130, %v2962, %v2966
        %v2969 = vshrl.u32 %v2773, 16
        %v2971 = vrot.slane %v2969, 4
        %v2972 = vshll.u32 %v2773, 16
        %v2974 = vrot.slane %v2972, 5
        %v2975 = vor.u32 %v2971, %v2974
        %v2976 = vrot.slane %v2975, 4
        %v2978 = vshll.u32 %v2774, 16
        %v2980 = vrot.slane %v2978, 5
        %v2981 = vsel %vm1130, %v2976, %v2980
        %v2982 = vshrl.u32 %v2774, 16
        %v2984 = vrot.slane %v2982, 4
        %v2985 = vor.u32 %v2984, %v2980
        %v2986 = vrot.slane %v2985, 4
        %v2988 = vshll.u32 %v2775, 16
        %v2990 = vrot.slane %v2988, 5
        %v2991 = vsel %vm1130, %v2986, %v2990
        %v2993 = vshrl.u32 %v2776, 16
        %v2995 = vrot.slane %v2993, 4
        %v2996 = vshll.u32 %v2776, 16
        %v2998 = vrot.slane %v2996, 5
        %v2999 = vor.u32 %v2995, %v2998
        %v3000 = vrot.slane %v2999, 4
        %v3002 = vshll.u32 %v2777, 16
        %v3004 = vrot.slane %v3002, 5
        %v3005 = vsel %vm1130, %v3000, %v3004
        %v3006 = vshrl.u32 %v2777, 16
        %v3008 = vrot.slane %v3006, 4
        %v3009 = vor.u32 %v3008, %v3004
        %v3010 = vrot.slane %v3009, 4
        %v3012 = vshll.u32 %v2778, 16
        %v3014 = vrot.slane %v3012, 5
        %v3015 = vsel %vm1130, %v3010, %v3014
        %v3017 = vshrl.u32 %v2779, 16
        %v3019 = vrot.slane %v3017, 4
        %v3020 = vshll.u32 %v2779, 16
        %v3022 = vrot.slane %v3020, 5
        %v3023 = vor.u32 %v3019, %v3022
        %v3024 = vrot.slane %v3023, 4
        %v3026 = vshll.u32 %v2780, 16
        %v3028 = vrot.slane %v3026, 5
        %v3029 = vsel %vm1130, %v3024, %v3028
        %v3030 = vshrl.u32 %v2780, 16
        %v3032 = vrot.slane %v3030, 4
        %v3033 = vor.u32 %v3032, %v3028
        %v3034 = vrot.slane %v3033, 4
        %v3036 = vshll.u32 %v2781, 16
        %v3038 = vrot.slane %v3036, 5
        %v3039 = vsel %vm1130, %v3034, %v3038
        %v3041 = vshrl.u32 %v2782, 16
        %v3043 = vrot.slane %v3041, 4
        %v3044 = vshll.u32 %v2782, 16
        %v3046 = vrot.slane %v3044, 5
        %v3047 = vor.u32 %v3043, %v3046
        %v3048 = vrot.slane %v3047, 4
        %v3050 = vshll.u32 %v2783, 16
        %v3052 = vrot.slane %v3050, 5
        %v3053 = vsel %vm1130, %v3048, %v3052
        %v3054 = vshrl.u32 %v2783, 16
        %v3056 = vrot.slane %v3054, 4
        %v3057 = vor.u32 %v3056, %v3052
        %v3058 = vrot.slane %v3057, 4
        %v3060 = vshll.u32 %v2784, 16
        %v3062 = vrot.slane %v3060, 5
        %v3063 = vsel %vm1130, %v3058, %v3062
        %v3065 = vshrl.u32 %v2785, 16
        %v3067 = vrot.slane %v3065, 4
        %v3068 = vshll.u32 %v2785, 16
        %v3070 = vrot.slane %v3068, 5
        %v3071 = vor.u32 %v3067, %v3070
        %v3072 = vrot.slane %v3071, 4
        %v3074 = vshll.u32 %v2786, 16
        %v3076 = vrot.slane %v3074, 5
        %v3077 = vsel %vm1130, %v3072, %v3076
        %v3078 = vshrl.u32 %v2786, 16
        %v3080 = vrot.slane %v3078, 4
        %v3081 = vor.u32 %v3080, %v3076
        %v3082 = vrot.slane %v3081, 4
        %v3084 = vshll.u32 %v2787, 16
        %v3086 = vrot.slane %v3084, 5
        %v3087 = vsel %vm1130, %v3082, %v3086
        %v3089 = vshrl.u32 %v2788, 16
        %v3091 = vrot.slane %v3089, 4
        %v3092 = vshll.u32 %v2788, 16
        %v3094 = vrot.slane %v3092, 5
        %v3095 = vor.u32 %v3091, %v3094
        %v3096 = vrot.slane %v3095, 4
        %v3098 = vshll.u32 %v2789, 16
        %v3100 = vrot.slane %v3098, 5
        %v3101 = vsel %vm1130, %v3096, %v3100
        %v3102 = vshrl.u32 %v2789, 16
        %v3104 = vrot.slane %v3102, 4
        %v3105 = vor.u32 %v3104, %v3100
        %v3106 = vrot.slane %v3105, 4
        %v3108 = vshll.u32 %v2790, 16
        %v3110 = vrot.slane %v3108, 5
        %v3111 = vsel %vm1130, %v3106, %v3110
        %v3113 = vshrl.u32 %v2791, 16
        %v3115 = vrot.slane %v3113, 4
        %v3116 = vshll.u32 %v2791, 16
        %v3118 = vrot.slane %v3116, 5
        %v3119 = vor.u32 %v3115, %v3118
        %v3120 = vrot.slane %v3119, 4
        %v3122 = vshll.u32 %v2792, 16
        %v3124 = vrot.slane %v3122, 5
        %v3125 = vsel %vm1130, %v3120, %v3124
        %v3126 = vshrl.u32 %v2792, 16
        %v3128 = vrot.slane %v3126, 4
        %v3129 = vor.u32 %v3128, %v3124
        %v3130 = vrot.slane %v3129, 4
        %v3132 = vshll.u32 %v2793, 16
        %v3134 = vrot.slane %v3132, 5
        %v3135 = vsel %vm1130, %v3130, %v3134
        %v3137 = vshrl.u32 %v2794, 16
        %v3139 = vrot.slane %v3137, 4
        %v3140 = vshll.u32 %v2794, 16
        %v3142 = vrot.slane %v3140, 5
        %v3143 = vor.u32 %v3139, %v3142
        %v3144 = vrot.slane %v3143, 4
        %v3146 = vshll.u32 %v2795, 16
        %v3148 = vrot.slane %v3146, 5
        %v3149 = vsel %vm1130, %v3144, %v3148
        %v3150 = vshrl.u32 %v2795, 16
        %v3152 = vrot.slane %v3150, 4
        %v3153 = vor.u32 %v3152, %v3148
        %v3154 = vrot.slane %v3153, 4
        %v3156 = vshll.u32 %v2796, 16
        %v3158 = vrot.slane %v3156, 5
        %v3159 = vsel %vm1130, %v3154, %v3158
        %v3161 = vshrl.u32 %v2797, 16
        %v3163 = vrot.slane %v3161, 4
        %v3164 = vshll.u32 %v2797, 16
        %v3166 = vrot.slane %v3164, 5
        %v3167 = vor.u32 %v3163, %v3166
        %v3168 = vrot.slane %v3167, 4
        %v3170 = vshll.u32 %v2798, 16
        %v3172 = vrot.slane %v3170, 5
        %v3173 = vsel %vm1130, %v3168, %v3172
        %v3174 = vshrl.u32 %v2798, 16
        %v3176 = vrot.slane %v3174, 4
        %v3177 = vor.u32 %v3176, %v3172
        %v3178 = vrot.slane %v3177, 4
        %v3180 = vshll.u32 %v2799, 16
        %v3182 = vrot.slane %v3180, 5
        %v3183 = vsel %vm1130, %v3178, %v3182
        %3216 = vst [vmem:[#allocation3 + $0x1c] sm:$0xf] %v2813
        %3217 = vst [vmem:[#allocation3 + $0x40] sm:$0xf] %v2823
        %3218 = vst [vmem:[#allocation3 + $0x64] sm:$0xf] %v2837
        %3219 = vst [vmem:[#allocation3 + $0x88] sm:$0xf] %v2847
        %3220 = vst [vmem:[#allocation3 + $0xac] sm:$0xf] %v2861
        %3221 = vst [vmem:[#allocation3 + $0xd0] sm:$0xf] %v2871
        %3222 = vst [vmem:[#allocation3 + $0xf4] sm:$0xf] %v2885
        %3223 = vst [vmem:[#allocation3 + $0x118] sm:$0xf] %v2895
        %3224 = vst [vmem:[#allocation3 + $0x13c] sm:$0xf] %v2909
        %3225 = vst [vmem:[#allocation3 + $0x160] sm:$0xf] %v2919
        %3226 = vst [vmem:[#allocation3 + $0x184] sm:$0xf] %v2933
        %3227 = vst [vmem:[#allocation3 + $0x1a8] sm:$0xf] %v2943
        %3228 = vst [vmem:[#allocation3 + $0x1cc] sm:$0xf] %v2957
        %3229 = vst [vmem:[#allocation3 + $0x1f0] sm:$0xf] %v2967
        %3230 = vst [vmem:[#allocation3 + $0x214] sm:$0xf] %v2981
        %3231 = vst [vmem:[#allocation3 + $0x238] sm:$0xf] %v2991
        %3232 = vst [vmem:[#allocation3 + $0x25c] sm:$0xf] %v3005
        %3233 = vst [vmem:[#allocation3 + $0x280] sm:$0xf] %v3015
        %3234 = vst [vmem:[#allocation3 + $0x2a4] sm:$0xf] %v3029
        %3235 = vst [vmem:[#allocation3 + $0x2c8] sm:$0xf] %v3039
        %3236 = vst [vmem:[#allocation3 + $0x2ec] sm:$0xf] %v3053
        %3237 = vst [vmem:[#allocation3 + $0x310] sm:$0xf] %v3063
        %3238 = vst [vmem:[#allocation3 + $0x334] sm:$0xf] %v3077
        %3239 = vst [vmem:[#allocation3 + $0x358] sm:$0xf] %v3087
        %3240 = vst [vmem:[#allocation3 + $0x37c] sm:$0xf] %v3101
        %3241 = vst [vmem:[#allocation3 + $0x3a0] sm:$0xf] %v3111
        %3242 = vst [vmem:[#allocation3 + $0x3c4] sm:$0xf] %v3125
        %3243 = vst [vmem:[#allocation3 + $0x3e8] sm:$0xf] %v3135
        %3244 = vst [vmem:[#allocation3 + $0x40c] sm:$0xf] %v3149
        %3245 = vst [vmem:[#allocation3 + $0x430] sm:$0xf] %v3159
        %3246 = vst [vmem:[#allocation3 + $0x454] sm:$0xf] %v3173
        %3247 = vst [vmem:[#allocation3 + $0x478] sm:$0xf] %v3183
        %v3248 = vld [vmem:[%s2687] sm:$0xe]
        %v3249 = vld [vmem:[%s2687 + $0x4] sm:$0xf]
        %v3250 = vld [vmem:[%s2687 + $0x8] sm:$0x1]
        %v3251 = vld [vmem:[%s2687 + $0xc] sm:$0xe]
        %v3252 = vld [vmem:[%s2687 + $0x10] sm:$0xf]
        %v3253 = vld [vmem:[%s2687 + $0x14] sm:$0x1]
        %v3254 = vld [vmem:[%s2687 + $0x18] sm:$0xe]
        %v3255 = vld [vmem:[%s2687 + $0x1c] sm:$0xf]
        %v3256 = vld [vmem:[%s2687 + $0x20] sm:$0x1]
        %v3257 = vld [vmem:[%s2687 + $0x24] sm:$0xe]
        %v3258 = vld [vmem:[%s2687 + $0x28] sm:$0xf]
        %v3259 = vld [vmem:[%s2687 + $0x2c] sm:$0x1]
        %v3260 = vld [vmem:[%s2687 + $0x30] sm:$0xe]
        %v3261 = vld [vmem:[%s2687 + $0x34] sm:$0xf]
        %v3262 = vld [vmem:[%s2687 + $0x38] sm:$0x1]
        %v3263 = vld [vmem:[%s2687 + $0x3c] sm:$0xe]
        %v3264 = vld [vmem:[%s2687 + $0x40] sm:$0xf]
        %v3265 = vld [vmem:[%s2687 + $0x44] sm:$0x1]
        %v3266 = vld [vmem:[%s2687 + $0x48] sm:$0xe]
        %v3267 = vld [vmem:[%s2687 + $0x4c] sm:$0xf]
        %v3268 = vld [vmem:[%s2687 + $0x50] sm:$0x1]
        %v3269 = vld [vmem:[%s2687 + $0x54] sm:$0xe]
        %v3270 = vld [vmem:[%s2687 + $0x58] sm:$0xf]
        %v3271 = vld [vmem:[%s2687 + $0x5c] sm:$0x1]
        %v3272 = vld [vmem:[%s2687 + $0x60] sm:$0xe]
        %v3273 = vld [vmem:[%s2687 + $0x64] sm:$0xf]
        %v3274 = vld [vmem:[%s2687 + $0x68] sm:$0x1]
        %v3275 = vld [vmem:[%s2687 + $0x6c] sm:$0xe]
        %v3276 = vld [vmem:[%s2687 + $0x70] sm:$0xf]
        %v3277 = vld [vmem:[%s2687 + $0x74] sm:$0x1]
        %v3278 = vld [vmem:[%s2687 + $0x78] sm:$0xe]
        %v3279 = vld [vmem:[%s2687 + $0x7c] sm:$0xf]
        %v3280 = vld [vmem:[%s2687 + $0x80] sm:$0x1]
        %v3281 = vld [vmem:[%s2687 + $0x84] sm:$0xe]
        %v3282 = vld [vmem:[%s2687 + $0x88] sm:$0xf]
        %v3283 = vld [vmem:[%s2687 + $0x8c] sm:$0x1]
        %v3284 = vld [vmem:[%s2687 + $0x90] sm:$0xe]
        %v3285 = vld [vmem:[%s2687 + $0x94] sm:$0xf]
        %v3286 = vld [vmem:[%s2687 + $0x98] sm:$0x1]
        %v3287 = vld [vmem:[%s2687 + $0x9c] sm:$0xe]
        %v3288 = vld [vmem:[%s2687 + $0xa0] sm:$0xf]
        %v3289 = vld [vmem:[%s2687 + $0xa4] sm:$0x1]
        %v3290 = vld [vmem:[%s2687 + $0xa8] sm:$0xe]
        %v3291 = vld [vmem:[%s2687 + $0xac] sm:$0xf]
        %v3292 = vld [vmem:[%s2687 + $0xb0] sm:$0x1]
        %v3293 = vld [vmem:[%s2687 + $0xb4] sm:$0xe]
        %v3294 = vld [vmem:[%s2687 + $0xb8] sm:$0xf]
        %v3295 = vld [vmem:[%s2687 + $0xbc] sm:$0x1]
        %v3344 = vrot.slane %v3248, 5
        %v3345 = vrot.slane %v3344, 4
        %v3346 = vrot.slane %v3249, 5
        %v3347 = vsel %vm1677, %v3345, %v3346
        %v3348 = vrot.slane %v3346, 4
        %v3349 = vrot.slane %v3250, 5
        %v3350 = vsel %vm1677, %v3348, %v3349
        %v3351 = vrot.slane %v3251, 5
        %v3352 = vrot.slane %v3351, 4
        %v3353 = vrot.slane %v3252, 5
        %v3354 = vsel %vm1677, %v3352, %v3353
        %v3355 = vrot.slane %v3353, 4
        %v3356 = vrot.slane %v3253, 5
        %v3357 = vsel %vm1677, %v3355, %v3356
        %v3358 = vrot.slane %v3254, 5
        %v3359 = vrot.slane %v3358, 4
        %v3360 = vrot.slane %v3255, 5
        %v3361 = vsel %vm1677, %v3359, %v3360
        %v3362 = vrot.slane %v3360, 4
        %v3363 = vrot.slane %v3256, 5
        %v3364 = vsel %vm1677, %v3362, %v3363
        %v3365 = vrot.slane %v3257, 5
        %v3366 = vrot.slane %v3365, 4
        %v3367 = vrot.slane %v3258, 5
        %v3368 = vsel %vm1677, %v3366, %v3367
        %v3369 = vrot.slane %v3367, 4
        %v3370 = vrot.slane %v3259, 5
        %v3371 = vsel %vm1677, %v3369, %v3370
        %v3372 = vrot.slane %v3260, 5
        %v3373 = vrot.slane %v3372, 4
        %v3374 = vrot.slane %v3261, 5
        %v3375 = vsel %vm1677, %v3373, %v3374
        %v3376 = vrot.slane %v3374, 4
        %v3377 = vrot.slane %v3262, 5
        %v3378 = vsel %vm1677, %v3376, %v3377
        %v3379 = vrot.slane %v3263, 5
        %v3380 = vrot.slane %v3379, 4
        %v3381 = vrot.slane %v3264, 5
        %v3382 = vsel %vm1677, %v3380, %v3381
        %v3383 = vrot.slane %v3381, 4
        %v3384 = vrot.slane %v3265, 5
        %v3385 = vsel %vm1677, %v3383, %v3384
        %v3386 = vrot.slane %v3266, 5
        %v3387 = vrot.slane %v3386, 4
        %v3388 = vrot.slane %v3267, 5
        %v3389 = vsel %vm1677, %v3387, %v3388
        %v3390 = vrot.slane %v3388, 4
        %v3391 = vrot.slane %v3268, 5
        %v3392 = vsel %vm1677, %v3390, %v3391
        %v3393 = vrot.slane %v3269, 5
        %v3394 = vrot.slane %v3393, 4
        %v3395 = vrot.slane %v3270, 5
        %v3396 = vsel %vm1677, %v3394, %v3395
        %v3397 = vrot.slane %v3395, 4
        %v3398 = vrot.slane %v3271, 5
        %v3399 = vsel %vm1677, %v3397, %v3398
        %v3400 = vrot.slane %v3272, 5
        %v3401 = vrot.slane %v3400, 4
        %v3402 = vrot.slane %v3273, 5
        %v3403 = vsel %vm1677, %v3401, %v3402
        %v3404 = vrot.slane %v3402, 4
        %v3405 = vrot.slane %v3274, 5
        %v3406 = vsel %vm1677, %v3404, %v3405
        %v3407 = vrot.slane %v3275, 5
        %v3408 = vrot.slane %v3407, 4
        %v3409 = vrot.slane %v3276, 5
        %v3410 = vsel %vm1677, %v3408, %v3409
        %v3411 = vrot.slane %v3409, 4
        %v3412 = vrot.slane %v3277, 5
        %v3413 = vsel %vm1677, %v3411, %v3412
        %v3414 = vrot.slane %v3278, 5
        %v3415 = vrot.slane %v3414, 4
        %v3416 = vrot.slane %v3279, 5
        %v3417 = vsel %vm1677, %v3415, %v3416
        %v3418 = vrot.slane %v3416, 4
        %v3419 = vrot.slane %v3280, 5
        %v3420 = vsel %vm1677, %v3418, %v3419
        %v3421 = vrot.slane %v3281, 5
        %v3422 = vrot.slane %v3421, 4
        %v3423 = vrot.slane %v3282, 5
        %v3424 = vsel %vm1677, %v3422, %v3423
        %v3425 = vrot.slane %v3423, 4
        %v3426 = vrot.slane %v3283, 5
        %v3427 = vsel %vm1677, %v3425, %v3426
        %v3428 = vrot.slane %v3284, 5
        %v3429 = vrot.slane %v3428, 4
        %v3430 = vrot.slane %v3285, 5
        %v3431 = vsel %vm1677, %v3429, %v3430
        %v3432 = vrot.slane %v3430, 4
        %v3433 = vrot.slane %v3286, 5
        %v3434 = vsel %vm1677, %v3432, %v3433
        %v3435 = vrot.slane %v3287, 5
        %v3436 = vrot.slane %v3435, 4
        %v3437 = vrot.slane %v3288, 5
        %v3438 = vsel %vm1677, %v3436, %v3437
        %v3439 = vrot.slane %v3437, 4
        %v3440 = vrot.slane %v3289, 5
        %v3441 = vsel %vm1677, %v3439, %v3440
        %v3442 = vrot.slane %v3290, 5
        %v3443 = vrot.slane %v3442, 4
        %v3444 = vrot.slane %v3291, 5
        %v3445 = vsel %vm1677, %v3443, %v3444
        %v3446 = vrot.slane %v3444, 4
        %v3447 = vrot.slane %v3292, 5
        %v3448 = vsel %vm1677, %v3446, %v3447
        %v3449 = vrot.slane %v3293, 5
        %v3450 = vrot.slane %v3449, 4
        %v3451 = vrot.slane %v3294, 5
        %v3452 = vsel %vm1677, %v3450, %v3451
        %v3453 = vrot.slane %v3451, 4
        %v3454 = vrot.slane %v3295, 5
        %v3455 = vsel %vm1677, %v3453, %v3454
        %3488 = vst [vmem:[#allocation3 + $0x20] sm:$0xf] %v3347
        %3489 = vst [vmem:[#allocation3 + $0x44] sm:$0xf] %v3350
        %3490 = vst [vmem:[#allocation3 + $0x68] sm:$0xf] %v3354
        %3491 = vst [vmem:[#allocation3 + $0x8c] sm:$0xf] %v3357
        %3492 = vst [vmem:[#allocation3 + $0xb0] sm:$0xf] %v3361
        %3493 = vst [vmem:[#allocation3 + $0xd4] sm:$0xf] %v3364
        %3494 = vst [vmem:[#allocation3 + $0xf8] sm:$0xf] %v3368
        %3495 = vst [vmem:[#allocation3 + $0x11c] sm:$0xf] %v3371
        %3496 = vst [vmem:[#allocation3 + $0x140] sm:$0xf] %v3375
        %3497 = vst [vmem:[#allocation3 + $0x164] sm:$0xf] %v3378
        %3498 = vst [vmem:[#allocation3 + $0x188] sm:$0xf] %v3382
        %3499 = vst [vmem:[#allocation3 + $0x1ac] sm:$0xf] %v3385
        %3500 = vst [vmem:[#allocation3 + $0x1d0] sm:$0xf] %v3389
        %3501 = vst [vmem:[#allocation3 + $0x1f4] sm:$0xf] %v3392
        %3502 = vst [vmem:[#allocation3 + $0x218] sm:$0xf] %v3396
        %3503 = vst [vmem:[#allocation3 + $0x23c] sm:$0xf] %v3399
        %3504 = vst [vmem:[#allocation3 + $0x260] sm:$0xf] %v3403
        %3505 = vst [vmem:[#allocation3 + $0x284] sm:$0xf] %v3406
        %3506 = vst [vmem:[#allocation3 + $0x2a8] sm:$0xf] %v3410
        %3507 = vst [vmem:[#allocation3 + $0x2cc] sm:$0xf] %v3413
        %3508 = vst [vmem:[#allocation3 + $0x2f0] sm:$0xf] %v3417
        %3509 = vst [vmem:[#allocation3 + $0x314] sm:$0xf] %v3420
        %3510 = vst [vmem:[#allocation3 + $0x338] sm:$0xf] %v3424
        %3511 = vst [vmem:[#allocation3 + $0x35c] sm:$0xf] %v3427
        %3512 = vst [vmem:[#allocation3 + $0x380] sm:$0xf] %v3431
        %3513 = vst [vmem:[#allocation3 + $0x3a4] sm:$0xf] %v3434
        %3514 = vst [vmem:[#allocation3 + $0x3c8] sm:$0xf] %v3438
        %3515 = vst [vmem:[#allocation3 + $0x3ec] sm:$0xf] %v3441
        %3516 = vst [vmem:[#allocation3 + $0x410] sm:$0xf] %v3445
        %3517 = vst [vmem:[#allocation3 + $0x434] sm:$0xf] %v3448
        %3518 = vst [vmem:[#allocation3 + $0x458] sm:$0xf] %v3452
        %3519 = vst [vmem:[#allocation3 + $0x47c] sm:$0xf] %v3455
        %v3520 = vld [vmem:[#allocation3] sm:$0xff]
        %v3521 = vld [vmem:[#allocation3 + $0x8] sm:$0xff]
        %v3522 = vld [vmem:[#allocation3 + $0x10] sm:$0xff]
        %v3523 = vld [vmem:[#allocation3 + $0x18] sm:$0xff]
        %v3524 = vld [vmem:[#allocation3 + $0x20] sm:$0xf]
        %v3525 = vld [vmem:[#allocation3 + $0x24] sm:$0xff]
        %v3526 = vld [vmem:[#allocation3 + $0x2c] sm:$0xff]
        %v3527 = vld [vmem:[#allocation3 + $0x34] sm:$0xff]
        %v3528 = vld [vmem:[#allocation3 + $0x3c] sm:$0xff]
        %v3529 = vld [vmem:[#allocation3 + $0x44] sm:$0xf]
        %v3530 = vld [vmem:[#allocation3 + $0x48] sm:$0xff]
        %v3531 = vld [vmem:[#allocation3 + $0x50] sm:$0xff]
        %v3532 = vld [vmem:[#allocation3 + $0x58] sm:$0xff]
        %v3533 = vld [vmem:[#allocation3 + $0x60] sm:$0xff]
        %v3534 = vld [vmem:[#allocation3 + $0x68] sm:$0xf]
        %v3535 = vld [vmem:[#allocation3 + $0x6c] sm:$0xff]
        %v3536 = vld [vmem:[#allocation3 + $0x74] sm:$0xff]
        %v3537 = vld [vmem:[#allocation3 + $0x7c] sm:$0xff]
        %v3538 = vld [vmem:[#allocation3 + $0x84] sm:$0xff]
        %v3539 = vld [vmem:[#allocation3 + $0x8c] sm:$0xf]
        %v3540 = vld [vmem:[#allocation3 + $0x90] sm:$0xff]
        %v3541 = vld [vmem:[#allocation3 + $0x98] sm:$0xff]
        %v3542 = vld [vmem:[#allocation3 + $0xa0] sm:$0xff]
        %v3543 = vld [vmem:[#allocation3 + $0xa8] sm:$0xff]
        %v3544 = vld [vmem:[#allocation3 + $0xb0] sm:$0xf]
        %v3545 = vld [vmem:[#allocation3 + $0xb4] sm:$0xff]
        %v3546 = vld [vmem:[#allocation3 + $0xbc] sm:$0xff]
        %v3547 = vld [vmem:[#allocation3 + $0xc4] sm:$0xff]
        %v3548 = vld [vmem:[#allocation3 + $0xcc] sm:$0xff]
        %v3549 = vld [vmem:[#allocation3 + $0xd4] sm:$0xf]
        %v3550 = vld [vmem:[#allocation3 + $0xd8] sm:$0xff]
        %v3551 = vld [vmem:[#allocation3 + $0xe0] sm:$0xff]
        %v3552 = vld [vmem:[#allocation3 + $0xe8] sm:$0xff]
        %v3553 = vld [vmem:[#allocation3 + $0xf0] sm:$0xff]
        %v3554 = vld [vmem:[#allocation3 + $0xf8] sm:$0xf]
        %v3555 = vld [vmem:[#allocation3 + $0xfc] sm:$0xff]
        %v3556 = vld [vmem:[#allocation3 + $0x104] sm:$0xff]
        %v3557 = vld [vmem:[#allocation3 + $0x10c] sm:$0xff]
        %v3558 = vld [vmem:[#allocation3 + $0x114] sm:$0xff]
        %v3559 = vld [vmem:[#allocation3 + $0x11c] sm:$0xf]
        %v3560 = vld [vmem:[#allocation3 + $0x120] sm:$0xff]
        %v3561 = vld [vmem:[#allocation3 + $0x128] sm:$0xff]
        %v3562 = vld [vmem:[#allocation3 + $0x130] sm:$0xff]
        %v3563 = vld [vmem:[#allocation3 + $0x138] sm:$0xff]
        %v3564 = vld [vmem:[#allocation3 + $0x140] sm:$0xf]
        %v3565 = vld [vmem:[#allocation3 + $0x144] sm:$0xff]
        %v3566 = vld [vmem:[#allocation3 + $0x14c] sm:$0xff]
        %v3567 = vld [vmem:[#allocation3 + $0x154] sm:$0xff]
        %v3568 = vld [vmem:[#allocation3 + $0x15c] sm:$0xff]
        %v3569 = vld [vmem:[#allocation3 + $0x164] sm:$0xf]
        %v3570 = vld [vmem:[#allocation3 + $0x168] sm:$0xff]
        %v3571 = vld [vmem:[#allocation3 + $0x170] sm:$0xff]
        %v3572 = vld [vmem:[#allocation3 + $0x178] sm:$0xff]
        %v3573 = vld [vmem:[#allocation3 + $0x180] sm:$0xff]
        %v3574 = vld [vmem:[#allocation3 + $0x188] sm:$0xf]
        %v3575 = vld [vmem:[#allocation3 + $0x18c] sm:$0xff]
        %v3576 = vld [vmem:[#allocation3 + $0x194] sm:$0xff]
        %v3577 = vld [vmem:[#allocation3 + $0x19c] sm:$0xff]
        %v3578 = vld [vmem:[#allocation3 + $0x1a4] sm:$0xff]
        %v3579 = vld [vmem:[#allocation3 + $0x1ac] sm:$0xf]
        %v3580 = vld [vmem:[#allocation3 + $0x1b0] sm:$0xff]
        %v3581 = vld [vmem:[#allocation3 + $0x1b8] sm:$0xff]
        %v3582 = vld [vmem:[#allocation3 + $0x1c0] sm:$0xff]
        %v3583 = vld [vmem:[#allocation3 + $0x1c8] sm:$0xff]
        %v3584 = vld [vmem:[#allocation3 + $0x1d0] sm:$0xf]
        %v3585 = vld [vmem:[#allocation3 + $0x1d4] sm:$0xff]
        %v3586 = vld [vmem:[#allocation3 + $0x1dc] sm:$0xff]
        %v3587 = vld [vmem:[#allocation3 + $0x1e4] sm:$0xff]
        %v3588 = vld [vmem:[#allocation3 + $0x1ec] sm:$0xff]
        %v3589 = vld [vmem:[#allocation3 + $0x1f4] sm:$0xf]
        %v3590 = vld [vmem:[#allocation3 + $0x1f8] sm:$0xff]
        %v3591 = vld [vmem:[#allocation3 + $0x200] sm:$0xff]
        %v3592 = vld [vmem:[#allocation3 + $0x208] sm:$0xff]
        %v3593 = vld [vmem:[#allocation3 + $0x210] sm:$0xff]
        %v3594 = vld [vmem:[#allocation3 + $0x218] sm:$0xf]
        %v3595 = vld [vmem:[#allocation3 + $0x21c] sm:$0xff]
        %v3596 = vld [vmem:[#allocation3 + $0x224] sm:$0xff]
        %v3597 = vld [vmem:[#allocation3 + $0x22c] sm:$0xff]
        %v3598 = vld [vmem:[#allocation3 + $0x234] sm:$0xff]
        %v3599 = vld [vmem:[#allocation3 + $0x23c] sm:$0xf]
        %v3600 = vld [vmem:[#allocation3 + $0x240] sm:$0xff]
        %v3601 = vld [vmem:[#allocation3 + $0x248] sm:$0xff]
        %v3602 = vld [vmem:[#allocation3 + $0x250] sm:$0xff]
        %v3603 = vld [vmem:[#allocation3 + $0x258] sm:$0xff]
        %v3604 = vld [vmem:[#allocation3 + $0x260] sm:$0xf]
        %v3605 = vld [vmem:[#allocation3 + $0x264] sm:$0xff]
        %v3606 = vld [vmem:[#allocation3 + $0x26c] sm:$0xff]
        %v3607 = vld [vmem:[#allocation3 + $0x274] sm:$0xff]
        %v3608 = vld [vmem:[#allocation3 + $0x27c] sm:$0xff]
        %v3609 = vld [vmem:[#allocation3 + $0x284] sm:$0xf]
        %v3610 = vld [vmem:[#allocation3 + $0x288] sm:$0xff]
        %v3611 = vld [vmem:[#allocation3 + $0x290] sm:$0xff]
        %v3612 = vld [vmem:[#allocation3 + $0x298] sm:$0xff]
        %v3613 = vld [vmem:[#allocation3 + $0x2a0] sm:$0xff]
        %v3614 = vld [vmem:[#allocation3 + $0x2a8] sm:$0xf]
        %v3615 = vld [vmem:[#allocation3 + $0x2ac] sm:$0xff]
        %v3616 = vld [vmem:[#allocation3 + $0x2b4] sm:$0xff]
        %v3617 = vld [vmem:[#allocation3 + $0x2bc] sm:$0xff]
        %v3618 = vld [vmem:[#allocation3 + $0x2c4] sm:$0xff]
        %v3619 = vld [vmem:[#allocation3 + $0x2cc] sm:$0xf]
        %v3620 = vld [vmem:[#allocation3 + $0x2d0] sm:$0xff]
        %v3621 = vld [vmem:[#allocation3 + $0x2d8] sm:$0xff]
        %v3622 = vld [vmem:[#allocation3 + $0x2e0] sm:$0xff]
        %v3623 = vld [vmem:[#allocation3 + $0x2e8] sm:$0xff]
        %v3624 = vld [vmem:[#allocation3 + $0x2f0] sm:$0xf]
        %v3625 = vld [vmem:[#allocation3 + $0x2f4] sm:$0xff]
        %v3626 = vld [vmem:[#allocation3 + $0x2fc] sm:$0xff]
        %v3627 = vld [vmem:[#allocation3 + $0x304] sm:$0xff]
        %v3628 = vld [vmem:[#allocation3 + $0x30c] sm:$0xff]
        %v3629 = vld [vmem:[#allocation3 + $0x314] sm:$0xf]
        %v3630 = vld [vmem:[#allocation3 + $0x318] sm:$0xff]
        %v3631 = vld [vmem:[#allocation3 + $0x320] sm:$0xff]
        %v3632 = vld [vmem:[#allocation3 + $0x328] sm:$0xff]
        %v3633 = vld [vmem:[#allocation3 + $0x330] sm:$0xff]
        %v3634 = vld [vmem:[#allocation3 + $0x338] sm:$0xf]
        %v3635 = vld [vmem:[#allocation3 + $0x33c] sm:$0xff]
        %v3636 = vld [vmem:[#allocation3 + $0x344] sm:$0xff]
        %v3637 = vld [vmem:[#allocation3 + $0x34c] sm:$0xff]
        %v3638 = vld [vmem:[#allocation3 + $0x354] sm:$0xff]
        %v3639 = vld [vmem:[#allocation3 + $0x35c] sm:$0xf]
        %v3640 = vld [vmem:[#allocation3 + $0x360] sm:$0xff]
        %v3641 = vld [vmem:[#allocation3 + $0x368] sm:$0xff]
        %v3642 = vld [vmem:[#allocation3 + $0x370] sm:$0xff]
        %v3643 = vld [vmem:[#allocation3 + $0x378] sm:$0xff]
        %v3644 = vld [vmem:[#allocation3 + $0x380] sm:$0xf]
        %v3645 = vld [vmem:[#allocation3 + $0x384] sm:$0xff]
        %v3646 = vld [vmem:[#allocation3 + $0x38c] sm:$0xff]
        %v3647 = vld [vmem:[#allocation3 + $0x394] sm:$0xff]
        %v3648 = vld [vmem:[#allocation3 + $0x39c] sm:$0xff]
        %v3649 = vld [vmem:[#allocation3 + $0x3a4] sm:$0xf]
        %v3650 = vld [vmem:[#allocation3 + $0x3a8] sm:$0xff]
        %v3651 = vld [vmem:[#allocation3 + $0x3b0] sm:$0xff]
        %v3652 = vld [vmem:[#allocation3 + $0x3b8] sm:$0xff]
        %v3653 = vld [vmem:[#allocation3 + $0x3c0] sm:$0xff]
        %v3654 = vld [vmem:[#allocation3 + $0x3c8] sm:$0xf]
        %v3655 = vld [vmem:[#allocation3 + $0x3cc] sm:$0xff]
        %v3656 = vld [vmem:[#allocation3 + $0x3d4] sm:$0xff]
        %v3657 = vld [vmem:[#allocation3 + $0x3dc] sm:$0xff]
        %v3658 = vld [vmem:[#allocation3 + $0x3e4] sm:$0xff]
        %v3659 = vld [vmem:[#allocation3 + $0x3ec] sm:$0xf]
        %v3660 = vld [vmem:[#allocation3 + $0x3f0] sm:$0xff]
        %v3661 = vld [vmem:[#allocation3 + $0x3f8] sm:$0xff]
        %v3662 = vld [vmem:[#allocation3 + $0x400] sm:$0xff]
        %v3663 = vld [vmem:[#allocation3 + $0x408] sm:$0xff]
        %v3664 = vld [vmem:[#allocation3 + $0x410] sm:$0xf]
        %v3665 = vld [vmem:[#allocation3 + $0x414] sm:$0xff]
        %v3666 = vld [vmem:[#allocation3 + $0x41c] sm:$0xff]
        %v3667 = vld [vmem:[#allocation3 + $0x424] sm:$0xff]
        %v3668 = vld [vmem:[#allocation3 + $0x42c] sm:$0xff]
        %v3669 = vld [vmem:[#allocation3 + $0x434] sm:$0xf]
        %v3670 = vld [vmem:[#allocation3 + $0x438] sm:$0xff]
        %v3671 = vld [vmem:[#allocation3 + $0x440] sm:$0xff]
        %v3672 = vld [vmem:[#allocation3 + $0x448] sm:$0xff]
        %v3673 = vld [vmem:[#allocation3 + $0x450] sm:$0xff]
        %v3674 = vld [vmem:[#allocation3 + $0x458] sm:$0xf]
        %v3675 = vld [vmem:[#allocation3 + $0x45c] sm:$0xff]
        %v3676 = vld [vmem:[#allocation3 + $0x464] sm:$0xff]
        %v3677 = vld [vmem:[#allocation3 + $0x46c] sm:$0xff]
        %v3678 = vld [vmem:[#allocation3 + $0x474] sm:$0xff]
        %v3679 = vld [vmem:[#allocation3 + $0x47c] sm:$0xf]
        %v3680 = vld [vmem:[%s1] sm:$0xf]
        %v3681 = vld [vmem:[%s1 + $0x4] sm:$0xf]
        %v3682 = vld [vmem:[%s1 + $0x8] sm:$0xf]
        %v3683 = vld [vmem:[%s1 + $0xc] sm:$0xf]
        %v3684 = vld [vmem:[%s1 + $0x10] sm:$0xf]
        %v3685 = vld [vmem:[%s1 + $0x14] sm:$0xf]
        %v3686 = vld [vmem:[%s1 + $0x18] sm:$0xf]
        %v3687 = vld [vmem:[%s1 + $0x1c] sm:$0xf]
        %v3688 = vld [vmem:[%s1 + $0x20] sm:$0xf]
        %v3689 = vld [vmem:[%s1 + $0x24] sm:$0xf]
        %v3690 = vld [vmem:[%s1 + $0x28] sm:$0xf]
        %v3691 = vld [vmem:[%s1 + $0x2c] sm:$0xf]
        %v3692 = vld [vmem:[%s1 + $0x30] sm:$0xf]
        %v3693 = vld [vmem:[%s1 + $0x34] sm:$0xf]
        %v3694 = vld [vmem:[%s1 + $0x38] sm:$0xf]
        %v3695 = vld [vmem:[%s1 + $0x3c] sm:$0xf]
        %v3696 = vld [vmem:[%s1 + $0x40] sm:$0xf]
        %v3697 = vld [vmem:[%s1 + $0x44] sm:$0xf]
        %v3698 = vld [vmem:[%s1 + $0x48] sm:$0xf]
        %v3699 = vld [vmem:[%s1 + $0x4c] sm:$0xf]
        %v3700 = vld [vmem:[%s1 + $0x50] sm:$0xf]
        %v3701 = vld [vmem:[%s1 + $0x54] sm:$0xf]
        %v3702 = vld [vmem:[%s1 + $0x58] sm:$0xf]
        %v3703 = vld [vmem:[%s1 + $0x5c] sm:$0xf]
        %v3704 = vld [vmem:[%s1 + $0x60] sm:$0xf]
        %v3705 = vld [vmem:[%s1 + $0x64] sm:$0xf]
        %v3706 = vld [vmem:[%s1 + $0x68] sm:$0xf]
        %v3707 = vld [vmem:[%s1 + $0x6c] sm:$0xf]
        %v3708 = vld [vmem:[%s1 + $0x70] sm:$0xf]
        %v3709 = vld [vmem:[%s1 + $0x74] sm:$0xf]
        %v3710 = vld [vmem:[%s1 + $0x78] sm:$0xf]
        %v3711 = vld [vmem:[%s1 + $0x7c] sm:$0xf]
        %v3712 = vld [vmem:[%s1 + $0x80] sm:$0xf]
        %v3713 = vld [vmem:[%s1 + $0x84] sm:$0xf]
        %v3714 = vld [vmem:[%s1 + $0x88] sm:$0xf]
        %v3715 = vld [vmem:[%s1 + $0x8c] sm:$0xf]
        %v3716 = vld [vmem:[%s1 + $0x90] sm:$0xf]
        %v3717 = vld [vmem:[%s1 + $0x94] sm:$0xf]
        %v3718 = vld [vmem:[%s1 + $0x98] sm:$0xf]
        %v3719 = vld [vmem:[%s1 + $0x9c] sm:$0xf]
        %v3720 = vld [vmem:[%s1 + $0xa0] sm:$0xf]
        %v3721 = vld [vmem:[%s1 + $0xa4] sm:$0xf]
        %v3722 = vld [vmem:[%s1 + $0xa8] sm:$0xf]
        %v3723 = vld [vmem:[%s1 + $0xac] sm:$0xf]
        %v3724 = vld [vmem:[%s1 + $0xb0] sm:$0xf]
        %v3725 = vld [vmem:[%s1 + $0xb4] sm:$0xf]
        %v3726 = vld [vmem:[%s1 + $0xb8] sm:$0xf]
        %v3727 = vld [vmem:[%s1 + $0xbc] sm:$0xf]
        %v3728 = vld [vmem:[%s1 + $0xc0] sm:$0xf]
        %v3729 = vld [vmem:[%s1 + $0xc4] sm:$0xf]
        %v3730 = vld [vmem:[%s1 + $0xc8] sm:$0xf]
        %v3731 = vld [vmem:[%s1 + $0xcc] sm:$0xf]
        %v3732 = vld [vmem:[%s1 + $0xd0] sm:$0xf]
        %v3733 = vld [vmem:[%s1 + $0xd4] sm:$0xf]
        %v3734 = vld [vmem:[%s1 + $0xd8] sm:$0xf]
        %v3735 = vld [vmem:[%s1 + $0xdc] sm:$0xf]
        %v3736 = vld [vmem:[%s1 + $0xe0] sm:$0xf]
        %v3737 = vld [vmem:[%s1 + $0xe4] sm:$0xf]
        %v3738 = vld [vmem:[%s1 + $0xe8] sm:$0xf]
        %v3739 = vld [vmem:[%s1 + $0xec] sm:$0xf]
        %v3740 = vld [vmem:[%s1 + $0xf0] sm:$0xf]
        %v3741 = vld [vmem:[%s1 + $0xf4] sm:$0xf]
        %v3742 = vld [vmem:[%s1 + $0xf8] sm:$0xf]
        %v3743 = vld [vmem:[%s1 + $0xfc] sm:$0xf]
        %v3744 = vld [vmem:[%s1 + $0x100] sm:$0xf]
        %v3745 = vld [vmem:[%s1 + $0x104] sm:$0xf]
        %v3746 = vld [vmem:[%s1 + $0x108] sm:$0xf]
        %v3747 = vld [vmem:[%s1 + $0x10c] sm:$0xf]
        %v3748 = vld [vmem:[%s1 + $0x110] sm:$0xf]
        %v3749 = vld [vmem:[%s1 + $0x114] sm:$0xf]
        %v3750 = vld [vmem:[%s1 + $0x118] sm:$0xf]
        %v3751 = vld [vmem:[%s1 + $0x11c] sm:$0xf]
        %v3752 = vld [vmem:[%s1 + $0x120] sm:$0xf]
        %v3753 = vld [vmem:[%s1 + $0x124] sm:$0xf]
        %v3754 = vld [vmem:[%s1 + $0x128] sm:$0xf]
        %v3755 = vld [vmem:[%s1 + $0x12c] sm:$0xf]
        %v3756 = vld [vmem:[%s1 + $0x130] sm:$0xf]
        %v3757 = vld [vmem:[%s1 + $0x134] sm:$0xf]
        %v3758 = vld [vmem:[%s1 + $0x138] sm:$0xf]
        %v3759 = vld [vmem:[%s1 + $0x13c] sm:$0xf]
        %v3760 = vld [vmem:[%s1 + $0x140] sm:$0xf]
        %v3761 = vld [vmem:[%s1 + $0x144] sm:$0xf]
        %v3762 = vld [vmem:[%s1 + $0x148] sm:$0xf]
        %v3763 = vld [vmem:[%s1 + $0x14c] sm:$0xf]
        %v3764 = vld [vmem:[%s1 + $0x150] sm:$0xf]
        %v3765 = vld [vmem:[%s1 + $0x154] sm:$0xf]
        %v3766 = vld [vmem:[%s1 + $0x158] sm:$0xf]
        %v3767 = vld [vmem:[%s1 + $0x15c] sm:$0xf]
        %v3768 = vld [vmem:[%s1 + $0x160] sm:$0xf]
        %v3769 = vld [vmem:[%s1 + $0x164] sm:$0xf]
        %v3770 = vld [vmem:[%s1 + $0x168] sm:$0xf]
        %v3771 = vld [vmem:[%s1 + $0x16c] sm:$0xf]
        %v3772 = vld [vmem:[%s1 + $0x170] sm:$0xf]
        %v3773 = vld [vmem:[%s1 + $0x174] sm:$0xf]
        %v3774 = vld [vmem:[%s1 + $0x178] sm:$0xf]
        %v3775 = vld [vmem:[%s1 + $0x17c] sm:$0xf]
        %v3776 = vld [vmem:[%s1 + $0x180] sm:$0xf]
        %v3777 = vld [vmem:[%s1 + $0x184] sm:$0xf]
        %v3778 = vld [vmem:[%s1 + $0x188] sm:$0xf]
        %v3779 = vld [vmem:[%s1 + $0x18c] sm:$0xf]
        %v3780 = vld [vmem:[%s1 + $0x190] sm:$0xf]
        %v3781 = vld [vmem:[%s1 + $0x194] sm:$0xf]
        %v3782 = vld [vmem:[%s1 + $0x198] sm:$0xf]
        %v3783 = vld [vmem:[%s1 + $0x19c] sm:$0xf]
        %v3784 = vld [vmem:[%s1 + $0x1a0] sm:$0xf]
        %v3785 = vld [vmem:[%s1 + $0x1a4] sm:$0xf]
        %v3786 = vld [vmem:[%s1 + $0x1a8] sm:$0xf]
        %v3787 = vld [vmem:[%s1 + $0x1ac] sm:$0xf]
        %v3788 = vld [vmem:[%s1 + $0x1b0] sm:$0xf]
        %v3789 = vld [vmem:[%s1 + $0x1b4] sm:$0xf]
        %v3790 = vld [vmem:[%s1 + $0x1b8] sm:$0xf]
        %v3791 = vld [vmem:[%s1 + $0x1bc] sm:$0xf]
        %v3792 = vld [vmem:[%s1 + $0x1c0] sm:$0xf]
        %v3793 = vld [vmem:[%s1 + $0x1c4] sm:$0xf]
        %v3794 = vld [vmem:[%s1 + $0x1c8] sm:$0xf]
        %v3795 = vld [vmem:[%s1 + $0x1cc] sm:$0xf]
        %v3796 = vld [vmem:[%s1 + $0x1d0] sm:$0xf]
        %v3797 = vld [vmem:[%s1 + $0x1d4] sm:$0xf]
        %v3798 = vld [vmem:[%s1 + $0x1d8] sm:$0xf]
        %v3799 = vld [vmem:[%s1 + $0x1dc] sm:$0xf]
        %v3800 = vld [vmem:[%s1 + $0x1e0] sm:$0xf]
        %v3801 = vld [vmem:[%s1 + $0x1e4] sm:$0xf]
        %v3802 = vld [vmem:[%s1 + $0x1e8] sm:$0xf]
        %v3803 = vld [vmem:[%s1 + $0x1ec] sm:$0xf]
        %v3804 = vld [vmem:[%s1 + $0x1f0] sm:$0xf]
        %v3805 = vld [vmem:[%s1 + $0x1f4] sm:$0xf]
        %v3806 = vld [vmem:[%s1 + $0x1f8] sm:$0xf]
        %v3807 = vld [vmem:[%s1 + $0x1fc] sm:$0xf]
        %v3808 = vld [vmem:[%s1 + $0x200] sm:$0xf]
        %v3809 = vld [vmem:[%s1 + $0x204] sm:$0xf]
        %v3810 = vld [vmem:[%s1 + $0x208] sm:$0xf]
        %v3811 = vld [vmem:[%s1 + $0x20c] sm:$0xf]
        %v3812 = vld [vmem:[%s1 + $0x210] sm:$0xf]
        %v3813 = vld [vmem:[%s1 + $0x214] sm:$0xf]
        %v3814 = vld [vmem:[%s1 + $0x218] sm:$0xf]
        %v3815 = vld [vmem:[%s1 + $0x21c] sm:$0xf]
        %v3816 = vld [vmem:[%s1 + $0x220] sm:$0xf]
        %v3817 = vld [vmem:[%s1 + $0x224] sm:$0xf]
        %v3818 = vld [vmem:[%s1 + $0x228] sm:$0xf]
        %v3819 = vld [vmem:[%s1 + $0x22c] sm:$0xf]
        %v3820 = vld [vmem:[%s1 + $0x230] sm:$0xf]
        %v3821 = vld [vmem:[%s1 + $0x234] sm:$0xf]
        %v3822 = vld [vmem:[%s1 + $0x238] sm:$0xf]
        %v3823 = vld [vmem:[%s1 + $0x23c] sm:$0xf]
        %v3824 = vld [vmem:[%s2] sm:$0x1]
        %v3826 = vperm.slane %v3824, 0
        %v3988 = vunpack.c.l.b16 %v3520
        %v3989 = vunpack.c.h.b16 %v3520
        %v3990 = vunpack.c.l.b16 %v3521
        %v3991 = vunpack.c.h.b16 %v3521
        %v3992 = vunpack.c.l.b16 %v3522
        %v3993 = vunpack.c.h.b16 %v3522
        %v3994 = vunpack.c.l.b16 %v3523
        %v3995 = vunpack.c.h.b16 %v3523
        %v3996 = vunpack.c.l.b16 %v3524
        %v3997 = vunpack.c.l.b16 %v3525
        %v3998 = vunpack.c.h.b16 %v3525
        %v3999 = vunpack.c.l.b16 %v3526
        %v4000 = vunpack.c.h.b16 %v3526
        %v4001 = vunpack.c.l.b16 %v3527
        %v4002 = vunpack.c.h.b16 %v3527
        %v4003 = vunpack.c.l.b16 %v3528
        %v4004 = vunpack.c.h.b16 %v3528
        %v4005 = vunpack.c.l.b16 %v3529
        %v4006 = vunpack.c.l.b16 %v3530
        %v4007 = vunpack.c.h.b16 %v3530
        %v4008 = vunpack.c.l.b16 %v3531
        %v4009 = vunpack.c.h.b16 %v3531
        %v4010 = vunpack.c.l.b16 %v3532
        %v4011 = vunpack.c.h.b16 %v3532
        %v4012 = vunpack.c.l.b16 %v3533
        %v4013 = vunpack.c.h.b16 %v3533
        %v4014 = vunpack.c.l.b16 %v3534
        %v4015 = vunpack.c.l.b16 %v3535
        %v4016 = vunpack.c.h.b16 %v3535
        %v4017 = vunpack.c.l.b16 %v3536
        %v4018 = vunpack.c.h.b16 %v3536
        %v4019 = vunpack.c.l.b16 %v3537
        %v4020 = vunpack.c.h.b16 %v3537
        %v4021 = vunpack.c.l.b16 %v3538
        %v4022 = vunpack.c.h.b16 %v3538
        %v4023 = vunpack.c.l.b16 %v3539
        %v4024 = vunpack.c.l.b16 %v3540
        %v4025 = vunpack.c.h.b16 %v3540
        %v4026 = vunpack.c.l.b16 %v3541
        %v4027 = vunpack.c.h.b16 %v3541
        %v4028 = vunpack.c.l.b16 %v3542
        %v4029 = vunpack.c.h.b16 %v3542
        %v4030 = vunpack.c.l.b16 %v3543
        %v4031 = vunpack.c.h.b16 %v3543
        %v4032 = vunpack.c.l.b16 %v3544
        %v4033 = vunpack.c.l.b16 %v3545
        %v4034 = vunpack.c.h.b16 %v3545
        %v4035 = vunpack.c.l.b16 %v3546
        %v4036 = vunpack.c.h.b16 %v3546
        %v4037 = vunpack.c.l.b16 %v3547
        %v4038 = vunpack.c.h.b16 %v3547
        %v4039 = vunpack.c.l.b16 %v3548
        %v4040 = vunpack.c.h.b16 %v3548
        %v4041 = vunpack.c.l.b16 %v3549
        %v4042 = vunpack.c.l.b16 %v3550
        %v4043 = vunpack.c.h.b16 %v3550
        %v4044 = vunpack.c.l.b16 %v3551
        %v4045 = vunpack.c.h.b16 %v3551
        %v4046 = vunpack.c.l.b16 %v3552
        %v4047 = vunpack.c.h.b16 %v3552
        %v4048 = vunpack.c.l.b16 %v3553
        %v4049 = vunpack.c.h.b16 %v3553
        %v4050 = vunpack.c.l.b16 %v3554
        %v4051 = vunpack.c.l.b16 %v3555
        %v4052 = vunpack.c.h.b16 %v3555
        %v4053 = vunpack.c.l.b16 %v3556
        %v4054 = vunpack.c.h.b16 %v3556
        %v4055 = vunpack.c.l.b16 %v3557
        %v4056 = vunpack.c.h.b16 %v3557
        %v4057 = vunpack.c.l.b16 %v3558
        %v4058 = vunpack.c.h.b16 %v3558
        %v4059 = vunpack.c.l.b16 %v3559
        %v4060 = vunpack.c.l.b16 %v3560
        %v4061 = vunpack.c.h.b16 %v3560
        %v4062 = vunpack.c.l.b16 %v3561
        %v4063 = vunpack.c.h.b16 %v3561
        %v4064 = vunpack.c.l.b16 %v3562
        %v4065 = vunpack.c.h.b16 %v3562
        %v4066 = vunpack.c.l.b16 %v3563
        %v4067 = vunpack.c.h.b16 %v3563
        %v4068 = vunpack.c.l.b16 %v3564
        %v4069 = vunpack.c.l.b16 %v3565
        %v4070 = vunpack.c.h.b16 %v3565
        %v4071 = vunpack.c.l.b16 %v3566
        %v4072 = vunpack.c.h.b16 %v3566
        %v4073 = vunpack.c.l.b16 %v3567
        %v4074 = vunpack.c.h.b16 %v3567
        %v4075 = vunpack.c.l.b16 %v3568
        %v4076 = vunpack.c.h.b16 %v3568
        %v4077 = vunpack.c.l.b16 %v3569
        %v4078 = vunpack.c.l.b16 %v3570
        %v4079 = vunpack.c.h.b16 %v3570
        %v4080 = vunpack.c.l.b16 %v3571
        %v4081 = vunpack.c.h.b16 %v3571
        %v4082 = vunpack.c.l.b16 %v3572
        %v4083 = vunpack.c.h.b16 %v3572
        %v4084 = vunpack.c.l.b16 %v3573
        %v4085 = vunpack.c.h.b16 %v3573
        %v4086 = vunpack.c.l.b16 %v3574
        %v4087 = vunpack.c.l.b16 %v3575
        %v4088 = vunpack.c.h.b16 %v3575
        %v4089 = vunpack.c.l.b16 %v3576
        %v4090 = vunpack.c.h.b16 %v3576
        %v4091 = vunpack.c.l.b16 %v3577
        %v4092 = vunpack.c.h.b16 %v3577
        %v4093 = vunpack.c.l.b16 %v3578
        %v4094 = vunpack.c.h.b16 %v3578
        %v4095 = vunpack.c.l.b16 %v3579
        %v4096 = vunpack.c.l.b16 %v3580
        %v4097 = vunpack.c.h.b16 %v3580
        %v4098 = vunpack.c.l.b16 %v3581
        %v4099 = vunpack.c.h.b16 %v3581
        %v4100 = vunpack.c.l.b16 %v3582
        %v4101 = vunpack.c.h.b16 %v3582
        %v4102 = vunpack.c.l.b16 %v3583
        %v4103 = vunpack.c.h.b16 %v3583
        %v4104 = vunpack.c.l.b16 %v3584
        %v4105 = vunpack.c.l.b16 %v3585
        %v4106 = vunpack.c.h.b16 %v3585
        %v4107 = vunpack.c.l.b16 %v3586
        %v4108 = vunpack.c.h.b16 %v3586
        %v4109 = vunpack.c.l.b16 %v3587
        %v4110 = vunpack.c.h.b16 %v3587
        %v4111 = vunpack.c.l.b16 %v3588
        %v4112 = vunpack.c.h.b16 %v3588
        %v4113 = vunpack.c.l.b16 %v3589
        %v4114 = vunpack.c.l.b16 %v3590
        %v4115 = vunpack.c.h.b16 %v3590
        %v4116 = vunpack.c.l.b16 %v3591
        %v4117 = vunpack.c.h.b16 %v3591
        %v4118 = vunpack.c.l.b16 %v3592
        %v4119 = vunpack.c.h.b16 %v3592
        %v4120 = vunpack.c.l.b16 %v3593
        %v4121 = vunpack.c.h.b16 %v3593
        %v4122 = vunpack.c.l.b16 %v3594
        %v4123 = vunpack.c.l.b16 %v3595
        %v4124 = vunpack.c.h.b16 %v3595
        %v4125 = vunpack.c.l.b16 %v3596
        %v4126 = vunpack.c.h.b16 %v3596
        %v4127 = vunpack.c.l.b16 %v3597
        %v4128 = vunpack.c.h.b16 %v3597
        %v4129 = vunpack.c.l.b16 %v3598
        %v4130 = vunpack.c.h.b16 %v3598
        %v4131 = vunpack.c.l.b16 %v3599
        %v4132 = vunpack.c.l.b16 %v3600
        %v4133 = vunpack.c.h.b16 %v3600
        %v4134 = vunpack.c.l.b16 %v3601
        %v4135 = vunpack.c.h.b16 %v3601
        %v4136 = vunpack.c.l.b16 %v3602
        %v4137 = vunpack.c.h.b16 %v3602
        %v4138 = vunpack.c.l.b16 %v3603
        %v4139 = vunpack.c.h.b16 %v3603
        %v4140 = vunpack.c.l.b16 %v3604
        %v4141 = vunpack.c.l.b16 %v3605
        %v4142 = vunpack.c.h.b16 %v3605
        %v4143 = vunpack.c.l.b16 %v3606
        %v4144 = vunpack.c.h.b16 %v3606
        %v4145 = vunpack.c.l.b16 %v3607
        %v4146 = vunpack.c.h.b16 %v3607
        %v4147 = vunpack.c.l.b16 %v3608
        %v4148 = vunpack.c.h.b16 %v3608
        %v4149 = vunpack.c.l.b16 %v3609
        %v4150 = vunpack.c.l.b16 %v3610
        %v4151 = vunpack.c.h.b16 %v3610
        %v4152 = vunpack.c.l.b16 %v3611
        %v4153 = vunpack.c.h.b16 %v3611
        %v4154 = vunpack.c.l.b16 %v3612
        %v4155 = vunpack.c.h.b16 %v3612
        %v4156 = vunpack.c.l.b16 %v3613
        %v4157 = vunpack.c.h.b16 %v3613
        %v4158 = vunpack.c.l.b16 %v3614
        %v4159 = vunpack.c.l.b16 %v3615
        %v4160 = vunpack.c.h.b16 %v3615
        %v4161 = vunpack.c.l.b16 %v3616
        %v4162 = vunpack.c.h.b16 %v3616
        %v4163 = vunpack.c.l.b16 %v3617
        %v4164 = vunpack.c.h.b16 %v3617
        %v4165 = vunpack.c.l.b16 %v3618
        %v4166 = vunpack.c.h.b16 %v3618
        %v4167 = vunpack.c.l.b16 %v3619
        %v4168 = vunpack.c.l.b16 %v3620
        %v4169 = vunpack.c.h.b16 %v3620
        %v4170 = vunpack.c.l.b16 %v3621
        %v4171 = vunpack.c.h.b16 %v3621
        %v4172 = vunpack.c.l.b16 %v3622
        %v4173 = vunpack.c.h.b16 %v3622
        %v4174 = vunpack.c.l.b16 %v3623
        %v4175 = vunpack.c.h.b16 %v3623
        %v4176 = vunpack.c.l.b16 %v3624
        %v4177 = vunpack.c.l.b16 %v3625
        %v4178 = vunpack.c.h.b16 %v3625
        %v4179 = vunpack.c.l.b16 %v3626
        %v4180 = vunpack.c.h.b16 %v3626
        %v4181 = vunpack.c.l.b16 %v3627
        %v4182 = vunpack.c.h.b16 %v3627
        %v4183 = vunpack.c.l.b16 %v3628
        %v4184 = vunpack.c.h.b16 %v3628
        %v4185 = vunpack.c.l.b16 %v3629
        %v4186 = vunpack.c.l.b16 %v3630
        %v4187 = vunpack.c.h.b16 %v3630
        %v4188 = vunpack.c.l.b16 %v3631
        %v4189 = vunpack.c.h.b16 %v3631
        %v4190 = vunpack.c.l.b16 %v3632
        %v4191 = vunpack.c.h.b16 %v3632
        %v4192 = vunpack.c.l.b16 %v3633
        %v4193 = vunpack.c.h.b16 %v3633
        %v4194 = vunpack.c.l.b16 %v3634
        %v4195 = vunpack.c.l.b16 %v3635
        %v4196 = vunpack.c.h.b16 %v3635
        %v4197 = vunpack.c.l.b16 %v3636
        %v4198 = vunpack.c.h.b16 %v3636
        %v4199 = vunpack.c.l.b16 %v3637
        %v4200 = vunpack.c.h.b16 %v3637
        %v4201 = vunpack.c.l.b16 %v3638
        %v4202 = vunpack.c.h.b16 %v3638
        %v4203 = vunpack.c.l.b16 %v3639
        %v4204 = vunpack.c.l.b16 %v3640
        %v4205 = vunpack.c.h.b16 %v3640
        %v4206 = vunpack.c.l.b16 %v3641
        %v4207 = vunpack.c.h.b16 %v3641
        %v4208 = vunpack.c.l.b16 %v3642
        %v4209 = vunpack.c.h.b16 %v3642
        %v4210 = vunpack.c.l.b16 %v3643
        %v4211 = vunpack.c.h.b16 %v3643
        %v4212 = vunpack.c.l.b16 %v3644
        %v4213 = vunpack.c.l.b16 %v3645
        %v4214 = vunpack.c.h.b16 %v3645
        %v4215 = vunpack.c.l.b16 %v3646
        %v4216 = vunpack.c.h.b16 %v3646
        %v4217 = vunpack.c.l.b16 %v3647
        %v4218 = vunpack.c.h.b16 %v3647
        %v4219 = vunpack.c.l.b16 %v3648
        %v4220 = vunpack.c.h.b16 %v3648
        %v4221 = vunpack.c.l.b16 %v3649
        %v4222 = vunpack.c.l.b16 %v3650
        %v4223 = vunpack.c.h.b16 %v3650
        %v4224 = vunpack.c.l.b16 %v3651
        %v4225 = vunpack.c.h.b16 %v3651
        %v4226 = vunpack.c.l.b16 %v3652
        %v4227 = vunpack.c.h.b16 %v3652
        %v4228 = vunpack.c.l.b16 %v3653
        %v4229 = vunpack.c.h.b16 %v3653
        %v4230 = vunpack.c.l.b16 %v3654
        %v4231 = vunpack.c.l.b16 %v3655
        %v4232 = vunpack.c.h.b16 %v3655
        %v4233 = vunpack.c.l.b16 %v3656
        %v4234 = vunpack.c.h.b16 %v3656
        %v4235 = vunpack.c.l.b16 %v3657
        %v4236 = vunpack.c.h.b16 %v3657
        %v4237 = vunpack.c.l.b16 %v3658
        %v4238 = vunpack.c.h.b16 %v3658
        %v4239 = vunpack.c.l.b16 %v3659
        %v4240 = vunpack.c.l.b16 %v3660
        %v4241 = vunpack.c.h.b16 %v3660
        %v4242 = vunpack.c.l.b16 %v3661
        %v4243 = vunpack.c.h.b16 %v3661
        %v4244 = vunpack.c.l.b16 %v3662
        %v4245 = vunpack.c.h.b16 %v3662
        %v4246 = vunpack.c.l.b16 %v3663
        %v4247 = vunpack.c.h.b16 %v3663
        %v4248 = vunpack.c.l.b16 %v3664
        %v4249 = vunpack.c.l.b16 %v3665
        %v4250 = vunpack.c.h.b16 %v3665
        %v4251 = vunpack.c.l.b16 %v3666
        %v4252 = vunpack.c.h.b16 %v3666
        %v4253 = vunpack.c.l.b16 %v3667
        %v4254 = vunpack.c.h.b16 %v3667
        %v4255 = vunpack.c.l.b16 %v3668
        %v4256 = vunpack.c.h.b16 %v3668
        %v4257 = vunpack.c.l.b16 %v3669
        %v4258 = vunpack.c.l.b16 %v3670
        %v4259 = vunpack.c.h.b16 %v3670
        %v4260 = vunpack.c.l.b16 %v3671
        %v4261 = vunpack.c.h.b16 %v3671
        %v4262 = vunpack.c.l.b16 %v3672
        %v4263 = vunpack.c.h.b16 %v3672
        %v4264 = vunpack.c.l.b16 %v3673
        %v4265 = vunpack.c.h.b16 %v3673
        %v4266 = vunpack.c.l.b16 %v3674
        %v4267 = vunpack.c.l.b16 %v3675
        %v4268 = vunpack.c.h.b16 %v3675
        %v4269 = vunpack.c.l.b16 %v3676
        %v4270 = vunpack.c.h.b16 %v3676
        %v4271 = vunpack.c.l.b16 %v3677
        %v4272 = vunpack.c.h.b16 %v3677
        %v4273 = vunpack.c.l.b16 %v3678
        %v4274 = vunpack.c.h.b16 %v3678
        %v4275 = vunpack.c.l.b16 %v3679
        %v4276 = vpack.c.b16 %v3997, %v3988
        %v4277 = vpack.c.b16 %v3998, %v3989
        %v4278 = vpack.c.b16 %v3999, %v3990
        %v4279 = vpack.c.b16 %v4000, %v3991
        %v4280 = vpack.c.b16 %v4001, %v3992
        %v4281 = vpack.c.b16 %v4002, %v3993
        %v4282 = vpack.c.b16 %v4003, %v3994
        %v4283 = vpack.c.b16 %v4004, %v3995
        %v4284 = vpack.c.b16 %v4005, %v3996
        %v4285 = vpack.c.b16 %v4015, %v4006
        %v4286 = vpack.c.b16 %v4016, %v4007
        %v4287 = vpack.c.b16 %v4017, %v4008
        %v4288 = vpack.c.b16 %v4018, %v4009
        %v4289 = vpack.c.b16 %v4019, %v4010
        %v4290 = vpack.c.b16 %v4020, %v4011
        %v4291 = vpack.c.b16 %v4021, %v4012
        %v4292 = vpack.c.b16 %v4022, %v4013
        %v4293 = vpack.c.b16 %v4023, %v4014
        %v4294 = vpack.c.b16 %v4033, %v4024
        %v4295 = vpack.c.b16 %v4034, %v4025
        %v4296 = vpack.c.b16 %v4035, %v4026
        %v4297 = vpack.c.b16 %v4036, %v4027
        %v4298 = vpack.c.b16 %v4037, %v4028
        %v4299 = vpack.c.b16 %v4038, %v4029
        %v4300 = vpack.c.b16 %v4039, %v4030
        %v4301 = vpack.c.b16 %v4040, %v4031
        %v4302 = vpack.c.b16 %v4041, %v4032
        %v4303 = vpack.c.b16 %v4051, %v4042
        %v4304 = vpack.c.b16 %v4052, %v4043
        %v4305 = vpack.c.b16 %v4053, %v4044
        %v4306 = vpack.c.b16 %v4054, %v4045
        %v4307 = vpack.c.b16 %v4055, %v4046
        %v4308 = vpack.c.b16 %v4056, %v4047
        %v4309 = vpack.c.b16 %v4057, %v4048
        %v4310 = vpack.c.b16 %v4058, %v4049
        %v4311 = vpack.c.b16 %v4059, %v4050
        %v4312 = vpack.c.b16 %v4069, %v4060
        %v4313 = vpack.c.b16 %v4070, %v4061
        %v4314 = vpack.c.b16 %v4071, %v4062
        %v4315 = vpack.c.b16 %v4072, %v4063
        %v4316 = vpack.c.b16 %v4073, %v4064
        %v4317 = vpack.c.b16 %v4074, %v4065
        %v4318 = vpack.c.b16 %v4075, %v4066
        %v4319 = vpack.c.b16 %v4076, %v4067
        %v4320 = vpack.c.b16 %v4077, %v4068
        %v4321 = vpack.c.b16 %v4087, %v4078
        %v4322 = vpack.c.b16 %v4088, %v4079
        %v4323 = vpack.c.b16 %v4089, %v4080
        %v4324 = vpack.c.b16 %v4090, %v4081
        %v4325 = vpack.c.b16 %v4091, %v4082
        %v4326 = vpack.c.b16 %v4092, %v4083
        %v4327 = vpack.c.b16 %v4093, %v4084
        %v4328 = vpack.c.b16 %v4094, %v4085
        %v4329 = vpack.c.b16 %v4095, %v4086
        %v4330 = vpack.c.b16 %v4105, %v4096
        %v4331 = vpack.c.b16 %v4106, %v4097
        %v4332 = vpack.c.b16 %v4107, %v4098
        %v4333 = vpack.c.b16 %v4108, %v4099
        %v4334 = vpack.c.b16 %v4109, %v4100
        %v4335 = vpack.c.b16 %v4110, %v4101
        %v4336 = vpack.c.b16 %v4111, %v4102
        %v4337 = vpack.c.b16 %v4112, %v4103
        %v4338 = vpack.c.b16 %v4113, %v4104
        %v4339 = vpack.c.b16 %v4123, %v4114
        %v4340 = vpack.c.b16 %v4124, %v4115
        %v4341 = vpack.c.b16 %v4125, %v4116
        %v4342 = vpack.c.b16 %v4126, %v4117
        %v4343 = vpack.c.b16 %v4127, %v4118
        %v4344 = vpack.c.b16 %v4128, %v4119
        %v4345 = vpack.c.b16 %v4129, %v4120
        %v4346 = vpack.c.b16 %v4130, %v4121
        %v4347 = vpack.c.b16 %v4131, %v4122
        %v4348 = vpack.c.b16 %v4141, %v4132
        %v4349 = vpack.c.b16 %v4142, %v4133
        %v4350 = vpack.c.b16 %v4143, %v4134
        %v4351 = vpack.c.b16 %v4144, %v4135
        %v4352 = vpack.c.b16 %v4145, %v4136
        %v4353 = vpack.c.b16 %v4146, %v4137
        %v4354 = vpack.c.b16 %v4147, %v4138
        %v4355 = vpack.c.b16 %v4148, %v4139
        %v4356 = vpack.c.b16 %v4149, %v4140
        %v4357 = vpack.c.b16 %v4159, %v4150
        %v4358 = vpack.c.b16 %v4160, %v4151
        %v4359 = vpack.c.b16 %v4161, %v4152
        %v4360 = vpack.c.b16 %v4162, %v4153
        %v4361 = vpack.c.b16 %v4163, %v4154
        %v4362 = vpack.c.b16 %v4164, %v4155
        %v4363 = vpack.c.b16 %v4165, %v4156
        %v4364 = vpack.c.b16 %v4166, %v4157
        %v4365 = vpack.c.b16 %v4167, %v4158
        %v4366 = vpack.c.b16 %v4177, %v4168
        %v4367 = vpack.c.b16 %v4178, %v4169
        %v4368 = vpack.c.b16 %v4179, %v4170
        %v4369 = vpack.c.b16 %v4180, %v4171
        %v4370 = vpack.c.b16 %v4181, %v4172
        %v4371 = vpack.c.b16 %v4182, %v4173
        %v4372 = vpack.c.b16 %v4183, %v4174
        %v4373 = vpack.c.b16 %v4184, %v4175
        %v4374 = vpack.c.b16 %v4185, %v4176
        %v4375 = vpack.c.b16 %v4195, %v4186
        %v4376 = vpack.c.b16 %v4196, %v4187
        %v4377 = vpack.c.b16 %v4197, %v4188
        %v4378 = vpack.c.b16 %v4198, %v4189
        %v4379 = vpack.c.b16 %v4199, %v4190
        %v4380 = vpack.c.b16 %v4200, %v4191
        %v4381 = vpack.c.b16 %v4201, %v4192
        %v4382 = vpack.c.b16 %v4202, %v4193
        %v4383 = vpack.c.b16 %v4203, %v4194
        %v4384 = vpack.c.b16 %v4213, %v4204
        %v4385 = vpack.c.b16 %v4214, %v4205
        %v4386 = vpack.c.b16 %v4215, %v4206
        %v4387 = vpack.c.b16 %v4216, %v4207
        %v4388 = vpack.c.b16 %v4217, %v4208
        %v4389 = vpack.c.b16 %v4218, %v4209
        %v4390 = vpack.c.b16 %v4219, %v4210
        %v4391 = vpack.c.b16 %v4220, %v4211
        %v4392 = vpack.c.b16 %v4221, %v4212
        %v4393 = vpack.c.b16 %v4231, %v4222
        %v4394 = vpack.c.b16 %v4232, %v4223
        %v4395 = vpack.c.b16 %v4233, %v4224
        %v4396 = vpack.c.b16 %v4234, %v4225
        %v4397 = vpack.c.b16 %v4235, %v4226
        %v4398 = vpack.c.b16 %v4236, %v4227
        %v4399 = vpack.c.b16 %v4237, %v4228
        %v4400 = vpack.c.b16 %v4238, %v4229
        %v4401 = vpack.c.b16 %v4239, %v4230
        %v4402 = vpack.c.b16 %v4249, %v4240
        %v4403 = vpack.c.b16 %v4250, %v4241
        %v4404 = vpack.c.b16 %v4251, %v4242
        %v4405 = vpack.c.b16 %v4252, %v4243
        %v4406 = vpack.c.b16 %v4253, %v4244
        %v4407 = vpack.c.b16 %v4254, %v4245
        %v4408 = vpack.c.b16 %v4255, %v4246
        %v4409 = vpack.c.b16 %v4256, %v4247
        %v4410 = vpack.c.b16 %v4257, %v4248
        %v4411 = vpack.c.b16 %v4267, %v4258
        %v4412 = vpack.c.b16 %v4268, %v4259
        %v4413 = vpack.c.b16 %v4269, %v4260
        %v4414 = vpack.c.b16 %v4270, %v4261
        %v4415 = vpack.c.b16 %v4271, %v4262
        %v4416 = vpack.c.b16 %v4272, %v4263
        %v4417 = vpack.c.b16 %v4273, %v4264
        %v4418 = vpack.c.b16 %v4274, %v4265
        %v4419 = vpack.c.b16 %v4275, %v4266
        %v4708 = vunpack.c.l.b16 %v3680
        %v4709 = vunpack.c.l.b16 %v3681
        %v4710 = vunpack.c.l.b16 %v3682
        %v4711 = vunpack.c.l.b16 %v3683
        %v4712 = vunpack.c.l.b16 %v3684
        %v4713 = vunpack.c.l.b16 %v3685
        %v4714 = vunpack.c.l.b16 %v3686
        %v4715 = vunpack.c.l.b16 %v3687
        %v4716 = vunpack.c.l.b16 %v3688
        %v4717 = vunpack.c.l.b16 %v3689
        %v4718 = vunpack.c.l.b16 %v3690
        %v4719 = vunpack.c.l.b16 %v3691
        %v4720 = vunpack.c.l.b16 %v3692
        %v4721 = vunpack.c.l.b16 %v3693
        %v4722 = vunpack.c.l.b16 %v3694
        %v4723 = vunpack.c.l.b16 %v3695
        %v4724 = vunpack.c.l.b16 %v3696
        %v4725 = vunpack.c.l.b16 %v3697
        %v4726 = vunpack.c.l.b16 %v3698
        %v4727 = vunpack.c.l.b16 %v3699
        %v4728 = vunpack.c.l.b16 %v3700
        %v4729 = vunpack.c.l.b16 %v3701
        %v4730 = vunpack.c.l.b16 %v3702
        %v4731 = vunpack.c.l.b16 %v3703
        %v4732 = vunpack.c.l.b16 %v3704
        %v4733 = vunpack.c.l.b16 %v3705
        %v4734 = vunpack.c.l.b16 %v3706
        %v4735 = vunpack.c.l.b16 %v3707
        %v4736 = vunpack.c.l.b16 %v3708
        %v4737 = vunpack.c.l.b16 %v3709
        %v4738 = vunpack.c.l.b16 %v3710
        %v4739 = vunpack.c.l.b16 %v3711
        %v4740 = vunpack.c.l.b16 %v3712
        %v4741 = vunpack.c.l.b16 %v3713
        %v4742 = vunpack.c.l.b16 %v3714
        %v4743 = vunpack.c.l.b16 %v3715
        %v4744 = vunpack.c.l.b16 %v3716
        %v4745 = vunpack.c.l.b16 %v3717
        %v4746 = vunpack.c.l.b16 %v3718
        %v4747 = vunpack.c.l.b16 %v3719
        %v4748 = vunpack.c.l.b16 %v3720
        %v4749 = vunpack.c.l.b16 %v3721
        %v4750 = vunpack.c.l.b16 %v3722
        %v4751 = vunpack.c.l.b16 %v3723
        %v4752 = vunpack.c.l.b16 %v3724
        %v4753 = vunpack.c.l.b16 %v3725
        %v4754 = vunpack.c.l.b16 %v3726
        %v4755 = vunpack.c.l.b16 %v3727
        %v4756 = vunpack.c.l.b16 %v3728
        %v4757 = vunpack.c.l.b16 %v3729
        %v4758 = vunpack.c.l.b16 %v3730
        %v4759 = vunpack.c.l.b16 %v3731
        %v4760 = vunpack.c.l.b16 %v3732
        %v4761 = vunpack.c.l.b16 %v3733
        %v4762 = vunpack.c.l.b16 %v3734
        %v4763 = vunpack.c.l.b16 %v3735
        %v4764 = vunpack.c.l.b16 %v3736
        %v4765 = vunpack.c.l.b16 %v3737
        %v4766 = vunpack.c.l.b16 %v3738
        %v4767 = vunpack.c.l.b16 %v3739
        %v4768 = vunpack.c.l.b16 %v3740
        %v4769 = vunpack.c.l.b16 %v3741
        %v4770 = vunpack.c.l.b16 %v3742
        %v4771 = vunpack.c.l.b16 %v3743
        %v4772 = vunpack.c.l.b16 %v3744
        %v4773 = vunpack.c.l.b16 %v3745
        %v4774 = vunpack.c.l.b16 %v3746
        %v4775 = vunpack.c.l.b16 %v3747
        %v4776 = vunpack.c.l.b16 %v3748
        %v4777 = vunpack.c.l.b16 %v3749
        %v4778 = vunpack.c.l.b16 %v3750
        %v4779 = vunpack.c.l.b16 %v3751
        %v4780 = vunpack.c.l.b16 %v3752
        %v4781 = vunpack.c.l.b16 %v3753
        %v4782 = vunpack.c.l.b16 %v3754
        %v4783 = vunpack.c.l.b16 %v3755
        %v4784 = vunpack.c.l.b16 %v3756
        %v4785 = vunpack.c.l.b16 %v3757
        %v4786 = vunpack.c.l.b16 %v3758
        %v4787 = vunpack.c.l.b16 %v3759
        %v4788 = vunpack.c.l.b16 %v3760
        %v4789 = vunpack.c.l.b16 %v3761
        %v4790 = vunpack.c.l.b16 %v3762
        %v4791 = vunpack.c.l.b16 %v3763
        %v4792 = vunpack.c.l.b16 %v3764
        %v4793 = vunpack.c.l.b16 %v3765
        %v4794 = vunpack.c.l.b16 %v3766
        %v4795 = vunpack.c.l.b16 %v3767
        %v4796 = vunpack.c.l.b16 %v3768
        %v4797 = vunpack.c.l.b16 %v3769
        %v4798 = vunpack.c.l.b16 %v3770
        %v4799 = vunpack.c.l.b16 %v3771
        %v4800 = vunpack.c.l.b16 %v3772
        %v4801 = vunpack.c.l.b16 %v3773
        %v4802 = vunpack.c.l.b16 %v3774
        %v4803 = vunpack.c.l.b16 %v3775
        %v4804 = vunpack.c.l.b16 %v3776
        %v4805 = vunpack.c.l.b16 %v3777
        %v4806 = vunpack.c.l.b16 %v3778
        %v4807 = vunpack.c.l.b16 %v3779
        %v4808 = vunpack.c.l.b16 %v3780
        %v4809 = vunpack.c.l.b16 %v3781
        %v4810 = vunpack.c.l.b16 %v3782
        %v4811 = vunpack.c.l.b16 %v3783
        %v4812 = vunpack.c.l.b16 %v3784
        %v4813 = vunpack.c.l.b16 %v3785
        %v4814 = vunpack.c.l.b16 %v3786
        %v4815 = vunpack.c.l.b16 %v3787
        %v4816 = vunpack.c.l.b16 %v3788
        %v4817 = vunpack.c.l.b16 %v3789
        %v4818 = vunpack.c.l.b16 %v3790
        %v4819 = vunpack.c.l.b16 %v3791
        %v4820 = vunpack.c.l.b16 %v3792
        %v4821 = vunpack.c.l.b16 %v3793
        %v4822 = vunpack.c.l.b16 %v3794
        %v4823 = vunpack.c.l.b16 %v3795
        %v4824 = vunpack.c.l.b16 %v3796
        %v4825 = vunpack.c.l.b16 %v3797
        %v4826 = vunpack.c.l.b16 %v3798
        %v4827 = vunpack.c.l.b16 %v3799
        %v4828 = vunpack.c.l.b16 %v3800
        %v4829 = vunpack.c.l.b16 %v3801
        %v4830 = vunpack.c.l.b16 %v3802
        %v4831 = vunpack.c.l.b16 %v3803
        %v4832 = vunpack.c.l.b16 %v3804
        %v4833 = vunpack.c.l.b16 %v3805
        %v4834 = vunpack.c.l.b16 %v3806
        %v4835 = vunpack.c.l.b16 %v3807
        %v4836 = vunpack.c.l.b16 %v3808
        %v4837 = vunpack.c.l.b16 %v3809
        %v4838 = vunpack.c.l.b16 %v3810
        %v4839 = vunpack.c.l.b16 %v3811
        %v4840 = vunpack.c.l.b16 %v3812
        %v4841 = vunpack.c.l.b16 %v3813
        %v4842 = vunpack.c.l.b16 %v3814
        %v4843 = vunpack.c.l.b16 %v3815
        %v4844 = vunpack.c.l.b16 %v3816
        %v4845 = vunpack.c.l.b16 %v3817
        %v4846 = vunpack.c.l.b16 %v3818
        %v4847 = vunpack.c.l.b16 %v3819
        %v4848 = vunpack.c.l.b16 %v3820
        %v4849 = vunpack.c.l.b16 %v3821
        %v4850 = vunpack.c.l.b16 %v3822
        %v4851 = vunpack.c.l.b16 %v3823
        %v4852 = vpack.c.b16 %v4709, %v4708
        %v4853 = vpack.c.b16 %v4711, %v4710
        %v4854 = vpack.c.b16 %v4713, %v4712
        %v4855 = vpack.c.b16 %v4715, %v4714
        %v4856 = vpack.c.b16 %v4717, %v4716
        %v4857 = vpack.c.b16 %v4719, %v4718
        %v4858 = vpack.c.b16 %v4721, %v4720
        %v4859 = vpack.c.b16 %v4723, %v4722
        %v4860 = vpack.c.b16 %v4725, %v4724
        %v4861 = vpack.c.b16 %v4727, %v4726
        %v4862 = vpack.c.b16 %v4729, %v4728
        %v4863 = vpack.c.b16 %v4731, %v4730
        %v4864 = vpack.c.b16 %v4733, %v4732
        %v4865 = vpack.c.b16 %v4735, %v4734
        %v4866 = vpack.c.b16 %v4737, %v4736
        %v4867 = vpack.c.b16 %v4739, %v4738
        %v4868 = vpack.c.b16 %v4741, %v4740
        %v4869 = vpack.c.b16 %v4743, %v4742
        %v4870 = vpack.c.b16 %v4745, %v4744
        %v4871 = vpack.c.b16 %v4747, %v4746
        %v4872 = vpack.c.b16 %v4749, %v4748
        %v4873 = vpack.c.b16 %v4751, %v4750
        %v4874 = vpack.c.b16 %v4753, %v4752
        %v4875 = vpack.c.b16 %v4755, %v4754
        %v4876 = vpack.c.b16 %v4757, %v4756
        %v4877 = vpack.c.b16 %v4759, %v4758
        %v4878 = vpack.c.b16 %v4761, %v4760
        %v4879 = vpack.c.b16 %v4763, %v4762
        %v4880 = vpack.c.b16 %v4765, %v4764
        %v4881 = vpack.c.b16 %v4767, %v4766
        %v4882 = vpack.c.b16 %v4769, %v4768
        %v4883 = vpack.c.b16 %v4771, %v4770
        %v4884 = vpack.c.b16 %v4773, %v4772
        %v4885 = vpack.c.b16 %v4775, %v4774
        %v4886 = vpack.c.b16 %v4777, %v4776
        %v4887 = vpack.c.b16 %v4779, %v4778
        %v4888 = vpack.c.b16 %v4781, %v4780
        %v4889 = vpack.c.b16 %v4783, %v4782
        %v4890 = vpack.c.b16 %v4785, %v4784
        %v4891 = vpack.c.b16 %v4787, %v4786
        %v4892 = vpack.c.b16 %v4789, %v4788
        %v4893 = vpack.c.b16 %v4791, %v4790
        %v4894 = vpack.c.b16 %v4793, %v4792
        %v4895 = vpack.c.b16 %v4795, %v4794
        %v4896 = vpack.c.b16 %v4797, %v4796
        %v4897 = vpack.c.b16 %v4799, %v4798
        %v4898 = vpack.c.b16 %v4801, %v4800
        %v4899 = vpack.c.b16 %v4803, %v4802
        %v4900 = vpack.c.b16 %v4805, %v4804
        %v4901 = vpack.c.b16 %v4807, %v4806
        %v4902 = vpack.c.b16 %v4809, %v4808
        %v4903 = vpack.c.b16 %v4811, %v4810
        %v4904 = vpack.c.b16 %v4813, %v4812
        %v4905 = vpack.c.b16 %v4815, %v4814
        %v4906 = vpack.c.b16 %v4817, %v4816
        %v4907 = vpack.c.b16 %v4819, %v4818
        %v4908 = vpack.c.b16 %v4821, %v4820
        %v4909 = vpack.c.b16 %v4823, %v4822
        %v4910 = vpack.c.b16 %v4825, %v4824
        %v4911 = vpack.c.b16 %v4827, %v4826
        %v4912 = vpack.c.b16 %v4829, %v4828
        %v4913 = vpack.c.b16 %v4831, %v4830
        %v4914 = vpack.c.b16 %v4833, %v4832
        %v4915 = vpack.c.b16 %v4835, %v4834
        %v4916 = vpack.c.b16 %v4837, %v4836
        %v4917 = vpack.c.b16 %v4839, %v4838
        %v4918 = vpack.c.b16 %v4841, %v4840
        %v4919 = vpack.c.b16 %v4843, %v4842
        %v4920 = vpack.c.b16 %v4845, %v4844
        %v4921 = vpack.c.b16 %v4847, %v4846
        %v4922 = vpack.c.b16 %v4849, %v4848
        %v4923 = vpack.c.b16 %v4851, %v4850
        %4996 = vmatpush.bf16.msra.mxu0 %v4859
        %4997 = vmatpush.bf16.msra.mxu0 %v4858
        %4998 = vmatpush.bf16.msra.mxu0 %v4857
        %4999 = vmatpush.bf16.msra.mxu0 %v4856
        %5000 = vmatpush.bf16.msra.mxu0 %v4855
        %5001 = vmatpush.bf16.msra.mxu0 %v4854
        %5002 = vmatpush.bf16.msra.mxu0 %v4853
        %5003 = vmatpush.bf16.msra.mxu0 %v4852
        %5004 = vmatmul.bf16.gmra.mxu0 %v4276
        %v5005 = vpop.f32.mrf.mxu0
        %v5006 = vadd.f32 %v3826, %v5005
        %v5007 = vpop.f32.mrf.mxu0
        %v5008 = vadd.f32 %v3826, %v5007
        %5009 = vmatmul.bf16.gmra.mxu0 %v4285
        %v5010 = vpop.f32.mrf.mxu0
        %v5011 = vadd.f32 %v3826, %v5010
        %v5012 = vpop.f32.mrf.mxu0
        %v5013 = vadd.f32 %v3826, %v5012
        %5014 = vmatmul.bf16.gmra.mxu0 %v4294
        %v5015 = vpop.f32.mrf.mxu0
        %v5016 = vadd.f32 %v3826, %v5015
        %v5017 = vpop.f32.mrf.mxu0
        %v5018 = vadd.f32 %v3826, %v5017
        %5019 = vmatmul.bf16.gmra.mxu0 %v4303
        %v5020 = vpop.f32.mrf.mxu0
        %v5021 = vadd.f32 %v3826, %v5020
        %v5022 = vpop.f32.mrf.mxu0
        %v5023 = vadd.f32 %v3826, %v5022
        %5024 = vmatmul.bf16.gmra.mxu0 %v4312
        %v5025 = vpop.f32.mrf.mxu0
        %v5026 = vadd.f32 %v3826, %v5025
        %v5027 = vpop.f32.mrf.mxu0
        %v5028 = vadd.f32 %v3826, %v5027
        %5029 = vmatmul.bf16.gmra.mxu0 %v4321
        %v5030 = vpop.f32.mrf.mxu0
        %v5031 = vadd.f32 %v3826, %v5030
        %v5032 = vpop.f32.mrf.mxu0
        %v5033 = vadd.f32 %v3826, %v5032
        %5034 = vmatmul.bf16.gmra.mxu0 %v4330
        %v5035 = vpop.f32.mrf.mxu0
        %v5036 = vadd.f32 %v3826, %v5035
        %v5037 = vpop.f32.mrf.mxu0
        %v5038 = vadd.f32 %v3826, %v5037
        %5039 = vmatmul.bf16.gmra.mxu0 %v4339
        %v5040 = vpop.f32.mrf.mxu0
        %v5041 = vadd.f32 %v3826, %v5040
        %v5042 = vpop.f32.mrf.mxu0
        %v5043 = vadd.f32 %v3826, %v5042
        %5044 = vmatmul.bf16.gmra.mxu0 %v4348
        %v5045 = vpop.f32.mrf.mxu0
        %v5046 = vadd.f32 %v3826, %v5045
        %v5047 = vpop.f32.mrf.mxu0
        %v5048 = vadd.f32 %v3826, %v5047
        %5049 = vmatmul.bf16.gmra.mxu0 %v4357
        %v5050 = vpop.f32.mrf.mxu0
        %v5051 = vadd.f32 %v3826, %v5050
        %v5052 = vpop.f32.mrf.mxu0
        %v5053 = vadd.f32 %v3826, %v5052
        %5054 = vmatmul.bf16.gmra.mxu0 %v4366
        %v5055 = vpop.f32.mrf.mxu0
        %v5056 = vadd.f32 %v3826, %v5055
        %v5057 = vpop.f32.mrf.mxu0
        %v5058 = vadd.f32 %v3826, %v5057
        %5059 = vmatmul.bf16.gmra.mxu0 %v4375
        %v5060 = vpop.f32.mrf.mxu0
        %v5061 = vadd.f32 %v3826, %v5060
        %v5062 = vpop.f32.mrf.mxu0
        %v5063 = vadd.f32 %v3826, %v5062
        %5064 = vmatmul.bf16.gmra.mxu0 %v4384
        %v5065 = vpop.f32.mrf.mxu0
        %v5066 = vadd.f32 %v3826, %v5065
        %v5067 = vpop.f32.mrf.mxu0
        %v5068 = vadd.f32 %v3826, %v5067
        %5069 = vmatmul.bf16.gmra.mxu0 %v4393
        %v5070 = vpop.f32.mrf.mxu0
        %v5071 = vadd.f32 %v3826, %v5070
        %v5072 = vpop.f32.mrf.mxu0
        %v5073 = vadd.f32 %v3826, %v5072
        %5074 = vmatmul.bf16.gmra.mxu0 %v4402
        %v5075 = vpop.f32.mrf.mxu0
        %v5076 = vadd.f32 %v3826, %v5075
        %v5077 = vpop.f32.mrf.mxu0
        %v5078 = vadd.f32 %v3826, %v5077
        %5079 = vmatmul.bf16.gmra.mxu0 %v4411
        %v5080 = vpop.f32.mrf.mxu0
        %v5081 = vadd.f32 %v3826, %v5080
        %v5082 = vpop.f32.mrf.mxu0
        %v5083 = vadd.f32 %v3826, %v5082
        %5084 = vdwg.mxu0
        %5085 = vmatpush.bf16.msra.mxu0 %v4867
        %5086 = vmatpush.bf16.msra.mxu0 %v4866
        %5087 = vmatpush.bf16.msra.mxu0 %v4865
        %5088 = vmatpush.bf16.msra.mxu0 %v4864
        %5089 = vmatpush.bf16.msra.mxu0 %v4863
        %5090 = vmatpush.bf16.msra.mxu0 %v4862
        %5091 = vmatpush.bf16.msra.mxu0 %v4861
        %5092 = vmatpush.bf16.msra.mxu0 %v4860
        %5093 = vmatmul.bf16.gmra.mxu0 %v4277
        %v5094 = vpop.f32.mrf.mxu0
        %v5095 = vadd.f32 %v5006, %v5094
        %v5096 = vpop.f32.mrf.mxu0
        %v5097 = vadd.f32 %v5008, %v5096
        %5098 = vmatmul.bf16.gmra.mxu0 %v4286
        %v5099 = vpop.f32.mrf.mxu0
        %v5100 = vadd.f32 %v5011, %v5099
        %v5101 = vpop.f32.mrf.mxu0
        %v5102 = vadd.f32 %v5013, %v5101
        %5103 = vmatmul.bf16.gmra.mxu0 %v4295
        %v5104 = vpop.f32.mrf.mxu0
        %v5105 = vadd.f32 %v5016, %v5104
        %v5106 = vpop.f32.mrf.mxu0
        %v5107 = vadd.f32 %v5018, %v5106
        %5108 = vmatmul.bf16.gmra.mxu0 %v4304
        %v5109 = vpop.f32.mrf.mxu0
        %v5110 = vadd.f32 %v5021, %v5109
        %v5111 = vpop.f32.mrf.mxu0
        %v5112 = vadd.f32 %v5023, %v5111
        %5113 = vmatmul.bf16.gmra.mxu0 %v4313
        %v5114 = vpop.f32.mrf.mxu0
        %v5115 = vadd.f32 %v5026, %v5114
        %v5116 = vpop.f32.mrf.mxu0
        %v5117 = vadd.f32 %v5028, %v5116
        %5118 = vmatmul.bf16.gmra.mxu0 %v4322
        %v5119 = vpop.f32.mrf.mxu0
        %v5120 = vadd.f32 %v5031, %v5119
        %v5121 = vpop.f32.mrf.mxu0
        %v5122 = vadd.f32 %v5033, %v5121
        %5123 = vmatmul.bf16.gmra.mxu0 %v4331
        %v5124 = vpop.f32.mrf.mxu0
        %v5125 = vadd.f32 %v5036, %v5124
        %v5126 = vpop.f32.mrf.mxu0
        %v5127 = vadd.f32 %v5038, %v5126
        %5128 = vmatmul.bf16.gmra.mxu0 %v4340
        %v5129 = vpop.f32.mrf.mxu0
        %v5130 = vadd.f32 %v5041, %v5129
        %v5131 = vpop.f32.mrf.mxu0
        %v5132 = vadd.f32 %v5043, %v5131
        %5133 = vmatmul.bf16.gmra.mxu0 %v4349
        %v5134 = vpop.f32.mrf.mxu0
        %v5135 = vadd.f32 %v5046, %v5134
        %v5136 = vpop.f32.mrf.mxu0
        %v5137 = vadd.f32 %v5048, %v5136
        %5138 = vmatmul.bf16.gmra.mxu0 %v4358
        %v5139 = vpop.f32.mrf.mxu0
        %v5140 = vadd.f32 %v5051, %v5139
        %v5141 = vpop.f32.mrf.mxu0
        %v5142 = vadd.f32 %v5053, %v5141
        %5143 = vmatmul.bf16.gmra.mxu0 %v4367
        %v5144 = vpop.f32.mrf.mxu0
        %v5145 = vadd.f32 %v5056, %v5144
        %v5146 = vpop.f32.mrf.mxu0
        %v5147 = vadd.f32 %v5058, %v5146
        %5148 = vmatmul.bf16.gmra.mxu0 %v4376
        %v5149 = vpop.f32.mrf.mxu0
        %v5150 = vadd.f32 %v5061, %v5149
        %v5151 = vpop.f32.mrf.mxu0
        %v5152 = vadd.f32 %v5063, %v5151
        %5153 = vmatmul.bf16.gmra.mxu0 %v4385
        %v5154 = vpop.f32.mrf.mxu0
        %v5155 = vadd.f32 %v5066, %v5154
        %v5156 = vpop.f32.mrf.mxu0
        %v5157 = vadd.f32 %v5068, %v5156
        %5158 = vmatmul.bf16.gmra.mxu0 %v4394
        %v5159 = vpop.f32.mrf.mxu0
        %v5160 = vadd.f32 %v5071, %v5159
        %v5161 = vpop.f32.mrf.mxu0
        %v5162 = vadd.f32 %v5073, %v5161
        %5163 = vmatmul.bf16.gmra.mxu0 %v4403
        %v5164 = vpop.f32.mrf.mxu0
        %v5165 = vadd.f32 %v5076, %v5164
        %v5166 = vpop.f32.mrf.mxu0
        %v5167 = vadd.f32 %v5078, %v5166
        %5168 = vmatmul.bf16.gmra.mxu0 %v4412
        %v5169 = vpop.f32.mrf.mxu0
        %v5170 = vadd.f32 %v5081, %v5169
        %v5171 = vpop.f32.mrf.mxu0
        %v5172 = vadd.f32 %v5083, %v5171
        %5173 = vdwg.mxu0
        %5174 = vmatpush.bf16.msra.mxu0 %v4875
        %5175 = vmatpush.bf16.msra.mxu0 %v4874
        %5176 = vmatpush.bf16.msra.mxu0 %v4873
        %5177 = vmatpush.bf16.msra.mxu0 %v4872
        %5178 = vmatpush.bf16.msra.mxu0 %v4871
        %5179 = vmatpush.bf16.msra.mxu0 %v4870
        %5180 = vmatpush.bf16.msra.mxu0 %v4869
        %5181 = vmatpush.bf16.msra.mxu0 %v4868
        %5182 = vmatmul.bf16.gmra.mxu0 %v4278
        %v5183 = vpop.f32.mrf.mxu0
        %v5184 = vadd.f32 %v5095, %v5183
        %v5185 = vpop.f32.mrf.mxu0
        %v5186 = vadd.f32 %v5097, %v5185
        %5187 = vmatmul.bf16.gmra.mxu0 %v4287
        %v5188 = vpop.f32.mrf.mxu0
        %v5189 = vadd.f32 %v5100, %v5188
        %v5190 = vpop.f32.mrf.mxu0
        %v5191 = vadd.f32 %v5102, %v5190
        %5192 = vmatmul.bf16.gmra.mxu0 %v4296
        %v5193 = vpop.f32.mrf.mxu0
        %v5194 = vadd.f32 %v5105, %v5193
        %v5195 = vpop.f32.mrf.mxu0
        %v5196 = vadd.f32 %v5107, %v5195
        %5197 = vmatmul.bf16.gmra.mxu0 %v4305
        %v5198 = vpop.f32.mrf.mxu0
        %v5199 = vadd.f32 %v5110, %v5198
        %v5200 = vpop.f32.mrf.mxu0
        %v5201 = vadd.f32 %v5112, %v5200
        %5202 = vmatmul.bf16.gmra.mxu0 %v4314
        %v5203 = vpop.f32.mrf.mxu0
        %v5204 = vadd.f32 %v5115, %v5203
        %v5205 = vpop.f32.mrf.mxu0
        %v5206 = vadd.f32 %v5117, %v5205
        %5207 = vmatmul.bf16.gmra.mxu0 %v4323
        %v5208 = vpop.f32.mrf.mxu0
        %v5209 = vadd.f32 %v5120, %v5208
        %v5210 = vpop.f32.mrf.mxu0
        %v5211 = vadd.f32 %v5122, %v5210
        %5212 = vmatmul.bf16.gmra.mxu0 %v4332
        %v5213 = vpop.f32.mrf.mxu0
        %v5214 = vadd.f32 %v5125, %v5213
        %v5215 = vpop.f32.mrf.mxu0
        %v5216 = vadd.f32 %v5127, %v5215
        %5217 = vmatmul.bf16.gmra.mxu0 %v4341
        %v5218 = vpop.f32.mrf.mxu0
        %v5219 = vadd.f32 %v5130, %v5218
        %v5220 = vpop.f32.mrf.mxu0
        %v5221 = vadd.f32 %v5132, %v5220
        %5222 = vmatmul.bf16.gmra.mxu0 %v4350
        %v5223 = vpop.f32.mrf.mxu0
        %v5224 = vadd.f32 %v5135, %v5223
        %v5225 = vpop.f32.mrf.mxu0
        %v5226 = vadd.f32 %v5137, %v5225
        %5227 = vmatmul.bf16.gmra.mxu0 %v4359
        %v5228 = vpop.f32.mrf.mxu0
        %v5229 = vadd.f32 %v5140, %v5228
        %v5230 = vpop.f32.mrf.mxu0
        %v5231 = vadd.f32 %v5142, %v5230
        %5232 = vmatmul.bf16.gmra.mxu0 %v4368
        %v5233 = vpop.f32.mrf.mxu0
        %v5234 = vadd.f32 %v5145, %v5233
        %v5235 = vpop.f32.mrf.mxu0
        %v5236 = vadd.f32 %v5147, %v5235
        %5237 = vmatmul.bf16.gmra.mxu0 %v4377
        %v5238 = vpop.f32.mrf.mxu0
        %v5239 = vadd.f32 %v5150, %v5238
        %v5240 = vpop.f32.mrf.mxu0
        %v5241 = vadd.f32 %v5152, %v5240
        %5242 = vmatmul.bf16.gmra.mxu0 %v4386
        %v5243 = vpop.f32.mrf.mxu0
        %v5244 = vadd.f32 %v5155, %v5243
        %v5245 = vpop.f32.mrf.mxu0
        %v5246 = vadd.f32 %v5157, %v5245
        %5247 = vmatmul.bf16.gmra.mxu0 %v4395
        %v5248 = vpop.f32.mrf.mxu0
        %v5249 = vadd.f32 %v5160, %v5248
        %v5250 = vpop.f32.mrf.mxu0
        %v5251 = vadd.f32 %v5162, %v5250
        %5252 = vmatmul.bf16.gmra.mxu0 %v4404
        %v5253 = vpop.f32.mrf.mxu0
        %v5254 = vadd.f32 %v5165, %v5253
        %v5255 = vpop.f32.mrf.mxu0
        %v5256 = vadd.f32 %v5167, %v5255
        %5257 = vmatmul.bf16.gmra.mxu0 %v4413
        %v5258 = vpop.f32.mrf.mxu0
        %v5259 = vadd.f32 %v5170, %v5258
        %v5260 = vpop.f32.mrf.mxu0
        %v5261 = vadd.f32 %v5172, %v5260
        %5262 = vdwg.mxu0
        %5263 = vmatpush.bf16.msra.mxu0 %v4883
        %5264 = vmatpush.bf16.msra.mxu0 %v4882
        %5265 = vmatpush.bf16.msra.mxu0 %v4881
        %5266 = vmatpush.bf16.msra.mxu0 %v4880
        %5267 = vmatpush.bf16.msra.mxu0 %v4879
        %5268 = vmatpush.bf16.msra.mxu0 %v4878
        %5269 = vmatpush.bf16.msra.mxu0 %v4877
        %5270 = vmatpush.bf16.msra.mxu0 %v4876
        %5271 = vmatmul.bf16.gmra.mxu0 %v4279
        %v5272 = vpop.f32.mrf.mxu0
        %v5273 = vadd.f32 %v5184, %v5272
        %v5274 = vpop.f32.mrf.mxu0
        %v5275 = vadd.f32 %v5186, %v5274
        %5276 = vmatmul.bf16.gmra.mxu0 %v4288
        %v5277 = vpop.f32.mrf.mxu0
        %v5278 = vadd.f32 %v5189, %v5277
        %v5279 = vpop.f32.mrf.mxu0
        %v5280 = vadd.f32 %v5191, %v5279
        %5281 = vmatmul.bf16.gmra.mxu0 %v4297
        %v5282 = vpop.f32.mrf.mxu0
        %v5283 = vadd.f32 %v5194, %v5282
        %v5284 = vpop.f32.mrf.mxu0
        %v5285 = vadd.f32 %v5196, %v5284
        %5286 = vmatmul.bf16.gmra.mxu0 %v4306
        %v5287 = vpop.f32.mrf.mxu0
        %v5288 = vadd.f32 %v5199, %v5287
        %v5289 = vpop.f32.mrf.mxu0
        %v5290 = vadd.f32 %v5201, %v5289
        %5291 = vmatmul.bf16.gmra.mxu0 %v4315
        %v5292 = vpop.f32.mrf.mxu0
        %v5293 = vadd.f32 %v5204, %v5292
        %v5294 = vpop.f32.mrf.mxu0
        %v5295 = vadd.f32 %v5206, %v5294
        %5296 = vmatmul.bf16.gmra.mxu0 %v4324
        %v5297 = vpop.f32.mrf.mxu0
        %v5298 = vadd.f32 %v5209, %v5297
        %v5299 = vpop.f32.mrf.mxu0
        %v5300 = vadd.f32 %v5211, %v5299
        %5301 = vmatmul.bf16.gmra.mxu0 %v4333
        %v5302 = vpop.f32.mrf.mxu0
        %v5303 = vadd.f32 %v5214, %v5302
        %v5304 = vpop.f32.mrf.mxu0
        %v5305 = vadd.f32 %v5216, %v5304
        %5306 = vmatmul.bf16.gmra.mxu0 %v4342
        %v5307 = vpop.f32.mrf.mxu0
        %v5308 = vadd.f32 %v5219, %v5307
        %v5309 = vpop.f32.mrf.mxu0
        %v5310 = vadd.f32 %v5221, %v5309
        %5311 = vmatmul.bf16.gmra.mxu0 %v4351
        %v5312 = vpop.f32.mrf.mxu0
        %v5313 = vadd.f32 %v5224, %v5312
        %v5314 = vpop.f32.mrf.mxu0
        %v5315 = vadd.f32 %v5226, %v5314
        %5316 = vmatmul.bf16.gmra.mxu0 %v4360
        %v5317 = vpop.f32.mrf.mxu0
        %v5318 = vadd.f32 %v5229, %v5317
        %v5319 = vpop.f32.mrf.mxu0
        %v5320 = vadd.f32 %v5231, %v5319
        %5321 = vmatmul.bf16.gmra.mxu0 %v4369
        %v5322 = vpop.f32.mrf.mxu0
        %v5323 = vadd.f32 %v5234, %v5322
        %v5324 = vpop.f32.mrf.mxu0
        %v5325 = vadd.f32 %v5236, %v5324
        %5326 = vmatmul.bf16.gmra.mxu0 %v4378
        %v5327 = vpop.f32.mrf.mxu0
        %v5328 = vadd.f32 %v5239, %v5327
        %v5329 = vpop.f32.mrf.mxu0
        %v5330 = vadd.f32 %v5241, %v5329
        %5331 = vmatmul.bf16.gmra.mxu0 %v4387
        %v5332 = vpop.f32.mrf.mxu0
        %v5333 = vadd.f32 %v5244, %v5332
        %v5334 = vpop.f32.mrf.mxu0
        %v5335 = vadd.f32 %v5246, %v5334
        %5336 = vmatmul.bf16.gmra.mxu0 %v4396
        %v5337 = vpop.f32.mrf.mxu0
        %v5338 = vadd.f32 %v5249, %v5337
        %v5339 = vpop.f32.mrf.mxu0
        %v5340 = vadd.f32 %v5251, %v5339
        %5341 = vmatmul.bf16.gmra.mxu0 %v4405
        %v5342 = vpop.f32.mrf.mxu0
        %v5343 = vadd.f32 %v5254, %v5342
        %v5344 = vpop.f32.mrf.mxu0
        %v5345 = vadd.f32 %v5256, %v5344
        %5346 = vmatmul.bf16.gmra.mxu0 %v4414
        %v5347 = vpop.f32.mrf.mxu0
        %v5348 = vadd.f32 %v5259, %v5347
        %v5349 = vpop.f32.mrf.mxu0
        %v5350 = vadd.f32 %v5261, %v5349
        %5351 = vdwg.mxu0
        %5352 = vmatpush.bf16.msra.mxu0 %v4891
        %5353 = vmatpush.bf16.msra.mxu0 %v4890
        %5354 = vmatpush.bf16.msra.mxu0 %v4889
        %5355 = vmatpush.bf16.msra.mxu0 %v4888
        %5356 = vmatpush.bf16.msra.mxu0 %v4887
        %5357 = vmatpush.bf16.msra.mxu0 %v4886
        %5358 = vmatpush.bf16.msra.mxu0 %v4885
        %5359 = vmatpush.bf16.msra.mxu0 %v4884
        %5360 = vmatmul.bf16.gmra.mxu0 %v4280
        %v5361 = vpop.f32.mrf.mxu0
        %v5362 = vadd.f32 %v5273, %v5361
        %v5363 = vpop.f32.mrf.mxu0
        %v5364 = vadd.f32 %v5275, %v5363
        %5365 = vmatmul.bf16.gmra.mxu0 %v4289
        %v5366 = vpop.f32.mrf.mxu0
        %v5367 = vadd.f32 %v5278, %v5366
        %v5368 = vpop.f32.mrf.mxu0
        %v5369 = vadd.f32 %v5280, %v5368
        %5370 = vmatmul.bf16.gmra.mxu0 %v4298
        %v5371 = vpop.f32.mrf.mxu0
        %v5372 = vadd.f32 %v5283, %v5371
        %v5373 = vpop.f32.mrf.mxu0
        %v5374 = vadd.f32 %v5285, %v5373
        %5375 = vmatmul.bf16.gmra.mxu0 %v4307
        %v5376 = vpop.f32.mrf.mxu0
        %v5377 = vadd.f32 %v5288, %v5376
        %v5378 = vpop.f32.mrf.mxu0
        %v5379 = vadd.f32 %v5290, %v5378
        %5380 = vmatmul.bf16.gmra.mxu0 %v4316
        %v5381 = vpop.f32.mrf.mxu0
        %v5382 = vadd.f32 %v5293, %v5381
        %v5383 = vpop.f32.mrf.mxu0
        %v5384 = vadd.f32 %v5295, %v5383
        %5385 = vmatmul.bf16.gmra.mxu0 %v4325
        %v5386 = vpop.f32.mrf.mxu0
        %v5387 = vadd.f32 %v5298, %v5386
        %v5388 = vpop.f32.mrf.mxu0
        %v5389 = vadd.f32 %v5300, %v5388
        %5390 = vmatmul.bf16.gmra.mxu0 %v4334
        %v5391 = vpop.f32.mrf.mxu0
        %v5392 = vadd.f32 %v5303, %v5391
        %v5393 = vpop.f32.mrf.mxu0
        %v5394 = vadd.f32 %v5305, %v5393
        %5395 = vmatmul.bf16.gmra.mxu0 %v4343
        %v5396 = vpop.f32.mrf.mxu0
        %v5397 = vadd.f32 %v5308, %v5396
        %v5398 = vpop.f32.mrf.mxu0
        %v5399 = vadd.f32 %v5310, %v5398
        %5400 = vmatmul.bf16.gmra.mxu0 %v4352
        %v5401 = vpop.f32.mrf.mxu0
        %v5402 = vadd.f32 %v5313, %v5401
        %v5403 = vpop.f32.mrf.mxu0
        %v5404 = vadd.f32 %v5315, %v5403
        %5405 = vmatmul.bf16.gmra.mxu0 %v4361
        %v5406 = vpop.f32.mrf.mxu0
        %v5407 = vadd.f32 %v5318, %v5406
        %v5408 = vpop.f32.mrf.mxu0
        %v5409 = vadd.f32 %v5320, %v5408
        %5410 = vmatmul.bf16.gmra.mxu0 %v4370
        %v5411 = vpop.f32.mrf.mxu0
        %v5412 = vadd.f32 %v5323, %v5411
        %v5413 = vpop.f32.mrf.mxu0
        %v5414 = vadd.f32 %v5325, %v5413
        %5415 = vmatmul.bf16.gmra.mxu0 %v4379
        %v5416 = vpop.f32.mrf.mxu0
        %v5417 = vadd.f32 %v5328, %v5416
        %v5418 = vpop.f32.mrf.mxu0
        %v5419 = vadd.f32 %v5330, %v5418
        %5420 = vmatmul.bf16.gmra.mxu0 %v4388
        %v5421 = vpop.f32.mrf.mxu0
        %v5422 = vadd.f32 %v5333, %v5421
        %v5423 = vpop.f32.mrf.mxu0
        %v5424 = vadd.f32 %v5335, %v5423
        %5425 = vmatmul.bf16.gmra.mxu0 %v4397
        %v5426 = vpop.f32.mrf.mxu0
        %v5427 = vadd.f32 %v5338, %v5426
        %v5428 = vpop.f32.mrf.mxu0
        %v5429 = vadd.f32 %v5340, %v5428
        %5430 = vmatmul.bf16.gmra.mxu0 %v4406
        %v5431 = vpop.f32.mrf.mxu0
        %v5432 = vadd.f32 %v5343, %v5431
        %v5433 = vpop.f32.mrf.mxu0
        %v5434 = vadd.f32 %v5345, %v5433
        %5435 = vmatmul.bf16.gmra.mxu0 %v4415
        %v5436 = vpop.f32.mrf.mxu0
        %v5437 = vadd.f32 %v5348, %v5436
        %v5438 = vpop.f32.mrf.mxu0
        %v5439 = vadd.f32 %v5350, %v5438
        %5440 = vdwg.mxu0
        %5441 = vmatpush.bf16.msra.mxu0 %v4899
        %5442 = vmatpush.bf16.msra.mxu0 %v4898
        %5443 = vmatpush.bf16.msra.mxu0 %v4897
        %5444 = vmatpush.bf16.msra.mxu0 %v4896
        %5445 = vmatpush.bf16.msra.mxu0 %v4895
        %5446 = vmatpush.bf16.msra.mxu0 %v4894
        %5447 = vmatpush.bf16.msra.mxu0 %v4893
        %5448 = vmatpush.bf16.msra.mxu0 %v4892
        %5449 = vmatmul.bf16.gmra.mxu0 %v4281
        %v5450 = vpop.f32.mrf.mxu0
        %v5451 = vadd.f32 %v5362, %v5450
        %v5452 = vpop.f32.mrf.mxu0
        %v5453 = vadd.f32 %v5364, %v5452
        %5454 = vmatmul.bf16.gmra.mxu0 %v4290
        %v5455 = vpop.f32.mrf.mxu0
        %v5456 = vadd.f32 %v5367, %v5455
        %v5457 = vpop.f32.mrf.mxu0
        %v5458 = vadd.f32 %v5369, %v5457
        %5459 = vmatmul.bf16.gmra.mxu0 %v4299
        %v5460 = vpop.f32.mrf.mxu0
        %v5461 = vadd.f32 %v5372, %v5460
        %v5462 = vpop.f32.mrf.mxu0
        %v5463 = vadd.f32 %v5374, %v5462
        %5464 = vmatmul.bf16.gmra.mxu0 %v4308
        %v5465 = vpop.f32.mrf.mxu0
        %v5466 = vadd.f32 %v5377, %v5465
        %v5467 = vpop.f32.mrf.mxu0
        %v5468 = vadd.f32 %v5379, %v5467
        %5469 = vmatmul.bf16.gmra.mxu0 %v4317
        %v5470 = vpop.f32.mrf.mxu0
        %v5471 = vadd.f32 %v5382, %v5470
        %v5472 = vpop.f32.mrf.mxu0
        %v5473 = vadd.f32 %v5384, %v5472
        %5474 = vmatmul.bf16.gmra.mxu0 %v4326
        %v5475 = vpop.f32.mrf.mxu0
        %v5476 = vadd.f32 %v5387, %v5475
        %v5477 = vpop.f32.mrf.mxu0
        %v5478 = vadd.f32 %v5389, %v5477
        %5479 = vmatmul.bf16.gmra.mxu0 %v4335
        %v5480 = vpop.f32.mrf.mxu0
        %v5481 = vadd.f32 %v5392, %v5480
        %v5482 = vpop.f32.mrf.mxu0
        %v5483 = vadd.f32 %v5394, %v5482
        %5484 = vmatmul.bf16.gmra.mxu0 %v4344
        %v5485 = vpop.f32.mrf.mxu0
        %v5486 = vadd.f32 %v5397, %v5485
        %v5487 = vpop.f32.mrf.mxu0
        %v5488 = vadd.f32 %v5399, %v5487
        %5489 = vmatmul.bf16.gmra.mxu0 %v4353
        %v5490 = vpop.f32.mrf.mxu0
        %v5491 = vadd.f32 %v5402, %v5490
        %v5492 = vpop.f32.mrf.mxu0
        %v5493 = vadd.f32 %v5404, %v5492
        %5494 = vmatmul.bf16.gmra.mxu0 %v4362
        %v5495 = vpop.f32.mrf.mxu0
        %v5496 = vadd.f32 %v5407, %v5495
        %v5497 = vpop.f32.mrf.mxu0
        %v5498 = vadd.f32 %v5409, %v5497
        %5499 = vmatmul.bf16.gmra.mxu0 %v4371
        %v5500 = vpop.f32.mrf.mxu0
        %v5501 = vadd.f32 %v5412, %v5500
        %v5502 = vpop.f32.mrf.mxu0
        %v5503 = vadd.f32 %v5414, %v5502
        %5504 = vmatmul.bf16.gmra.mxu0 %v4380
        %v5505 = vpop.f32.mrf.mxu0
        %v5506 = vadd.f32 %v5417, %v5505
        %v5507 = vpop.f32.mrf.mxu0
        %v5508 = vadd.f32 %v5419, %v5507
        %5509 = vmatmul.bf16.gmra.mxu0 %v4389
        %v5510 = vpop.f32.mrf.mxu0
        %v5511 = vadd.f32 %v5422, %v5510
        %v5512 = vpop.f32.mrf.mxu0
        %v5513 = vadd.f32 %v5424, %v5512
        %5514 = vmatmul.bf16.gmra.mxu0 %v4398
        %v5515 = vpop.f32.mrf.mxu0
        %v5516 = vadd.f32 %v5427, %v5515
        %v5517 = vpop.f32.mrf.mxu0
        %v5518 = vadd.f32 %v5429, %v5517
        %5519 = vmatmul.bf16.gmra.mxu0 %v4407
        %v5520 = vpop.f32.mrf.mxu0
        %v5521 = vadd.f32 %v5432, %v5520
        %v5522 = vpop.f32.mrf.mxu0
        %v5523 = vadd.f32 %v5434, %v5522
        %5524 = vmatmul.bf16.gmra.mxu0 %v4416
        %v5525 = vpop.f32.mrf.mxu0
        %v5526 = vadd.f32 %v5437, %v5525
        %v5527 = vpop.f32.mrf.mxu0
        %v5528 = vadd.f32 %v5439, %v5527
        %5529 = vdwg.mxu0
        %5530 = vmatpush.bf16.msra.mxu0 %v4907
        %5531 = vmatpush.bf16.msra.mxu0 %v4906
        %5532 = vmatpush.bf16.msra.mxu0 %v4905
        %5533 = vmatpush.bf16.msra.mxu0 %v4904
        %5534 = vmatpush.bf16.msra.mxu0 %v4903
        %5535 = vmatpush.bf16.msra.mxu0 %v4902
        %5536 = vmatpush.bf16.msra.mxu0 %v4901
        %5537 = vmatpush.bf16.msra.mxu0 %v4900
        %5538 = vmatmul.bf16.gmra.mxu0 %v4282
        %v5539 = vpop.f32.mrf.mxu0
        %v5540 = vadd.f32 %v5451, %v5539
        %v5541 = vpop.f32.mrf.mxu0
        %v5542 = vadd.f32 %v5453, %v5541
        %5543 = vmatmul.bf16.gmra.mxu0 %v4291
        %v5544 = vpop.f32.mrf.mxu0
        %v5545 = vadd.f32 %v5456, %v5544
        %v5546 = vpop.f32.mrf.mxu0
        %v5547 = vadd.f32 %v5458, %v5546
        %5548 = vmatmul.bf16.gmra.mxu0 %v4300
        %v5549 = vpop.f32.mrf.mxu0
        %v5550 = vadd.f32 %v5461, %v5549
        %v5551 = vpop.f32.mrf.mxu0
        %v5552 = vadd.f32 %v5463, %v5551
        %5553 = vmatmul.bf16.gmra.mxu0 %v4309
        %v5554 = vpop.f32.mrf.mxu0
        %v5555 = vadd.f32 %v5466, %v5554
        %v5556 = vpop.f32.mrf.mxu0
        %v5557 = vadd.f32 %v5468, %v5556
        %5558 = vmatmul.bf16.gmra.mxu0 %v4318
        %v5559 = vpop.f32.mrf.mxu0
        %v5560 = vadd.f32 %v5471, %v5559
        %v5561 = vpop.f32.mrf.mxu0
        %v5562 = vadd.f32 %v5473, %v5561
        %5563 = vmatmul.bf16.gmra.mxu0 %v4327
        %v5564 = vpop.f32.mrf.mxu0
        %v5565 = vadd.f32 %v5476, %v5564
        %v5566 = vpop.f32.mrf.mxu0
        %v5567 = vadd.f32 %v5478, %v5566
        %5568 = vmatmul.bf16.gmra.mxu0 %v4336
        %v5569 = vpop.f32.mrf.mxu0
        %v5570 = vadd.f32 %v5481, %v5569
        %v5571 = vpop.f32.mrf.mxu0
        %v5572 = vadd.f32 %v5483, %v5571
        %5573 = vmatmul.bf16.gmra.mxu0 %v4345
        %v5574 = vpop.f32.mrf.mxu0
        %v5575 = vadd.f32 %v5486, %v5574
        %v5576 = vpop.f32.mrf.mxu0
        %v5577 = vadd.f32 %v5488, %v5576
        %5578 = vmatmul.bf16.gmra.mxu0 %v4354
        %v5579 = vpop.f32.mrf.mxu0
        %v5580 = vadd.f32 %v5491, %v5579
        %v5581 = vpop.f32.mrf.mxu0
        %v5582 = vadd.f32 %v5493, %v5581
        %5583 = vmatmul.bf16.gmra.mxu0 %v4363
        %v5584 = vpop.f32.mrf.mxu0
        %v5585 = vadd.f32 %v5496, %v5584
        %v5586 = vpop.f32.mrf.mxu0
        %v5587 = vadd.f32 %v5498, %v5586
        %5588 = vmatmul.bf16.gmra.mxu0 %v4372
        %v5589 = vpop.f32.mrf.mxu0
        %v5590 = vadd.f32 %v5501, %v5589
        %v5591 = vpop.f32.mrf.mxu0
        %v5592 = vadd.f32 %v5503, %v5591
        %5593 = vmatmul.bf16.gmra.mxu0 %v4381
        %v5594 = vpop.f32.mrf.mxu0
        %v5595 = vadd.f32 %v5506, %v5594
        %v5596 = vpop.f32.mrf.mxu0
        %v5597 = vadd.f32 %v5508, %v5596
        %5598 = vmatmul.bf16.gmra.mxu0 %v4390
        %v5599 = vpop.f32.mrf.mxu0
        %v5600 = vadd.f32 %v5511, %v5599
        %v5601 = vpop.f32.mrf.mxu0
        %v5602 = vadd.f32 %v5513, %v5601
        %5603 = vmatmul.bf16.gmra.mxu0 %v4399
        %v5604 = vpop.f32.mrf.mxu0
        %v5605 = vadd.f32 %v5516, %v5604
        %v5606 = vpop.f32.mrf.mxu0
        %v5607 = vadd.f32 %v5518, %v5606
        %5608 = vmatmul.bf16.gmra.mxu0 %v4408
        %v5609 = vpop.f32.mrf.mxu0
        %v5610 = vadd.f32 %v5521, %v5609
        %v5611 = vpop.f32.mrf.mxu0
        %v5612 = vadd.f32 %v5523, %v5611
        %5613 = vmatmul.bf16.gmra.mxu0 %v4417
        %v5614 = vpop.f32.mrf.mxu0
        %v5615 = vadd.f32 %v5526, %v5614
        %v5616 = vpop.f32.mrf.mxu0
        %v5617 = vadd.f32 %v5528, %v5616
        %5618 = vdwg.mxu0
        %5619 = vmatpush.bf16.msra.mxu0 %v4915
        %5620 = vmatpush.bf16.msra.mxu0 %v4914
        %5621 = vmatpush.bf16.msra.mxu0 %v4913
        %5622 = vmatpush.bf16.msra.mxu0 %v4912
        %5623 = vmatpush.bf16.msra.mxu0 %v4911
        %5624 = vmatpush.bf16.msra.mxu0 %v4910
        %5625 = vmatpush.bf16.msra.mxu0 %v4909
        %5626 = vmatpush.bf16.msra.mxu0 %v4908
        %5627 = vmatmul.bf16.gmra.mxu0 %v4283
        %v5628 = vpop.f32.mrf.mxu0
        %v5629 = vadd.f32 %v5540, %v5628
        %v5630 = vpop.f32.mrf.mxu0
        %v5631 = vadd.f32 %v5542, %v5630
        %5632 = vmatmul.bf16.gmra.mxu0 %v4292
        %v5633 = vpop.f32.mrf.mxu0
        %v5634 = vadd.f32 %v5545, %v5633
        %v5635 = vpop.f32.mrf.mxu0
        %v5636 = vadd.f32 %v5547, %v5635
        %5637 = vmatmul.bf16.gmra.mxu0 %v4301
        %v5638 = vpop.f32.mrf.mxu0
        %v5639 = vadd.f32 %v5550, %v5638
        %v5640 = vpop.f32.mrf.mxu0
        %v5641 = vadd.f32 %v5552, %v5640
        %5642 = vmatmul.bf16.gmra.mxu0 %v4310
        %v5643 = vpop.f32.mrf.mxu0
        %v5644 = vadd.f32 %v5555, %v5643
        %v5645 = vpop.f32.mrf.mxu0
        %v5646 = vadd.f32 %v5557, %v5645
        %5647 = vmatmul.bf16.gmra.mxu0 %v4319
        %v5648 = vpop.f32.mrf.mxu0
        %v5649 = vadd.f32 %v5560, %v5648
        %v5650 = vpop.f32.mrf.mxu0
        %v5651 = vadd.f32 %v5562, %v5650
        %5652 = vmatmul.bf16.gmra.mxu0 %v4328
        %v5653 = vpop.f32.mrf.mxu0
        %v5654 = vadd.f32 %v5565, %v5653
        %v5655 = vpop.f32.mrf.mxu0
        %v5656 = vadd.f32 %v5567, %v5655
        %5657 = vmatmul.bf16.gmra.mxu0 %v4337
        %v5658 = vpop.f32.mrf.mxu0
        %v5659 = vadd.f32 %v5570, %v5658
        %v5660 = vpop.f32.mrf.mxu0
        %v5661 = vadd.f32 %v5572, %v5660
        %5662 = vmatmul.bf16.gmra.mxu0 %v4346
        %v5663 = vpop.f32.mrf.mxu0
        %v5664 = vadd.f32 %v5575, %v5663
        %v5665 = vpop.f32.mrf.mxu0
        %v5666 = vadd.f32 %v5577, %v5665
        %5667 = vmatmul.bf16.gmra.mxu0 %v4355
        %v5668 = vpop.f32.mrf.mxu0
        %v5669 = vadd.f32 %v5580, %v5668
        %v5670 = vpop.f32.mrf.mxu0
        %v5671 = vadd.f32 %v5582, %v5670
        %5672 = vmatmul.bf16.gmra.mxu0 %v4364
        %v5673 = vpop.f32.mrf.mxu0
        %v5674 = vadd.f32 %v5585, %v5673
        %v5675 = vpop.f32.mrf.mxu0
        %v5676 = vadd.f32 %v5587, %v5675
        %5677 = vmatmul.bf16.gmra.mxu0 %v4373
        %v5678 = vpop.f32.mrf.mxu0
        %v5679 = vadd.f32 %v5590, %v5678
        %v5680 = vpop.f32.mrf.mxu0
        %v5681 = vadd.f32 %v5592, %v5680
        %5682 = vmatmul.bf16.gmra.mxu0 %v4382
        %v5683 = vpop.f32.mrf.mxu0
        %v5684 = vadd.f32 %v5595, %v5683
        %v5685 = vpop.f32.mrf.mxu0
        %v5686 = vadd.f32 %v5597, %v5685
        %5687 = vmatmul.bf16.gmra.mxu0 %v4391
        %v5688 = vpop.f32.mrf.mxu0
        %v5689 = vadd.f32 %v5600, %v5688
        %v5690 = vpop.f32.mrf.mxu0
        %v5691 = vadd.f32 %v5602, %v5690
        %5692 = vmatmul.bf16.gmra.mxu0 %v4400
        %v5693 = vpop.f32.mrf.mxu0
        %v5694 = vadd.f32 %v5605, %v5693
        %v5695 = vpop.f32.mrf.mxu0
        %v5696 = vadd.f32 %v5607, %v5695
        %5697 = vmatmul.bf16.gmra.mxu0 %v4409
        %v5698 = vpop.f32.mrf.mxu0
        %v5699 = vadd.f32 %v5610, %v5698
        %v5700 = vpop.f32.mrf.mxu0
        %v5701 = vadd.f32 %v5612, %v5700
        %5702 = vmatmul.bf16.gmra.mxu0 %v4418
        %v5703 = vpop.f32.mrf.mxu0
        %v5704 = vadd.f32 %v5615, %v5703
        %v5705 = vpop.f32.mrf.mxu0
        %v5706 = vadd.f32 %v5617, %v5705
        %5707 = vdwg.mxu0
        %5708 = vmatpush.bf16.msra.mxu0 %v4923
        %5709 = vmatpush.bf16.msra.mxu0 %v4922
        %5710 = vmatpush.bf16.msra.mxu0 %v4921
        %5711 = vmatpush.bf16.msra.mxu0 %v4920
        %5712 = vmatpush.bf16.msra.mxu0 %v4919
        %5713 = vmatpush.bf16.msra.mxu0 %v4918
        %5714 = vmatpush.bf16.msra.mxu0 %v4917
        %5715 = vmatpush.bf16.msra.mxu0 %v4916
        %5716 = vmatmul.bf16.gmra.mxu0 %v4284
        %v5717 = vpop.f32.mrf.mxu0
        %v5718 = vadd.f32 %v5629, %v5717
        %v5719 = vpop.f32.mrf.mxu0
        %v5720 = vadd.f32 %v5631, %v5719
        %5721 = vmatmul.bf16.gmra.mxu0 %v4293
        %v5722 = vpop.f32.mrf.mxu0
        %v5723 = vadd.f32 %v5634, %v5722
        %v5724 = vpop.f32.mrf.mxu0
        %v5725 = vadd.f32 %v5636, %v5724
        %5726 = vmatmul.bf16.gmra.mxu0 %v4302
        %v5727 = vpop.f32.mrf.mxu0
        %v5728 = vadd.f32 %v5639, %v5727
        %v5729 = vpop.f32.mrf.mxu0
        %v5730 = vadd.f32 %v5641, %v5729
        %5731 = vmatmul.bf16.gmra.mxu0 %v4311
        %v5732 = vpop.f32.mrf.mxu0
        %v5733 = vadd.f32 %v5644, %v5732
        %v5734 = vpop.f32.mrf.mxu0
        %v5735 = vadd.f32 %v5646, %v5734
        %5736 = vmatmul.bf16.gmra.mxu0 %v4320
        %v5737 = vpop.f32.mrf.mxu0
        %v5738 = vadd.f32 %v5649, %v5737
        %v5739 = vpop.f32.mrf.mxu0
        %v5740 = vadd.f32 %v5651, %v5739
        %5741 = vmatmul.bf16.gmra.mxu0 %v4329
        %v5742 = vpop.f32.mrf.mxu0
        %v5743 = vadd.f32 %v5654, %v5742
        %v5744 = vpop.f32.mrf.mxu0
        %v5745 = vadd.f32 %v5656, %v5744
        %5746 = vmatmul.bf16.gmra.mxu0 %v4338
        %v5747 = vpop.f32.mrf.mxu0
        %v5748 = vadd.f32 %v5659, %v5747
        %v5749 = vpop.f32.mrf.mxu0
        %v5750 = vadd.f32 %v5661, %v5749
        %5751 = vmatmul.bf16.gmra.mxu0 %v4347
        %v5752 = vpop.f32.mrf.mxu0
        %v5753 = vadd.f32 %v5664, %v5752
        %v5754 = vpop.f32.mrf.mxu0
        %v5755 = vadd.f32 %v5666, %v5754
        %5756 = vmatmul.bf16.gmra.mxu0 %v4356
        %v5757 = vpop.f32.mrf.mxu0
        %v5758 = vadd.f32 %v5669, %v5757
        %v5759 = vpop.f32.mrf.mxu0
        %v5760 = vadd.f32 %v5671, %v5759
        %5761 = vmatmul.bf16.gmra.mxu0 %v4365
        %v5762 = vpop.f32.mrf.mxu0
        %v5763 = vadd.f32 %v5674, %v5762
        %v5764 = vpop.f32.mrf.mxu0
        %v5765 = vadd.f32 %v5676, %v5764
        %5766 = vmatmul.bf16.gmra.mxu0 %v4374
        %v5767 = vpop.f32.mrf.mxu0
        %v5768 = vadd.f32 %v5679, %v5767
        %v5769 = vpop.f32.mrf.mxu0
        %v5770 = vadd.f32 %v5681, %v5769
        %5771 = vmatmul.bf16.gmra.mxu0 %v4383
        %v5772 = vpop.f32.mrf.mxu0
        %v5773 = vadd.f32 %v5684, %v5772
        %v5774 = vpop.f32.mrf.mxu0
        %v5775 = vadd.f32 %v5686, %v5774
        %5776 = vmatmul.bf16.gmra.mxu0 %v4392
        %v5777 = vpop.f32.mrf.mxu0
        %v5778 = vadd.f32 %v5689, %v5777
        %v5779 = vpop.f32.mrf.mxu0
        %v5780 = vadd.f32 %v5691, %v5779
        %5781 = vmatmul.bf16.gmra.mxu0 %v4401
        %v5782 = vpop.f32.mrf.mxu0
        %v5783 = vadd.f32 %v5694, %v5782
        %v5784 = vpop.f32.mrf.mxu0
        %v5785 = vadd.f32 %v5696, %v5784
        %5786 = vmatmul.bf16.gmra.mxu0 %v4410
        %v5787 = vpop.f32.mrf.mxu0
        %v5788 = vadd.f32 %v5699, %v5787
        %v5789 = vpop.f32.mrf.mxu0
        %v5790 = vadd.f32 %v5701, %v5789
        %5791 = vmatmul.bf16.gmra.mxu0 %v4419
        %v5792 = vpop.f32.mrf.mxu0
        %v5793 = vadd.f32 %v5704, %v5792
        %v5794 = vpop.f32.mrf.mxu0
        %v5795 = vadd.f32 %v5706, %v5794
        %5796 = vdwg.mxu0
        %v5797 = vmax.f32 %v5718, 0.0
        %v5798 = vmax.f32 %v5720, 0.0
        %v5799 = vmax.f32 %v5723, 0.0
        %v5800 = vmax.f32 %v5725, 0.0
        %v5801 = vmax.f32 %v5728, 0.0
        %v5802 = vmax.f32 %v5730, 0.0
        %v5803 = vmax.f32 %v5733, 0.0
        %v5804 = vmax.f32 %v5735, 0.0
        %v5805 = vmax.f32 %v5738, 0.0
        %v5806 = vmax.f32 %v5740, 0.0
        %v5807 = vmax.f32 %v5743, 0.0
        %v5808 = vmax.f32 %v5745, 0.0
        %v5809 = vmax.f32 %v5748, 0.0
        %v5810 = vmax.f32 %v5750, 0.0
        %v5811 = vmax.f32 %v5753, 0.0
        %v5812 = vmax.f32 %v5755, 0.0
        %v5813 = vmax.f32 %v5758, 0.0
        %v5814 = vmax.f32 %v5760, 0.0
        %v5815 = vmax.f32 %v5763, 0.0
        %v5816 = vmax.f32 %v5765, 0.0
        %v5817 = vmax.f32 %v5768, 0.0
        %v5818 = vmax.f32 %v5770, 0.0
        %v5819 = vmax.f32 %v5773, 0.0
        %v5820 = vmax.f32 %v5775, 0.0
        %v5821 = vmax.f32 %v5778, 0.0
        %v5822 = vmax.f32 %v5780, 0.0
        %v5823 = vmax.f32 %v5783, 0.0
        %v5824 = vmax.f32 %v5785, 0.0
        %v5825 = vmax.f32 %v5788, 0.0
        %v5826 = vmax.f32 %v5790, 0.0
        %v5827 = vmax.f32 %v5793, 0.0
        %v5828 = vmax.f32 %v5795, 0.0
        %v5829 = vpack.c.bf16 %v5797, %v5797
        %v5830 = vpack.c.bf16 %v5798, %v5798
        %v5831 = vpack.c.bf16 %v5799, %v5799
        %v5832 = vpack.c.bf16 %v5800, %v5800
        %v5833 = vpack.c.bf16 %v5801, %v5801
        %v5834 = vpack.c.bf16 %v5802, %v5802
        %v5835 = vpack.c.bf16 %v5803, %v5803
        %v5836 = vpack.c.bf16 %v5804, %v5804
        %v5837 = vpack.c.bf16 %v5805, %v5805
        %v5838 = vpack.c.bf16 %v5806, %v5806
        %v5839 = vpack.c.bf16 %v5807, %v5807
        %v5840 = vpack.c.bf16 %v5808, %v5808
        %v5841 = vpack.c.bf16 %v5809, %v5809
        %v5842 = vpack.c.bf16 %v5810, %v5810
        %v5843 = vpack.c.bf16 %v5811, %v5811
        %v5844 = vpack.c.bf16 %v5812, %v5812
        %v5845 = vpack.c.bf16 %v5813, %v5813
        %v5846 = vpack.c.bf16 %v5814, %v5814
        %v5847 = vpack.c.bf16 %v5815, %v5815
        %v5848 = vpack.c.bf16 %v5816, %v5816
        %v5849 = vpack.c.bf16 %v5817, %v5817
        %v5850 = vpack.c.bf16 %v5818, %v5818
        %v5851 = vpack.c.bf16 %v5819, %v5819
        %v5852 = vpack.c.bf16 %v5820, %v5820
        %v5853 = vpack.c.bf16 %v5821, %v5821
        %v5854 = vpack.c.bf16 %v5822, %v5822
        %v5855 = vpack.c.bf16 %v5823, %v5823
        %v5856 = vpack.c.bf16 %v5824, %v5824
        %v5857 = vpack.c.bf16 %v5825, %v5825
        %v5858 = vpack.c.bf16 %v5826, %v5826
        %v5859 = vpack.c.bf16 %v5827, %v5827
        %v5860 = vpack.c.bf16 %v5828, %v5828
        %5861 = vst [vmem:[#allocation4] sm:$0xf] %v5829
        %5862 = vst [vmem:[#allocation4 + $0x4] sm:$0xf] %v5830
        %5863 = vst [vmem:[#allocation4 + $0x8] sm:$0xf] %v5831
        %5864 = vst [vmem:[#allocation4 + $0xc] sm:$0xf] %v5832
        %5865 = vst [vmem:[#allocation4 + $0x10] sm:$0xf] %v5833
        %5866 = vst [vmem:[#allocation4 + $0x14] sm:$0xf] %v5834
        %5867 = vst [vmem:[#allocation4 + $0x18] sm:$0xf] %v5835
        %5868 = vst [vmem:[#allocation4 + $0x1c] sm:$0xf] %v5836
        %5869 = vst [vmem:[#allocation4 + $0x20] sm:$0xf] %v5837
        %5870 = vst [vmem:[#allocation4 + $0x24] sm:$0xf] %v5838
        %5871 = vst [vmem:[#allocation4 + $0x28] sm:$0xf] %v5839
        %5872 = vst [vmem:[#allocation4 + $0x2c] sm:$0xf] %v5840
        %5873 = vst [vmem:[#allocation4 + $0x30] sm:$0xf] %v5841
        %5874 = vst [vmem:[#allocation4 + $0x34] sm:$0xf] %v5842
        %5875 = vst [vmem:[#allocation4 + $0x38] sm:$0xf] %v5843
        %5876 = vst [vmem:[#allocation4 + $0x3c] sm:$0xf] %v5844
        %5877 = vst [vmem:[#allocation4 + $0x40] sm:$0xf] %v5845
        %5878 = vst [vmem:[#allocation4 + $0x44] sm:$0xf] %v5846
        %5879 = vst [vmem:[#allocation4 + $0x48] sm:$0xf] %v5847
        %5880 = vst [vmem:[#allocation4 + $0x4c] sm:$0xf] %v5848
        %5881 = vst [vmem:[#allocation4 + $0x50] sm:$0xf] %v5849
        %5882 = vst [vmem:[#allocation4 + $0x54] sm:$0xf] %v5850
        %5883 = vst [vmem:[#allocation4 + $0x58] sm:$0xf] %v5851
        %5884 = vst [vmem:[#allocation4 + $0x5c] sm:$0xf] %v5852
        %5885 = vst [vmem:[#allocation4 + $0x60] sm:$0xf] %v5853
        %5886 = vst [vmem:[#allocation4 + $0x64] sm:$0xf] %v5854
        %5887 = vst [vmem:[#allocation4 + $0x68] sm:$0xf] %v5855
        %5888 = vst [vmem:[#allocation4 + $0x6c] sm:$0xf] %v5856
        %5889 = vst [vmem:[#allocation4 + $0x70] sm:$0xf] %v5857
        %5890 = vst [vmem:[#allocation4 + $0x74] sm:$0xf] %v5858
        %5891 = vst [vmem:[#allocation4 + $0x78] sm:$0xf] %v5859
        %5892 = vst [vmem:[#allocation4 + $0x7c] sm:$0xf] %v5860
        %v5893 = vld [vmem:[#allocation4] sm:$0xf]
        %v5894 = vld [vmem:[#allocation4 + $0x4] sm:$0xf]
        %v5895 = vld [vmem:[#allocation4 + $0x8] sm:$0xf]
        %v5896 = vld [vmem:[#allocation4 + $0xc] sm:$0xf]
        %v5897 = vld [vmem:[#allocation4 + $0x10] sm:$0xf]
        %v5898 = vld [vmem:[#allocation4 + $0x14] sm:$0xf]
        %v5899 = vld [vmem:[#allocation4 + $0x18] sm:$0xf]
        %v5900 = vld [vmem:[#allocation4 + $0x1c] sm:$0xf]
        %v5901 = vld [vmem:[#allocation4 + $0x20] sm:$0xf]
        %v5902 = vld [vmem:[#allocation4 + $0x24] sm:$0xf]
        %v5903 = vld [vmem:[#allocation4 + $0x28] sm:$0xf]
        %v5904 = vld [vmem:[#allocation4 + $0x2c] sm:$0xf]
        %v5905 = vld [vmem:[#allocation4 + $0x30] sm:$0xf]
        %v5906 = vld [vmem:[#allocation4 + $0x34] sm:$0xf]
        %v5907 = vld [vmem:[#allocation4 + $0x38] sm:$0xf]
        %v5908 = vld [vmem:[#allocation4 + $0x3c] sm:$0xf]
        %v5909 = vld [vmem:[#allocation4 + $0x40] sm:$0xf]
        %v5910 = vld [vmem:[#allocation4 + $0x44] sm:$0xf]
        %v5911 = vld [vmem:[#allocation4 + $0x48] sm:$0xf]
        %v5912 = vld [vmem:[#allocation4 + $0x4c] sm:$0xf]
        %v5913 = vld [vmem:[#allocation4 + $0x50] sm:$0xf]
        %v5914 = vld [vmem:[#allocation4 + $0x54] sm:$0xf]
        %v5915 = vld [vmem:[#allocation4 + $0x58] sm:$0xf]
        %v5916 = vld [vmem:[#allocation4 + $0x5c] sm:$0xf]
        %v5917 = vld [vmem:[#allocation4 + $0x60] sm:$0xf]
        %v5918 = vld [vmem:[#allocation4 + $0x64] sm:$0xf]
        %v5919 = vld [vmem:[#allocation4 + $0x68] sm:$0xf]
        %v5920 = vld [vmem:[#allocation4 + $0x6c] sm:$0xf]
        %v5921 = vld [vmem:[#allocation4 + $0x70] sm:$0xf]
        %v5922 = vld [vmem:[#allocation4 + $0x74] sm:$0xf]
        %v5923 = vld [vmem:[#allocation4 + $0x78] sm:$0xf]
        %v5924 = vld [vmem:[#allocation4 + $0x7c] sm:$0xf]
        %v5925 = vld [vmem:[#allocation6] sm:$0xf]
        %v5926 = vld [vmem:[#allocation6 + $0x4] sm:$0xf]
        %v5927 = vld [vmem:[#allocation6 + $0x8] sm:$0xf]
        %v5928 = vld [vmem:[#allocation6 + $0xc] sm:$0xf]
        %v5929 = vld [vmem:[#allocation6 + $0x10] sm:$0xf]
        %v5930 = vld [vmem:[#allocation6 + $0x14] sm:$0xf]
        %v5931 = vld [vmem:[#allocation6 + $0x18] sm:$0xf]
        %v5932 = vld [vmem:[#allocation6 + $0x1c] sm:$0xf]
        %v5933 = vld [vmem:[#allocation6 + $0x20] sm:$0xf]
        %v5934 = vld [vmem:[#allocation6 + $0x24] sm:$0xf]
        %v5935 = vld [vmem:[#allocation6 + $0x28] sm:$0xf]
        %v5936 = vld [vmem:[#allocation6 + $0x2c] sm:$0xf]
        %v5937 = vld [vmem:[#allocation6 + $0x30] sm:$0xf]
        %v5938 = vld [vmem:[#allocation6 + $0x34] sm:$0xf]
        %v5939 = vld [vmem:[#allocation6 + $0x38] sm:$0xf]
        %v5940 = vld [vmem:[#allocation6 + $0x3c] sm:$0xf]
        %v5941 = vld [vmem:[%s4] sm:$0x1]
        %v5943 = vperm.slane %v5941, 0
        %v5977 = vunpack.c.l.b16 %v5893
        %v5978 = vunpack.c.l.b16 %v5894
        %v5979 = vunpack.c.l.b16 %v5895
        %v5980 = vunpack.c.l.b16 %v5896
        %v5981 = vunpack.c.l.b16 %v5897
        %v5982 = vunpack.c.l.b16 %v5898
        %v5983 = vunpack.c.l.b16 %v5899
        %v5984 = vunpack.c.l.b16 %v5900
        %v5985 = vunpack.c.l.b16 %v5901
        %v5986 = vunpack.c.l.b16 %v5902
        %v5987 = vunpack.c.l.b16 %v5903
        %v5988 = vunpack.c.l.b16 %v5904
        %v5989 = vunpack.c.l.b16 %v5905
        %v5990 = vunpack.c.l.b16 %v5906
        %v5991 = vunpack.c.l.b16 %v5907
        %v5992 = vunpack.c.l.b16 %v5908
        %v5993 = vunpack.c.l.b16 %v5909
        %v5994 = vunpack.c.l.b16 %v5910
        %v5995 = vunpack.c.l.b16 %v5911
        %v5996 = vunpack.c.l.b16 %v5912
        %v5997 = vunpack.c.l.b16 %v5913
        %v5998 = vunpack.c.l.b16 %v5914
        %v5999 = vunpack.c.l.b16 %v5915
        %v6000 = vunpack.c.l.b16 %v5916
        %v6001 = vunpack.c.l.b16 %v5917
        %v6002 = vunpack.c.l.b16 %v5918
        %v6003 = vunpack.c.l.b16 %v5919
        %v6004 = vunpack.c.l.b16 %v5920
        %v6005 = vunpack.c.l.b16 %v5921
        %v6006 = vunpack.c.l.b16 %v5922
        %v6007 = vunpack.c.l.b16 %v5923
        %v6008 = vunpack.c.l.b16 %v5924
        %v6009 = vpack.c.b16 %v5978, %v5977
        %v6010 = vpack.c.b16 %v5980, %v5979
        %v6011 = vpack.c.b16 %v5982, %v5981
        %v6012 = vpack.c.b16 %v5984, %v5983
        %v6013 = vpack.c.b16 %v5986, %v5985
        %v6014 = vpack.c.b16 %v5988, %v5987
        %v6015 = vpack.c.b16 %v5990, %v5989
        %v6016 = vpack.c.b16 %v5992, %v5991
        %v6017 = vpack.c.b16 %v5994, %v5993
        %v6018 = vpack.c.b16 %v5996, %v5995
        %v6019 = vpack.c.b16 %v5998, %v5997
        %v6020 = vpack.c.b16 %v6000, %v5999
        %v6021 = vpack.c.b16 %v6002, %v6001
        %v6022 = vpack.c.b16 %v6004, %v6003
        %v6023 = vpack.c.b16 %v6006, %v6005
        %v6024 = vpack.c.b16 %v6008, %v6007
        %v6057 = vunpack.c.l.b16 %v5925
        %v6058 = vunpack.c.l.b16 %v5926
        %v6059 = vunpack.c.l.b16 %v5927
        %v6060 = vunpack.c.l.b16 %v5928
        %v6061 = vunpack.c.l.b16 %v5929
        %v6062 = vunpack.c.l.b16 %v5930
        %v6063 = vunpack.c.l.b16 %v5931
        %v6064 = vunpack.c.l.b16 %v5932
        %v6065 = vunpack.c.l.b16 %v5933
        %v6066 = vunpack.c.l.b16 %v5934
        %v6067 = vunpack.c.l.b16 %v5935
        %v6068 = vunpack.c.l.b16 %v5936
        %v6069 = vunpack.c.l.b16 %v5937
        %v6070 = vunpack.c.l.b16 %v5938
        %v6071 = vunpack.c.l.b16 %v5939
        %v6072 = vunpack.c.l.b16 %v5940
        %v6073 = vpack.c.b16 %v6058, %v6057
        %v6074 = vpack.c.b16 %v6060, %v6059
        %v6075 = vpack.c.b16 %v6062, %v6061
        %v6076 = vpack.c.b16 %v6064, %v6063
        %v6077 = vpack.c.b16 %v6066, %v6065
        %v6078 = vpack.c.b16 %v6068, %v6067
        %v6079 = vpack.c.b16 %v6070, %v6069
        %v6080 = vpack.c.b16 %v6072, %v6071
        %6089 = vmatpush.bf16.msra.mxu0 %v6080
        %6090 = vmatpush.bf16.msra.mxu0 %v6079
        %6091 = vmatpush.bf16.msra.mxu0 %v6078
        %6092 = vmatpush.bf16.msra.mxu0 %v6077
        %6093 = vmatpush.bf16.msra.mxu0 %v6076
        %6094 = vmatpush.bf16.msra.mxu0 %v6075
        %6095 = vmatpush.bf16.msra.mxu0 %v6074
        %6096 = vmatpush.bf16.msra.mxu0 %v6073
        %6097 = vmatmul.bf16.gmra.mxu0 %v6009
        %v6098 = vpop.f32.mrf.mxu0
        %v6099 = vadd.f32 %v5943, %v6098
        %v6100 = vpop.f32.mrf.mxu0
        %v6101 = vadd.f32 %v5943, %v6100
        %6102 = vmatmul.bf16.gmra.mxu0 %v6010
        %v6103 = vpop.f32.mrf.mxu0
        %v6104 = vadd.f32 %v5943, %v6103
        %v6105 = vpop.f32.mrf.mxu0
        %v6106 = vadd.f32 %v5943, %v6105
        %6107 = vmatmul.bf16.gmra.mxu0 %v6011
        %v6108 = vpop.f32.mrf.mxu0
        %v6109 = vadd.f32 %v5943, %v6108
        %v6110 = vpop.f32.mrf.mxu0
        %v6111 = vadd.f32 %v5943, %v6110
        %6112 = vmatmul.bf16.gmra.mxu0 %v6012
        %v6113 = vpop.f32.mrf.mxu0
        %v6114 = vadd.f32 %v5943, %v6113
        %v6115 = vpop.f32.mrf.mxu0
        %v6116 = vadd.f32 %v5943, %v6115
        %6117 = vmatmul.bf16.gmra.mxu0 %v6013
        %v6118 = vpop.f32.mrf.mxu0
        %v6119 = vadd.f32 %v5943, %v6118
        %v6120 = vpop.f32.mrf.mxu0
        %v6121 = vadd.f32 %v5943, %v6120
        %6122 = vmatmul.bf16.gmra.mxu0 %v6014
        %v6123 = vpop.f32.mrf.mxu0
        %v6124 = vadd.f32 %v5943, %v6123
        %v6125 = vpop.f32.mrf.mxu0
        %v6126 = vadd.f32 %v5943, %v6125
        %6127 = vmatmul.bf16.gmra.mxu0 %v6015
        %v6128 = vpop.f32.mrf.mxu0
        %v6129 = vadd.f32 %v5943, %v6128
        %v6130 = vpop.f32.mrf.mxu0
        %v6131 = vadd.f32 %v5943, %v6130
        %6132 = vmatmul.bf16.gmra.mxu0 %v6016
        %v6133 = vpop.f32.mrf.mxu0
        %v6134 = vadd.f32 %v5943, %v6133
        %v6135 = vpop.f32.mrf.mxu0
        %v6136 = vadd.f32 %v5943, %v6135
        %6137 = vmatmul.bf16.gmra.mxu0 %v6017
        %v6138 = vpop.f32.mrf.mxu0
        %v6139 = vadd.f32 %v5943, %v6138
        %v6140 = vpop.f32.mrf.mxu0
        %v6141 = vadd.f32 %v5943, %v6140
        %6142 = vmatmul.bf16.gmra.mxu0 %v6018
        %v6143 = vpop.f32.mrf.mxu0
        %v6144 = vadd.f32 %v5943, %v6143
        %v6145 = vpop.f32.mrf.mxu0
        %v6146 = vadd.f32 %v5943, %v6145
        %6147 = vmatmul.bf16.gmra.mxu0 %v6019
        %v6148 = vpop.f32.mrf.mxu0
        %v6149 = vadd.f32 %v5943, %v6148
        %v6150 = vpop.f32.mrf.mxu0
        %v6151 = vadd.f32 %v5943, %v6150
        %6152 = vmatmul.bf16.gmra.mxu0 %v6020
        %v6153 = vpop.f32.mrf.mxu0
        %v6154 = vadd.f32 %v5943, %v6153
        %v6155 = vpop.f32.mrf.mxu0
        %v6156 = vadd.f32 %v5943, %v6155
        %6157 = vmatmul.bf16.gmra.mxu0 %v6021
        %v6158 = vpop.f32.mrf.mxu0
        %v6159 = vadd.f32 %v5943, %v6158
        %v6160 = vpop.f32.mrf.mxu0
        %v6161 = vadd.f32 %v5943, %v6160
        %6162 = vmatmul.bf16.gmra.mxu0 %v6022
        %v6163 = vpop.f32.mrf.mxu0
        %v6164 = vadd.f32 %v5943, %v6163
        %v6165 = vpop.f32.mrf.mxu0
        %v6166 = vadd.f32 %v5943, %v6165
        %6167 = vmatmul.bf16.gmra.mxu0 %v6023
        %v6168 = vpop.f32.mrf.mxu0
        %v6169 = vadd.f32 %v5943, %v6168
        %v6170 = vpop.f32.mrf.mxu0
        %v6171 = vadd.f32 %v5943, %v6170
        %6172 = vmatmul.bf16.gmra.mxu0 %v6024
        %v6173 = vpop.f32.mrf.mxu0
        %v6174 = vadd.f32 %v5943, %v6173
        %v6175 = vpop.f32.mrf.mxu0
        %v6176 = vadd.f32 %v5943, %v6175
        %6177 = vdwg.mxu0
        %v6178 = vmax.f32 %v6099, 0.0
        %v6179 = vmax.f32 %v6101, 0.0
        %v6180 = vmax.f32 %v6104, 0.0
        %v6181 = vmax.f32 %v6106, 0.0
        %v6182 = vmax.f32 %v6109, 0.0
        %v6183 = vmax.f32 %v6111, 0.0
        %v6184 = vmax.f32 %v6114, 0.0
        %v6185 = vmax.f32 %v6116, 0.0
        %v6186 = vmax.f32 %v6119, 0.0
        %v6187 = vmax.f32 %v6121, 0.0
        %v6188 = vmax.f32 %v6124, 0.0
        %v6189 = vmax.f32 %v6126, 0.0
        %v6190 = vmax.f32 %v6129, 0.0
        %v6191 = vmax.f32 %v6131, 0.0
        %v6192 = vmax.f32 %v6134, 0.0
        %v6193 = vmax.f32 %v6136, 0.0
        %v6194 = vmax.f32 %v6139, 0.0
        %v6195 = vmax.f32 %v6141, 0.0
        %v6196 = vmax.f32 %v6144, 0.0
        %v6197 = vmax.f32 %v6146, 0.0
        %v6198 = vmax.f32 %v6149, 0.0
        %v6199 = vmax.f32 %v6151, 0.0
        %v6200 = vmax.f32 %v6154, 0.0
        %v6201 = vmax.f32 %v6156, 0.0
        %v6202 = vmax.f32 %v6159, 0.0
        %v6203 = vmax.f32 %v6161, 0.0
        %v6204 = vmax.f32 %v6164, 0.0
        %v6205 = vmax.f32 %v6166, 0.0
        %v6206 = vmax.f32 %v6169, 0.0
        %v6207 = vmax.f32 %v6171, 0.0
        %v6208 = vmax.f32 %v6174, 0.0
        %v6209 = vmax.f32 %v6176, 0.0
        %v6210 = vpack.c.bf16 %v6178, %v6178
        %v6211 = vpack.c.bf16 %v6179, %v6179
        %v6212 = vpack.c.bf16 %v6180, %v6180
        %v6213 = vpack.c.bf16 %v6181, %v6181
        %v6214 = vpack.c.bf16 %v6182, %v6182
        %v6215 = vpack.c.bf16 %v6183, %v6183
        %v6216 = vpack.c.bf16 %v6184, %v6184
        %v6217 = vpack.c.bf16 %v6185, %v6185
        %v6218 = vpack.c.bf16 %v6186, %v6186
        %v6219 = vpack.c.bf16 %v6187, %v6187
        %v6220 = vpack.c.bf16 %v6188, %v6188
        %v6221 = vpack.c.bf16 %v6189, %v6189
        %v6222 = vpack.c.bf16 %v6190, %v6190
        %v6223 = vpack.c.bf16 %v6191, %v6191
        %v6224 = vpack.c.bf16 %v6192, %v6192
        %v6225 = vpack.c.bf16 %v6193, %v6193
        %v6226 = vpack.c.bf16 %v6194, %v6194
        %v6227 = vpack.c.bf16 %v6195, %v6195
        %v6228 = vpack.c.bf16 %v6196, %v6196
        %v6229 = vpack.c.bf16 %v6197, %v6197
        %v6230 = vpack.c.bf16 %v6198, %v6198
        %v6231 = vpack.c.bf16 %v6199, %v6199
        %v6232 = vpack.c.bf16 %v6200, %v6200
        %v6233 = vpack.c.bf16 %v6201, %v6201
        %v6234 = vpack.c.bf16 %v6202, %v6202
        %v6235 = vpack.c.bf16 %v6203, %v6203
        %v6236 = vpack.c.bf16 %v6204, %v6204
        %v6237 = vpack.c.bf16 %v6205, %v6205
        %v6238 = vpack.c.bf16 %v6206, %v6206
        %v6239 = vpack.c.bf16 %v6207, %v6207
        %v6240 = vpack.c.bf16 %v6208, %v6208
        %v6241 = vpack.c.bf16 %v6209, %v6209
        %v6274 = vunpack.c.l.b16 %v6210
        %v6275 = vunpack.c.l.b16 %v6211
        %v6276 = vunpack.c.l.b16 %v6212
        %v6277 = vunpack.c.l.b16 %v6213
        %v6278 = vunpack.c.l.b16 %v6214
        %v6279 = vunpack.c.l.b16 %v6215
        %v6280 = vunpack.c.l.b16 %v6216
        %v6281 = vunpack.c.l.b16 %v6217
        %v6282 = vunpack.c.l.b16 %v6218
        %v6283 = vunpack.c.l.b16 %v6219
        %v6284 = vunpack.c.l.b16 %v6220
        %v6285 = vunpack.c.l.b16 %v6221
        %v6286 = vunpack.c.l.b16 %v6222
        %v6287 = vunpack.c.l.b16 %v6223
        %v6288 = vunpack.c.l.b16 %v6224
        %v6289 = vunpack.c.l.b16 %v6225
        %v6290 = vunpack.c.l.b16 %v6226
        %v6291 = vunpack.c.l.b16 %v6227
        %v6292 = vunpack.c.l.b16 %v6228
        %v6293 = vunpack.c.l.b16 %v6229
        %v6294 = vunpack.c.l.b16 %v6230
        %v6295 = vunpack.c.l.b16 %v6231
        %v6296 = vunpack.c.l.b16 %v6232
        %v6297 = vunpack.c.l.b16 %v6233
        %v6298 = vunpack.c.l.b16 %v6234
        %v6299 = vunpack.c.l.b16 %v6235
        %v6300 = vunpack.c.l.b16 %v6236
        %v6301 = vunpack.c.l.b16 %v6237
        %v6302 = vunpack.c.l.b16 %v6238
        %v6303 = vunpack.c.l.b16 %v6239
        %v6304 = vunpack.c.l.b16 %v6240
        %v6305 = vunpack.c.l.b16 %v6241
        %v6306 = vpack.c.b16 %v6275, %v6274
        %v6307 = vpack.c.b16 %v6277, %v6276
        %v6308 = vpack.c.b16 %v6279, %v6278
        %v6309 = vpack.c.b16 %v6281, %v6280
        %v6310 = vpack.c.b16 %v6283, %v6282
        %v6311 = vpack.c.b16 %v6285, %v6284
        %v6312 = vpack.c.b16 %v6287, %v6286
        %v6313 = vpack.c.b16 %v6289, %v6288
        %v6314 = vpack.c.b16 %v6291, %v6290
        %v6315 = vpack.c.b16 %v6293, %v6292
        %v6316 = vpack.c.b16 %v6295, %v6294
        %v6317 = vpack.c.b16 %v6297, %v6296
        %v6318 = vpack.c.b16 %v6299, %v6298
        %v6319 = vpack.c.b16 %v6301, %v6300
        %v6320 = vpack.c.b16 %v6303, %v6302
        %v6321 = vpack.c.b16 %v6305, %v6304
        %v6323 = vshrl.u32 %v6306, 16
        %v6325 = vrot.slane %v6323, 7
        %v6326 = vshll.u32 %v6306, 16
        %v6328 = vor.u32 %v6325, %v6326
        %v6330 = vshrl.u32 %v6307, 16
        %v6332 = vrot.slane %v6330, 7
        %v6333 = vshll.u32 %v6307, 16
        %v6335 = vor.u32 %v6332, %v6333
        %v6337 = vshrl.u32 %v6308, 16
        %v6339 = vrot.slane %v6337, 7
        %v6340 = vshll.u32 %v6308, 16
        %v6342 = vor.u32 %v6339, %v6340
        %v6344 = vshrl.u32 %v6309, 16
        %v6346 = vrot.slane %v6344, 7
        %v6347 = vshll.u32 %v6309, 16
        %v6349 = vor.u32 %v6346, %v6347
        %v6351 = vshrl.u32 %v6310, 16
        %v6353 = vrot.slane %v6351, 7
        %v6354 = vshll.u32 %v6310, 16
        %v6356 = vor.u32 %v6353, %v6354
        %v6358 = vshrl.u32 %v6311, 16
        %v6360 = vrot.slane %v6358, 7
        %v6361 = vshll.u32 %v6311, 16
        %v6363 = vor.u32 %v6360, %v6361
        %v6365 = vshrl.u32 %v6312, 16
        %v6367 = vrot.slane %v6365, 7
        %v6368 = vshll.u32 %v6312, 16
        %v6370 = vor.u32 %v6367, %v6368
        %v6372 = vshrl.u32 %v6313, 16
        %v6374 = vrot.slane %v6372, 7
        %v6375 = vshll.u32 %v6313, 16
        %v6377 = vor.u32 %v6374, %v6375
        %v6379 = vshrl.u32 %v6314, 16
        %v6381 = vrot.slane %v6379, 7
        %v6382 = vshll.u32 %v6314, 16
        %v6384 = vor.u32 %v6381, %v6382
        %v6386 = vshrl.u32 %v6315, 16
        %v6388 = vrot.slane %v6386, 7
        %v6389 = vshll.u32 %v6315, 16
        %v6391 = vor.u32 %v6388, %v6389
        %v6393 = vshrl.u32 %v6316, 16
        %v6395 = vrot.slane %v6393, 7
        %v6396 = vshll.u32 %v6316, 16
        %v6398 = vor.u32 %v6395, %v6396
        %v6400 = vshrl.u32 %v6317, 16
        %v6402 = vrot.slane %v6400, 7
        %v6403 = vshll.u32 %v6317, 16
        %v6405 = vor.u32 %v6402, %v6403
        %v6407 = vshrl.u32 %v6318, 16
        %v6409 = vrot.slane %v6407, 7
        %v6410 = vshll.u32 %v6318, 16
        %v6412 = vor.u32 %v6409, %v6410
        %v6414 = vshrl.u32 %v6319, 16
        %v6416 = vrot.slane %v6414, 7
        %v6417 = vshll.u32 %v6319, 16
        %v6419 = vor.u32 %v6416, %v6417
        %v6421 = vshrl.u32 %v6320, 16
        %v6423 = vrot.slane %v6421, 7
        %v6424 = vshll.u32 %v6320, 16
        %v6426 = vor.u32 %v6423, %v6424
        %v6428 = vshrl.u32 %v6321, 16
        %v6430 = vrot.slane %v6428, 7
        %v6431 = vshll.u32 %v6321, 16
        %v6433 = vor.u32 %v6430, %v6431
        %v6466 = vsel %vm740, 0, %v6328
        %v6467 = vsel %vm740, 0, %v6335
        %v6468 = vsel %vm740, 0, %v6342
        %v6469 = vsel %vm740, 0, %v6349
        %v6470 = vsel %vm740, 0, %v6356
        %v6471 = vsel %vm740, 0, %v6363
        %v6472 = vsel %vm740, 0, %v6370
        %v6473 = vsel %vm740, 0, %v6377
        %v6474 = vsel %vm740, 0, %v6384
        %v6475 = vsel %vm740, 0, %v6391
        %v6476 = vsel %vm740, 0, %v6398
        %v6477 = vsel %vm740, 0, %v6405
        %v6478 = vsel %vm740, 0, %v6412
        %v6479 = vsel %vm740, 0, %v6419
        %v6480 = vsel %vm740, 0, %v6426
        %v6481 = vsel %vm740, 0, %v6433
        %v6482 = vsel %vm740, %v6325, 0
        %v6483 = vsel %vm740, %v6332, 0
        %v6484 = vsel %vm740, %v6339, 0
        %v6485 = vsel %vm740, %v6346, 0
        %v6486 = vsel %vm740, %v6353, 0
        %v6487 = vsel %vm740, %v6360, 0
        %v6488 = vsel %vm740, %v6367, 0
        %v6489 = vsel %vm740, %v6374, 0
        %v6490 = vsel %vm740, %v6381, 0
        %v6491 = vsel %vm740, %v6388, 0
        %v6492 = vsel %vm740, %v6395, 0
        %v6493 = vsel %vm740, %v6402, 0
        %v6494 = vsel %vm740, %v6409, 0
        %v6495 = vsel %vm740, %v6416, 0
        %v6496 = vsel %vm740, %v6423, 0
        %v6497 = vsel %vm740, %v6430, 0
        %v6530 = vunpack.c.l.b16 %v6466
        %v6531 = vunpack.c.h.b16 %v6466
        %v6532 = vunpack.c.l.b16 %v6482
        %v6533 = vunpack.c.l.b16 %v6467
        %v6534 = vunpack.c.h.b16 %v6467
        %v6535 = vunpack.c.l.b16 %v6483
        %v6536 = vunpack.c.l.b16 %v6468
        %v6537 = vunpack.c.h.b16 %v6468
        %v6538 = vunpack.c.l.b16 %v6484
        %v6539 = vunpack.c.l.b16 %v6469
        %v6540 = vunpack.c.h.b16 %v6469
        %v6541 = vunpack.c.l.b16 %v6485
        %v6542 = vunpack.c.l.b16 %v6470
        %v6543 = vunpack.c.h.b16 %v6470
        %v6544 = vunpack.c.l.b16 %v6486
        %v6545 = vunpack.c.l.b16 %v6471
        %v6546 = vunpack.c.h.b16 %v6471
        %v6547 = vunpack.c.l.b16 %v6487
        %v6548 = vunpack.c.l.b16 %v6472
        %v6549 = vunpack.c.h.b16 %v6472
        %v6550 = vunpack.c.l.b16 %v6488
        %v6551 = vunpack.c.l.b16 %v6473
        %v6552 = vunpack.c.h.b16 %v6473
        %v6553 = vunpack.c.l.b16 %v6489
        %v6554 = vunpack.c.l.b16 %v6474
        %v6555 = vunpack.c.h.b16 %v6474
        %v6556 = vunpack.c.l.b16 %v6490
        %v6557 = vunpack.c.l.b16 %v6475
        %v6558 = vunpack.c.h.b16 %v6475
        %v6559 = vunpack.c.l.b16 %v6491
        %v6560 = vunpack.c.l.b16 %v6476
        %v6561 = vunpack.c.h.b16 %v6476
        %v6562 = vunpack.c.l.b16 %v6492
        %v6563 = vunpack.c.l.b16 %v6477
        %v6564 = vunpack.c.h.b16 %v6477
        %v6565 = vunpack.c.l.b16 %v6493
        %v6566 = vunpack.c.l.b16 %v6478
        %v6567 = vunpack.c.h.b16 %v6478
        %v6568 = vunpack.c.l.b16 %v6494
        %v6569 = vunpack.c.l.b16 %v6479
        %v6570 = vunpack.c.h.b16 %v6479
        %v6571 = vunpack.c.l.b16 %v6495
        %v6572 = vunpack.c.l.b16 %v6480
        %v6573 = vunpack.c.h.b16 %v6480
        %v6574 = vunpack.c.l.b16 %v6496
        %v6575 = vunpack.c.l.b16 %v6481
        %v6576 = vunpack.c.h.b16 %v6481
        %v6577 = vunpack.c.l.b16 %v6497
        %v6578 = vpack.c.b16 %v6530, %v6530
        %v6579 = vpack.c.b16 %v6531, %v6531
        %v6580 = vpack.c.b16 %v6532, %v6532
        %v6581 = vpack.c.b16 %v6533, %v6533
        %v6582 = vpack.c.b16 %v6534, %v6534
        %v6583 = vpack.c.b16 %v6535, %v6535
        %v6584 = vpack.c.b16 %v6536, %v6536
        %v6585 = vpack.c.b16 %v6537, %v6537
        %v6586 = vpack.c.b16 %v6538, %v6538
        %v6587 = vpack.c.b16 %v6539, %v6539
        %v6588 = vpack.c.b16 %v6540, %v6540
        %v6589 = vpack.c.b16 %v6541, %v6541
        %v6590 = vpack.c.b16 %v6542, %v6542
        %v6591 = vpack.c.b16 %v6543, %v6543
        %v6592 = vpack.c.b16 %v6544, %v6544
        %v6593 = vpack.c.b16 %v6545, %v6545
        %v6594 = vpack.c.b16 %v6546, %v6546
        %v6595 = vpack.c.b16 %v6547, %v6547
        %v6596 = vpack.c.b16 %v6548, %v6548
        %v6597 = vpack.c.b16 %v6549, %v6549
        %v6598 = vpack.c.b16 %v6550, %v6550
        %v6599 = vpack.c.b16 %v6551, %v6551
        %v6600 = vpack.c.b16 %v6552, %v6552
        %v6601 = vpack.c.b16 %v6553, %v6553
        %v6602 = vpack.c.b16 %v6554, %v6554
        %v6603 = vpack.c.b16 %v6555, %v6555
        %v6604 = vpack.c.b16 %v6556, %v6556
        %v6605 = vpack.c.b16 %v6557, %v6557
        %v6606 = vpack.c.b16 %v6558, %v6558
        %v6607 = vpack.c.b16 %v6559, %v6559
        %v6608 = vpack.c.b16 %v6560, %v6560
        %v6609 = vpack.c.b16 %v6561, %v6561
        %v6610 = vpack.c.b16 %v6562, %v6562
        %v6611 = vpack.c.b16 %v6563, %v6563
        %v6612 = vpack.c.b16 %v6564, %v6564
        %v6613 = vpack.c.b16 %v6565, %v6565
        %v6614 = vpack.c.b16 %v6566, %v6566
        %v6615 = vpack.c.b16 %v6567, %v6567
        %v6616 = vpack.c.b16 %v6568, %v6568
        %v6617 = vpack.c.b16 %v6569, %v6569
        %v6618 = vpack.c.b16 %v6570, %v6570
        %v6619 = vpack.c.b16 %v6571, %v6571
        %v6620 = vpack.c.b16 %v6572, %v6572
        %v6621 = vpack.c.b16 %v6573, %v6573
        %v6622 = vpack.c.b16 %v6574, %v6574
        %v6623 = vpack.c.b16 %v6575, %v6575
        %v6624 = vpack.c.b16 %v6576, %v6576
        %v6625 = vpack.c.b16 %v6577, %v6577
        %6674 = vst [vmem:[#allocation2] sm:$0xf] %v860
        %6675 = vst [vmem:[#allocation2 + $0x4] sm:$0xf] %v861
        %6676 = vst [vmem:[#allocation2 + $0x8] sm:$0x1] %v862
        %6677 = vst [vmem:[#allocation2 + $0xc] sm:$0xf] %v6578
        %6678 = vst [vmem:[#allocation2 + $0x10] sm:$0xf] %v6579
        %6679 = vst [vmem:[#allocation2 + $0x14] sm:$0x1] %v6580
        %6680 = vst [vmem:[#allocation2 + $0x18] sm:$0xf] %v6581
        %6681 = vst [vmem:[#allocation2 + $0x1c] sm:$0xf] %v6582
        %6682 = vst [vmem:[#allocation2 + $0x20] sm:$0x1] %v6583
        %6683 = vst [vmem:[#allocation2 + $0x24] sm:$0xf] %v6584
        %6684 = vst [vmem:[#allocation2 + $0x28] sm:$0xf] %v6585
        %6685 = vst [vmem:[#allocation2 + $0x2c] sm:$0x1] %v6586
        %6686 = vst [vmem:[#allocation2 + $0x30] sm:$0xf] %v6587
        %6687 = vst [vmem:[#allocation2 + $0x34] sm:$0xf] %v6588
        %6688 = vst [vmem:[#allocation2 + $0x38] sm:$0x1] %v6589
        %6689 = vst [vmem:[#allocation2 + $0x3c] sm:$0xf] %v6590
        %6690 = vst [vmem:[#allocation2 + $0x40] sm:$0xf] %v6591
        %6691 = vst [vmem:[#allocation2 + $0x44] sm:$0x1] %v6592
        %6692 = vst [vmem:[#allocation2 + $0x48] sm:$0xf] %v6593
        %6693 = vst [vmem:[#allocation2 + $0x4c] sm:$0xf] %v6594
        %6694 = vst [vmem:[#allocation2 + $0x50] sm:$0x1] %v6595
        %6695 = vst [vmem:[#allocation2 + $0x54] sm:$0xf] %v6596
        %6696 = vst [vmem:[#allocation2 + $0x58] sm:$0xf] %v6597
        %6697 = vst [vmem:[#allocation2 + $0x5c] sm:$0x1] %v6598
        %6698 = vst [vmem:[#allocation2 + $0x60] sm:$0xf] %v6599
        %6699 = vst [vmem:[#allocation2 + $0x64] sm:$0xf] %v6600
        %6700 = vst [vmem:[#allocation2 + $0x68] sm:$0x1] %v6601
        %6701 = vst [vmem:[#allocation2 + $0x6c] sm:$0xf] %v6602
        %6702 = vst [vmem:[#allocation2 + $0x70] sm:$0xf] %v6603
        %6703 = vst [vmem:[#allocation2 + $0x74] sm:$0x1] %v6604
        %6704 = vst [vmem:[#allocation2 + $0x78] sm:$0xf] %v6605
        %6705 = vst [vmem:[#allocation2 + $0x7c] sm:$0xf] %v6606
        %6706 = vst [vmem:[#allocation2 + $0x80] sm:$0x1] %v6607
        %6707 = vst [vmem:[#allocation2 + $0x84] sm:$0xf] %v6608
        %6708 = vst [vmem:[#allocation2 + $0x88] sm:$0xf] %v6609
        %6709 = vst [vmem:[#allocation2 + $0x8c] sm:$0x1] %v6610
        %6710 = vst [vmem:[#allocation2 + $0x90] sm:$0xf] %v6611
        %6711 = vst [vmem:[#allocation2 + $0x94] sm:$0xf] %v6612
        %6712 = vst [vmem:[#allocation2 + $0x98] sm:$0x1] %v6613
        %6713 = vst [vmem:[#allocation2 + $0x9c] sm:$0xf] %v6614
        %6714 = vst [vmem:[#allocation2 + $0xa0] sm:$0xf] %v6615
        %6715 = vst [vmem:[#allocation2 + $0xa4] sm:$0x1] %v6616
        %6716 = vst [vmem:[#allocation2 + $0xa8] sm:$0xf] %v6617
        %6717 = vst [vmem:[#allocation2 + $0xac] sm:$0xf] %v6618
        %6718 = vst [vmem:[#allocation2 + $0xb0] sm:$0x1] %v6619
        %6719 = vst [vmem:[#allocation2 + $0xb4] sm:$0xf] %v6620
        %6720 = vst [vmem:[#allocation2 + $0xb8] sm:$0xf] %v6621
        %6721 = vst [vmem:[#allocation2 + $0xbc] sm:$0x1] %v6622
        %6722 = vst [vmem:[#allocation2 + $0xc0] sm:$0xf] %v6623
        %6723 = vst [vmem:[#allocation2 + $0xc4] sm:$0xf] %v6624
        %6724 = vst [vmem:[#allocation2 + $0xc8] sm:$0x1] %v6625
        %6725 = vst [vmem:[#allocation2 + $0xcc] sm:$0xf] %v860
        %6726 = vst [vmem:[#allocation2 + $0xd0] sm:$0xf] %v861
        %6727 = vst [vmem:[#allocation2 + $0xd4] sm:$0x1] %v862
        %v6728 = vld [vmem:[#allocation2] sm:$0xf]
        %v6729 = vld [vmem:[#allocation2 + $0x4] sm:$0xf]
        %v6730 = vld [vmem:[#allocation2 + $0xc] sm:$0xf]
        %v6731 = vld [vmem:[#allocation2 + $0x10] sm:$0xf]
        %v6732 = vld [vmem:[#allocation2 + $0x18] sm:$0xf]
        %v6733 = vld [vmem:[#allocation2 + $0x1c] sm:$0xf]
        %v6734 = vld [vmem:[#allocation2 + $0x24] sm:$0xf]
        %v6735 = vld [vmem:[#allocation2 + $0x28] sm:$0xf]
        %v6736 = vld [vmem:[#allocation2 + $0x30] sm:$0xf]
        %v6737 = vld [vmem:[#allocation2 + $0x34] sm:$0xf]
        %v6738 = vld [vmem:[#allocation2 + $0x3c] sm:$0xf]
        %v6739 = vld [vmem:[#allocation2 + $0x40] sm:$0xf]
        %v6740 = vld [vmem:[#allocation2 + $0x48] sm:$0xf]
        %v6741 = vld [vmem:[#allocation2 + $0x4c] sm:$0xf]
        %v6742 = vld [vmem:[#allocation2 + $0x54] sm:$0xf]
        %v6743 = vld [vmem:[#allocation2 + $0x58] sm:$0xf]
        %v6744 = vld [vmem:[#allocation2 + $0x60] sm:$0xf]
        %v6745 = vld [vmem:[#allocation2 + $0x64] sm:$0xf]
        %v6746 = vld [vmem:[#allocation2 + $0x6c] sm:$0xf]
        %v6747 = vld [vmem:[#allocation2 + $0x70] sm:$0xf]
        %v6748 = vld [vmem:[#allocation2 + $0x78] sm:$0xf]
        %v6749 = vld [vmem:[#allocation2 + $0x7c] sm:$0xf]
        %v6750 = vld [vmem:[#allocation2 + $0x84] sm:$0xf]
        %v6751 = vld [vmem:[#allocation2 + $0x88] sm:$0xf]
        %v6752 = vld [vmem:[#allocation2 + $0x90] sm:$0xf]
        %v6753 = vld [vmem:[#allocation2 + $0x94] sm:$0xf]
        %v6754 = vld [vmem:[#allocation2 + $0x9c] sm:$0xf]
        %v6755 = vld [vmem:[#allocation2 + $0xa0] sm:$0xf]
        %v6756 = vld [vmem:[#allocation2 + $0xa8] sm:$0xf]
        %v6757 = vld [vmem:[#allocation2 + $0xac] sm:$0xf]
        %v6758 = vld [vmem:[#allocation2 + $0xb4] sm:$0xf]
        %v6759 = vld [vmem:[#allocation2 + $0xb8] sm:$0xf]
        %6760 = vst [vmem:[#allocation3] sm:$0xf] %v6728
        %6761 = vst [vmem:[#allocation3 + $0x24] sm:$0xf] %v6729
        %6762 = vst [vmem:[#allocation3 + $0x48] sm:$0xf] %v6730
        %6763 = vst [vmem:[#allocation3 + $0x6c] sm:$0xf] %v6731
        %6764 = vst [vmem:[#allocation3 + $0x90] sm:$0xf] %v6732
        %6765 = vst [vmem:[#allocation3 + $0xb4] sm:$0xf] %v6733
        %6766 = vst [vmem:[#allocation3 + $0xd8] sm:$0xf] %v6734
        %6767 = vst [vmem:[#allocation3 + $0xfc] sm:$0xf] %v6735
        %6768 = vst [vmem:[#allocation3 + $0x120] sm:$0xf] %v6736
        %6769 = vst [vmem:[#allocation3 + $0x144] sm:$0xf] %v6737
        %6770 = vst [vmem:[#allocation3 + $0x168] sm:$0xf] %v6738
        %6771 = vst [vmem:[#allocation3 + $0x18c] sm:$0xf] %v6739
        %6772 = vst [vmem:[#allocation3 + $0x1b0] sm:$0xf] %v6740
        %6773 = vst [vmem:[#allocation3 + $0x1d4] sm:$0xf] %v6741
        %6774 = vst [vmem:[#allocation3 + $0x1f8] sm:$0xf] %v6742
        %6775 = vst [vmem:[#allocation3 + $0x21c] sm:$0xf] %v6743
        %6776 = vst [vmem:[#allocation3 + $0x240] sm:$0xf] %v6744
        %6777 = vst [vmem:[#allocation3 + $0x264] sm:$0xf] %v6745
        %6778 = vst [vmem:[#allocation3 + $0x288] sm:$0xf] %v6746
        %6779 = vst [vmem:[#allocation3 + $0x2ac] sm:$0xf] %v6747
        %6780 = vst [vmem:[#allocation3 + $0x2d0] sm:$0xf] %v6748
        %6781 = vst [vmem:[#allocation3 + $0x2f4] sm:$0xf] %v6749
        %6782 = vst [vmem:[#allocation3 + $0x318] sm:$0xf] %v6750
        %6783 = vst [vmem:[#allocation3 + $0x33c] sm:$0xf] %v6751
        %6784 = vst [vmem:[#allocation3 + $0x360] sm:$0xf] %v6752
        %6785 = vst [vmem:[#allocation3 + $0x384] sm:$0xf] %v6753
        %6786 = vst [vmem:[#allocation3 + $0x3a8] sm:$0xf] %v6754
        %6787 = vst [vmem:[#allocation3 + $0x3cc] sm:$0xf] %v6755
        %6788 = vst [vmem:[#allocation3 + $0x3f0] sm:$0xf] %v6756
        %6789 = vst [vmem:[#allocation3 + $0x414] sm:$0xf] %v6757
        %6790 = vst [vmem:[#allocation3 + $0x438] sm:$0xf] %v6758
        %6791 = vst [vmem:[#allocation3 + $0x45c] sm:$0xf] %v6759
        %v6792 = vld [vmem:[#allocation2] sm:$0xf]
        %v6793 = vld [vmem:[#allocation2 + $0x4] sm:$0xf]
        %v6794 = vld [vmem:[#allocation2 + $0x8] sm:$0x1]
        %v6795 = vld [vmem:[#allocation2 + $0xc] sm:$0xf]
        %v6796 = vld [vmem:[#allocation2 + $0x10] sm:$0xf]
        %v6797 = vld [vmem:[#allocation2 + $0x14] sm:$0x1]
        %v6798 = vld [vmem:[#allocation2 + $0x18] sm:$0xf]
        %v6799 = vld [vmem:[#allocation2 + $0x1c] sm:$0xf]
        %v6800 = vld [vmem:[#allocation2 + $0x20] sm:$0x1]
        %v6801 = vld [vmem:[#allocation2 + $0x24] sm:$0xf]
        %v6802 = vld [vmem:[#allocation2 + $0x28] sm:$0xf]
        %v6803 = vld [vmem:[#allocation2 + $0x2c] sm:$0x1]
        %v6804 = vld [vmem:[#allocation2 + $0x30] sm:$0xf]
        %v6805 = vld [vmem:[#allocation2 + $0x34] sm:$0xf]
        %v6806 = vld [vmem:[#allocation2 + $0x38] sm:$0x1]
        %v6807 = vld [vmem:[#allocation2 + $0x3c] sm:$0xf]
        %v6808 = vld [vmem:[#allocation2 + $0x40] sm:$0xf]
        %v6809 = vld [vmem:[#allocation2 + $0x44] sm:$0x1]
        %v6810 = vld [vmem:[#allocation2 + $0x48] sm:$0xf]
        %v6811 = vld [vmem:[#allocation2 + $0x4c] sm:$0xf]
        %v6812 = vld [vmem:[#allocation2 + $0x50] sm:$0x1]
        %v6813 = vld [vmem:[#allocation2 + $0x54] sm:$0xf]
        %v6814 = vld [vmem:[#allocation2 + $0x58] sm:$0xf]
        %v6815 = vld [vmem:[#allocation2 + $0x5c] sm:$0x1]
        %v6816 = vld [vmem:[#allocation2 + $0x60] sm:$0xf]
        %v6817 = vld [vmem:[#allocation2 + $0x64] sm:$0xf]
        %v6818 = vld [vmem:[#allocation2 + $0x68] sm:$0x1]
        %v6819 = vld [vmem:[#allocation2 + $0x6c] sm:$0xf]
        %v6820 = vld [vmem:[#allocation2 + $0x70] sm:$0xf]
        %v6821 = vld [vmem:[#allocation2 + $0x74] sm:$0x1]
        %v6822 = vld [vmem:[#allocation2 + $0x78] sm:$0xf]
        %v6823 = vld [vmem:[#allocation2 + $0x7c] sm:$0xf]
        %v6824 = vld [vmem:[#allocation2 + $0x80] sm:$0x1]
        %v6825 = vld [vmem:[#allocation2 + $0x84] sm:$0xf]
        %v6826 = vld [vmem:[#allocation2 + $0x88] sm:$0xf]
        %v6827 = vld [vmem:[#allocation2 + $0x8c] sm:$0x1]
        %v6828 = vld [vmem:[#allocation2 + $0x90] sm:$0xf]
        %v6829 = vld [vmem:[#allocation2 + $0x94] sm:$0xf]
        %v6830 = vld [vmem:[#allocation2 + $0x98] sm:$0x1]
        %v6831 = vld [vmem:[#allocation2 + $0x9c] sm:$0xf]
        %v6832 = vld [vmem:[#allocation2 + $0xa0] sm:$0xf]
        %v6833 = vld [vmem:[#allocation2 + $0xa4] sm:$0x1]
        %v6834 = vld [vmem:[#allocation2 + $0xa8] sm:$0xf]
        %v6835 = vld [vmem:[#allocation2 + $0xac] sm:$0xf]
        %v6836 = vld [vmem:[#allocation2 + $0xb0] sm:$0x1]
        %v6837 = vld [vmem:[#allocation2 + $0xb4] sm:$0xf]
        %v6838 = vld [vmem:[#allocation2 + $0xb8] sm:$0xf]
        %v6839 = vld [vmem:[#allocation2 + $0xbc] sm:$0x1]
        %v6841 = vshrl.u32 %v6792, 16
        %v6843 = vrot.slane %v6841, 4
        %v6844 = vshll.u32 %v6792, 16
        %v6846 = vrot.slane %v6844, 5
        %v6847 = vor.u32 %v6843, %v6846
        %v6848 = vrot.slane %v6847, 4
        %v6850 = vshll.u32 %v6793, 16
        %v6852 = vrot.slane %v6850, 5
        %v6853 = vsel %vm1130, %v6848, %v6852
        %v6854 = vshrl.u32 %v6793, 16
        %v6856 = vrot.slane %v6854, 4
        %v6857 = vor.u32 %v6856, %v6852
        %v6858 = vrot.slane %v6857, 4
        %v6860 = vshll.u32 %v6794, 16
        %v6862 = vrot.slane %v6860, 5
        %v6863 = vsel %vm1130, %v6858, %v6862
        %v6865 = vshrl.u32 %v6795, 16
        %v6867 = vrot.slane %v6865, 4
        %v6868 = vshll.u32 %v6795, 16
        %v6870 = vrot.slane %v6868, 5
        %v6871 = vor.u32 %v6867, %v6870
        %v6872 = vrot.slane %v6871, 4
        %v6874 = vshll.u32 %v6796, 16
        %v6876 = vrot.slane %v6874, 5
        %v6877 = vsel %vm1130, %v6872, %v6876
        %v6878 = vshrl.u32 %v6796, 16
        %v6880 = vrot.slane %v6878, 4
        %v6881 = vor.u32 %v6880, %v6876
        %v6882 = vrot.slane %v6881, 4
        %v6884 = vshll.u32 %v6797, 16
        %v6886 = vrot.slane %v6884, 5
        %v6887 = vsel %vm1130, %v6882, %v6886
        %v6889 = vshrl.u32 %v6798, 16
        %v6891 = vrot.slane %v6889, 4
        %v6892 = vshll.u32 %v6798, 16
        %v6894 = vrot.slane %v6892, 5
        %v6895 = vor.u32 %v6891, %v6894
        %v6896 = vrot.slane %v6895, 4
        %v6898 = vshll.u32 %v6799, 16
        %v6900 = vrot.slane %v6898, 5
        %v6901 = vsel %vm1130, %v6896, %v6900
        %v6902 = vshrl.u32 %v6799, 16
        %v6904 = vrot.slane %v6902, 4
        %v6905 = vor.u32 %v6904, %v6900
        %v6906 = vrot.slane %v6905, 4
        %v6908 = vshll.u32 %v6800, 16
        %v6910 = vrot.slane %v6908, 5
        %v6911 = vsel %vm1130, %v6906, %v6910
        %v6913 = vshrl.u32 %v6801, 16
        %v6915 = vrot.slane %v6913, 4
        %v6916 = vshll.u32 %v6801, 16
        %v6918 = vrot.slane %v6916, 5
        %v6919 = vor.u32 %v6915, %v6918
        %v6920 = vrot.slane %v6919, 4
        %v6922 = vshll.u32 %v6802, 16
        %v6924 = vrot.slane %v6922, 5
        %v6925 = vsel %vm1130, %v6920, %v6924
        %v6926 = vshrl.u32 %v6802, 16
        %v6928 = vrot.slane %v6926, 4
        %v6929 = vor.u32 %v6928, %v6924
        %v6930 = vrot.slane %v6929, 4
        %v6932 = vshll.u32 %v6803, 16
        %v6934 = vrot.slane %v6932, 5
        %v6935 = vsel %vm1130, %v6930, %v6934
        %v6937 = vshrl.u32 %v6804, 16
        %v6939 = vrot.slane %v6937, 4
        %v6940 = vshll.u32 %v6804, 16
        %v6942 = vrot.slane %v6940, 5
        %v6943 = vor.u32 %v6939, %v6942
        %v6944 = vrot.slane %v6943, 4
        %v6946 = vshll.u32 %v6805, 16
        %v6948 = vrot.slane %v6946, 5
        %v6949 = vsel %vm1130, %v6944, %v6948
        %v6950 = vshrl.u32 %v6805, 16
        %v6952 = vrot.slane %v6950, 4
        %v6953 = vor.u32 %v6952, %v6948
        %v6954 = vrot.slane %v6953, 4
        %v6956 = vshll.u32 %v6806, 16
        %v6958 = vrot.slane %v6956, 5
        %v6959 = vsel %vm1130, %v6954, %v6958
        %v6961 = vshrl.u32 %v6807, 16
        %v6963 = vrot.slane %v6961, 4
        %v6964 = vshll.u32 %v6807, 16
        %v6966 = vrot.slane %v6964, 5
        %v6967 = vor.u32 %v6963, %v6966
        %v6968 = vrot.slane %v6967, 4
        %v6970 = vshll.u32 %v6808, 16
        %v6972 = vrot.slane %v6970, 5
        %v6973 = vsel %vm1130, %v6968, %v6972
        %v6974 = vshrl.u32 %v6808, 16
        %v6976 = vrot.slane %v6974, 4
        %v6977 = vor.u32 %v6976, %v6972
        %v6978 = vrot.slane %v6977, 4
        %v6980 = vshll.u32 %v6809, 16
        %v6982 = vrot.slane %v6980, 5
        %v6983 = vsel %vm1130, %v6978, %v6982
        %v6985 = vshrl.u32 %v6810, 16
        %v6987 = vrot.slane %v6985, 4
        %v6988 = vshll.u32 %v6810, 16
        %v6990 = vrot.slane %v6988, 5
        %v6991 = vor.u32 %v6987, %v6990
        %v6992 = vrot.slane %v6991, 4
        %v6994 = vshll.u32 %v6811, 16
        %v6996 = vrot.slane %v6994, 5
        %v6997 = vsel %vm1130, %v6992, %v6996
        %v6998 = vshrl.u32 %v6811, 16
        %v7000 = vrot.slane %v6998, 4
        %v7001 = vor.u32 %v7000, %v6996
        %v7002 = vrot.slane %v7001, 4
        %v7004 = vshll.u32 %v6812, 16
        %v7006 = vrot.slane %v7004, 5
        %v7007 = vsel %vm1130, %v7002, %v7006
        %v7009 = vshrl.u32 %v6813, 16
        %v7011 = vrot.slane %v7009, 4
        %v7012 = vshll.u32 %v6813, 16
        %v7014 = vrot.slane %v7012, 5
        %v7015 = vor.u32 %v7011, %v7014
        %v7016 = vrot.slane %v7015, 4
        %v7018 = vshll.u32 %v6814, 16
        %v7020 = vrot.slane %v7018, 5
        %v7021 = vsel %vm1130, %v7016, %v7020
        %v7022 = vshrl.u32 %v6814, 16
        %v7024 = vrot.slane %v7022, 4
        %v7025 = vor.u32 %v7024, %v7020
        %v7026 = vrot.slane %v7025, 4
        %v7028 = vshll.u32 %v6815, 16
        %v7030 = vrot.slane %v7028, 5
        %v7031 = vsel %vm1130, %v7026, %v7030
        %v7033 = vshrl.u32 %v6816, 16
        %v7035 = vrot.slane %v7033, 4
        %v7036 = vshll.u32 %v6816, 16
        %v7038 = vrot.slane %v7036, 5
        %v7039 = vor.u32 %v7035, %v7038
        %v7040 = vrot.slane %v7039, 4
        %v7042 = vshll.u32 %v6817, 16
        %v7044 = vrot.slane %v7042, 5
        %v7045 = vsel %vm1130, %v7040, %v7044
        %v7046 = vshrl.u32 %v6817, 16
        %v7048 = vrot.slane %v7046, 4
        %v7049 = vor.u32 %v7048, %v7044
        %v7050 = vrot.slane %v7049, 4
        %v7052 = vshll.u32 %v6818, 16
        %v7054 = vrot.slane %v7052, 5
        %v7055 = vsel %vm1130, %v7050, %v7054
        %v7057 = vshrl.u32 %v6819, 16
        %v7059 = vrot.slane %v7057, 4
        %v7060 = vshll.u32 %v6819, 16
        %v7062 = vrot.slane %v7060, 5
        %v7063 = vor.u32 %v7059, %v7062
        %v7064 = vrot.slane %v7063, 4
        %v7066 = vshll.u32 %v6820, 16
        %v7068 = vrot.slane %v7066, 5
        %v7069 = vsel %vm1130, %v7064, %v7068
        %v7070 = vshrl.u32 %v6820, 16
        %v7072 = vrot.slane %v7070, 4
        %v7073 = vor.u32 %v7072, %v7068
        %v7074 = vrot.slane %v7073, 4
        %v7076 = vshll.u32 %v6821, 16
        %v7078 = vrot.slane %v7076, 5
        %v7079 = vsel %vm1130, %v7074, %v7078
        %v7081 = vshrl.u32 %v6822, 16
        %v7083 = vrot.slane %v7081, 4
        %v7084 = vshll.u32 %v6822, 16
        %v7086 = vrot.slane %v7084, 5
        %v7087 = vor.u32 %v7083, %v7086
        %v7088 = vrot.slane %v7087, 4
        %v7090 = vshll.u32 %v6823, 16
        %v7092 = vrot.slane %v7090, 5
        %v7093 = vsel %vm1130, %v7088, %v7092
        %v7094 = vshrl.u32 %v6823, 16
        %v7096 = vrot.slane %v7094, 4
        %v7097 = vor.u32 %v7096, %v7092
        %v7098 = vrot.slane %v7097, 4
        %v7100 = vshll.u32 %v6824, 16
        %v7102 = vrot.slane %v7100, 5
        %v7103 = vsel %vm1130, %v7098, %v7102
        %v7105 = vshrl.u32 %v6825, 16
        %v7107 = vrot.slane %v7105, 4
        %v7108 = vshll.u32 %v6825, 16
        %v7110 = vrot.slane %v7108, 5
        %v7111 = vor.u32 %v7107, %v7110
        %v7112 = vrot.slane %v7111, 4
        %v7114 = vshll.u32 %v6826, 16
        %v7116 = vrot.slane %v7114, 5
        %v7117 = vsel %vm1130, %v7112, %v7116
        %v7118 = vshrl.u32 %v6826, 16
        %v7120 = vrot.slane %v7118, 4
        %v7121 = vor.u32 %v7120, %v7116
        %v7122 = vrot.slane %v7121, 4
        %v7124 = vshll.u32 %v6827, 16
        %v7126 = vrot.slane %v7124, 5
        %v7127 = vsel %vm1130, %v7122, %v7126
        %v7129 = vshrl.u32 %v6828, 16
        %v7131 = vrot.slane %v7129, 4
        %v7132 = vshll.u32 %v6828, 16
        %v7134 = vrot.slane %v7132, 5
        %v7135 = vor.u32 %v7131, %v7134
        %v7136 = vrot.slane %v7135, 4
        %v7138 = vshll.u32 %v6829, 16
        %v7140 = vrot.slane %v7138, 5
        %v7141 = vsel %vm1130, %v7136, %v7140
        %v7142 = vshrl.u32 %v6829, 16
        %v7144 = vrot.slane %v7142, 4
        %v7145 = vor.u32 %v7144, %v7140
        %v7146 = vrot.slane %v7145, 4
        %v7148 = vshll.u32 %v6830, 16
        %v7150 = vrot.slane %v7148, 5
        %v7151 = vsel %vm1130, %v7146, %v7150
        %v7153 = vshrl.u32 %v6831, 16
        %v7155 = vrot.slane %v7153, 4
        %v7156 = vshll.u32 %v6831, 16
        %v7158 = vrot.slane %v7156, 5
        %v7159 = vor.u32 %v7155, %v7158
        %v7160 = vrot.slane %v7159, 4
        %v7162 = vshll.u32 %v6832, 16
        %v7164 = vrot.slane %v7162, 5
        %v7165 = vsel %vm1130, %v7160, %v7164
        %v7166 = vshrl.u32 %v6832, 16
        %v7168 = vrot.slane %v7166, 4
        %v7169 = vor.u32 %v7168, %v7164
        %v7170 = vrot.slane %v7169, 4
        %v7172 = vshll.u32 %v6833, 16
        %v7174 = vrot.slane %v7172, 5
        %v7175 = vsel %vm1130, %v7170, %v7174
        %v7177 = vshrl.u32 %v6834, 16
        %v7179 = vrot.slane %v7177, 4
        %v7180 = vshll.u32 %v6834, 16
        %v7182 = vrot.slane %v7180, 5
        %v7183 = vor.u32 %v7179, %v7182
        %v7184 = vrot.slane %v7183, 4
        %v7186 = vshll.u32 %v6835, 16
        %v7188 = vrot.slane %v7186, 5
        %v7189 = vsel %vm1130, %v7184, %v7188
        %v7190 = vshrl.u32 %v6835, 16
        %v7192 = vrot.slane %v7190, 4
        %v7193 = vor.u32 %v7192, %v7188
        %v7194 = vrot.slane %v7193, 4
        %v7196 = vshll.u32 %v6836, 16
        %v7198 = vrot.slane %v7196, 5
        %v7199 = vsel %vm1130, %v7194, %v7198
        %v7201 = vshrl.u32 %v6837, 16
        %v7203 = vrot.slane %v7201, 4
        %v7204 = vshll.u32 %v6837, 16
        %v7206 = vrot.slane %v7204, 5
        %v7207 = vor.u32 %v7203, %v7206
        %v7208 = vrot.slane %v7207, 4
        %v7210 = vshll.u32 %v6838, 16
        %v7212 = vrot.slane %v7210, 5
        %v7213 = vsel %vm1130, %v7208, %v7212
        %v7214 = vshrl.u32 %v6838, 16
        %v7216 = vrot.slane %v7214, 4
        %v7217 = vor.u32 %v7216, %v7212
        %v7218 = vrot.slane %v7217, 4
        %v7220 = vshll.u32 %v6839, 16
        %v7222 = vrot.slane %v7220, 5
        %v7223 = vsel %vm1130, %v7218, %v7222
        %7256 = vst [vmem:[#allocation3 + $0x4] sm:$0xf] %v6853
        %7257 = vst [vmem:[#allocation3 + $0x28] sm:$0xf] %v6863
        %7258 = vst [vmem:[#allocation3 + $0x4c] sm:$0xf] %v6877
        %7259 = vst [vmem:[#allocation3 + $0x70] sm:$0xf] %v6887
        %7260 = vst [vmem:[#allocation3 + $0x94] sm:$0xf] %v6901
        %7261 = vst [vmem:[#allocation3 + $0xb8] sm:$0xf] %v6911
        %7262 = vst [vmem:[#allocation3 + $0xdc] sm:$0xf] %v6925
        %7263 = vst [vmem:[#allocation3 + $0x100] sm:$0xf] %v6935
        %7264 = vst [vmem:[#allocation3 + $0x124] sm:$0xf] %v6949
        %7265 = vst [vmem:[#allocation3 + $0x148] sm:$0xf] %v6959
        %7266 = vst [vmem:[#allocation3 + $0x16c] sm:$0xf] %v6973
        %7267 = vst [vmem:[#allocation3 + $0x190] sm:$0xf] %v6983
        %7268 = vst [vmem:[#allocation3 + $0x1b4] sm:$0xf] %v6997
        %7269 = vst [vmem:[#allocation3 + $0x1d8] sm:$0xf] %v7007
        %7270 = vst [vmem:[#allocation3 + $0x1fc] sm:$0xf] %v7021
        %7271 = vst [vmem:[#allocation3 + $0x220] sm:$0xf] %v7031
        %7272 = vst [vmem:[#allocation3 + $0x244] sm:$0xf] %v7045
        %7273 = vst [vmem:[#allocation3 + $0x268] sm:$0xf] %v7055
        %7274 = vst [vmem:[#allocation3 + $0x28c] sm:$0xf] %v7069
        %7275 = vst [vmem:[#allocation3 + $0x2b0] sm:$0xf] %v7079
        %7276 = vst [vmem:[#allocation3 + $0x2d4] sm:$0xf] %v7093
        %7277 = vst [vmem:[#allocation3 + $0x2f8] sm:$0xf] %v7103
        %7278 = vst [vmem:[#allocation3 + $0x31c] sm:$0xf] %v7117
        %7279 = vst [vmem:[#allocation3 + $0x340] sm:$0xf] %v7127
        %7280 = vst [vmem:[#allocation3 + $0x364] sm:$0xf] %v7141
        %7281 = vst [vmem:[#allocation3 + $0x388] sm:$0xf] %v7151
        %7282 = vst [vmem:[#allocation3 + $0x3ac] sm:$0xf] %v7165
        %7283 = vst [vmem:[#allocation3 + $0x3d0] sm:$0xf] %v7175
        %7284 = vst [vmem:[#allocation3 + $0x3f4] sm:$0xf] %v7189
        %7285 = vst [vmem:[#allocation3 + $0x418] sm:$0xf] %v7199
        %7286 = vst [vmem:[#allocation3 + $0x43c] sm:$0xf] %v7213
        %7287 = vst [vmem:[#allocation3 + $0x460] sm:$0xf] %v7223
        %v7288 = vld [vmem:[#allocation2] sm:$0xe]
        %v7289 = vld [vmem:[#allocation2 + $0x4] sm:$0xf]
        %v7290 = vld [vmem:[#allocation2 + $0x8] sm:$0x1]
        %v7291 = vld [vmem:[#allocation2 + $0xc] sm:$0xe]
        %v7292 = vld [vmem:[#allocation2 + $0x10] sm:$0xf]
        %v7293 = vld [vmem:[#allocation2 + $0x14] sm:$0x1]
        %v7294 = vld [vmem:[#allocation2 + $0x18] sm:$0xe]
        %v7295 = vld [vmem:[#allocation2 + $0x1c] sm:$0xf]
        %v7296 = vld [vmem:[#allocation2 + $0x20] sm:$0x1]
        %v7297 = vld [vmem:[#allocation2 + $0x24] sm:$0xe]
        %v7298 = vld [vmem:[#allocation2 + $0x28] sm:$0xf]
        %v7299 = vld [vmem:[#allocation2 + $0x2c] sm:$0x1]
        %v7300 = vld [vmem:[#allocation2 + $0x30] sm:$0xe]
        %v7301 = vld [vmem:[#allocation2 + $0x34] sm:$0xf]
        %v7302 = vld [vmem:[#allocation2 + $0x38] sm:$0x1]
        %v7303 = vld [vmem:[#allocation2 + $0x3c] sm:$0xe]
        %v7304 = vld [vmem:[#allocation2 + $0x40] sm:$0xf]
        %v7305 = vld [vmem:[#allocation2 + $0x44] sm:$0x1]
        %v7306 = vld [vmem:[#allocation2 + $0x48] sm:$0xe]
        %v7307 = vld [vmem:[#allocation2 + $0x4c] sm:$0xf]
        %v7308 = vld [vmem:[#allocation2 + $0x50] sm:$0x1]
        %v7309 = vld [vmem:[#allocation2 + $0x54] sm:$0xe]
        %v7310 = vld [vmem:[#allocation2 + $0x58] sm:$0xf]
        %v7311 = vld [vmem:[#allocation2 + $0x5c] sm:$0x1]
        %v7312 = vld [vmem:[#allocation2 + $0x60] sm:$0xe]
        %v7313 = vld [vmem:[#allocation2 + $0x64] sm:$0xf]
        %v7314 = vld [vmem:[#allocation2 + $0x68] sm:$0x1]
        %v7315 = vld [vmem:[#allocation2 + $0x6c] sm:$0xe]
        %v7316 = vld [vmem:[#allocation2 + $0x70] sm:$0xf]
        %v7317 = vld [vmem:[#allocation2 + $0x74] sm:$0x1]
        %v7318 = vld [vmem:[#allocation2 + $0x78] sm:$0xe]
        %v7319 = vld [vmem:[#allocation2 + $0x7c] sm:$0xf]
        %v7320 = vld [vmem:[#allocation2 + $0x80] sm:$0x1]
        %v7321 = vld [vmem:[#allocation2 + $0x84] sm:$0xe]
        %v7322 = vld [vmem:[#allocation2 + $0x88] sm:$0xf]
        %v7323 = vld [vmem:[#allocation2 + $0x8c] sm:$0x1]
        %v7324 = vld [vmem:[#allocation2 + $0x90] sm:$0xe]
        %v7325 = vld [vmem:[#allocation2 + $0x94] sm:$0xf]
        %v7326 = vld [vmem:[#allocation2 + $0x98] sm:$0x1]
        %v7327 = vld [vmem:[#allocation2 + $0x9c] sm:$0xe]
        %v7328 = vld [vmem:[#allocation2 + $0xa0] sm:$0xf]
        %v7329 = vld [vmem:[#allocation2 + $0xa4] sm:$0x1]
        %v7330 = vld [vmem:[#allocation2 + $0xa8] sm:$0xe]
        %v7331 = vld [vmem:[#allocation2 + $0xac] sm:$0xf]
        %v7332 = vld [vmem:[#allocation2 + $0xb0] sm:$0x1]
        %v7333 = vld [vmem:[#allocation2 + $0xb4] sm:$0xe]
        %v7334 = vld [vmem:[#allocation2 + $0xb8] sm:$0xf]
        %v7335 = vld [vmem:[#allocation2 + $0xbc] sm:$0x1]
        %v7384 = vrot.slane %v7288, 5
        %v7385 = vrot.slane %v7384, 4
        %v7386 = vrot.slane %v7289, 5
        %v7387 = vsel %vm1677, %v7385, %v7386
        %v7388 = vrot.slane %v7386, 4
        %v7389 = vrot.slane %v7290, 5
        %v7390 = vsel %vm1677, %v7388, %v7389
        %v7391 = vrot.slane %v7291, 5
        %v7392 = vrot.slane %v7391, 4
        %v7393 = vrot.slane %v7292, 5
        %v7394 = vsel %vm1677, %v7392, %v7393
        %v7395 = vrot.slane %v7393, 4
        %v7396 = vrot.slane %v7293, 5
        %v7397 = vsel %vm1677, %v7395, %v7396
        %v7398 = vrot.slane %v7294, 5
        %v7399 = vrot.slane %v7398, 4
        %v7400 = vrot.slane %v7295, 5
        %v7401 = vsel %vm1677, %v7399, %v7400
        %v7402 = vrot.slane %v7400, 4
        %v7403 = vrot.slane %v7296, 5
        %v7404 = vsel %vm1677, %v7402, %v7403
        %v7405 = vrot.slane %v7297, 5
        %v7406 = vrot.slane %v7405, 4
        %v7407 = vrot.slane %v7298, 5
        %v7408 = vsel %vm1677, %v7406, %v7407
        %v7409 = vrot.slane %v7407, 4
        %v7410 = vrot.slane %v7299, 5
        %v7411 = vsel %vm1677, %v7409, %v7410
        %v7412 = vrot.slane %v7300, 5
        %v7413 = vrot.slane %v7412, 4
        %v7414 = vrot.slane %v7301, 5
        %v7415 = vsel %vm1677, %v7413, %v7414
        %v7416 = vrot.slane %v7414, 4
        %v7417 = vrot.slane %v7302, 5
        %v7418 = vsel %vm1677, %v7416, %v7417
        %v7419 = vrot.slane %v7303, 5
        %v7420 = vrot.slane %v7419, 4
        %v7421 = vrot.slane %v7304, 5
        %v7422 = vsel %vm1677, %v7420, %v7421
        %v7423 = vrot.slane %v7421, 4
        %v7424 = vrot.slane %v7305, 5
        %v7425 = vsel %vm1677, %v7423, %v7424
        %v7426 = vrot.slane %v7306, 5
        %v7427 = vrot.slane %v7426, 4
        %v7428 = vrot.slane %v7307, 5
        %v7429 = vsel %vm1677, %v7427, %v7428
        %v7430 = vrot.slane %v7428, 4
        %v7431 = vrot.slane %v7308, 5
        %v7432 = vsel %vm1677, %v7430, %v7431
        %v7433 = vrot.slane %v7309, 5
        %v7434 = vrot.slane %v7433, 4
        %v7435 = vrot.slane %v7310, 5
        %v7436 = vsel %vm1677, %v7434, %v7435
        %v7437 = vrot.slane %v7435, 4
        %v7438 = vrot.slane %v7311, 5
        %v7439 = vsel %vm1677, %v7437, %v7438
        %v7440 = vrot.slane %v7312, 5
        %v7441 = vrot.slane %v7440, 4
        %v7442 = vrot.slane %v7313, 5
        %v7443 = vsel %vm1677, %v7441, %v7442
        %v7444 = vrot.slane %v7442, 4
        %v7445 = vrot.slane %v7314, 5
        %v7446 = vsel %vm1677, %v7444, %v7445
        %v7447 = vrot.slane %v7315, 5
        %v7448 = vrot.slane %v7447, 4
        %v7449 = vrot.slane %v7316, 5
        %v7450 = vsel %vm1677, %v7448, %v7449
        %v7451 = vrot.slane %v7449, 4
        %v7452 = vrot.slane %v7317, 5
        %v7453 = vsel %vm1677, %v7451, %v7452
        %v7454 = vrot.slane %v7318, 5
        %v7455 = vrot.slane %v7454, 4
        %v7456 = vrot.slane %v7319, 5
        %v7457 = vsel %vm1677, %v7455, %v7456
        %v7458 = vrot.slane %v7456, 4
        %v7459 = vrot.slane %v7320, 5
        %v7460 = vsel %vm1677, %v7458, %v7459
        %v7461 = vrot.slane %v7321, 5
        %v7462 = vrot.slane %v7461, 4
        %v7463 = vrot.slane %v7322, 5
        %v7464 = vsel %vm1677, %v7462, %v7463
        %v7465 = vrot.slane %v7463, 4
        %v7466 = vrot.slane %v7323, 5
        %v7467 = vsel %vm1677, %v7465, %v7466
        %v7468 = vrot.slane %v7324, 5
        %v7469 = vrot.slane %v7468, 4
        %v7470 = vrot.slane %v7325, 5
        %v7471 = vsel %vm1677, %v7469, %v7470
        %v7472 = vrot.slane %v7470, 4
        %v7473 = vrot.slane %v7326, 5
        %v7474 = vsel %vm1677, %v7472, %v7473
        %v7475 = vrot.slane %v7327, 5
        %v7476 = vrot.slane %v7475, 4
        %v7477 = vrot.slane %v7328, 5
        %v7478 = vsel %vm1677, %v7476, %v7477
        %v7479 = vrot.slane %v7477, 4
        %v7480 = vrot.slane %v7329, 5
        %v7481 = vsel %vm1677, %v7479, %v7480
        %v7482 = vrot.slane %v7330, 5
        %v7483 = vrot.slane %v7482, 4
        %v7484 = vrot.slane %v7331, 5
        %v7485 = vsel %vm1677, %v7483, %v7484
        %v7486 = vrot.slane %v7484, 4
        %v7487 = vrot.slane %v7332, 5
        %v7488 = vsel %vm1677, %v7486, %v7487
        %v7489 = vrot.slane %v7333, 5
        %v7490 = vrot.slane %v7489, 4
        %v7491 = vrot.slane %v7334, 5
        %v7492 = vsel %vm1677, %v7490, %v7491
        %v7493 = vrot.slane %v7491, 4
        %v7494 = vrot.slane %v7335, 5
        %v7495 = vsel %vm1677, %v7493, %v7494
        %7528 = vst [vmem:[#allocation3 + $0x8] sm:$0xf] %v7387
        %7529 = vst [vmem:[#allocation3 + $0x2c] sm:$0xf] %v7390
        %7530 = vst [vmem:[#allocation3 + $0x50] sm:$0xf] %v7394
        %7531 = vst [vmem:[#allocation3 + $0x74] sm:$0xf] %v7397
        %7532 = vst [vmem:[#allocation3 + $0x98] sm:$0xf] %v7401
        %7533 = vst [vmem:[#allocation3 + $0xbc] sm:$0xf] %v7404
        %7534 = vst [vmem:[#allocation3 + $0xe0] sm:$0xf] %v7408
        %7535 = vst [vmem:[#allocation3 + $0x104] sm:$0xf] %v7411
        %7536 = vst [vmem:[#allocation3 + $0x128] sm:$0xf] %v7415
        %7537 = vst [vmem:[#allocation3 + $0x14c] sm:$0xf] %v7418
        %7538 = vst [vmem:[#allocation3 + $0x170] sm:$0xf] %v7422
        %7539 = vst [vmem:[#allocation3 + $0x194] sm:$0xf] %v7425
        %7540 = vst [vmem:[#allocation3 + $0x1b8] sm:$0xf] %v7429
        %7541 = vst [vmem:[#allocation3 + $0x1dc] sm:$0xf] %v7432
        %7542 = vst [vmem:[#allocation3 + $0x200] sm:$0xf] %v7436
        %7543 = vst [vmem:[#allocation3 + $0x224] sm:$0xf] %v7439
        %7544 = vst [vmem:[#allocation3 + $0x248] sm:$0xf] %v7443
        %7545 = vst [vmem:[#allocation3 + $0x26c] sm:$0xf] %v7446
        %7546 = vst [vmem:[#allocation3 + $0x290] sm:$0xf] %v7450
        %7547 = vst [vmem:[#allocation3 + $0x2b4] sm:$0xf] %v7453
        %7548 = vst [vmem:[#allocation3 + $0x2d8] sm:$0xf] %v7457
        %7549 = vst [vmem:[#allocation3 + $0x2fc] sm:$0xf] %v7460
        %7550 = vst [vmem:[#allocation3 + $0x320] sm:$0xf] %v7464
        %7551 = vst [vmem:[#allocation3 + $0x344] sm:$0xf] %v7467
        %7552 = vst [vmem:[#allocation3 + $0x368] sm:$0xf] %v7471
        %7553 = vst [vmem:[#allocation3 + $0x38c] sm:$0xf] %v7474
        %7554 = vst [vmem:[#allocation3 + $0x3b0] sm:$0xf] %v7478
        %7555 = vst [vmem:[#allocation3 + $0x3d4] sm:$0xf] %v7481
        %7556 = vst [vmem:[#allocation3 + $0x3f8] sm:$0xf] %v7485
        %7557 = vst [vmem:[#allocation3 + $0x41c] sm:$0xf] %v7488
        %7558 = vst [vmem:[#allocation3 + $0x440] sm:$0xf] %v7492
        %7559 = vst [vmem:[#allocation3 + $0x464] sm:$0xf] %v7495
        %v7560 = vld [vmem:[%s1854] sm:$0xf]
        %v7561 = vld [vmem:[%s1854 + $0x4] sm:$0xf]
        %v7562 = vld [vmem:[%s1854 + $0xc] sm:$0xf]
        %v7563 = vld [vmem:[%s1854 + $0x10] sm:$0xf]
        %v7564 = vld [vmem:[%s1854 + $0x18] sm:$0xf]
        %v7565 = vld [vmem:[%s1854 + $0x1c] sm:$0xf]
        %v7566 = vld [vmem:[%s1854 + $0x24] sm:$0xf]
        %v7567 = vld [vmem:[%s1854 + $0x28] sm:$0xf]
        %v7568 = vld [vmem:[%s1854 + $0x30] sm:$0xf]
        %v7569 = vld [vmem:[%s1854 + $0x34] sm:$0xf]
        %v7570 = vld [vmem:[%s1854 + $0x3c] sm:$0xf]
        %v7571 = vld [vmem:[%s1854 + $0x40] sm:$0xf]
        %v7572 = vld [vmem:[%s1854 + $0x48] sm:$0xf]
        %v7573 = vld [vmem:[%s1854 + $0x4c] sm:$0xf]
        %v7574 = vld [vmem:[%s1854 + $0x54] sm:$0xf]
        %v7575 = vld [vmem:[%s1854 + $0x58] sm:$0xf]
        %v7576 = vld [vmem:[%s1854 + $0x60] sm:$0xf]
        %v7577 = vld [vmem:[%s1854 + $0x64] sm:$0xf]
        %v7578 = vld [vmem:[%s1854 + $0x6c] sm:$0xf]
        %v7579 = vld [vmem:[%s1854 + $0x70] sm:$0xf]
        %v7580 = vld [vmem:[%s1854 + $0x78] sm:$0xf]
        %v7581 = vld [vmem:[%s1854 + $0x7c] sm:$0xf]
        %v7582 = vld [vmem:[%s1854 + $0x84] sm:$0xf]
        %v7583 = vld [vmem:[%s1854 + $0x88] sm:$0xf]
        %v7584 = vld [vmem:[%s1854 + $0x90] sm:$0xf]
        %v7585 = vld [vmem:[%s1854 + $0x94] sm:$0xf]
        %v7586 = vld [vmem:[%s1854 + $0x9c] sm:$0xf]
        %v7587 = vld [vmem:[%s1854 + $0xa0] sm:$0xf]
        %v7588 = vld [vmem:[%s1854 + $0xa8] sm:$0xf]
        %v7589 = vld [vmem:[%s1854 + $0xac] sm:$0xf]
        %v7590 = vld [vmem:[%s1854 + $0xb4] sm:$0xf]
        %v7591 = vld [vmem:[%s1854 + $0xb8] sm:$0xf]
        %7592 = vst [vmem:[#allocation3 + $0xc] sm:$0xf] %v7560
        %7593 = vst [vmem:[#allocation3 + $0x30] sm:$0xf] %v7561
        %7594 = vst [vmem:[#allocation3 + $0x54] sm:$0xf] %v7562
        %7595 = vst [vmem:[#allocation3 + $0x78] sm:$0xf] %v7563
        %7596 = vst [vmem:[#allocation3 + $0x9c] sm:$0xf] %v7564
        %7597 = vst [vmem:[#allocation3 + $0xc0] sm:$0xf] %v7565
        %7598 = vst [vmem:[#allocation3 + $0xe4] sm:$0xf] %v7566
        %7599 = vst [vmem:[#allocation3 + $0x108] sm:$0xf] %v7567
        %7600 = vst [vmem:[#allocation3 + $0x12c] sm:$0xf] %v7568
        %7601 = vst [vmem:[#allocation3 + $0x150] sm:$0xf] %v7569
        %7602 = vst [vmem:[#allocation3 + $0x174] sm:$0xf] %v7570
        %7603 = vst [vmem:[#allocation3 + $0x198] sm:$0xf] %v7571
        %7604 = vst [vmem:[#allocation3 + $0x1bc] sm:$0xf] %v7572
        %7605 = vst [vmem:[#allocation3 + $0x1e0] sm:$0xf] %v7573
        %7606 = vst [vmem:[#allocation3 + $0x204] sm:$0xf] %v7574
        %7607 = vst [vmem:[#allocation3 + $0x228] sm:$0xf] %v7575
        %7608 = vst [vmem:[#allocation3 + $0x24c] sm:$0xf] %v7576
        %7609 = vst [vmem:[#allocation3 + $0x270] sm:$0xf] %v7577
        %7610 = vst [vmem:[#allocation3 + $0x294] sm:$0xf] %v7578
        %7611 = vst [vmem:[#allocation3 + $0x2b8] sm:$0xf] %v7579
        %7612 = vst [vmem:[#allocation3 + $0x2dc] sm:$0xf] %v7580
        %7613 = vst [vmem:[#allocation3 + $0x300] sm:$0xf] %v7581
        %7614 = vst [vmem:[#allocation3 + $0x324] sm:$0xf] %v7582
        %7615 = vst [vmem:[#allocation3 + $0x348] sm:$0xf] %v7583
        %7616 = vst [vmem:[#allocation3 + $0x36c] sm:$0xf] %v7584
        %7617 = vst [vmem:[#allocation3 + $0x390] sm:$0xf] %v7585
        %7618 = vst [vmem:[#allocation3 + $0x3b4] sm:$0xf] %v7586
        %7619 = vst [vmem:[#allocation3 + $0x3d8] sm:$0xf] %v7587
        %7620 = vst [vmem:[#allocation3 + $0x3fc] sm:$0xf] %v7588
        %7621 = vst [vmem:[#allocation3 + $0x420] sm:$0xf] %v7589
        %7622 = vst [vmem:[#allocation3 + $0x444] sm:$0xf] %v7590
        %7623 = vst [vmem:[#allocation3 + $0x468] sm:$0xf] %v7591
        %v7624 = vld [vmem:[%s1854] sm:$0xf]
        %v7625 = vld [vmem:[%s1854 + $0x4] sm:$0xf]
        %v7626 = vld [vmem:[%s1854 + $0x8] sm:$0x1]
        %v7627 = vld [vmem:[%s1854 + $0xc] sm:$0xf]
        %v7628 = vld [vmem:[%s1854 + $0x10] sm:$0xf]
        %v7629 = vld [vmem:[%s1854 + $0x14] sm:$0x1]
        %v7630 = vld [vmem:[%s1854 + $0x18] sm:$0xf]
        %v7631 = vld [vmem:[%s1854 + $0x1c] sm:$0xf]
        %v7632 = vld [vmem:[%s1854 + $0x20] sm:$0x1]
        %v7633 = vld [vmem:[%s1854 + $0x24] sm:$0xf]
        %v7634 = vld [vmem:[%s1854 + $0x28] sm:$0xf]
        %v7635 = vld [vmem:[%s1854 + $0x2c] sm:$0x1]
        %v7636 = vld [vmem:[%s1854 + $0x30] sm:$0xf]
        %v7637 = vld [vmem:[%s1854 + $0x34] sm:$0xf]
        %v7638 = vld [vmem:[%s1854 + $0x38] sm:$0x1]
        %v7639 = vld [vmem:[%s1854 + $0x3c] sm:$0xf]
        %v7640 = vld [vmem:[%s1854 + $0x40] sm:$0xf]
        %v7641 = vld [vmem:[%s1854 + $0x44] sm:$0x1]
        %v7642 = vld [vmem:[%s1854 + $0x48] sm:$0xf]
        %v7643 = vld [vmem:[%s1854 + $0x4c] sm:$0xf]
        %v7644 = vld [vmem:[%s1854 + $0x50] sm:$0x1]
        %v7645 = vld [vmem:[%s1854 + $0x54] sm:$0xf]
        %v7646 = vld [vmem:[%s1854 + $0x58] sm:$0xf]
        %v7647 = vld [vmem:[%s1854 + $0x5c] sm:$0x1]
        %v7648 = vld [vmem:[%s1854 + $0x60] sm:$0xf]
        %v7649 = vld [vmem:[%s1854 + $0x64] sm:$0xf]
        %v7650 = vld [vmem:[%s1854 + $0x68] sm:$0x1]
        %v7651 = vld [vmem:[%s1854 + $0x6c] sm:$0xf]
        %v7652 = vld [vmem:[%s1854 + $0x70] sm:$0xf]
        %v7653 = vld [vmem:[%s1854 + $0x74] sm:$0x1]
        %v7654 = vld [vmem:[%s1854 + $0x78] sm:$0xf]
        %v7655 = vld [vmem:[%s1854 + $0x7c] sm:$0xf]
        %v7656 = vld [vmem:[%s1854 + $0x80] sm:$0x1]
        %v7657 = vld [vmem:[%s1854 + $0x84] sm:$0xf]
        %v7658 = vld [vmem:[%s1854 + $0x88] sm:$0xf]
        %v7659 = vld [vmem:[%s1854 + $0x8c] sm:$0x1]
        %v7660 = vld [vmem:[%s1854 + $0x90] sm:$0xf]
        %v7661 = vld [vmem:[%s1854 + $0x94] sm:$0xf]
        %v7662 = vld [vmem:[%s1854 + $0x98] sm:$0x1]
        %v7663 = vld [vmem:[%s1854 + $0x9c] sm:$0xf]
        %v7664 = vld [vmem:[%s1854 + $0xa0] sm:$0xf]
        %v7665 = vld [vmem:[%s1854 + $0xa4] sm:$0x1]
        %v7666 = vld [vmem:[%s1854 + $0xa8] sm:$0xf]
        %v7667 = vld [vmem:[%s1854 + $0xac] sm:$0xf]
        %v7668 = vld [vmem:[%s1854 + $0xb0] sm:$0x1]
        %v7669 = vld [vmem:[%s1854 + $0xb4] sm:$0xf]
        %v7670 = vld [vmem:[%s1854 + $0xb8] sm:$0xf]
        %v7671 = vld [vmem:[%s1854 + $0xbc] sm:$0x1]
        %v7673 = vshrl.u32 %v7624, 16
        %v7675 = vrot.slane %v7673, 4
        %v7676 = vshll.u32 %v7624, 16
        %v7678 = vrot.slane %v7676, 5
        %v7679 = vor.u32 %v7675, %v7678
        %v7680 = vrot.slane %v7679, 4
        %v7682 = vshll.u32 %v7625, 16
        %v7684 = vrot.slane %v7682, 5
        %v7685 = vsel %vm1130, %v7680, %v7684
        %v7686 = vshrl.u32 %v7625, 16
        %v7688 = vrot.slane %v7686, 4
        %v7689 = vor.u32 %v7688, %v7684
        %v7690 = vrot.slane %v7689, 4
        %v7692 = vshll.u32 %v7626, 16
        %v7694 = vrot.slane %v7692, 5
        %v7695 = vsel %vm1130, %v7690, %v7694
        %v7697 = vshrl.u32 %v7627, 16
        %v7699 = vrot.slane %v7697, 4
        %v7700 = vshll.u32 %v7627, 16
        %v7702 = vrot.slane %v7700, 5
        %v7703 = vor.u32 %v7699, %v7702
        %v7704 = vrot.slane %v7703, 4
        %v7706 = vshll.u32 %v7628, 16
        %v7708 = vrot.slane %v7706, 5
        %v7709 = vsel %vm1130, %v7704, %v7708
        %v7710 = vshrl.u32 %v7628, 16
        %v7712 = vrot.slane %v7710, 4
        %v7713 = vor.u32 %v7712, %v7708
        %v7714 = vrot.slane %v7713, 4
        %v7716 = vshll.u32 %v7629, 16
        %v7718 = vrot.slane %v7716, 5
        %v7719 = vsel %vm1130, %v7714, %v7718
        %v7721 = vshrl.u32 %v7630, 16
        %v7723 = vrot.slane %v7721, 4
        %v7724 = vshll.u32 %v7630, 16
        %v7726 = vrot.slane %v7724, 5
        %v7727 = vor.u32 %v7723, %v7726
        %v7728 = vrot.slane %v7727, 4
        %v7730 = vshll.u32 %v7631, 16
        %v7732 = vrot.slane %v7730, 5
        %v7733 = vsel %vm1130, %v7728, %v7732
        %v7734 = vshrl.u32 %v7631, 16
        %v7736 = vrot.slane %v7734, 4
        %v7737 = vor.u32 %v7736, %v7732
        %v7738 = vrot.slane %v7737, 4
        %v7740 = vshll.u32 %v7632, 16
        %v7742 = vrot.slane %v7740, 5
        %v7743 = vsel %vm1130, %v7738, %v7742
        %v7745 = vshrl.u32 %v7633, 16
        %v7747 = vrot.slane %v7745, 4
        %v7748 = vshll.u32 %v7633, 16
        %v7750 = vrot.slane %v7748, 5
        %v7751 = vor.u32 %v7747, %v7750
        %v7752 = vrot.slane %v7751, 4
        %v7754 = vshll.u32 %v7634, 16
        %v7756 = vrot.slane %v7754, 5
        %v7757 = vsel %vm1130, %v7752, %v7756
        %v7758 = vshrl.u32 %v7634, 16
        %v7760 = vrot.slane %v7758, 4
        %v7761 = vor.u32 %v7760, %v7756
        %v7762 = vrot.slane %v7761, 4
        %v7764 = vshll.u32 %v7635, 16
        %v7766 = vrot.slane %v7764, 5
        %v7767 = vsel %vm1130, %v7762, %v7766
        %v7769 = vshrl.u32 %v7636, 16
        %v7771 = vrot.slane %v7769, 4
        %v7772 = vshll.u32 %v7636, 16
        %v7774 = vrot.slane %v7772, 5
        %v7775 = vor.u32 %v7771, %v7774
        %v7776 = vrot.slane %v7775, 4
        %v7778 = vshll.u32 %v7637, 16
        %v7780 = vrot.slane %v7778, 5
        %v7781 = vsel %vm1130, %v7776, %v7780
        %v7782 = vshrl.u32 %v7637, 16
        %v7784 = vrot.slane %v7782, 4
        %v7785 = vor.u32 %v7784, %v7780
        %v7786 = vrot.slane %v7785, 4
        %v7788 = vshll.u32 %v7638, 16
        %v7790 = vrot.slane %v7788, 5
        %v7791 = vsel %vm1130, %v7786, %v7790
        %v7793 = vshrl.u32 %v7639, 16
        %v7795 = vrot.slane %v7793, 4
        %v7796 = vshll.u32 %v7639, 16
        %v7798 = vrot.slane %v7796, 5
        %v7799 = vor.u32 %v7795, %v7798
        %v7800 = vrot.slane %v7799, 4
        %v7802 = vshll.u32 %v7640, 16
        %v7804 = vrot.slane %v7802, 5
        %v7805 = vsel %vm1130, %v7800, %v7804
        %v7806 = vshrl.u32 %v7640, 16
        %v7808 = vrot.slane %v7806, 4
        %v7809 = vor.u32 %v7808, %v7804
        %v7810 = vrot.slane %v7809, 4
        %v7812 = vshll.u32 %v7641, 16
        %v7814 = vrot.slane %v7812, 5
        %v7815 = vsel %vm1130, %v7810, %v7814
        %v7817 = vshrl.u32 %v7642, 16
        %v7819 = vrot.slane %v7817, 4
        %v7820 = vshll.u32 %v7642, 16
        %v7822 = vrot.slane %v7820, 5
        %v7823 = vor.u32 %v7819, %v7822
        %v7824 = vrot.slane %v7823, 4
        %v7826 = vshll.u32 %v7643, 16
        %v7828 = vrot.slane %v7826, 5
        %v7829 = vsel %vm1130, %v7824, %v7828
        %v7830 = vshrl.u32 %v7643, 16
        %v7832 = vrot.slane %v7830, 4
        %v7833 = vor.u32 %v7832, %v7828
        %v7834 = vrot.slane %v7833, 4
        %v7836 = vshll.u32 %v7644, 16
        %v7838 = vrot.slane %v7836, 5
        %v7839 = vsel %vm1130, %v7834, %v7838
        %v7841 = vshrl.u32 %v7645, 16
        %v7843 = vrot.slane %v7841, 4
        %v7844 = vshll.u32 %v7645, 16
        %v7846 = vrot.slane %v7844, 5
        %v7847 = vor.u32 %v7843, %v7846
        %v7848 = vrot.slane %v7847, 4
        %v7850 = vshll.u32 %v7646, 16
        %v7852 = vrot.slane %v7850, 5
        %v7853 = vsel %vm1130, %v7848, %v7852
        %v7854 = vshrl.u32 %v7646, 16
        %v7856 = vrot.slane %v7854, 4
        %v7857 = vor.u32 %v7856, %v7852
        %v7858 = vrot.slane %v7857, 4
        %v7860 = vshll.u32 %v7647, 16
        %v7862 = vrot.slane %v7860, 5
        %v7863 = vsel %vm1130, %v7858, %v7862
        %v7865 = vshrl.u32 %v7648, 16
        %v7867 = vrot.slane %v7865, 4
        %v7868 = vshll.u32 %v7648, 16
        %v7870 = vrot.slane %v7868, 5
        %v7871 = vor.u32 %v7867, %v7870
        %v7872 = vrot.slane %v7871, 4
        %v7874 = vshll.u32 %v7649, 16
        %v7876 = vrot.slane %v7874, 5
        %v7877 = vsel %vm1130, %v7872, %v7876
        %v7878 = vshrl.u32 %v7649, 16
        %v7880 = vrot.slane %v7878, 4
        %v7881 = vor.u32 %v7880, %v7876
        %v7882 = vrot.slane %v7881, 4
        %v7884 = vshll.u32 %v7650, 16
        %v7886 = vrot.slane %v7884, 5
        %v7887 = vsel %vm1130, %v7882, %v7886
        %v7889 = vshrl.u32 %v7651, 16
        %v7891 = vrot.slane %v7889, 4
        %v7892 = vshll.u32 %v7651, 16
        %v7894 = vrot.slane %v7892, 5
        %v7895 = vor.u32 %v7891, %v7894
        %v7896 = vrot.slane %v7895, 4
        %v7898 = vshll.u32 %v7652, 16
        %v7900 = vrot.slane %v7898, 5
        %v7901 = vsel %vm1130, %v7896, %v7900
        %v7902 = vshrl.u32 %v7652, 16
        %v7904 = vrot.slane %v7902, 4
        %v7905 = vor.u32 %v7904, %v7900
        %v7906 = vrot.slane %v7905, 4
        %v7908 = vshll.u32 %v7653, 16
        %v7910 = vrot.slane %v7908, 5
        %v7911 = vsel %vm1130, %v7906, %v7910
        %v7913 = vshrl.u32 %v7654, 16
        %v7915 = vrot.slane %v7913, 4
        %v7916 = vshll.u32 %v7654, 16
        %v7918 = vrot.slane %v7916, 5
        %v7919 = vor.u32 %v7915, %v7918
        %v7920 = vrot.slane %v7919, 4
        %v7922 = vshll.u32 %v7655, 16
        %v7924 = vrot.slane %v7922, 5
        %v7925 = vsel %vm1130, %v7920, %v7924
        %v7926 = vshrl.u32 %v7655, 16
        %v7928 = vrot.slane %v7926, 4
        %v7929 = vor.u32 %v7928, %v7924
        %v7930 = vrot.slane %v7929, 4
        %v7932 = vshll.u32 %v7656, 16
        %v7934 = vrot.slane %v7932, 5
        %v7935 = vsel %vm1130, %v7930, %v7934
        %v7937 = vshrl.u32 %v7657, 16
        %v7939 = vrot.slane %v7937, 4
        %v7940 = vshll.u32 %v7657, 16
        %v7942 = vrot.slane %v7940, 5
        %v7943 = vor.u32 %v7939, %v7942
        %v7944 = vrot.slane %v7943, 4
        %v7946 = vshll.u32 %v7658, 16
        %v7948 = vrot.slane %v7946, 5
        %v7949 = vsel %vm1130, %v7944, %v7948
        %v7950 = vshrl.u32 %v7658, 16
        %v7952 = vrot.slane %v7950, 4
        %v7953 = vor.u32 %v7952, %v7948
        %v7954 = vrot.slane %v7953, 4
        %v7956 = vshll.u32 %v7659, 16
        %v7958 = vrot.slane %v7956, 5
        %v7959 = vsel %vm1130, %v7954, %v7958
        %v7961 = vshrl.u32 %v7660, 16
        %v7963 = vrot.slane %v7961, 4
        %v7964 = vshll.u32 %v7660, 16
        %v7966 = vrot.slane %v7964, 5
        %v7967 = vor.u32 %v7963, %v7966
        %v7968 = vrot.slane %v7967, 4
        %v7970 = vshll.u32 %v7661, 16
        %v7972 = vrot.slane %v7970, 5
        %v7973 = vsel %vm1130, %v7968, %v7972
        %v7974 = vshrl.u32 %v7661, 16
        %v7976 = vrot.slane %v7974, 4
        %v7977 = vor.u32 %v7976, %v7972
        %v7978 = vrot.slane %v7977, 4
        %v7980 = vshll.u32 %v7662, 16
        %v7982 = vrot.slane %v7980, 5
        %v7983 = vsel %vm1130, %v7978, %v7982
        %v7985 = vshrl.u32 %v7663, 16
        %v7987 = vrot.slane %v7985, 4
        %v7988 = vshll.u32 %v7663, 16
        %v7990 = vrot.slane %v7988, 5
        %v7991 = vor.u32 %v7987, %v7990
        %v7992 = vrot.slane %v7991, 4
        %v7994 = vshll.u32 %v7664, 16
        %v7996 = vrot.slane %v7994, 5
        %v7997 = vsel %vm1130, %v7992, %v7996
        %v7998 = vshrl.u32 %v7664, 16
        %v8000 = vrot.slane %v7998, 4
        %v8001 = vor.u32 %v8000, %v7996
        %v8002 = vrot.slane %v8001, 4
        %v8004 = vshll.u32 %v7665, 16
        %v8006 = vrot.slane %v8004, 5
        %v8007 = vsel %vm1130, %v8002, %v8006
        %v8009 = vshrl.u32 %v7666, 16
        %v8011 = vrot.slane %v8009, 4
        %v8012 = vshll.u32 %v7666, 16
        %v8014 = vrot.slane %v8012, 5
        %v8015 = vor.u32 %v8011, %v8014
        %v8016 = vrot.slane %v8015, 4
        %v8018 = vshll.u32 %v7667, 16
        %v8020 = vrot.slane %v8018, 5
        %v8021 = vsel %vm1130, %v8016, %v8020
        %v8022 = vshrl.u32 %v7667, 16
        %v8024 = vrot.slane %v8022, 4
        %v8025 = vor.u32 %v8024, %v8020
        %v8026 = vrot.slane %v8025, 4
        %v8028 = vshll.u32 %v7668, 16
        %v8030 = vrot.slane %v8028, 5
        %v8031 = vsel %vm1130, %v8026, %v8030
        %v8033 = vshrl.u32 %v7669, 16
        %v8035 = vrot.slane %v8033, 4
        %v8036 = vshll.u32 %v7669, 16
        %v8038 = vrot.slane %v8036, 5
        %v8039 = vor.u32 %v8035, %v8038
        %v8040 = vrot.slane %v8039, 4
        %v8042 = vshll.u32 %v7670, 16
        %v8044 = vrot.slane %v8042, 5
        %v8045 = vsel %vm1130, %v8040, %v8044
        %v8046 = vshrl.u32 %v7670, 16
        %v8048 = vrot.slane %v8046, 4
        %v8049 = vor.u32 %v8048, %v8044
        %v8050 = vrot.slane %v8049, 4
        %v8052 = vshll.u32 %v7671, 16
        %v8054 = vrot.slane %v8052, 5
        %v8055 = vsel %vm1130, %v8050, %v8054
        %8088 = vst [vmem:[#allocation3 + $0x10] sm:$0xf] %v7685
        %8089 = vst [vmem:[#allocation3 + $0x34] sm:$0xf] %v7695
        %8090 = vst [vmem:[#allocation3 + $0x58] sm:$0xf] %v7709
        %8091 = vst [vmem:[#allocation3 + $0x7c] sm:$0xf] %v7719
        %8092 = vst [vmem:[#allocation3 + $0xa0] sm:$0xf] %v7733
        %8093 = vst [vmem:[#allocation3 + $0xc4] sm:$0xf] %v7743
        %8094 = vst [vmem:[#allocation3 + $0xe8] sm:$0xf] %v7757
        %8095 = vst [vmem:[#allocation3 + $0x10c] sm:$0xf] %v7767
        %8096 = vst [vmem:[#allocation3 + $0x130] sm:$0xf] %v7781
        %8097 = vst [vmem:[#allocation3 + $0x154] sm:$0xf] %v7791
        %8098 = vst [vmem:[#allocation3 + $0x178] sm:$0xf] %v7805
        %8099 = vst [vmem:[#allocation3 + $0x19c] sm:$0xf] %v7815
        %8100 = vst [vmem:[#allocation3 + $0x1c0] sm:$0xf] %v7829
        %8101 = vst [vmem:[#allocation3 + $0x1e4] sm:$0xf] %v7839
        %8102 = vst [vmem:[#allocation3 + $0x208] sm:$0xf] %v7853
        %8103 = vst [vmem:[#allocation3 + $0x22c] sm:$0xf] %v7863
        %8104 = vst [vmem:[#allocation3 + $0x250] sm:$0xf] %v7877
        %8105 = vst [vmem:[#allocation3 + $0x274] sm:$0xf] %v7887
        %8106 = vst [vmem:[#allocation3 + $0x298] sm:$0xf] %v7901
        %8107 = vst [vmem:[#allocation3 + $0x2bc] sm:$0xf] %v7911
        %8108 = vst [vmem:[#allocation3 + $0x2e0] sm:$0xf] %v7925
        %8109 = vst [vmem:[#allocation3 + $0x304] sm:$0xf] %v7935
        %8110 = vst [vmem:[#allocation3 + $0x328] sm:$0xf] %v7949
        %8111 = vst [vmem:[#allocation3 + $0x34c] sm:$0xf] %v7959
        %8112 = vst [vmem:[#allocation3 + $0x370] sm:$0xf] %v7973
        %8113 = vst [vmem:[#allocation3 + $0x394] sm:$0xf] %v7983
        %8114 = vst [vmem:[#allocation3 + $0x3b8] sm:$0xf] %v7997
        %8115 = vst [vmem:[#allocation3 + $0x3dc] sm:$0xf] %v8007
        %8116 = vst [vmem:[#allocation3 + $0x400] sm:$0xf] %v8021
        %8117 = vst [vmem:[#allocation3 + $0x424] sm:$0xf] %v8031
        %8118 = vst [vmem:[#allocation3 + $0x448] sm:$0xf] %v8045
        %8119 = vst [vmem:[#allocation3 + $0x46c] sm:$0xf] %v8055
        %v8120 = vld [vmem:[%s1854] sm:$0xe]
        %v8121 = vld [vmem:[%s1854 + $0x4] sm:$0xf]
        %v8122 = vld [vmem:[%s1854 + $0x8] sm:$0x1]
        %v8123 = vld [vmem:[%s1854 + $0xc] sm:$0xe]
        %v8124 = vld [vmem:[%s1854 + $0x10] sm:$0xf]
        %v8125 = vld [vmem:[%s1854 + $0x14] sm:$0x1]
        %v8126 = vld [vmem:[%s1854 + $0x18] sm:$0xe]
        %v8127 = vld [vmem:[%s1854 + $0x1c] sm:$0xf]
        %v8128 = vld [vmem:[%s1854 + $0x20] sm:$0x1]
        %v8129 = vld [vmem:[%s1854 + $0x24] sm:$0xe]
        %v8130 = vld [vmem:[%s1854 + $0x28] sm:$0xf]
        %v8131 = vld [vmem:[%s1854 + $0x2c] sm:$0x1]
        %v8132 = vld [vmem:[%s1854 + $0x30] sm:$0xe]
        %v8133 = vld [vmem:[%s1854 + $0x34] sm:$0xf]
        %v8134 = vld [vmem:[%s1854 + $0x38] sm:$0x1]
        %v8135 = vld [vmem:[%s1854 + $0x3c] sm:$0xe]
        %v8136 = vld [vmem:[%s1854 + $0x40] sm:$0xf]
        %v8137 = vld [vmem:[%s1854 + $0x44] sm:$0x1]
        %v8138 = vld [vmem:[%s1854 + $0x48] sm:$0xe]
        %v8139 = vld [vmem:[%s1854 + $0x4c] sm:$0xf]
        %v8140 = vld [vmem:[%s1854 + $0x50] sm:$0x1]
        %v8141 = vld [vmem:[%s1854 + $0x54] sm:$0xe]
        %v8142 = vld [vmem:[%s1854 + $0x58] sm:$0xf]
        %v8143 = vld [vmem:[%s1854 + $0x5c] sm:$0x1]
        %v8144 = vld [vmem:[%s1854 + $0x60] sm:$0xe]
        %v8145 = vld [vmem:[%s1854 + $0x64] sm:$0xf]
        %v8146 = vld [vmem:[%s1854 + $0x68] sm:$0x1]
        %v8147 = vld [vmem:[%s1854 + $0x6c] sm:$0xe]
        %v8148 = vld [vmem:[%s1854 + $0x70] sm:$0xf]
        %v8149 = vld [vmem:[%s1854 + $0x74] sm:$0x1]
        %v8150 = vld [vmem:[%s1854 + $0x78] sm:$0xe]
        %v8151 = vld [vmem:[%s1854 + $0x7c] sm:$0xf]
        %v8152 = vld [vmem:[%s1854 + $0x80] sm:$0x1]
        %v8153 = vld [vmem:[%s1854 + $0x84] sm:$0xe]
        %v8154 = vld [vmem:[%s1854 + $0x88] sm:$0xf]
        %v8155 = vld [vmem:[%s1854 + $0x8c] sm:$0x1]
        %v8156 = vld [vmem:[%s1854 + $0x90] sm:$0xe]
        %v8157 = vld [vmem:[%s1854 + $0x94] sm:$0xf]
        %v8158 = vld [vmem:[%s1854 + $0x98] sm:$0x1]
        %v8159 = vld [vmem:[%s1854 + $0x9c] sm:$0xe]
        %v8160 = vld [vmem:[%s1854 + $0xa0] sm:$0xf]
        %v8161 = vld [vmem:[%s1854 + $0xa4] sm:$0x1]
        %v8162 = vld [vmem:[%s1854 + $0xa8] sm:$0xe]
        %v8163 = vld [vmem:[%s1854 + $0xac] sm:$0xf]
        %v8164 = vld [vmem:[%s1854 + $0xb0] sm:$0x1]
        %v8165 = vld [vmem:[%s1854 + $0xb4] sm:$0xe]
        %v8166 = vld [vmem:[%s1854 + $0xb8] sm:$0xf]
        %v8167 = vld [vmem:[%s1854 + $0xbc] sm:$0x1]
        %v8216 = vrot.slane %v8120, 5
        %v8217 = vrot.slane %v8216, 4
        %v8218 = vrot.slane %v8121, 5
        %v8219 = vsel %vm1677, %v8217, %v8218
        %v8220 = vrot.slane %v8218, 4
        %v8221 = vrot.slane %v8122, 5
        %v8222 = vsel %vm1677, %v8220, %v8221
        %v8223 = vrot.slane %v8123, 5
        %v8224 = vrot.slane %v8223, 4
        %v8225 = vrot.slane %v8124, 5
        %v8226 = vsel %vm1677, %v8224, %v8225
        %v8227 = vrot.slane %v8225, 4
        %v8228 = vrot.slane %v8125, 5
        %v8229 = vsel %vm1677, %v8227, %v8228
        %v8230 = vrot.slane %v8126, 5
        %v8231 = vrot.slane %v8230, 4
        %v8232 = vrot.slane %v8127, 5
        %v8233 = vsel %vm1677, %v8231, %v8232
        %v8234 = vrot.slane %v8232, 4
        %v8235 = vrot.slane %v8128, 5
        %v8236 = vsel %vm1677, %v8234, %v8235
        %v8237 = vrot.slane %v8129, 5
        %v8238 = vrot.slane %v8237, 4
        %v8239 = vrot.slane %v8130, 5
        %v8240 = vsel %vm1677, %v8238, %v8239
        %v8241 = vrot.slane %v8239, 4
        %v8242 = vrot.slane %v8131, 5
        %v8243 = vsel %vm1677, %v8241, %v8242
        %v8244 = vrot.slane %v8132, 5
        %v8245 = vrot.slane %v8244, 4
        %v8246 = vrot.slane %v8133, 5
        %v8247 = vsel %vm1677, %v8245, %v8246
        %v8248 = vrot.slane %v8246, 4
        %v8249 = vrot.slane %v8134, 5
        %v8250 = vsel %vm1677, %v8248, %v8249
        %v8251 = vrot.slane %v8135, 5
        %v8252 = vrot.slane %v8251, 4
        %v8253 = vrot.slane %v8136, 5
        %v8254 = vsel %vm1677, %v8252, %v8253
        %v8255 = vrot.slane %v8253, 4
        %v8256 = vrot.slane %v8137, 5
        %v8257 = vsel %vm1677, %v8255, %v8256
        %v8258 = vrot.slane %v8138, 5
        %v8259 = vrot.slane %v8258, 4
        %v8260 = vrot.slane %v8139, 5
        %v8261 = vsel %vm1677, %v8259, %v8260
        %v8262 = vrot.slane %v8260, 4
        %v8263 = vrot.slane %v8140, 5
        %v8264 = vsel %vm1677, %v8262, %v8263
        %v8265 = vrot.slane %v8141, 5
        %v8266 = vrot.slane %v8265, 4
        %v8267 = vrot.slane %v8142, 5
        %v8268 = vsel %vm1677, %v8266, %v8267
        %v8269 = vrot.slane %v8267, 4
        %v8270 = vrot.slane %v8143, 5
        %v8271 = vsel %vm1677, %v8269, %v8270
        %v8272 = vrot.slane %v8144, 5
        %v8273 = vrot.slane %v8272, 4
        %v8274 = vrot.slane %v8145, 5
        %v8275 = vsel %vm1677, %v8273, %v8274
        %v8276 = vrot.slane %v8274, 4
        %v8277 = vrot.slane %v8146, 5
        %v8278 = vsel %vm1677, %v8276, %v8277
        %v8279 = vrot.slane %v8147, 5
        %v8280 = vrot.slane %v8279, 4
        %v8281 = vrot.slane %v8148, 5
        %v8282 = vsel %vm1677, %v8280, %v8281
        %v8283 = vrot.slane %v8281, 4
        %v8284 = vrot.slane %v8149, 5
        %v8285 = vsel %vm1677, %v8283, %v8284
        %v8286 = vrot.slane %v8150, 5
        %v8287 = vrot.slane %v8286, 4
        %v8288 = vrot.slane %v8151, 5
        %v8289 = vsel %vm1677, %v8287, %v8288
        %v8290 = vrot.slane %v8288, 4
        %v8291 = vrot.slane %v8152, 5
        %v8292 = vsel %vm1677, %v8290, %v8291
        %v8293 = vrot.slane %v8153, 5
        %v8294 = vrot.slane %v8293, 4
        %v8295 = vrot.slane %v8154, 5
        %v8296 = vsel %vm1677, %v8294, %v8295
        %v8297 = vrot.slane %v8295, 4
        %v8298 = vrot.slane %v8155, 5
        %v8299 = vsel %vm1677, %v8297, %v8298
        %v8300 = vrot.slane %v8156, 5
        %v8301 = vrot.slane %v8300, 4
        %v8302 = vrot.slane %v8157, 5
        %v8303 = vsel %vm1677, %v8301, %v8302
        %v8304 = vrot.slane %v8302, 4
        %v8305 = vrot.slane %v8158, 5
        %v8306 = vsel %vm1677, %v8304, %v8305
        %v8307 = vrot.slane %v8159, 5
        %v8308 = vrot.slane %v8307, 4
        %v8309 = vrot.slane %v8160, 5
        %v8310 = vsel %vm1677, %v8308, %v8309
        %v8311 = vrot.slane %v8309, 4
        %v8312 = vrot.slane %v8161, 5
        %v8313 = vsel %vm1677, %v8311, %v8312
        %v8314 = vrot.slane %v8162, 5
        %v8315 = vrot.slane %v8314, 4
        %v8316 = vrot.slane %v8163, 5
        %v8317 = vsel %vm1677, %v8315, %v8316
        %v8318 = vrot.slane %v8316, 4
        %v8319 = vrot.slane %v8164, 5
        %v8320 = vsel %vm1677, %v8318, %v8319
        %v8321 = vrot.slane %v8165, 5
        %v8322 = vrot.slane %v8321, 4
        %v8323 = vrot.slane %v8166, 5
        %v8324 = vsel %vm1677, %v8322, %v8323
        %v8325 = vrot.slane %v8323, 4
        %v8326 = vrot.slane %v8167, 5
        %v8327 = vsel %vm1677, %v8325, %v8326
        %8360 = vst [vmem:[#allocation3 + $0x14] sm:$0xf] %v8219
        %8361 = vst [vmem:[#allocation3 + $0x38] sm:$0xf] %v8222
        %8362 = vst [vmem:[#allocation3 + $0x5c] sm:$0xf] %v8226
        %8363 = vst [vmem:[#allocation3 + $0x80] sm:$0xf] %v8229
        %8364 = vst [vmem:[#allocation3 + $0xa4] sm:$0xf] %v8233
        %8365 = vst [vmem:[#allocation3 + $0xc8] sm:$0xf] %v8236
        %8366 = vst [vmem:[#allocation3 + $0xec] sm:$0xf] %v8240
        %8367 = vst [vmem:[#allocation3 + $0x110] sm:$0xf] %v8243
        %8368 = vst [vmem:[#allocation3 + $0x134] sm:$0xf] %v8247
        %8369 = vst [vmem:[#allocation3 + $0x158] sm:$0xf] %v8250
        %8370 = vst [vmem:[#allocation3 + $0x17c] sm:$0xf] %v8254
        %8371 = vst [vmem:[#allocation3 + $0x1a0] sm:$0xf] %v8257
        %8372 = vst [vmem:[#allocation3 + $0x1c4] sm:$0xf] %v8261
        %8373 = vst [vmem:[#allocation3 + $0x1e8] sm:$0xf] %v8264
        %8374 = vst [vmem:[#allocation3 + $0x20c] sm:$0xf] %v8268
        %8375 = vst [vmem:[#allocation3 + $0x230] sm:$0xf] %v8271
        %8376 = vst [vmem:[#allocation3 + $0x254] sm:$0xf] %v8275
        %8377 = vst [vmem:[#allocation3 + $0x278] sm:$0xf] %v8278
        %8378 = vst [vmem:[#allocation3 + $0x29c] sm:$0xf] %v8282
        %8379 = vst [vmem:[#allocation3 + $0x2c0] sm:$0xf] %v8285
        %8380 = vst [vmem:[#allocation3 + $0x2e4] sm:$0xf] %v8289
        %8381 = vst [vmem:[#allocation3 + $0x308] sm:$0xf] %v8292
        %8382 = vst [vmem:[#allocation3 + $0x32c] sm:$0xf] %v8296
        %8383 = vst [vmem:[#allocation3 + $0x350] sm:$0xf] %v8299
        %8384 = vst [vmem:[#allocation3 + $0x374] sm:$0xf] %v8303
        %8385 = vst [vmem:[#allocation3 + $0x398] sm:$0xf] %v8306
        %8386 = vst [vmem:[#allocation3 + $0x3bc] sm:$0xf] %v8310
        %8387 = vst [vmem:[#allocation3 + $0x3e0] sm:$0xf] %v8313
        %8388 = vst [vmem:[#allocation3 + $0x404] sm:$0xf] %v8317
        %8389 = vst [vmem:[#allocation3 + $0x428] sm:$0xf] %v8320
        %8390 = vst [vmem:[#allocation3 + $0x44c] sm:$0xf] %v8324
        %8391 = vst [vmem:[#allocation3 + $0x470] sm:$0xf] %v8327
        %v8392 = vld [vmem:[%s2687] sm:$0xf]
        %v8393 = vld [vmem:[%s2687 + $0x4] sm:$0xf]
        %v8394 = vld [vmem:[%s2687 + $0xc] sm:$0xf]
        %v8395 = vld [vmem:[%s2687 + $0x10] sm:$0xf]
        %v8396 = vld [vmem:[%s2687 + $0x18] sm:$0xf]
        %v8397 = vld [vmem:[%s2687 + $0x1c] sm:$0xf]
        %v8398 = vld [vmem:[%s2687 + $0x24] sm:$0xf]
        %v8399 = vld [vmem:[%s2687 + $0x28] sm:$0xf]
        %v8400 = vld [vmem:[%s2687 + $0x30] sm:$0xf]
        %v8401 = vld [vmem:[%s2687 + $0x34] sm:$0xf]
        %v8402 = vld [vmem:[%s2687 + $0x3c] sm:$0xf]
        %v8403 = vld [vmem:[%s2687 + $0x40] sm:$0xf]
        %v8404 = vld [vmem:[%s2687 + $0x48] sm:$0xf]
        %v8405 = vld [vmem:[%s2687 + $0x4c] sm:$0xf]
        %v8406 = vld [vmem:[%s2687 + $0x54] sm:$0xf]
        %v8407 = vld [vmem:[%s2687 + $0x58] sm:$0xf]
        %v8408 = vld [vmem:[%s2687 + $0x60] sm:$0xf]
        %v8409 = vld [vmem:[%s2687 + $0x64] sm:$0xf]
        %v8410 = vld [vmem:[%s2687 + $0x6c] sm:$0xf]
        %v8411 = vld [vmem:[%s2687 + $0x70] sm:$0xf]
        %v8412 = vld [vmem:[%s2687 + $0x78] sm:$0xf]
        %v8413 = vld [vmem:[%s2687 + $0x7c] sm:$0xf]
        %v8414 = vld [vmem:[%s2687 + $0x84] sm:$0xf]
        %v8415 = vld [vmem:[%s2687 + $0x88] sm:$0xf]
        %v8416 = vld [vmem:[%s2687 + $0x90] sm:$0xf]
        %v8417 = vld [vmem:[%s2687 + $0x94] sm:$0xf]
        %v8418 = vld [vmem:[%s2687 + $0x9c] sm:$0xf]
        %v8419 = vld [vmem:[%s2687 + $0xa0] sm:$0xf]
        %v8420 = vld [vmem:[%s2687 + $0xa8] sm:$0xf]
        %v8421 = vld [vmem:[%s2687 + $0xac] sm:$0xf]
        %v8422 = vld [vmem:[%s2687 + $0xb4] sm:$0xf]
        %v8423 = vld [vmem:[%s2687 + $0xb8] sm:$0xf]
        %8424 = vst [vmem:[#allocation3 + $0x18] sm:$0xf] %v8392
        %8425 = vst [vmem:[#allocation3 + $0x3c] sm:$0xf] %v8393
        %8426 = vst [vmem:[#allocation3 + $0x60] sm:$0xf] %v8394
        %8427 = vst [vmem:[#allocation3 + $0x84] sm:$0xf] %v8395
        %8428 = vst [vmem:[#allocation3 + $0xa8] sm:$0xf] %v8396
        %8429 = vst [vmem:[#allocation3 + $0xcc] sm:$0xf] %v8397
        %8430 = vst [vmem:[#allocation3 + $0xf0] sm:$0xf] %v8398
        %8431 = vst [vmem:[#allocation3 + $0x114] sm:$0xf] %v8399
        %8432 = vst [vmem:[#allocation3 + $0x138] sm:$0xf] %v8400
        %8433 = vst [vmem:[#allocation3 + $0x15c] sm:$0xf] %v8401
        %8434 = vst [vmem:[#allocation3 + $0x180] sm:$0xf] %v8402
        %8435 = vst [vmem:[#allocation3 + $0x1a4] sm:$0xf] %v8403
        %8436 = vst [vmem:[#allocation3 + $0x1c8] sm:$0xf] %v8404
        %8437 = vst [vmem:[#allocation3 + $0x1ec] sm:$0xf] %v8405
        %8438 = vst [vmem:[#allocation3 + $0x210] sm:$0xf] %v8406
        %8439 = vst [vmem:[#allocation3 + $0x234] sm:$0xf] %v8407
        %8440 = vst [vmem:[#allocation3 + $0x258] sm:$0xf] %v8408
        %8441 = vst [vmem:[#allocation3 + $0x27c] sm:$0xf] %v8409
        %8442 = vst [vmem:[#allocation3 + $0x2a0] sm:$0xf] %v8410
        %8443 = vst [vmem:[#allocation3 + $0x2c4] sm:$0xf] %v8411
        %8444 = vst [vmem:[#allocation3 + $0x2e8] sm:$0xf] %v8412
        %8445 = vst [vmem:[#allocation3 + $0x30c] sm:$0xf] %v8413
        %8446 = vst [vmem:[#allocation3 + $0x330] sm:$0xf] %v8414
        %8447 = vst [vmem:[#allocation3 + $0x354] sm:$0xf] %v8415
        %8448 = vst [vmem:[#allocation3 + $0x378] sm:$0xf] %v8416
        %8449 = vst [vmem:[#allocation3 + $0x39c] sm:$0xf] %v8417
        %8450 = vst [vmem:[#allocation3 + $0x3c0] sm:$0xf] %v8418
        %8451 = vst [vmem:[#allocation3 + $0x3e4] sm:$0xf] %v8419
        %8452 = vst [vmem:[#allocation3 + $0x408] sm:$0xf] %v8420
        %8453 = vst [vmem:[#allocation3 + $0x42c] sm:$0xf] %v8421
        %8454 = vst [vmem:[#allocation3 + $0x450] sm:$0xf] %v8422
        %8455 = vst [vmem:[#allocation3 + $0x474] sm:$0xf] %v8423
        %v8456 = vld [vmem:[%s2687] sm:$0xf]
        %v8457 = vld [vmem:[%s2687 + $0x4] sm:$0xf]
        %v8458 = vld [vmem:[%s2687 + $0x8] sm:$0x1]
        %v8459 = vld [vmem:[%s2687 + $0xc] sm:$0xf]
        %v8460 = vld [vmem:[%s2687 + $0x10] sm:$0xf]
        %v8461 = vld [vmem:[%s2687 + $0x14] sm:$0x1]
        %v8462 = vld [vmem:[%s2687 + $0x18] sm:$0xf]
        %v8463 = vld [vmem:[%s2687 + $0x1c] sm:$0xf]
        %v8464 = vld [vmem:[%s2687 + $0x20] sm:$0x1]
        %v8465 = vld [vmem:[%s2687 + $0x24] sm:$0xf]
        %v8466 = vld [vmem:[%s2687 + $0x28] sm:$0xf]
        %v8467 = vld [vmem:[%s2687 + $0x2c] sm:$0x1]
        %v8468 = vld [vmem:[%s2687 + $0x30] sm:$0xf]
        %v8469 = vld [vmem:[%s2687 + $0x34] sm:$0xf]
        %v8470 = vld [vmem:[%s2687 + $0x38] sm:$0x1]
        %v8471 = vld [vmem:[%s2687 + $0x3c] sm:$0xf]
        %v8472 = vld [vmem:[%s2687 + $0x40] sm:$0xf]
        %v8473 = vld [vmem:[%s2687 + $0x44] sm:$0x1]
        %v8474 = vld [vmem:[%s2687 + $0x48] sm:$0xf]
        %v8475 = vld [vmem:[%s2687 + $0x4c] sm:$0xf]
        %v8476 = vld [vmem:[%s2687 + $0x50] sm:$0x1]
        %v8477 = vld [vmem:[%s2687 + $0x54] sm:$0xf]
        %v8478 = vld [vmem:[%s2687 + $0x58] sm:$0xf]
        %v8479 = vld [vmem:[%s2687 + $0x5c] sm:$0x1]
        %v8480 = vld [vmem:[%s2687 + $0x60] sm:$0xf]
        %v8481 = vld [vmem:[%s2687 + $0x64] sm:$0xf]
        %v8482 = vld [vmem:[%s2687 + $0x68] sm:$0x1]
        %v8483 = vld [vmem:[%s2687 + $0x6c] sm:$0xf]
        %v8484 = vld [vmem:[%s2687 + $0x70] sm:$0xf]
        %v8485 = vld [vmem:[%s2687 + $0x74] sm:$0x1]
        %v8486 = vld [vmem:[%s2687 + $0x78] sm:$0xf]
        %v8487 = vld [vmem:[%s2687 + $0x7c] sm:$0xf]
        %v8488 = vld [vmem:[%s2687 + $0x80] sm:$0x1]
        %v8489 = vld [vmem:[%s2687 + $0x84] sm:$0xf]
        %v8490 = vld [vmem:[%s2687 + $0x88] sm:$0xf]
        %v8491 = vld [vmem:[%s2687 + $0x8c] sm:$0x1]
        %v8492 = vld [vmem:[%s2687 + $0x90] sm:$0xf]
        %v8493 = vld [vmem:[%s2687 + $0x94] sm:$0xf]
        %v8494 = vld [vmem:[%s2687 + $0x98] sm:$0x1]
        %v8495 = vld [vmem:[%s2687 + $0x9c] sm:$0xf]
        %v8496 = vld [vmem:[%s2687 + $0xa0] sm:$0xf]
        %v8497 = vld [vmem:[%s2687 + $0xa4] sm:$0x1]
        %v8498 = vld [vmem:[%s2687 + $0xa8] sm:$0xf]
        %v8499 = vld [vmem:[%s2687 + $0xac] sm:$0xf]
        %v8500 = vld [vmem:[%s2687 + $0xb0] sm:$0x1]
        %v8501 = vld [vmem:[%s2687 + $0xb4] sm:$0xf]
        %v8502 = vld [vmem:[%s2687 + $0xb8] sm:$0xf]
        %v8503 = vld [vmem:[%s2687 + $0xbc] sm:$0x1]
        %v8505 = vshrl.u32 %v8456, 16
        %v8507 = vrot.slane %v8505, 4
        %v8508 = vshll.u32 %v8456, 16
        %v8510 = vrot.slane %v8508, 5
        %v8511 = vor.u32 %v8507, %v8510
        %v8512 = vrot.slane %v8511, 4
        %v8514 = vshll.u32 %v8457, 16
        %v8516 = vrot.slane %v8514, 5
        %v8517 = vsel %vm1130, %v8512, %v8516
        %v8518 = vshrl.u32 %v8457, 16
        %v8520 = vrot.slane %v8518, 4
        %v8521 = vor.u32 %v8520, %v8516
        %v8522 = vrot.slane %v8521, 4
        %v8524 = vshll.u32 %v8458, 16
        %v8526 = vrot.slane %v8524, 5
        %v8527 = vsel %vm1130, %v8522, %v8526
        %v8529 = vshrl.u32 %v8459, 16
        %v8531 = vrot.slane %v8529, 4
        %v8532 = vshll.u32 %v8459, 16
        %v8534 = vrot.slane %v8532, 5
        %v8535 = vor.u32 %v8531, %v8534
        %v8536 = vrot.slane %v8535, 4
        %v8538 = vshll.u32 %v8460, 16
        %v8540 = vrot.slane %v8538, 5
        %v8541 = vsel %vm1130, %v8536, %v8540
        %v8542 = vshrl.u32 %v8460, 16
        %v8544 = vrot.slane %v8542, 4
        %v8545 = vor.u32 %v8544, %v8540
        %v8546 = vrot.slane %v8545, 4
        %v8548 = vshll.u32 %v8461, 16
        %v8550 = vrot.slane %v8548, 5
        %v8551 = vsel %vm1130, %v8546, %v8550
        %v8553 = vshrl.u32 %v8462, 16
        %v8555 = vrot.slane %v8553, 4
        %v8556 = vshll.u32 %v8462, 16
        %v8558 = vrot.slane %v8556, 5
        %v8559 = vor.u32 %v8555, %v8558
        %v8560 = vrot.slane %v8559, 4
        %v8562 = vshll.u32 %v8463, 16
        %v8564 = vrot.slane %v8562, 5
        %v8565 = vsel %vm1130, %v8560, %v8564
        %v8566 = vshrl.u32 %v8463, 16
        %v8568 = vrot.slane %v8566, 4
        %v8569 = vor.u32 %v8568, %v8564
        %v8570 = vrot.slane %v8569, 4
        %v8572 = vshll.u32 %v8464, 16
        %v8574 = vrot.slane %v8572, 5
        %v8575 = vsel %vm1130, %v8570, %v8574
        %v8577 = vshrl.u32 %v8465, 16
        %v8579 = vrot.slane %v8577, 4
        %v8580 = vshll.u32 %v8465, 16
        %v8582 = vrot.slane %v8580, 5
        %v8583 = vor.u32 %v8579, %v8582
        %v8584 = vrot.slane %v8583, 4
        %v8586 = vshll.u32 %v8466, 16
        %v8588 = vrot.slane %v8586, 5
        %v8589 = vsel %vm1130, %v8584, %v8588
        %v8590 = vshrl.u32 %v8466, 16
        %v8592 = vrot.slane %v8590, 4
        %v8593 = vor.u32 %v8592, %v8588
        %v8594 = vrot.slane %v8593, 4
        %v8596 = vshll.u32 %v8467, 16
        %v8598 = vrot.slane %v8596, 5
        %v8599 = vsel %vm1130, %v8594, %v8598
        %v8601 = vshrl.u32 %v8468, 16
        %v8603 = vrot.slane %v8601, 4
        %v8604 = vshll.u32 %v8468, 16
        %v8606 = vrot.slane %v8604, 5
        %v8607 = vor.u32 %v8603, %v8606
        %v8608 = vrot.slane %v8607, 4
        %v8610 = vshll.u32 %v8469, 16
        %v8612 = vrot.slane %v8610, 5
        %v8613 = vsel %vm1130, %v8608, %v8612
        %v8614 = vshrl.u32 %v8469, 16
        %v8616 = vrot.slane %v8614, 4
        %v8617 = vor.u32 %v8616, %v8612
        %v8618 = vrot.slane %v8617, 4
        %v8620 = vshll.u32 %v8470, 16
        %v8622 = vrot.slane %v8620, 5
        %v8623 = vsel %vm1130, %v8618, %v8622
        %v8625 = vshrl.u32 %v8471, 16
        %v8627 = vrot.slane %v8625, 4
        %v8628 = vshll.u32 %v8471, 16
        %v8630 = vrot.slane %v8628, 5
        %v8631 = vor.u32 %v8627, %v8630
        %v8632 = vrot.slane %v8631, 4
        %v8634 = vshll.u32 %v8472, 16
        %v8636 = vrot.slane %v8634, 5
        %v8637 = vsel %vm1130, %v8632, %v8636
        %v8638 = vshrl.u32 %v8472, 16
        %v8640 = vrot.slane %v8638, 4
        %v8641 = vor.u32 %v8640, %v8636
        %v8642 = vrot.slane %v8641, 4
        %v8644 = vshll.u32 %v8473, 16
        %v8646 = vrot.slane %v8644, 5
        %v8647 = vsel %vm1130, %v8642, %v8646
        %v8649 = vshrl.u32 %v8474, 16
        %v8651 = vrot.slane %v8649, 4
        %v8652 = vshll.u32 %v8474, 16
        %v8654 = vrot.slane %v8652, 5
        %v8655 = vor.u32 %v8651, %v8654
        %v8656 = vrot.slane %v8655, 4
        %v8658 = vshll.u32 %v8475, 16
        %v8660 = vrot.slane %v8658, 5
        %v8661 = vsel %vm1130, %v8656, %v8660
        %v8662 = vshrl.u32 %v8475, 16
        %v8664 = vrot.slane %v8662, 4
        %v8665 = vor.u32 %v8664, %v8660
        %v8666 = vrot.slane %v8665, 4
        %v8668 = vshll.u32 %v8476, 16
        %v8670 = vrot.slane %v8668, 5
        %v8671 = vsel %vm1130, %v8666, %v8670
        %v8673 = vshrl.u32 %v8477, 16
        %v8675 = vrot.slane %v8673, 4
        %v8676 = vshll.u32 %v8477, 16
        %v8678 = vrot.slane %v8676, 5
        %v8679 = vor.u32 %v8675, %v8678
        %v8680 = vrot.slane %v8679, 4
        %v8682 = vshll.u32 %v8478, 16
        %v8684 = vrot.slane %v8682, 5
        %v8685 = vsel %vm1130, %v8680, %v8684
        %v8686 = vshrl.u32 %v8478, 16
        %v8688 = vrot.slane %v8686, 4
        %v8689 = vor.u32 %v8688, %v8684
        %v8690 = vrot.slane %v8689, 4
        %v8692 = vshll.u32 %v8479, 16
        %v8694 = vrot.slane %v8692, 5
        %v8695 = vsel %vm1130, %v8690, %v8694
        %v8697 = vshrl.u32 %v8480, 16
        %v8699 = vrot.slane %v8697, 4
        %v8700 = vshll.u32 %v8480, 16
        %v8702 = vrot.slane %v8700, 5
        %v8703 = vor.u32 %v8699, %v8702
        %v8704 = vrot.slane %v8703, 4
        %v8706 = vshll.u32 %v8481, 16
        %v8708 = vrot.slane %v8706, 5
        %v8709 = vsel %vm1130, %v8704, %v8708
        %v8710 = vshrl.u32 %v8481, 16
        %v8712 = vrot.slane %v8710, 4
        %v8713 = vor.u32 %v8712, %v8708
        %v8714 = vrot.slane %v8713, 4
        %v8716 = vshll.u32 %v8482, 16
        %v8718 = vrot.slane %v8716, 5
        %v8719 = vsel %vm1130, %v8714, %v8718
        %v8721 = vshrl.u32 %v8483, 16
        %v8723 = vrot.slane %v8721, 4
        %v8724 = vshll.u32 %v8483, 16
        %v8726 = vrot.slane %v8724, 5
        %v8727 = vor.u32 %v8723, %v8726
        %v8728 = vrot.slane %v8727, 4
        %v8730 = vshll.u32 %v8484, 16
        %v8732 = vrot.slane %v8730, 5
        %v8733 = vsel %vm1130, %v8728, %v8732
        %v8734 = vshrl.u32 %v8484, 16
        %v8736 = vrot.slane %v8734, 4
        %v8737 = vor.u32 %v8736, %v8732
        %v8738 = vrot.slane %v8737, 4
        %v8740 = vshll.u32 %v8485, 16
        %v8742 = vrot.slane %v8740, 5
        %v8743 = vsel %vm1130, %v8738, %v8742
        %v8745 = vshrl.u32 %v8486, 16
        %v8747 = vrot.slane %v8745, 4
        %v8748 = vshll.u32 %v8486, 16
        %v8750 = vrot.slane %v8748, 5
        %v8751 = vor.u32 %v8747, %v8750
        %v8752 = vrot.slane %v8751, 4
        %v8754 = vshll.u32 %v8487, 16
        %v8756 = vrot.slane %v8754, 5
        %v8757 = vsel %vm1130, %v8752, %v8756
        %v8758 = vshrl.u32 %v8487, 16
        %v8760 = vrot.slane %v8758, 4
        %v8761 = vor.u32 %v8760, %v8756
        %v8762 = vrot.slane %v8761, 4
        %v8764 = vshll.u32 %v8488, 16
        %v8766 = vrot.slane %v8764, 5
        %v8767 = vsel %vm1130, %v8762, %v8766
        %v8769 = vshrl.u32 %v8489, 16
        %v8771 = vrot.slane %v8769, 4
        %v8772 = vshll.u32 %v8489, 16
        %v8774 = vrot.slane %v8772, 5
        %v8775 = vor.u32 %v8771, %v8774
        %v8776 = vrot.slane %v8775, 4
        %v8778 = vshll.u32 %v8490, 16
        %v8780 = vrot.slane %v8778, 5
        %v8781 = vsel %vm1130, %v8776, %v8780
        %v8782 = vshrl.u32 %v8490, 16
        %v8784 = vrot.slane %v8782, 4
        %v8785 = vor.u32 %v8784, %v8780
        %v8786 = vrot.slane %v8785, 4
        %v8788 = vshll.u32 %v8491, 16
        %v8790 = vrot.slane %v8788, 5
        %v8791 = vsel %vm1130, %v8786, %v8790
        %v8793 = vshrl.u32 %v8492, 16
        %v8795 = vrot.slane %v8793, 4
        %v8796 = vshll.u32 %v8492, 16
        %v8798 = vrot.slane %v8796, 5
        %v8799 = vor.u32 %v8795, %v8798
        %v8800 = vrot.slane %v8799, 4
        %v8802 = vshll.u32 %v8493, 16
        %v8804 = vrot.slane %v8802, 5
        %v8805 = vsel %vm1130, %v8800, %v8804
        %v8806 = vshrl.u32 %v8493, 16
        %v8808 = vrot.slane %v8806, 4
        %v8809 = vor.u32 %v8808, %v8804
        %v8810 = vrot.slane %v8809, 4
        %v8812 = vshll.u32 %v8494, 16
        %v8814 = vrot.slane %v8812, 5
        %v8815 = vsel %vm1130, %v8810, %v8814
        %v8817 = vshrl.u32 %v8495, 16
        %v8819 = vrot.slane %v8817, 4
        %v8820 = vshll.u32 %v8495, 16
        %v8822 = vrot.slane %v8820, 5
        %v8823 = vor.u32 %v8819, %v8822
        %v8824 = vrot.slane %v8823, 4
        %v8826 = vshll.u32 %v8496, 16
        %v8828 = vrot.slane %v8826, 5
        %v8829 = vsel %vm1130, %v8824, %v8828
        %v8830 = vshrl.u32 %v8496, 16
        %v8832 = vrot.slane %v8830, 4
        %v8833 = vor.u32 %v8832, %v8828
        %v8834 = vrot.slane %v8833, 4
        %v8836 = vshll.u32 %v8497, 16
        %v8838 = vrot.slane %v8836, 5
        %v8839 = vsel %vm1130, %v8834, %v8838
        %v8841 = vshrl.u32 %v8498, 16
        %v8843 = vrot.slane %v8841, 4
        %v8844 = vshll.u32 %v8498, 16
        %v8846 = vrot.slane %v8844, 5
        %v8847 = vor.u32 %v8843, %v8846
        %v8848 = vrot.slane %v8847, 4
        %v8850 = vshll.u32 %v8499, 16
        %v8852 = vrot.slane %v8850, 5
        %v8853 = vsel %vm1130, %v8848, %v8852
        %v8854 = vshrl.u32 %v8499, 16
        %v8856 = vrot.slane %v8854, 4
        %v8857 = vor.u32 %v8856, %v8852
        %v8858 = vrot.slane %v8857, 4
        %v8860 = vshll.u32 %v8500, 16
        %v8862 = vrot.slane %v8860, 5
        %v8863 = vsel %vm1130, %v8858, %v8862
        %v8865 = vshrl.u32 %v8501, 16
        %v8867 = vrot.slane %v8865, 4
        %v8868 = vshll.u32 %v8501, 16
        %v8870 = vrot.slane %v8868, 5
        %v8871 = vor.u32 %v8867, %v8870
        %v8872 = vrot.slane %v8871, 4
        %v8874 = vshll.u32 %v8502, 16
        %v8876 = vrot.slane %v8874, 5
        %v8877 = vsel %vm1130, %v8872, %v8876
        %v8878 = vshrl.u32 %v8502, 16
        %v8880 = vrot.slane %v8878, 4
        %v8881 = vor.u32 %v8880, %v8876
        %v8882 = vrot.slane %v8881, 4
        %v8884 = vshll.u32 %v8503, 16
        %v8886 = vrot.slane %v8884, 5
        %v8887 = vsel %vm1130, %v8882, %v8886
        %8920 = vst [vmem:[#allocation3 + $0x1c] sm:$0xf] %v8517
        %8921 = vst [vmem:[#allocation3 + $0x40] sm:$0xf] %v8527
        %8922 = vst [vmem:[#allocation3 + $0x64] sm:$0xf] %v8541
        %8923 = vst [vmem:[#allocation3 + $0x88] sm:$0xf] %v8551
        %8924 = vst [vmem:[#allocation3 + $0xac] sm:$0xf] %v8565
        %8925 = vst [vmem:[#allocation3 + $0xd0] sm:$0xf] %v8575
        %8926 = vst [vmem:[#allocation3 + $0xf4] sm:$0xf] %v8589
        %8927 = vst [vmem:[#allocation3 + $0x118] sm:$0xf] %v8599
        %8928 = vst [vmem:[#allocation3 + $0x13c] sm:$0xf] %v8613
        %8929 = vst [vmem:[#allocation3 + $0x160] sm:$0xf] %v8623
        %8930 = vst [vmem:[#allocation3 + $0x184] sm:$0xf] %v8637
        %8931 = vst [vmem:[#allocation3 + $0x1a8] sm:$0xf] %v8647
        %8932 = vst [vmem:[#allocation3 + $0x1cc] sm:$0xf] %v8661
        %8933 = vst [vmem:[#allocation3 + $0x1f0] sm:$0xf] %v8671
        %8934 = vst [vmem:[#allocation3 + $0x214] sm:$0xf] %v8685
        %8935 = vst [vmem:[#allocation3 + $0x238] sm:$0xf] %v8695
        %8936 = vst [vmem:[#allocation3 + $0x25c] sm:$0xf] %v8709
        %8937 = vst [vmem:[#allocation3 + $0x280] sm:$0xf] %v8719
        %8938 = vst [vmem:[#allocation3 + $0x2a4] sm:$0xf] %v8733
        %8939 = vst [vmem:[#allocation3 + $0x2c8] sm:$0xf] %v8743
        %8940 = vst [vmem:[#allocation3 + $0x2ec] sm:$0xf] %v8757
        %8941 = vst [vmem:[#allocation3 + $0x310] sm:$0xf] %v8767
        %8942 = vst [vmem:[#allocation3 + $0x334] sm:$0xf] %v8781
        %8943 = vst [vmem:[#allocation3 + $0x358] sm:$0xf] %v8791
        %8944 = vst [vmem:[#allocation3 + $0x37c] sm:$0xf] %v8805
        %8945 = vst [vmem:[#allocation3 + $0x3a0] sm:$0xf] %v8815
        %8946 = vst [vmem:[#allocation3 + $0x3c4] sm:$0xf] %v8829
        %8947 = vst [vmem:[#allocation3 + $0x3e8] sm:$0xf] %v8839
        %8948 = vst [vmem:[#allocation3 + $0x40c] sm:$0xf] %v8853
        %8949 = vst [vmem:[#allocation3 + $0x430] sm:$0xf] %v8863
        %8950 = vst [vmem:[#allocation3 + $0x454] sm:$0xf] %v8877
        %8951 = vst [vmem:[#allocation3 + $0x478] sm:$0xf] %v8887
        %v8952 = vld [vmem:[%s2687] sm:$0xe]
        %v8953 = vld [vmem:[%s2687 + $0x4] sm:$0xf]
        %v8954 = vld [vmem:[%s2687 + $0x8] sm:$0x1]
        %v8955 = vld [vmem:[%s2687 + $0xc] sm:$0xe]
        %v8956 = vld [vmem:[%s2687 + $0x10] sm:$0xf]
        %v8957 = vld [vmem:[%s2687 + $0x14] sm:$0x1]
        %v8958 = vld [vmem:[%s2687 + $0x18] sm:$0xe]
        %v8959 = vld [vmem:[%s2687 + $0x1c] sm:$0xf]
        %v8960 = vld [vmem:[%s2687 + $0x20] sm:$0x1]
        %v8961 = vld [vmem:[%s2687 + $0x24] sm:$0xe]
        %v8962 = vld [vmem:[%s2687 + $0x28] sm:$0xf]
        %v8963 = vld [vmem:[%s2687 + $0x2c] sm:$0x1]
        %v8964 = vld [vmem:[%s2687 + $0x30] sm:$0xe]
        %v8965 = vld [vmem:[%s2687 + $0x34] sm:$0xf]
        %v8966 = vld [vmem:[%s2687 + $0x38] sm:$0x1]
        %v8967 = vld [vmem:[%s2687 + $0x3c] sm:$0xe]
        %v8968 = vld [vmem:[%s2687 + $0x40] sm:$0xf]
        %v8969 = vld [vmem:[%s2687 + $0x44] sm:$0x1]
        %v8970 = vld [vmem:[%s2687 + $0x48] sm:$0xe]
        %v8971 = vld [vmem:[%s2687 + $0x4c] sm:$0xf]
        %v8972 = vld [vmem:[%s2687 + $0x50] sm:$0x1]
        %v8973 = vld [vmem:[%s2687 + $0x54] sm:$0xe]
        %v8974 = vld [vmem:[%s2687 + $0x58] sm:$0xf]
        %v8975 = vld [vmem:[%s2687 + $0x5c] sm:$0x1]
        %v8976 = vld [vmem:[%s2687 + $0x60] sm:$0xe]
        %v8977 = vld [vmem:[%s2687 + $0x64] sm:$0xf]
        %v8978 = vld [vmem:[%s2687 + $0x68] sm:$0x1]
        %v8979 = vld [vmem:[%s2687 + $0x6c] sm:$0xe]
        %v8980 = vld [vmem:[%s2687 + $0x70] sm:$0xf]
        %v8981 = vld [vmem:[%s2687 + $0x74] sm:$0x1]
        %v8982 = vld [vmem:[%s2687 + $0x78] sm:$0xe]
        %v8983 = vld [vmem:[%s2687 + $0x7c] sm:$0xf]
        %v8984 = vld [vmem:[%s2687 + $0x80] sm:$0x1]
        %v8985 = vld [vmem:[%s2687 + $0x84] sm:$0xe]
        %v8986 = vld [vmem:[%s2687 + $0x88] sm:$0xf]
        %v8987 = vld [vmem:[%s2687 + $0x8c] sm:$0x1]
        %v8988 = vld [vmem:[%s2687 + $0x90] sm:$0xe]
        %v8989 = vld [vmem:[%s2687 + $0x94] sm:$0xf]
        %v8990 = vld [vmem:[%s2687 + $0x98] sm:$0x1]
        %v8991 = vld [vmem:[%s2687 + $0x9c] sm:$0xe]
        %v8992 = vld [vmem:[%s2687 + $0xa0] sm:$0xf]
        %v8993 = vld [vmem:[%s2687 + $0xa4] sm:$0x1]
        %v8994 = vld [vmem:[%s2687 + $0xa8] sm:$0xe]
        %v8995 = vld [vmem:[%s2687 + $0xac] sm:$0xf]
        %v8996 = vld [vmem:[%s2687 + $0xb0] sm:$0x1]
        %v8997 = vld [vmem:[%s2687 + $0xb4] sm:$0xe]
        %v8998 = vld [vmem:[%s2687 + $0xb8] sm:$0xf]
        %v8999 = vld [vmem:[%s2687 + $0xbc] sm:$0x1]
        %v9048 = vrot.slane %v8952, 5
        %v9049 = vrot.slane %v9048, 4
        %v9050 = vrot.slane %v8953, 5
        %v9051 = vsel %vm1677, %v9049, %v9050
        %v9052 = vrot.slane %v9050, 4
        %v9053 = vrot.slane %v8954, 5
        %v9054 = vsel %vm1677, %v9052, %v9053
        %v9055 = vrot.slane %v8955, 5
        %v9056 = vrot.slane %v9055, 4
        %v9057 = vrot.slane %v8956, 5
        %v9058 = vsel %vm1677, %v9056, %v9057
        %v9059 = vrot.slane %v9057, 4
        %v9060 = vrot.slane %v8957, 5
        %v9061 = vsel %vm1677, %v9059, %v9060
        %v9062 = vrot.slane %v8958, 5
        %v9063 = vrot.slane %v9062, 4
        %v9064 = vrot.slane %v8959, 5
        %v9065 = vsel %vm1677, %v9063, %v9064
        %v9066 = vrot.slane %v9064, 4
        %v9067 = vrot.slane %v8960, 5
        %v9068 = vsel %vm1677, %v9066, %v9067
        %v9069 = vrot.slane %v8961, 5
        %v9070 = vrot.slane %v9069, 4
        %v9071 = vrot.slane %v8962, 5
        %v9072 = vsel %vm1677, %v9070, %v9071
        %v9073 = vrot.slane %v9071, 4
        %v9074 = vrot.slane %v8963, 5
        %v9075 = vsel %vm1677, %v9073, %v9074
        %v9076 = vrot.slane %v8964, 5
        %v9077 = vrot.slane %v9076, 4
        %v9078 = vrot.slane %v8965, 5
        %v9079 = vsel %vm1677, %v9077, %v9078
        %v9080 = vrot.slane %v9078, 4
        %v9081 = vrot.slane %v8966, 5
        %v9082 = vsel %vm1677, %v9080, %v9081
        %v9083 = vrot.slane %v8967, 5
        %v9084 = vrot.slane %v9083, 4
        %v9085 = vrot.slane %v8968, 5
        %v9086 = vsel %vm1677, %v9084, %v9085
        %v9087 = vrot.slane %v9085, 4
        %v9088 = vrot.slane %v8969, 5
        %v9089 = vsel %vm1677, %v9087, %v9088
        %v9090 = vrot.slane %v8970, 5
        %v9091 = vrot.slane %v9090, 4
        %v9092 = vrot.slane %v8971, 5
        %v9093 = vsel %vm1677, %v9091, %v9092
        %v9094 = vrot.slane %v9092, 4
        %v9095 = vrot.slane %v8972, 5
        %v9096 = vsel %vm1677, %v9094, %v9095
        %v9097 = vrot.slane %v8973, 5
        %v9098 = vrot.slane %v9097, 4
        %v9099 = vrot.slane %v8974, 5
        %v9100 = vsel %vm1677, %v9098, %v9099
        %v9101 = vrot.slane %v9099, 4
        %v9102 = vrot.slane %v8975, 5
        %v9103 = vsel %vm1677, %v9101, %v9102
        %v9104 = vrot.slane %v8976, 5
        %v9105 = vrot.slane %v9104, 4
        %v9106 = vrot.slane %v8977, 5
        %v9107 = vsel %vm1677, %v9105, %v9106
        %v9108 = vrot.slane %v9106, 4
        %v9109 = vrot.slane %v8978, 5
        %v9110 = vsel %vm1677, %v9108, %v9109
        %v9111 = vrot.slane %v8979, 5
        %v9112 = vrot.slane %v9111, 4
        %v9113 = vrot.slane %v8980, 5
        %v9114 = vsel %vm1677, %v9112, %v9113
        %v9115 = vrot.slane %v9113, 4
        %v9116 = vrot.slane %v8981, 5
        %v9117 = vsel %vm1677, %v9115, %v9116
        %v9118 = vrot.slane %v8982, 5
        %v9119 = vrot.slane %v9118, 4
        %v9120 = vrot.slane %v8983, 5
        %v9121 = vsel %vm1677, %v9119, %v9120
        %v9122 = vrot.slane %v9120, 4
        %v9123 = vrot.slane %v8984, 5
        %v9124 = vsel %vm1677, %v9122, %v9123
        %v9125 = vrot.slane %v8985, 5
        %v9126 = vrot.slane %v9125, 4
        %v9127 = vrot.slane %v8986, 5
        %v9128 = vsel %vm1677, %v9126, %v9127
        %v9129 = vrot.slane %v9127, 4
        %v9130 = vrot.slane %v8987, 5
        %v9131 = vsel %vm1677, %v9129, %v9130
        %v9132 = vrot.slane %v8988, 5
        %v9133 = vrot.slane %v9132, 4
        %v9134 = vrot.slane %v8989, 5
        %v9135 = vsel %vm1677, %v9133, %v9134
        %v9136 = vrot.slane %v9134, 4
        %v9137 = vrot.slane %v8990, 5
        %v9138 = vsel %vm1677, %v9136, %v9137
        %v9139 = vrot.slane %v8991, 5
        %v9140 = vrot.slane %v9139, 4
        %v9141 = vrot.slane %v8992, 5
        %v9142 = vsel %vm1677, %v9140, %v9141
        %v9143 = vrot.slane %v9141, 4
        %v9144 = vrot.slane %v8993, 5
        %v9145 = vsel %vm1677, %v9143, %v9144
        %v9146 = vrot.slane %v8994, 5
        %v9147 = vrot.slane %v9146, 4
        %v9148 = vrot.slane %v8995, 5
        %v9149 = vsel %vm1677, %v9147, %v9148
        %v9150 = vrot.slane %v9148, 4
        %v9151 = vrot.slane %v8996, 5
        %v9152 = vsel %vm1677, %v9150, %v9151
        %v9153 = vrot.slane %v8997, 5
        %v9154 = vrot.slane %v9153, 4
        %v9155 = vrot.slane %v8998, 5
        %v9156 = vsel %vm1677, %v9154, %v9155
        %v9157 = vrot.slane %v9155, 4
        %v9158 = vrot.slane %v8999, 5
        %v9159 = vsel %vm1677, %v9157, %v9158
        %9192 = vst [vmem:[#allocation3 + $0x20] sm:$0xf] %v9051
        %9193 = vst [vmem:[#allocation3 + $0x44] sm:$0xf] %v9054
        %9194 = vst [vmem:[#allocation3 + $0x68] sm:$0xf] %v9058
        %9195 = vst [vmem:[#allocation3 + $0x8c] sm:$0xf] %v9061
        %9196 = vst [vmem:[#allocation3 + $0xb0] sm:$0xf] %v9065
        %9197 = vst [vmem:[#allocation3 + $0xd4] sm:$0xf] %v9068
        %9198 = vst [vmem:[#allocation3 + $0xf8] sm:$0xf] %v9072
        %9199 = vst [vmem:[#allocation3 + $0x11c] sm:$0xf] %v9075
        %9200 = vst [vmem:[#allocation3 + $0x140] sm:$0xf] %v9079
        %9201 = vst [vmem:[#allocation3 + $0x164] sm:$0xf] %v9082
        %9202 = vst [vmem:[#allocation3 + $0x188] sm:$0xf] %v9086
        %9203 = vst [vmem:[#allocation3 + $0x1ac] sm:$0xf] %v9089
        %9204 = vst [vmem:[#allocation3 + $0x1d0] sm:$0xf] %v9093
        %9205 = vst [vmem:[#allocation3 + $0x1f4] sm:$0xf] %v9096
        %9206 = vst [vmem:[#allocation3 + $0x218] sm:$0xf] %v9100
        %9207 = vst [vmem:[#allocation3 + $0x23c] sm:$0xf] %v9103
        %9208 = vst [vmem:[#allocation3 + $0x260] sm:$0xf] %v9107
        %9209 = vst [vmem:[#allocation3 + $0x284] sm:$0xf] %v9110
        %9210 = vst [vmem:[#allocation3 + $0x2a8] sm:$0xf] %v9114
        %9211 = vst [vmem:[#allocation3 + $0x2cc] sm:$0xf] %v9117
        %9212 = vst [vmem:[#allocation3 + $0x2f0] sm:$0xf] %v9121
        %9213 = vst [vmem:[#allocation3 + $0x314] sm:$0xf] %v9124
        %9214 = vst [vmem:[#allocation3 + $0x338] sm:$0xf] %v9128
        %9215 = vst [vmem:[#allocation3 + $0x35c] sm:$0xf] %v9131
        %9216 = vst [vmem:[#allocation3 + $0x380] sm:$0xf] %v9135
        %9217 = vst [vmem:[#allocation3 + $0x3a4] sm:$0xf] %v9138
        %9218 = vst [vmem:[#allocation3 + $0x3c8] sm:$0xf] %v9142
        %9219 = vst [vmem:[#allocation3 + $0x3ec] sm:$0xf] %v9145
        %9220 = vst [vmem:[#allocation3 + $0x410] sm:$0xf] %v9149
        %9221 = vst [vmem:[#allocation3 + $0x434] sm:$0xf] %v9152
        %9222 = vst [vmem:[#allocation3 + $0x458] sm:$0xf] %v9156
        %9223 = vst [vmem:[#allocation3 + $0x47c] sm:$0xf] %v9159
        %v9224 = vld [vmem:[#allocation3] sm:$0xff]
        %v9225 = vld [vmem:[#allocation3 + $0x8] sm:$0xff]
        %v9226 = vld [vmem:[#allocation3 + $0x10] sm:$0xff]
        %v9227 = vld [vmem:[#allocation3 + $0x18] sm:$0xff]
        %v9228 = vld [vmem:[#allocation3 + $0x20] sm:$0xf]
        %v9229 = vld [vmem:[#allocation3 + $0x24] sm:$0xff]
        %v9230 = vld [vmem:[#allocation3 + $0x2c] sm:$0xff]
        %v9231 = vld [vmem:[#allocation3 + $0x34] sm:$0xff]
        %v9232 = vld [vmem:[#allocation3 + $0x3c] sm:$0xff]
        %v9233 = vld [vmem:[#allocation3 + $0x44] sm:$0xf]
        %v9234 = vld [vmem:[#allocation3 + $0x48] sm:$0xff]
        %v9235 = vld [vmem:[#allocation3 + $0x50] sm:$0xff]
        %v9236 = vld [vmem:[#allocation3 + $0x58] sm:$0xff]
        %v9237 = vld [vmem:[#allocation3 + $0x60] sm:$0xff]
        %v9238 = vld [vmem:[#allocation3 + $0x68] sm:$0xf]
        %v9239 = vld [vmem:[#allocation3 + $0x6c] sm:$0xff]
        %v9240 = vld [vmem:[#allocation3 + $0x74] sm:$0xff]
        %v9241 = vld [vmem:[#allocation3 + $0x7c] sm:$0xff]
        %v9242 = vld [vmem:[#allocation3 + $0x84] sm:$0xff]
        %v9243 = vld [vmem:[#allocation3 + $0x8c] sm:$0xf]
        %v9244 = vld [vmem:[#allocation3 + $0x90] sm:$0xff]
        %v9245 = vld [vmem:[#allocation3 + $0x98] sm:$0xff]
        %v9246 = vld [vmem:[#allocation3 + $0xa0] sm:$0xff]
        %v9247 = vld [vmem:[#allocation3 + $0xa8] sm:$0xff]
        %v9248 = vld [vmem:[#allocation3 + $0xb0] sm:$0xf]
        %v9249 = vld [vmem:[#allocation3 + $0xb4] sm:$0xff]
        %v9250 = vld [vmem:[#allocation3 + $0xbc] sm:$0xff]
        %v9251 = vld [vmem:[#allocation3 + $0xc4] sm:$0xff]
        %v9252 = vld [vmem:[#allocation3 + $0xcc] sm:$0xff]
        %v9253 = vld [vmem:[#allocation3 + $0xd4] sm:$0xf]
        %v9254 = vld [vmem:[#allocation3 + $0xd8] sm:$0xff]
        %v9255 = vld [vmem:[#allocation3 + $0xe0] sm:$0xff]
        %v9256 = vld [vmem:[#allocation3 + $0xe8] sm:$0xff]
        %v9257 = vld [vmem:[#allocation3 + $0xf0] sm:$0xff]
        %v9258 = vld [vmem:[#allocation3 + $0xf8] sm:$0xf]
        %v9259 = vld [vmem:[#allocation3 + $0xfc] sm:$0xff]
        %v9260 = vld [vmem:[#allocation3 + $0x104] sm:$0xff]
        %v9261 = vld [vmem:[#allocation3 + $0x10c] sm:$0xff]
        %v9262 = vld [vmem:[#allocation3 + $0x114] sm:$0xff]
        %v9263 = vld [vmem:[#allocation3 + $0x11c] sm:$0xf]
        %v9264 = vld [vmem:[#allocation3 + $0x120] sm:$0xff]
        %v9265 = vld [vmem:[#allocation3 + $0x128] sm:$0xff]
        %v9266 = vld [vmem:[#allocation3 + $0x130] sm:$0xff]
        %v9267 = vld [vmem:[#allocation3 + $0x138] sm:$0xff]
        %v9268 = vld [vmem:[#allocation3 + $0x140] sm:$0xf]
        %v9269 = vld [vmem:[#allocation3 + $0x144] sm:$0xff]
        %v9270 = vld [vmem:[#allocation3 + $0x14c] sm:$0xff]
        %v9271 = vld [vmem:[#allocation3 + $0x154] sm:$0xff]
        %v9272 = vld [vmem:[#allocation3 + $0x15c] sm:$0xff]
        %v9273 = vld [vmem:[#allocation3 + $0x164] sm:$0xf]
        %v9274 = vld [vmem:[#allocation3 + $0x168] sm:$0xff]
        %v9275 = vld [vmem:[#allocation3 + $0x170] sm:$0xff]
        %v9276 = vld [vmem:[#allocation3 + $0x178] sm:$0xff]
        %v9277 = vld [vmem:[#allocation3 + $0x180] sm:$0xff]
        %v9278 = vld [vmem:[#allocation3 + $0x188] sm:$0xf]
        %v9279 = vld [vmem:[#allocation3 + $0x18c] sm:$0xff]
        %v9280 = vld [vmem:[#allocation3 + $0x194] sm:$0xff]
        %v9281 = vld [vmem:[#allocation3 + $0x19c] sm:$0xff]
        %v9282 = vld [vmem:[#allocation3 + $0x1a4] sm:$0xff]
        %v9283 = vld [vmem:[#allocation3 + $0x1ac] sm:$0xf]
        %v9284 = vld [vmem:[#allocation3 + $0x1b0] sm:$0xff]
        %v9285 = vld [vmem:[#allocation3 + $0x1b8] sm:$0xff]
        %v9286 = vld [vmem:[#allocation3 + $0x1c0] sm:$0xff]
        %v9287 = vld [vmem:[#allocation3 + $0x1c8] sm:$0xff]
        %v9288 = vld [vmem:[#allocation3 + $0x1d0] sm:$0xf]
        %v9289 = vld [vmem:[#allocation3 + $0x1d4] sm:$0xff]
        %v9290 = vld [vmem:[#allocation3 + $0x1dc] sm:$0xff]
        %v9291 = vld [vmem:[#allocation3 + $0x1e4] sm:$0xff]
        %v9292 = vld [vmem:[#allocation3 + $0x1ec] sm:$0xff]
        %v9293 = vld [vmem:[#allocation3 + $0x1f4] sm:$0xf]
        %v9294 = vld [vmem:[#allocation3 + $0x1f8] sm:$0xff]
        %v9295 = vld [vmem:[#allocation3 + $0x200] sm:$0xff]
        %v9296 = vld [vmem:[#allocation3 + $0x208] sm:$0xff]
        %v9297 = vld [vmem:[#allocation3 + $0x210] sm:$0xff]
        %v9298 = vld [vmem:[#allocation3 + $0x218] sm:$0xf]
        %v9299 = vld [vmem:[#allocation3 + $0x21c] sm:$0xff]
        %v9300 = vld [vmem:[#allocation3 + $0x224] sm:$0xff]
        %v9301 = vld [vmem:[#allocation3 + $0x22c] sm:$0xff]
        %v9302 = vld [vmem:[#allocation3 + $0x234] sm:$0xff]
        %v9303 = vld [vmem:[#allocation3 + $0x23c] sm:$0xf]
        %v9304 = vld [vmem:[#allocation3 + $0x240] sm:$0xff]
        %v9305 = vld [vmem:[#allocation3 + $0x248] sm:$0xff]
        %v9306 = vld [vmem:[#allocation3 + $0x250] sm:$0xff]
        %v9307 = vld [vmem:[#allocation3 + $0x258] sm:$0xff]
        %v9308 = vld [vmem:[#allocation3 + $0x260] sm:$0xf]
        %v9309 = vld [vmem:[#allocation3 + $0x264] sm:$0xff]
        %v9310 = vld [vmem:[#allocation3 + $0x26c] sm:$0xff]
        %v9311 = vld [vmem:[#allocation3 + $0x274] sm:$0xff]
        %v9312 = vld [vmem:[#allocation3 + $0x27c] sm:$0xff]
        %v9313 = vld [vmem:[#allocation3 + $0x284] sm:$0xf]
        %v9314 = vld [vmem:[#allocation3 + $0x288] sm:$0xff]
        %v9315 = vld [vmem:[#allocation3 + $0x290] sm:$0xff]
        %v9316 = vld [vmem:[#allocation3 + $0x298] sm:$0xff]
        %v9317 = vld [vmem:[#allocation3 + $0x2a0] sm:$0xff]
        %v9318 = vld [vmem:[#allocation3 + $0x2a8] sm:$0xf]
        %v9319 = vld [vmem:[#allocation3 + $0x2ac] sm:$0xff]
        %v9320 = vld [vmem:[#allocation3 + $0x2b4] sm:$0xff]
        %v9321 = vld [vmem:[#allocation3 + $0x2bc] sm:$0xff]
        %v9322 = vld [vmem:[#allocation3 + $0x2c4] sm:$0xff]
        %v9323 = vld [vmem:[#allocation3 + $0x2cc] sm:$0xf]
        %v9324 = vld [vmem:[#allocation3 + $0x2d0] sm:$0xff]
        %v9325 = vld [vmem:[#allocation3 + $0x2d8] sm:$0xff]
        %v9326 = vld [vmem:[#allocation3 + $0x2e0] sm:$0xff]
        %v9327 = vld [vmem:[#allocation3 + $0x2e8] sm:$0xff]
        %v9328 = vld [vmem:[#allocation3 + $0x2f0] sm:$0xf]
        %v9329 = vld [vmem:[#allocation3 + $0x2f4] sm:$0xff]
        %v9330 = vld [vmem:[#allocation3 + $0x2fc] sm:$0xff]
        %v9331 = vld [vmem:[#allocation3 + $0x304] sm:$0xff]
        %v9332 = vld [vmem:[#allocation3 + $0x30c] sm:$0xff]
        %v9333 = vld [vmem:[#allocation3 + $0x314] sm:$0xf]
        %v9334 = vld [vmem:[#allocation3 + $0x318] sm:$0xff]
        %v9335 = vld [vmem:[#allocation3 + $0x320] sm:$0xff]
        %v9336 = vld [vmem:[#allocation3 + $0x328] sm:$0xff]
        %v9337 = vld [vmem:[#allocation3 + $0x330] sm:$0xff]
        %v9338 = vld [vmem:[#allocation3 + $0x338] sm:$0xf]
        %v9339 = vld [vmem:[#allocation3 + $0x33c] sm:$0xff]
        %v9340 = vld [vmem:[#allocation3 + $0x344] sm:$0xff]
        %v9341 = vld [vmem:[#allocation3 + $0x34c] sm:$0xff]
        %v9342 = vld [vmem:[#allocation3 + $0x354] sm:$0xff]
        %v9343 = vld [vmem:[#allocation3 + $0x35c] sm:$0xf]
        %v9344 = vld [vmem:[#allocation3 + $0x360] sm:$0xff]
        %v9345 = vld [vmem:[#allocation3 + $0x368] sm:$0xff]
        %v9346 = vld [vmem:[#allocation3 + $0x370] sm:$0xff]
        %v9347 = vld [vmem:[#allocation3 + $0x378] sm:$0xff]
        %v9348 = vld [vmem:[#allocation3 + $0x380] sm:$0xf]
        %v9349 = vld [vmem:[#allocation3 + $0x384] sm:$0xff]
        %v9350 = vld [vmem:[#allocation3 + $0x38c] sm:$0xff]
        %v9351 = vld [vmem:[#allocation3 + $0x394] sm:$0xff]
        %v9352 = vld [vmem:[#allocation3 + $0x39c] sm:$0xff]
        %v9353 = vld [vmem:[#allocation3 + $0x3a4] sm:$0xf]
        %v9354 = vld [vmem:[#allocation3 + $0x3a8] sm:$0xff]
        %v9355 = vld [vmem:[#allocation3 + $0x3b0] sm:$0xff]
        %v9356 = vld [vmem:[#allocation3 + $0x3b8] sm:$0xff]
        %v9357 = vld [vmem:[#allocation3 + $0x3c0] sm:$0xff]
        %v9358 = vld [vmem:[#allocation3 + $0x3c8] sm:$0xf]
        %v9359 = vld [vmem:[#allocation3 + $0x3cc] sm:$0xff]
        %v9360 = vld [vmem:[#allocation3 + $0x3d4] sm:$0xff]
        %v9361 = vld [vmem:[#allocation3 + $0x3dc] sm:$0xff]
        %v9362 = vld [vmem:[#allocation3 + $0x3e4] sm:$0xff]
        %v9363 = vld [vmem:[#allocation3 + $0x3ec] sm:$0xf]
        %v9364 = vld [vmem:[#allocation3 + $0x3f0] sm:$0xff]
        %v9365 = vld [vmem:[#allocation3 + $0x3f8] sm:$0xff]
        %v9366 = vld [vmem:[#allocation3 + $0x400] sm:$0xff]
        %v9367 = vld [vmem:[#allocation3 + $0x408] sm:$0xff]
        %v9368 = vld [vmem:[#allocation3 + $0x410] sm:$0xf]
        %v9369 = vld [vmem:[#allocation3 + $0x414] sm:$0xff]
        %v9370 = vld [vmem:[#allocation3 + $0x41c] sm:$0xff]
        %v9371 = vld [vmem:[#allocation3 + $0x424] sm:$0xff]
        %v9372 = vld [vmem:[#allocation3 + $0x42c] sm:$0xff]
        %v9373 = vld [vmem:[#allocation3 + $0x434] sm:$0xf]
        %v9374 = vld [vmem:[#allocation3 + $0x438] sm:$0xff]
        %v9375 = vld [vmem:[#allocation3 + $0x440] sm:$0xff]
        %v9376 = vld [vmem:[#allocation3 + $0x448] sm:$0xff]
        %v9377 = vld [vmem:[#allocation3 + $0x450] sm:$0xff]
        %v9378 = vld [vmem:[#allocation3 + $0x458] sm:$0xf]
        %v9379 = vld [vmem:[#allocation3 + $0x45c] sm:$0xff]
        %v9380 = vld [vmem:[#allocation3 + $0x464] sm:$0xff]
        %v9381 = vld [vmem:[#allocation3 + $0x46c] sm:$0xff]
        %v9382 = vld [vmem:[#allocation3 + $0x474] sm:$0xff]
        %v9383 = vld [vmem:[#allocation3 + $0x47c] sm:$0xf]
        %v9384 = vld [vmem:[#allocation9] sm:$0xf]
        %v9385 = vld [vmem:[#allocation9 + $0x4] sm:$0xf]
        %v9386 = vld [vmem:[#allocation9 + $0x8] sm:$0xf]
        %v9387 = vld [vmem:[#allocation9 + $0xc] sm:$0xf]
        %v9388 = vld [vmem:[#allocation9 + $0x10] sm:$0xf]
        %v9389 = vld [vmem:[#allocation9 + $0x14] sm:$0xf]
        %v9390 = vld [vmem:[#allocation9 + $0x18] sm:$0xf]
        %v9391 = vld [vmem:[#allocation9 + $0x1c] sm:$0xf]
        %v9392 = vld [vmem:[#allocation9 + $0x20] sm:$0xf]
        %v9393 = vld [vmem:[#allocation9 + $0x24] sm:$0xf]
        %v9394 = vld [vmem:[#allocation9 + $0x28] sm:$0xf]
        %v9395 = vld [vmem:[#allocation9 + $0x2c] sm:$0xf]
        %v9396 = vld [vmem:[#allocation9 + $0x30] sm:$0xf]
        %v9397 = vld [vmem:[#allocation9 + $0x34] sm:$0xf]
        %v9398 = vld [vmem:[#allocation9 + $0x38] sm:$0xf]
        %v9399 = vld [vmem:[#allocation9 + $0x3c] sm:$0xf]
        %v9400 = vld [vmem:[#allocation9 + $0x40] sm:$0xf]
        %v9401 = vld [vmem:[#allocation9 + $0x44] sm:$0xf]
        %v9402 = vld [vmem:[#allocation9 + $0x48] sm:$0xf]
        %v9403 = vld [vmem:[#allocation9 + $0x4c] sm:$0xf]
        %v9404 = vld [vmem:[#allocation9 + $0x50] sm:$0xf]
        %v9405 = vld [vmem:[#allocation9 + $0x54] sm:$0xf]
        %v9406 = vld [vmem:[#allocation9 + $0x58] sm:$0xf]
        %v9407 = vld [vmem:[#allocation9 + $0x5c] sm:$0xf]
        %v9408 = vld [vmem:[#allocation9 + $0x60] sm:$0xf]
        %v9409 = vld [vmem:[#allocation9 + $0x64] sm:$0xf]
        %v9410 = vld [vmem:[#allocation9 + $0x68] sm:$0xf]
        %v9411 = vld [vmem:[#allocation9 + $0x6c] sm:$0xf]
        %v9412 = vld [vmem:[#allocation9 + $0x70] sm:$0xf]
        %v9413 = vld [vmem:[#allocation9 + $0x74] sm:$0xf]
        %v9414 = vld [vmem:[#allocation9 + $0x78] sm:$0xf]
        %v9415 = vld [vmem:[#allocation9 + $0x7c] sm:$0xf]
        %v9416 = vld [vmem:[#allocation9 + $0x80] sm:$0xf]
        %v9417 = vld [vmem:[#allocation9 + $0x84] sm:$0xf]
        %v9418 = vld [vmem:[#allocation9 + $0x88] sm:$0xf]
        %v9419 = vld [vmem:[#allocation9 + $0x8c] sm:$0xf]
        %v9420 = vld [vmem:[#allocation9 + $0x90] sm:$0xf]
        %v9421 = vld [vmem:[#allocation9 + $0x94] sm:$0xf]
        %v9422 = vld [vmem:[#allocation9 + $0x98] sm:$0xf]
        %v9423 = vld [vmem:[#allocation9 + $0x9c] sm:$0xf]
        %v9424 = vld [vmem:[#allocation9 + $0xa0] sm:$0xf]
        %v9425 = vld [vmem:[#allocation9 + $0xa4] sm:$0xf]
        %v9426 = vld [vmem:[#allocation9 + $0xa8] sm:$0xf]
        %v9427 = vld [vmem:[#allocation9 + $0xac] sm:$0xf]
        %v9428 = vld [vmem:[#allocation9 + $0xb0] sm:$0xf]
        %v9429 = vld [vmem:[#allocation9 + $0xb4] sm:$0xf]
        %v9430 = vld [vmem:[#allocation9 + $0xb8] sm:$0xf]
        %v9431 = vld [vmem:[#allocation9 + $0xbc] sm:$0xf]
        %v9432 = vld [vmem:[#allocation9 + $0xc0] sm:$0xf]
        %v9433 = vld [vmem:[#allocation9 + $0xc4] sm:$0xf]
        %v9434 = vld [vmem:[#allocation9 + $0xc8] sm:$0xf]
        %v9435 = vld [vmem:[#allocation9 + $0xcc] sm:$0xf]
        %v9436 = vld [vmem:[#allocation9 + $0xd0] sm:$0xf]
        %v9437 = vld [vmem:[#allocation9 + $0xd4] sm:$0xf]
        %v9438 = vld [vmem:[#allocation9 + $0xd8] sm:$0xf]
        %v9439 = vld [vmem:[#allocation9 + $0xdc] sm:$0xf]
        %v9440 = vld [vmem:[#allocation9 + $0xe0] sm:$0xf]
        %v9441 = vld [vmem:[#allocation9 + $0xe4] sm:$0xf]
        %v9442 = vld [vmem:[#allocation9 + $0xe8] sm:$0xf]
        %v9443 = vld [vmem:[#allocation9 + $0xec] sm:$0xf]
        %v9444 = vld [vmem:[#allocation9 + $0xf0] sm:$0xf]
        %v9445 = vld [vmem:[#allocation9 + $0xf4] sm:$0xf]
        %v9446 = vld [vmem:[#allocation9 + $0xf8] sm:$0xf]
        %v9447 = vld [vmem:[#allocation9 + $0xfc] sm:$0xf]
        %v9448 = vld [vmem:[#allocation9 + $0x100] sm:$0xf]
        %v9449 = vld [vmem:[#allocation9 + $0x104] sm:$0xf]
        %v9450 = vld [vmem:[#allocation9 + $0x108] sm:$0xf]
        %v9451 = vld [vmem:[#allocation9 + $0x10c] sm:$0xf]
        %v9452 = vld [vmem:[#allocation9 + $0x110] sm:$0xf]
        %v9453 = vld [vmem:[#allocation9 + $0x114] sm:$0xf]
        %v9454 = vld [vmem:[#allocation9 + $0x118] sm:$0xf]
        %v9455 = vld [vmem:[#allocation9 + $0x11c] sm:$0xf]
        %v9456 = vld [vmem:[#allocation9 + $0x120] sm:$0xf]
        %v9457 = vld [vmem:[#allocation9 + $0x124] sm:$0xf]
        %v9458 = vld [vmem:[#allocation9 + $0x128] sm:$0xf]
        %v9459 = vld [vmem:[#allocation9 + $0x12c] sm:$0xf]
        %v9460 = vld [vmem:[#allocation9 + $0x130] sm:$0xf]
        %v9461 = vld [vmem:[#allocation9 + $0x134] sm:$0xf]
        %v9462 = vld [vmem:[#allocation9 + $0x138] sm:$0xf]
        %v9463 = vld [vmem:[#allocation9 + $0x13c] sm:$0xf]
        %v9464 = vld [vmem:[#allocation9 + $0x140] sm:$0xf]
        %v9465 = vld [vmem:[#allocation9 + $0x144] sm:$0xf]
        %v9466 = vld [vmem:[#allocation9 + $0x148] sm:$0xf]
        %v9467 = vld [vmem:[#allocation9 + $0x14c] sm:$0xf]
        %v9468 = vld [vmem:[#allocation9 + $0x150] sm:$0xf]
        %v9469 = vld [vmem:[#allocation9 + $0x154] sm:$0xf]
        %v9470 = vld [vmem:[#allocation9 + $0x158] sm:$0xf]
        %v9471 = vld [vmem:[#allocation9 + $0x15c] sm:$0xf]
        %v9472 = vld [vmem:[#allocation9 + $0x160] sm:$0xf]
        %v9473 = vld [vmem:[#allocation9 + $0x164] sm:$0xf]
        %v9474 = vld [vmem:[#allocation9 + $0x168] sm:$0xf]
        %v9475 = vld [vmem:[#allocation9 + $0x16c] sm:$0xf]
        %v9476 = vld [vmem:[#allocation9 + $0x170] sm:$0xf]
        %v9477 = vld [vmem:[#allocation9 + $0x174] sm:$0xf]
        %v9478 = vld [vmem:[#allocation9 + $0x178] sm:$0xf]
        %v9479 = vld [vmem:[#allocation9 + $0x17c] sm:$0xf]
        %v9480 = vld [vmem:[#allocation9 + $0x180] sm:$0xf]
        %v9481 = vld [vmem:[#allocation9 + $0x184] sm:$0xf]
        %v9482 = vld [vmem:[#allocation9 + $0x188] sm:$0xf]
        %v9483 = vld [vmem:[#allocation9 + $0x18c] sm:$0xf]
        %v9484 = vld [vmem:[#allocation9 + $0x190] sm:$0xf]
        %v9485 = vld [vmem:[#allocation9 + $0x194] sm:$0xf]
        %v9486 = vld [vmem:[#allocation9 + $0x198] sm:$0xf]
        %v9487 = vld [vmem:[#allocation9 + $0x19c] sm:$0xf]
        %v9488 = vld [vmem:[#allocation9 + $0x1a0] sm:$0xf]
        %v9489 = vld [vmem:[#allocation9 + $0x1a4] sm:$0xf]
        %v9490 = vld [vmem:[#allocation9 + $0x1a8] sm:$0xf]
        %v9491 = vld [vmem:[#allocation9 + $0x1ac] sm:$0xf]
        %v9492 = vld [vmem:[#allocation9 + $0x1b0] sm:$0xf]
        %v9493 = vld [vmem:[#allocation9 + $0x1b4] sm:$0xf]
        %v9494 = vld [vmem:[#allocation9 + $0x1b8] sm:$0xf]
        %v9495 = vld [vmem:[#allocation9 + $0x1bc] sm:$0xf]
        %v9496 = vld [vmem:[#allocation9 + $0x1c0] sm:$0xf]
        %v9497 = vld [vmem:[#allocation9 + $0x1c4] sm:$0xf]
        %v9498 = vld [vmem:[#allocation9 + $0x1c8] sm:$0xf]
        %v9499 = vld [vmem:[#allocation9 + $0x1cc] sm:$0xf]
        %v9500 = vld [vmem:[#allocation9 + $0x1d0] sm:$0xf]
        %v9501 = vld [vmem:[#allocation9 + $0x1d4] sm:$0xf]
        %v9502 = vld [vmem:[#allocation9 + $0x1d8] sm:$0xf]
        %v9503 = vld [vmem:[#allocation9 + $0x1dc] sm:$0xf]
        %v9504 = vld [vmem:[#allocation9 + $0x1e0] sm:$0xf]
        %v9505 = vld [vmem:[#allocation9 + $0x1e4] sm:$0xf]
        %v9506 = vld [vmem:[#allocation9 + $0x1e8] sm:$0xf]
        %v9507 = vld [vmem:[#allocation9 + $0x1ec] sm:$0xf]
        %v9508 = vld [vmem:[#allocation9 + $0x1f0] sm:$0xf]
        %v9509 = vld [vmem:[#allocation9 + $0x1f4] sm:$0xf]
        %v9510 = vld [vmem:[#allocation9 + $0x1f8] sm:$0xf]
        %v9511 = vld [vmem:[#allocation9 + $0x1fc] sm:$0xf]
        %v9512 = vld [vmem:[#allocation9 + $0x200] sm:$0xf]
        %v9513 = vld [vmem:[#allocation9 + $0x204] sm:$0xf]
        %v9514 = vld [vmem:[#allocation9 + $0x208] sm:$0xf]
        %v9515 = vld [vmem:[#allocation9 + $0x20c] sm:$0xf]
        %v9516 = vld [vmem:[#allocation9 + $0x210] sm:$0xf]
        %v9517 = vld [vmem:[#allocation9 + $0x214] sm:$0xf]
        %v9518 = vld [vmem:[#allocation9 + $0x218] sm:$0xf]
        %v9519 = vld [vmem:[#allocation9 + $0x21c] sm:$0xf]
        %v9520 = vld [vmem:[#allocation9 + $0x220] sm:$0xf]
        %v9521 = vld [vmem:[#allocation9 + $0x224] sm:$0xf]
        %v9522 = vld [vmem:[#allocation9 + $0x228] sm:$0xf]
        %v9523 = vld [vmem:[#allocation9 + $0x22c] sm:$0xf]
        %v9524 = vld [vmem:[#allocation9 + $0x230] sm:$0xf]
        %v9525 = vld [vmem:[#allocation9 + $0x234] sm:$0xf]
        %v9526 = vld [vmem:[#allocation9 + $0x238] sm:$0xf]
        %v9527 = vld [vmem:[#allocation9 + $0x23c] sm:$0xf]
        %v9528 = vld [vmem:[%s6] sm:$0x1]
        %v9530 = vperm.slane %v9528, 0
        %v9692 = vunpack.c.l.b16 %v9224
        %v9693 = vunpack.c.h.b16 %v9224
        %v9694 = vunpack.c.l.b16 %v9225
        %v9695 = vunpack.c.h.b16 %v9225
        %v9696 = vunpack.c.l.b16 %v9226
        %v9697 = vunpack.c.h.b16 %v9226
        %v9698 = vunpack.c.l.b16 %v9227
        %v9699 = vunpack.c.h.b16 %v9227
        %v9700 = vunpack.c.l.b16 %v9228
        %v9701 = vunpack.c.l.b16 %v9229
        %v9702 = vunpack.c.h.b16 %v9229
        %v9703 = vunpack.c.l.b16 %v9230
        %v9704 = vunpack.c.h.b16 %v9230
        %v9705 = vunpack.c.l.b16 %v9231
        %v9706 = vunpack.c.h.b16 %v9231
        %v9707 = vunpack.c.l.b16 %v9232
        %v9708 = vunpack.c.h.b16 %v9232
        %v9709 = vunpack.c.l.b16 %v9233
        %v9710 = vunpack.c.l.b16 %v9234
        %v9711 = vunpack.c.h.b16 %v9234
        %v9712 = vunpack.c.l.b16 %v9235
        %v9713 = vunpack.c.h.b16 %v9235
        %v9714 = vunpack.c.l.b16 %v9236
        %v9715 = vunpack.c.h.b16 %v9236
        %v9716 = vunpack.c.l.b16 %v9237
        %v9717 = vunpack.c.h.b16 %v9237
        %v9718 = vunpack.c.l.b16 %v9238
        %v9719 = vunpack.c.l.b16 %v9239
        %v9720 = vunpack.c.h.b16 %v9239
        %v9721 = vunpack.c.l.b16 %v9240
        %v9722 = vunpack.c.h.b16 %v9240
        %v9723 = vunpack.c.l.b16 %v9241
        %v9724 = vunpack.c.h.b16 %v9241
        %v9725 = vunpack.c.l.b16 %v9242
        %v9726 = vunpack.c.h.b16 %v9242
        %v9727 = vunpack.c.l.b16 %v9243
        %v9728 = vunpack.c.l.b16 %v9244
        %v9729 = vunpack.c.h.b16 %v9244
        %v9730 = vunpack.c.l.b16 %v9245
        %v9731 = vunpack.c.h.b16 %v9245
        %v9732 = vunpack.c.l.b16 %v9246
        %v9733 = vunpack.c.h.b16 %v9246
        %v9734 = vunpack.c.l.b16 %v9247
        %v9735 = vunpack.c.h.b16 %v9247
        %v9736 = vunpack.c.l.b16 %v9248
        %v9737 = vunpack.c.l.b16 %v9249
        %v9738 = vunpack.c.h.b16 %v9249
        %v9739 = vunpack.c.l.b16 %v9250
        %v9740 = vunpack.c.h.b16 %v9250
        %v9741 = vunpack.c.l.b16 %v9251
        %v9742 = vunpack.c.h.b16 %v9251
        %v9743 = vunpack.c.l.b16 %v9252
        %v9744 = vunpack.c.h.b16 %v9252
        %v9745 = vunpack.c.l.b16 %v9253
        %v9746 = vunpack.c.l.b16 %v9254
        %v9747 = vunpack.c.h.b16 %v9254
        %v9748 = vunpack.c.l.b16 %v9255
        %v9749 = vunpack.c.h.b16 %v9255
        %v9750 = vunpack.c.l.b16 %v9256
        %v9751 = vunpack.c.h.b16 %v9256
        %v9752 = vunpack.c.l.b16 %v9257
        %v9753 = vunpack.c.h.b16 %v9257
        %v9754 = vunpack.c.l.b16 %v9258
        %v9755 = vunpack.c.l.b16 %v9259
        %v9756 = vunpack.c.h.b16 %v9259
        %v9757 = vunpack.c.l.b16 %v9260
        %v9758 = vunpack.c.h.b16 %v9260
        %v9759 = vunpack.c.l.b16 %v9261
        %v9760 = vunpack.c.h.b16 %v9261
        %v9761 = vunpack.c.l.b16 %v9262
        %v9762 = vunpack.c.h.b16 %v9262
        %v9763 = vunpack.c.l.b16 %v9263
        %v9764 = vunpack.c.l.b16 %v9264
        %v9765 = vunpack.c.h.b16 %v9264
        %v9766 = vunpack.c.l.b16 %v9265
        %v9767 = vunpack.c.h.b16 %v9265
        %v9768 = vunpack.c.l.b16 %v9266
        %v9769 = vunpack.c.h.b16 %v9266
        %v9770 = vunpack.c.l.b16 %v9267
        %v9771 = vunpack.c.h.b16 %v9267
        %v9772 = vunpack.c.l.b16 %v9268
        %v9773 = vunpack.c.l.b16 %v9269
        %v9774 = vunpack.c.h.b16 %v9269
        %v9775 = vunpack.c.l.b16 %v9270
        %v9776 = vunpack.c.h.b16 %v9270
        %v9777 = vunpack.c.l.b16 %v9271
        %v9778 = vunpack.c.h.b16 %v9271
        %v9779 = vunpack.c.l.b16 %v9272
        %v9780 = vunpack.c.h.b16 %v9272
        %v9781 = vunpack.c.l.b16 %v9273
        %v9782 = vunpack.c.l.b16 %v9274
        %v9783 = vunpack.c.h.b16 %v9274
        %v9784 = vunpack.c.l.b16 %v9275
        %v9785 = vunpack.c.h.b16 %v9275
        %v9786 = vunpack.c.l.b16 %v9276
        %v9787 = vunpack.c.h.b16 %v9276
        %v9788 = vunpack.c.l.b16 %v9277
        %v9789 = vunpack.c.h.b16 %v9277
        %v9790 = vunpack.c.l.b16 %v9278
        %v9791 = vunpack.c.l.b16 %v9279
        %v9792 = vunpack.c.h.b16 %v9279
        %v9793 = vunpack.c.l.b16 %v9280
        %v9794 = vunpack.c.h.b16 %v9280
        %v9795 = vunpack.c.l.b16 %v9281
        %v9796 = vunpack.c.h.b16 %v9281
        %v9797 = vunpack.c.l.b16 %v9282
        %v9798 = vunpack.c.h.b16 %v9282
        %v9799 = vunpack.c.l.b16 %v9283
        %v9800 = vunpack.c.l.b16 %v9284
        %v9801 = vunpack.c.h.b16 %v9284
        %v9802 = vunpack.c.l.b16 %v9285
        %v9803 = vunpack.c.h.b16 %v9285
        %v9804 = vunpack.c.l.b16 %v9286
        %v9805 = vunpack.c.h.b16 %v9286
        %v9806 = vunpack.c.l.b16 %v9287
        %v9807 = vunpack.c.h.b16 %v9287
        %v9808 = vunpack.c.l.b16 %v9288
        %v9809 = vunpack.c.l.b16 %v9289
        %v9810 = vunpack.c.h.b16 %v9289
        %v9811 = vunpack.c.l.b16 %v9290
        %v9812 = vunpack.c.h.b16 %v9290
        %v9813 = vunpack.c.l.b16 %v9291
        %v9814 = vunpack.c.h.b16 %v9291
        %v9815 = vunpack.c.l.b16 %v9292
        %v9816 = vunpack.c.h.b16 %v9292
        %v9817 = vunpack.c.l.b16 %v9293
        %v9818 = vunpack.c.l.b16 %v9294
        %v9819 = vunpack.c.h.b16 %v9294
        %v9820 = vunpack.c.l.b16 %v9295
        %v9821 = vunpack.c.h.b16 %v9295
        %v9822 = vunpack.c.l.b16 %v9296
        %v9823 = vunpack.c.h.b16 %v9296
        %v9824 = vunpack.c.l.b16 %v9297
        %v9825 = vunpack.c.h.b16 %v9297
        %v9826 = vunpack.c.l.b16 %v9298
        %v9827 = vunpack.c.l.b16 %v9299
        %v9828 = vunpack.c.h.b16 %v9299
        %v9829 = vunpack.c.l.b16 %v9300
        %v9830 = vunpack.c.h.b16 %v9300
        %v9831 = vunpack.c.l.b16 %v9301
        %v9832 = vunpack.c.h.b16 %v9301
        %v9833 = vunpack.c.l.b16 %v9302
        %v9834 = vunpack.c.h.b16 %v9302
        %v9835 = vunpack.c.l.b16 %v9303
        %v9836 = vunpack.c.l.b16 %v9304
        %v9837 = vunpack.c.h.b16 %v9304
        %v9838 = vunpack.c.l.b16 %v9305
        %v9839 = vunpack.c.h.b16 %v9305
        %v9840 = vunpack.c.l.b16 %v9306
        %v9841 = vunpack.c.h.b16 %v9306
        %v9842 = vunpack.c.l.b16 %v9307
        %v9843 = vunpack.c.h.b16 %v9307
        %v9844 = vunpack.c.l.b16 %v9308
        %v9845 = vunpack.c.l.b16 %v9309
        %v9846 = vunpack.c.h.b16 %v9309
        %v9847 = vunpack.c.l.b16 %v9310
        %v9848 = vunpack.c.h.b16 %v9310
        %v9849 = vunpack.c.l.b16 %v9311
        %v9850 = vunpack.c.h.b16 %v9311
        %v9851 = vunpack.c.l.b16 %v9312
        %v9852 = vunpack.c.h.b16 %v9312
        %v9853 = vunpack.c.l.b16 %v9313
        %v9854 = vunpack.c.l.b16 %v9314
        %v9855 = vunpack.c.h.b16 %v9314
        %v9856 = vunpack.c.l.b16 %v9315
        %v9857 = vunpack.c.h.b16 %v9315
        %v9858 = vunpack.c.l.b16 %v9316
        %v9859 = vunpack.c.h.b16 %v9316
        %v9860 = vunpack.c.l.b16 %v9317
        %v9861 = vunpack.c.h.b16 %v9317
        %v9862 = vunpack.c.l.b16 %v9318
        %v9863 = vunpack.c.l.b16 %v9319
        %v9864 = vunpack.c.h.b16 %v9319
        %v9865 = vunpack.c.l.b16 %v9320
        %v9866 = vunpack.c.h.b16 %v9320
        %v9867 = vunpack.c.l.b16 %v9321
        %v9868 = vunpack.c.h.b16 %v9321
        %v9869 = vunpack.c.l.b16 %v9322
        %v9870 = vunpack.c.h.b16 %v9322
        %v9871 = vunpack.c.l.b16 %v9323
        %v9872 = vunpack.c.l.b16 %v9324
        %v9873 = vunpack.c.h.b16 %v9324
        %v9874 = vunpack.c.l.b16 %v9325
        %v9875 = vunpack.c.h.b16 %v9325
        %v9876 = vunpack.c.l.b16 %v9326
        %v9877 = vunpack.c.h.b16 %v9326
        %v9878 = vunpack.c.l.b16 %v9327
        %v9879 = vunpack.c.h.b16 %v9327
        %v9880 = vunpack.c.l.b16 %v9328
        %v9881 = vunpack.c.l.b16 %v9329
        %v9882 = vunpack.c.h.b16 %v9329
        %v9883 = vunpack.c.l.b16 %v9330
        %v9884 = vunpack.c.h.b16 %v9330
        %v9885 = vunpack.c.l.b16 %v9331
        %v9886 = vunpack.c.h.b16 %v9331
        %v9887 = vunpack.c.l.b16 %v9332
        %v9888 = vunpack.c.h.b16 %v9332
        %v9889 = vunpack.c.l.b16 %v9333
        %v9890 = vunpack.c.l.b16 %v9334
        %v9891 = vunpack.c.h.b16 %v9334
        %v9892 = vunpack.c.l.b16 %v9335
        %v9893 = vunpack.c.h.b16 %v9335
        %v9894 = vunpack.c.l.b16 %v9336
        %v9895 = vunpack.c.h.b16 %v9336
        %v9896 = vunpack.c.l.b16 %v9337
        %v9897 = vunpack.c.h.b16 %v9337
        %v9898 = vunpack.c.l.b16 %v9338
        %v9899 = vunpack.c.l.b16 %v9339
        %v9900 = vunpack.c.h.b16 %v9339
        %v9901 = vunpack.c.l.b16 %v9340
        %v9902 = vunpack.c.h.b16 %v9340
        %v9903 = vunpack.c.l.b16 %v9341
        %v9904 = vunpack.c.h.b16 %v9341
        %v9905 = vunpack.c.l.b16 %v9342
        %v9906 = vunpack.c.h.b16 %v9342
        %v9907 = vunpack.c.l.b16 %v9343
        %v9908 = vunpack.c.l.b16 %v9344
        %v9909 = vunpack.c.h.b16 %v9344
        %v9910 = vunpack.c.l.b16 %v9345
        %v9911 = vunpack.c.h.b16 %v9345
        %v9912 = vunpack.c.l.b16 %v9346
        %v9913 = vunpack.c.h.b16 %v9346
        %v9914 = vunpack.c.l.b16 %v9347
        %v9915 = vunpack.c.h.b16 %v9347
        %v9916 = vunpack.c.l.b16 %v9348
        %v9917 = vunpack.c.l.b16 %v9349
        %v9918 = vunpack.c.h.b16 %v9349
        %v9919 = vunpack.c.l.b16 %v9350
        %v9920 = vunpack.c.h.b16 %v9350
        %v9921 = vunpack.c.l.b16 %v9351
        %v9922 = vunpack.c.h.b16 %v9351
        %v9923 = vunpack.c.l.b16 %v9352
        %v9924 = vunpack.c.h.b16 %v9352
        %v9925 = vunpack.c.l.b16 %v9353
        %v9926 = vunpack.c.l.b16 %v9354
        %v9927 = vunpack.c.h.b16 %v9354
        %v9928 = vunpack.c.l.b16 %v9355
        %v9929 = vunpack.c.h.b16 %v9355
        %v9930 = vunpack.c.l.b16 %v9356
        %v9931 = vunpack.c.h.b16 %v9356
        %v9932 = vunpack.c.l.b16 %v9357
        %v9933 = vunpack.c.h.b16 %v9357
        %v9934 = vunpack.c.l.b16 %v9358
        %v9935 = vunpack.c.l.b16 %v9359
        %v9936 = vunpack.c.h.b16 %v9359
        %v9937 = vunpack.c.l.b16 %v9360
        %v9938 = vunpack.c.h.b16 %v9360
        %v9939 = vunpack.c.l.b16 %v9361
        %v9940 = vunpack.c.h.b16 %v9361
        %v9941 = vunpack.c.l.b16 %v9362
        %v9942 = vunpack.c.h.b16 %v9362
        %v9943 = vunpack.c.l.b16 %v9363
        %v9944 = vunpack.c.l.b16 %v9364
        %v9945 = vunpack.c.h.b16 %v9364
        %v9946 = vunpack.c.l.b16 %v9365
        %v9947 = vunpack.c.h.b16 %v9365
        %v9948 = vunpack.c.l.b16 %v9366
        %v9949 = vunpack.c.h.b16 %v9366
        %v9950 = vunpack.c.l.b16 %v9367
        %v9951 = vunpack.c.h.b16 %v9367
        %v9952 = vunpack.c.l.b16 %v9368
        %v9953 = vunpack.c.l.b16 %v9369
        %v9954 = vunpack.c.h.b16 %v9369
        %v9955 = vunpack.c.l.b16 %v9370
        %v9956 = vunpack.c.h.b16 %v9370
        %v9957 = vunpack.c.l.b16 %v9371
        %v9958 = vunpack.c.h.b16 %v9371
        %v9959 = vunpack.c.l.b16 %v9372
        %v9960 = vunpack.c.h.b16 %v9372
        %v9961 = vunpack.c.l.b16 %v9373
        %v9962 = vunpack.c.l.b16 %v9374
        %v9963 = vunpack.c.h.b16 %v9374
        %v9964 = vunpack.c.l.b16 %v9375
        %v9965 = vunpack.c.h.b16 %v9375
        %v9966 = vunpack.c.l.b16 %v9376
        %v9967 = vunpack.c.h.b16 %v9376
        %v9968 = vunpack.c.l.b16 %v9377
        %v9969 = vunpack.c.h.b16 %v9377
        %v9970 = vunpack.c.l.b16 %v9378
        %v9971 = vunpack.c.l.b16 %v9379
        %v9972 = vunpack.c.h.b16 %v9379
        %v9973 = vunpack.c.l.b16 %v9380
        %v9974 = vunpack.c.h.b16 %v9380
        %v9975 = vunpack.c.l.b16 %v9381
        %v9976 = vunpack.c.h.b16 %v9381
        %v9977 = vunpack.c.l.b16 %v9382
        %v9978 = vunpack.c.h.b16 %v9382
        %v9979 = vunpack.c.l.b16 %v9383
        %v9980 = vpack.c.b16 %v9701, %v9692
        %v9981 = vpack.c.b16 %v9702, %v9693
        %v9982 = vpack.c.b16 %v9703, %v9694
        %v9983 = vpack.c.b16 %v9704, %v9695
        %v9984 = vpack.c.b16 %v9705, %v9696
        %v9985 = vpack.c.b16 %v9706, %v9697
        %v9986 = vpack.c.b16 %v9707, %v9698
        %v9987 = vpack.c.b16 %v9708, %v9699
        %v9988 = vpack.c.b16 %v9709, %v9700
        %v9989 = vpack.c.b16 %v9719, %v9710
        %v9990 = vpack.c.b16 %v9720, %v9711
        %v9991 = vpack.c.b16 %v9721, %v9712
        %v9992 = vpack.c.b16 %v9722, %v9713
        %v9993 = vpack.c.b16 %v9723, %v9714
        %v9994 = vpack.c.b16 %v9724, %v9715
        %v9995 = vpack.c.b16 %v9725, %v9716
        %v9996 = vpack.c.b16 %v9726, %v9717
        %v9997 = vpack.c.b16 %v9727, %v9718
        %v9998 = vpack.c.b16 %v9737, %v9728
        %v9999 = vpack.c.b16 %v9738, %v9729
        %v10000 = vpack.c.b16 %v9739, %v9730
        %v10001 = vpack.c.b16 %v9740, %v9731
        %v10002 = vpack.c.b16 %v9741, %v9732
        %v10003 = vpack.c.b16 %v9742, %v9733
        %v10004 = vpack.c.b16 %v9743, %v9734
        %v10005 = vpack.c.b16 %v9744, %v9735
        %v10006 = vpack.c.b16 %v9745, %v9736
        %v10007 = vpack.c.b16 %v9755, %v9746
        %v10008 = vpack.c.b16 %v9756, %v9747
        %v10009 = vpack.c.b16 %v9757, %v9748
        %v10010 = vpack.c.b16 %v9758, %v9749
        %v10011 = vpack.c.b16 %v9759, %v9750
        %v10012 = vpack.c.b16 %v9760, %v9751
        %v10013 = vpack.c.b16 %v9761, %v9752
        %v10014 = vpack.c.b16 %v9762, %v9753
        %v10015 = vpack.c.b16 %v9763, %v9754
        %v10016 = vpack.c.b16 %v9773, %v9764
        %v10017 = vpack.c.b16 %v9774, %v9765
        %v10018 = vpack.c.b16 %v9775, %v9766
        %v10019 = vpack.c.b16 %v9776, %v9767
        %v10020 = vpack.c.b16 %v9777, %v9768
        %v10021 = vpack.c.b16 %v9778, %v9769
        %v10022 = vpack.c.b16 %v9779, %v9770
        %v10023 = vpack.c.b16 %v9780, %v9771
        %v10024 = vpack.c.b16 %v9781, %v9772
        %v10025 = vpack.c.b16 %v9791, %v9782
        %v10026 = vpack.c.b16 %v9792, %v9783
        %v10027 = vpack.c.b16 %v9793, %v9784
        %v10028 = vpack.c.b16 %v9794, %v9785
        %v10029 = vpack.c.b16 %v9795, %v9786
        %v10030 = vpack.c.b16 %v9796, %v9787
        %v10031 = vpack.c.b16 %v9797, %v9788
        %v10032 = vpack.c.b16 %v9798, %v9789
        %v10033 = vpack.c.b16 %v9799, %v9790
        %v10034 = vpack.c.b16 %v9809, %v9800
        %v10035 = vpack.c.b16 %v9810, %v9801
        %v10036 = vpack.c.b16 %v9811, %v9802
        %v10037 = vpack.c.b16 %v9812, %v9803
        %v10038 = vpack.c.b16 %v9813, %v9804
        %v10039 = vpack.c.b16 %v9814, %v9805
        %v10040 = vpack.c.b16 %v9815, %v9806
        %v10041 = vpack.c.b16 %v9816, %v9807
        %v10042 = vpack.c.b16 %v9817, %v9808
        %v10043 = vpack.c.b16 %v9827, %v9818
        %v10044 = vpack.c.b16 %v9828, %v9819
        %v10045 = vpack.c.b16 %v9829, %v9820
        %v10046 = vpack.c.b16 %v9830, %v9821
        %v10047 = vpack.c.b16 %v9831, %v9822
        %v10048 = vpack.c.b16 %v9832, %v9823
        %v10049 = vpack.c.b16 %v9833, %v9824
        %v10050 = vpack.c.b16 %v9834, %v9825
        %v10051 = vpack.c.b16 %v9835, %v9826
        %v10052 = vpack.c.b16 %v9845, %v9836
        %v10053 = vpack.c.b16 %v9846, %v9837
        %v10054 = vpack.c.b16 %v9847, %v9838
        %v10055 = vpack.c.b16 %v9848, %v9839
        %v10056 = vpack.c.b16 %v9849, %v9840
        %v10057 = vpack.c.b16 %v9850, %v9841
        %v10058 = vpack.c.b16 %v9851, %v9842
        %v10059 = vpack.c.b16 %v9852, %v9843
        %v10060 = vpack.c.b16 %v9853, %v9844
        %v10061 = vpack.c.b16 %v9863, %v9854
        %v10062 = vpack.c.b16 %v9864, %v9855
        %v10063 = vpack.c.b16 %v9865, %v9856
        %v10064 = vpack.c.b16 %v9866, %v9857
        %v10065 = vpack.c.b16 %v9867, %v9858
        %v10066 = vpack.c.b16 %v9868, %v9859
        %v10067 = vpack.c.b16 %v9869, %v9860
        %v10068 = vpack.c.b16 %v9870, %v9861
        %v10069 = vpack.c.b16 %v9871, %v9862
        %v10070 = vpack.c.b16 %v9881, %v9872
        %v10071 = vpack.c.b16 %v9882, %v9873
        %v10072 = vpack.c.b16 %v9883, %v9874
        %v10073 = vpack.c.b16 %v9884, %v9875
        %v10074 = vpack.c.b16 %v9885, %v9876
        %v10075 = vpack.c.b16 %v9886, %v9877
        %v10076 = vpack.c.b16 %v9887, %v9878
        %v10077 = vpack.c.b16 %v9888, %v9879
        %v10078 = vpack.c.b16 %v9889, %v9880
        %v10079 = vpack.c.b16 %v9899, %v9890
        %v10080 = vpack.c.b16 %v9900, %v9891
        %v10081 = vpack.c.b16 %v9901, %v9892
        %v10082 = vpack.c.b16 %v9902, %v9893
        %v10083 = vpack.c.b16 %v9903, %v9894
        %v10084 = vpack.c.b16 %v9904, %v9895
        %v10085 = vpack.c.b16 %v9905, %v9896
        %v10086 = vpack.c.b16 %v9906, %v9897
        %v10087 = vpack.c.b16 %v9907, %v9898
        %v10088 = vpack.c.b16 %v9917, %v9908
        %v10089 = vpack.c.b16 %v9918, %v9909
        %v10090 = vpack.c.b16 %v9919, %v9910
        %v10091 = vpack.c.b16 %v9920, %v9911
        %v10092 = vpack.c.b16 %v9921, %v9912
        %v10093 = vpack.c.b16 %v9922, %v9913
        %v10094 = vpack.c.b16 %v9923, %v9914
        %v10095 = vpack.c.b16 %v9924, %v9915
        %v10096 = vpack.c.b16 %v9925, %v9916
        %v10097 = vpack.c.b16 %v9935, %v9926
        %v10098 = vpack.c.b16 %v9936, %v9927
        %v10099 = vpack.c.b16 %v9937, %v9928
        %v10100 = vpack.c.b16 %v9938, %v9929
        %v10101 = vpack.c.b16 %v9939, %v9930
        %v10102 = vpack.c.b16 %v9940, %v9931
        %v10103 = vpack.c.b16 %v9941, %v9932
        %v10104 = vpack.c.b16 %v9942, %v9933
        %v10105 = vpack.c.b16 %v9943, %v9934
        %v10106 = vpack.c.b16 %v9953, %v9944
        %v10107 = vpack.c.b16 %v9954, %v9945
        %v10108 = vpack.c.b16 %v9955, %v9946
        %v10109 = vpack.c.b16 %v9956, %v9947
        %v10110 = vpack.c.b16 %v9957, %v9948
        %v10111 = vpack.c.b16 %v9958, %v9949
        %v10112 = vpack.c.b16 %v9959, %v9950
        %v10113 = vpack.c.b16 %v9960, %v9951
        %v10114 = vpack.c.b16 %v9961, %v9952
        %v10115 = vpack.c.b16 %v9971, %v9962
        %v10116 = vpack.c.b16 %v9972, %v9963
        %v10117 = vpack.c.b16 %v9973, %v9964
        %v10118 = vpack.c.b16 %v9974, %v9965
        %v10119 = vpack.c.b16 %v9975, %v9966
        %v10120 = vpack.c.b16 %v9976, %v9967
        %v10121 = vpack.c.b16 %v9977, %v9968
        %v10122 = vpack.c.b16 %v9978, %v9969
        %v10123 = vpack.c.b16 %v9979, %v9970
        %v10412 = vunpack.c.l.b16 %v9384
        %v10413 = vunpack.c.l.b16 %v9385
        %v10414 = vunpack.c.l.b16 %v9386
        %v10415 = vunpack.c.l.b16 %v9387
        %v10416 = vunpack.c.l.b16 %v9388
        %v10417 = vunpack.c.l.b16 %v9389
        %v10418 = vunpack.c.l.b16 %v9390
        %v10419 = vunpack.c.l.b16 %v9391
        %v10420 = vunpack.c.l.b16 %v9392
        %v10421 = vunpack.c.l.b16 %v9393
        %v10422 = vunpack.c.l.b16 %v9394
        %v10423 = vunpack.c.l.b16 %v9395
        %v10424 = vunpack.c.l.b16 %v9396
        %v10425 = vunpack.c.l.b16 %v9397
        %v10426 = vunpack.c.l.b16 %v9398
        %v10427 = vunpack.c.l.b16 %v9399
        %v10428 = vunpack.c.l.b16 %v9400
        %v10429 = vunpack.c.l.b16 %v9401
        %v10430 = vunpack.c.l.b16 %v9402
        %v10431 = vunpack.c.l.b16 %v9403
        %v10432 = vunpack.c.l.b16 %v9404
        %v10433 = vunpack.c.l.b16 %v9405
        %v10434 = vunpack.c.l.b16 %v9406
        %v10435 = vunpack.c.l.b16 %v9407
        %v10436 = vunpack.c.l.b16 %v9408
        %v10437 = vunpack.c.l.b16 %v9409
        %v10438 = vunpack.c.l.b16 %v9410
        %v10439 = vunpack.c.l.b16 %v9411
        %v10440 = vunpack.c.l.b16 %v9412
        %v10441 = vunpack.c.l.b16 %v9413
        %v10442 = vunpack.c.l.b16 %v9414
        %v10443 = vunpack.c.l.b16 %v9415
        %v10444 = vunpack.c.l.b16 %v9416
        %v10445 = vunpack.c.l.b16 %v9417
        %v10446 = vunpack.c.l.b16 %v9418
        %v10447 = vunpack.c.l.b16 %v9419
        %v10448 = vunpack.c.l.b16 %v9420
        %v10449 = vunpack.c.l.b16 %v9421
        %v10450 = vunpack.c.l.b16 %v9422
        %v10451 = vunpack.c.l.b16 %v9423
        %v10452 = vunpack.c.l.b16 %v9424
        %v10453 = vunpack.c.l.b16 %v9425
        %v10454 = vunpack.c.l.b16 %v9426
        %v10455 = vunpack.c.l.b16 %v9427
        %v10456 = vunpack.c.l.b16 %v9428
        %v10457 = vunpack.c.l.b16 %v9429
        %v10458 = vunpack.c.l.b16 %v9430
        %v10459 = vunpack.c.l.b16 %v9431
        %v10460 = vunpack.c.l.b16 %v9432
        %v10461 = vunpack.c.l.b16 %v9433
        %v10462 = vunpack.c.l.b16 %v9434
        %v10463 = vunpack.c.l.b16 %v9435
        %v10464 = vunpack.c.l.b16 %v9436
        %v10465 = vunpack.c.l.b16 %v9437
        %v10466 = vunpack.c.l.b16 %v9438
        %v10467 = vunpack.c.l.b16 %v9439
        %v10468 = vunpack.c.l.b16 %v9440
        %v10469 = vunpack.c.l.b16 %v9441
        %v10470 = vunpack.c.l.b16 %v9442
        %v10471 = vunpack.c.l.b16 %v9443
        %v10472 = vunpack.c.l.b16 %v9444
        %v10473 = vunpack.c.l.b16 %v9445
        %v10474 = vunpack.c.l.b16 %v9446
        %v10475 = vunpack.c.l.b16 %v9447
        %v10476 = vunpack.c.l.b16 %v9448
        %v10477 = vunpack.c.l.b16 %v9449
        %v10478 = vunpack.c.l.b16 %v9450
        %v10479 = vunpack.c.l.b16 %v9451
        %v10480 = vunpack.c.l.b16 %v9452
        %v10481 = vunpack.c.l.b16 %v9453
        %v10482 = vunpack.c.l.b16 %v9454
        %v10483 = vunpack.c.l.b16 %v9455
        %v10484 = vunpack.c.l.b16 %v9456
        %v10485 = vunpack.c.l.b16 %v9457
        %v10486 = vunpack.c.l.b16 %v9458
        %v10487 = vunpack.c.l.b16 %v9459
        %v10488 = vunpack.c.l.b16 %v9460
        %v10489 = vunpack.c.l.b16 %v9461
        %v10490 = vunpack.c.l.b16 %v9462
        %v10491 = vunpack.c.l.b16 %v9463
        %v10492 = vunpack.c.l.b16 %v9464
        %v10493 = vunpack.c.l.b16 %v9465
        %v10494 = vunpack.c.l.b16 %v9466
        %v10495 = vunpack.c.l.b16 %v9467
        %v10496 = vunpack.c.l.b16 %v9468
        %v10497 = vunpack.c.l.b16 %v9469
        %v10498 = vunpack.c.l.b16 %v9470
        %v10499 = vunpack.c.l.b16 %v9471
        %v10500 = vunpack.c.l.b16 %v9472
        %v10501 = vunpack.c.l.b16 %v9473
        %v10502 = vunpack.c.l.b16 %v9474
        %v10503 = vunpack.c.l.b16 %v9475
        %v10504 = vunpack.c.l.b16 %v9476
        %v10505 = vunpack.c.l.b16 %v9477
        %v10506 = vunpack.c.l.b16 %v9478
        %v10507 = vunpack.c.l.b16 %v9479
        %v10508 = vunpack.c.l.b16 %v9480
        %v10509 = vunpack.c.l.b16 %v9481
        %v10510 = vunpack.c.l.b16 %v9482
        %v10511 = vunpack.c.l.b16 %v9483
        %v10512 = vunpack.c.l.b16 %v9484
        %v10513 = vunpack.c.l.b16 %v9485
        %v10514 = vunpack.c.l.b16 %v9486
        %v10515 = vunpack.c.l.b16 %v9487
        %v10516 = vunpack.c.l.b16 %v9488
        %v10517 = vunpack.c.l.b16 %v9489
        %v10518 = vunpack.c.l.b16 %v9490
        %v10519 = vunpack.c.l.b16 %v9491
        %v10520 = vunpack.c.l.b16 %v9492
        %v10521 = vunpack.c.l.b16 %v9493
        %v10522 = vunpack.c.l.b16 %v9494
        %v10523 = vunpack.c.l.b16 %v9495
        %v10524 = vunpack.c.l.b16 %v9496
        %v10525 = vunpack.c.l.b16 %v9497
        %v10526 = vunpack.c.l.b16 %v9498
        %v10527 = vunpack.c.l.b16 %v9499
        %v10528 = vunpack.c.l.b16 %v9500
        %v10529 = vunpack.c.l.b16 %v9501
        %v10530 = vunpack.c.l.b16 %v9502
        %v10531 = vunpack.c.l.b16 %v9503
        %v10532 = vunpack.c.l.b16 %v9504
        %v10533 = vunpack.c.l.b16 %v9505
        %v10534 = vunpack.c.l.b16 %v9506
        %v10535 = vunpack.c.l.b16 %v9507
        %v10536 = vunpack.c.l.b16 %v9508
        %v10537 = vunpack.c.l.b16 %v9509
        %v10538 = vunpack.c.l.b16 %v9510
        %v10539 = vunpack.c.l.b16 %v9511
        %v10540 = vunpack.c.l.b16 %v9512
        %v10541 = vunpack.c.l.b16 %v9513
        %v10542 = vunpack.c.l.b16 %v9514
        %v10543 = vunpack.c.l.b16 %v9515
        %v10544 = vunpack.c.l.b16 %v9516
        %v10545 = vunpack.c.l.b16 %v9517
        %v10546 = vunpack.c.l.b16 %v9518
        %v10547 = vunpack.c.l.b16 %v9519
        %v10548 = vunpack.c.l.b16 %v9520
        %v10549 = vunpack.c.l.b16 %v9521
        %v10550 = vunpack.c.l.b16 %v9522
        %v10551 = vunpack.c.l.b16 %v9523
        %v10552 = vunpack.c.l.b16 %v9524
        %v10553 = vunpack.c.l.b16 %v9525
        %v10554 = vunpack.c.l.b16 %v9526
        %v10555 = vunpack.c.l.b16 %v9527
        %v10556 = vpack.c.b16 %v10413, %v10412
        %v10557 = vpack.c.b16 %v10415, %v10414
        %v10558 = vpack.c.b16 %v10417, %v10416
        %v10559 = vpack.c.b16 %v10419, %v10418
        %v10560 = vpack.c.b16 %v10421, %v10420
        %v10561 = vpack.c.b16 %v10423, %v10422
        %v10562 = vpack.c.b16 %v10425, %v10424
        %v10563 = vpack.c.b16 %v10427, %v10426
        %v10564 = vpack.c.b16 %v10429, %v10428
        %v10565 = vpack.c.b16 %v10431, %v10430
        %v10566 = vpack.c.b16 %v10433, %v10432
        %v10567 = vpack.c.b16 %v10435, %v10434
        %v10568 = vpack.c.b16 %v10437, %v10436
        %v10569 = vpack.c.b16 %v10439, %v10438
        %v10570 = vpack.c.b16 %v10441, %v10440
        %v10571 = vpack.c.b16 %v10443, %v10442
        %v10572 = vpack.c.b16 %v10445, %v10444
        %v10573 = vpack.c.b16 %v10447, %v10446
        %v10574 = vpack.c.b16 %v10449, %v10448
        %v10575 = vpack.c.b16 %v10451, %v10450
        %v10576 = vpack.c.b16 %v10453, %v10452
        %v10577 = vpack.c.b16 %v10455, %v10454
        %v10578 = vpack.c.b16 %v10457, %v10456
        %v10579 = vpack.c.b16 %v10459, %v10458
        %v10580 = vpack.c.b16 %v10461, %v10460
        %v10581 = vpack.c.b16 %v10463, %v10462
        %v10582 = vpack.c.b16 %v10465, %v10464
        %v10583 = vpack.c.b16 %v10467, %v10466
        %v10584 = vpack.c.b16 %v10469, %v10468
        %v10585 = vpack.c.b16 %v10471, %v10470
        %v10586 = vpack.c.b16 %v10473, %v10472
        %v10587 = vpack.c.b16 %v10475, %v10474
        %v10588 = vpack.c.b16 %v10477, %v10476
        %v10589 = vpack.c.b16 %v10479, %v10478
        %v10590 = vpack.c.b16 %v10481, %v10480
        %v10591 = vpack.c.b16 %v10483, %v10482
        %v10592 = vpack.c.b16 %v10485, %v10484
        %v10593 = vpack.c.b16 %v10487, %v10486
        %v10594 = vpack.c.b16 %v10489, %v10488
        %v10595 = vpack.c.b16 %v10491, %v10490
        %v10596 = vpack.c.b16 %v10493, %v10492
        %v10597 = vpack.c.b16 %v10495, %v10494
        %v10598 = vpack.c.b16 %v10497, %v10496
        %v10599 = vpack.c.b16 %v10499, %v10498
        %v10600 = vpack.c.b16 %v10501, %v10500
        %v10601 = vpack.c.b16 %v10503, %v10502
        %v10602 = vpack.c.b16 %v10505, %v10504
        %v10603 = vpack.c.b16 %v10507, %v10506
        %v10604 = vpack.c.b16 %v10509, %v10508
        %v10605 = vpack.c.b16 %v10511, %v10510
        %v10606 = vpack.c.b16 %v10513, %v10512
        %v10607 = vpack.c.b16 %v10515, %v10514
        %v10608 = vpack.c.b16 %v10517, %v10516
        %v10609 = vpack.c.b16 %v10519, %v10518
        %v10610 = vpack.c.b16 %v10521, %v10520
        %v10611 = vpack.c.b16 %v10523, %v10522
        %v10612 = vpack.c.b16 %v10525, %v10524
        %v10613 = vpack.c.b16 %v10527, %v10526
        %v10614 = vpack.c.b16 %v10529, %v10528
        %v10615 = vpack.c.b16 %v10531, %v10530
        %v10616 = vpack.c.b16 %v10533, %v10532
        %v10617 = vpack.c.b16 %v10535, %v10534
        %v10618 = vpack.c.b16 %v10537, %v10536
        %v10619 = vpack.c.b16 %v10539, %v10538
        %v10620 = vpack.c.b16 %v10541, %v10540
        %v10621 = vpack.c.b16 %v10543, %v10542
        %v10622 = vpack.c.b16 %v10545, %v10544
        %v10623 = vpack.c.b16 %v10547, %v10546
        %v10624 = vpack.c.b16 %v10549, %v10548
        %v10625 = vpack.c.b16 %v10551, %v10550
        %v10626 = vpack.c.b16 %v10553, %v10552
        %v10627 = vpack.c.b16 %v10555, %v10554
        %10700 = vmatpush.bf16.msra.mxu0 %v10563
        %10701 = vmatpush.bf16.msra.mxu0 %v10562
        %10702 = vmatpush.bf16.msra.mxu0 %v10561
        %10703 = vmatpush.bf16.msra.mxu0 %v10560
        %10704 = vmatpush.bf16.msra.mxu0 %v10559
        %10705 = vmatpush.bf16.msra.mxu0 %v10558
        %10706 = vmatpush.bf16.msra.mxu0 %v10557
        %10707 = vmatpush.bf16.msra.mxu0 %v10556
        %10708 = vmatmul.bf16.gmra.mxu0 %v9980
        %v10709 = vpop.f32.mrf.mxu0
        %v10710 = vadd.f32 %v9530, %v10709
        %v10711 = vpop.f32.mrf.mxu0
        %v10712 = vadd.f32 %v9530, %v10711
        %10713 = vmatmul.bf16.gmra.mxu0 %v9989
        %v10714 = vpop.f32.mrf.mxu0
        %v10715 = vadd.f32 %v9530, %v10714
        %v10716 = vpop.f32.mrf.mxu0
        %v10717 = vadd.f32 %v9530, %v10716
        %10718 = vmatmul.bf16.gmra.mxu0 %v9998
        %v10719 = vpop.f32.mrf.mxu0
        %v10720 = vadd.f32 %v9530, %v10719
        %v10721 = vpop.f32.mrf.mxu0
        %v10722 = vadd.f32 %v9530, %v10721
        %10723 = vmatmul.bf16.gmra.mxu0 %v10007
        %v10724 = vpop.f32.mrf.mxu0
        %v10725 = vadd.f32 %v9530, %v10724
        %v10726 = vpop.f32.mrf.mxu0
        %v10727 = vadd.f32 %v9530, %v10726
        %10728 = vmatmul.bf16.gmra.mxu0 %v10016
        %v10729 = vpop.f32.mrf.mxu0
        %v10730 = vadd.f32 %v9530, %v10729
        %v10731 = vpop.f32.mrf.mxu0
        %v10732 = vadd.f32 %v9530, %v10731
        %10733 = vmatmul.bf16.gmra.mxu0 %v10025
        %v10734 = vpop.f32.mrf.mxu0
        %v10735 = vadd.f32 %v9530, %v10734
        %v10736 = vpop.f32.mrf.mxu0
        %v10737 = vadd.f32 %v9530, %v10736
        %10738 = vmatmul.bf16.gmra.mxu0 %v10034
        %v10739 = vpop.f32.mrf.mxu0
        %v10740 = vadd.f32 %v9530, %v10739
        %v10741 = vpop.f32.mrf.mxu0
        %v10742 = vadd.f32 %v9530, %v10741
        %10743 = vmatmul.bf16.gmra.mxu0 %v10043
        %v10744 = vpop.f32.mrf.mxu0
        %v10745 = vadd.f32 %v9530, %v10744
        %v10746 = vpop.f32.mrf.mxu0
        %v10747 = vadd.f32 %v9530, %v10746
        %10748 = vmatmul.bf16.gmra.mxu0 %v10052
        %v10749 = vpop.f32.mrf.mxu0
        %v10750 = vadd.f32 %v9530, %v10749
        %v10751 = vpop.f32.mrf.mxu0
        %v10752 = vadd.f32 %v9530, %v10751
        %10753 = vmatmul.bf16.gmra.mxu0 %v10061
        %v10754 = vpop.f32.mrf.mxu0
        %v10755 = vadd.f32 %v9530, %v10754
        %v10756 = vpop.f32.mrf.mxu0
        %v10757 = vadd.f32 %v9530, %v10756
        %10758 = vmatmul.bf16.gmra.mxu0 %v10070
        %v10759 = vpop.f32.mrf.mxu0
        %v10760 = vadd.f32 %v9530, %v10759
        %v10761 = vpop.f32.mrf.mxu0
        %v10762 = vadd.f32 %v9530, %v10761
        %10763 = vmatmul.bf16.gmra.mxu0 %v10079
        %v10764 = vpop.f32.mrf.mxu0
        %v10765 = vadd.f32 %v9530, %v10764
        %v10766 = vpop.f32.mrf.mxu0
        %v10767 = vadd.f32 %v9530, %v10766
        %10768 = vmatmul.bf16.gmra.mxu0 %v10088
        %v10769 = vpop.f32.mrf.mxu0
        %v10770 = vadd.f32 %v9530, %v10769
        %v10771 = vpop.f32.mrf.mxu0
        %v10772 = vadd.f32 %v9530, %v10771
        %10773 = vmatmul.bf16.gmra.mxu0 %v10097
        %v10774 = vpop.f32.mrf.mxu0
        %v10775 = vadd.f32 %v9530, %v10774
        %v10776 = vpop.f32.mrf.mxu0
        %v10777 = vadd.f32 %v9530, %v10776
        %10778 = vmatmul.bf16.gmra.mxu0 %v10106
        %v10779 = vpop.f32.mrf.mxu0
        %v10780 = vadd.f32 %v9530, %v10779
        %v10781 = vpop.f32.mrf.mxu0
        %v10782 = vadd.f32 %v9530, %v10781
        %10783 = vmatmul.bf16.gmra.mxu0 %v10115
        %v10784 = vpop.f32.mrf.mxu0
        %v10785 = vadd.f32 %v9530, %v10784
        %v10786 = vpop.f32.mrf.mxu0
        %v10787 = vadd.f32 %v9530, %v10786
        %10788 = vdwg.mxu0
        %10789 = vmatpush.bf16.msra.mxu0 %v10571
        %10790 = vmatpush.bf16.msra.mxu0 %v10570
        %10791 = vmatpush.bf16.msra.mxu0 %v10569
        %10792 = vmatpush.bf16.msra.mxu0 %v10568
        %10793 = vmatpush.bf16.msra.mxu0 %v10567
        %10794 = vmatpush.bf16.msra.mxu0 %v10566
        %10795 = vmatpush.bf16.msra.mxu0 %v10565
        %10796 = vmatpush.bf16.msra.mxu0 %v10564
        %10797 = vmatmul.bf16.gmra.mxu0 %v9981
        %v10798 = vpop.f32.mrf.mxu0
        %v10799 = vadd.f32 %v10710, %v10798
        %v10800 = vpop.f32.mrf.mxu0
        %v10801 = vadd.f32 %v10712, %v10800
        %10802 = vmatmul.bf16.gmra.mxu0 %v9990
        %v10803 = vpop.f32.mrf.mxu0
        %v10804 = vadd.f32 %v10715, %v10803
        %v10805 = vpop.f32.mrf.mxu0
        %v10806 = vadd.f32 %v10717, %v10805
        %10807 = vmatmul.bf16.gmra.mxu0 %v9999
        %v10808 = vpop.f32.mrf.mxu0
        %v10809 = vadd.f32 %v10720, %v10808
        %v10810 = vpop.f32.mrf.mxu0
        %v10811 = vadd.f32 %v10722, %v10810
        %10812 = vmatmul.bf16.gmra.mxu0 %v10008
        %v10813 = vpop.f32.mrf.mxu0
        %v10814 = vadd.f32 %v10725, %v10813
        %v10815 = vpop.f32.mrf.mxu0
        %v10816 = vadd.f32 %v10727, %v10815
        %10817 = vmatmul.bf16.gmra.mxu0 %v10017
        %v10818 = vpop.f32.mrf.mxu0
        %v10819 = vadd.f32 %v10730, %v10818
        %v10820 = vpop.f32.mrf.mxu0
        %v10821 = vadd.f32 %v10732, %v10820
        %10822 = vmatmul.bf16.gmra.mxu0 %v10026
        %v10823 = vpop.f32.mrf.mxu0
        %v10824 = vadd.f32 %v10735, %v10823
        %v10825 = vpop.f32.mrf.mxu0
        %v10826 = vadd.f32 %v10737, %v10825
        %10827 = vmatmul.bf16.gmra.mxu0 %v10035
        %v10828 = vpop.f32.mrf.mxu0
        %v10829 = vadd.f32 %v10740, %v10828
        %v10830 = vpop.f32.mrf.mxu0
        %v10831 = vadd.f32 %v10742, %v10830
        %10832 = vmatmul.bf16.gmra.mxu0 %v10044
        %v10833 = vpop.f32.mrf.mxu0
        %v10834 = vadd.f32 %v10745, %v10833
        %v10835 = vpop.f32.mrf.mxu0
        %v10836 = vadd.f32 %v10747, %v10835
        %10837 = vmatmul.bf16.gmra.mxu0 %v10053
        %v10838 = vpop.f32.mrf.mxu0
        %v10839 = vadd.f32 %v10750, %v10838
        %v10840 = vpop.f32.mrf.mxu0
        %v10841 = vadd.f32 %v10752, %v10840
        %10842 = vmatmul.bf16.gmra.mxu0 %v10062
        %v10843 = vpop.f32.mrf.mxu0
        %v10844 = vadd.f32 %v10755, %v10843
        %v10845 = vpop.f32.mrf.mxu0
        %v10846 = vadd.f32 %v10757, %v10845
        %10847 = vmatmul.bf16.gmra.mxu0 %v10071
        %v10848 = vpop.f32.mrf.mxu0
        %v10849 = vadd.f32 %v10760, %v10848
        %v10850 = vpop.f32.mrf.mxu0
        %v10851 = vadd.f32 %v10762, %v10850
        %10852 = vmatmul.bf16.gmra.mxu0 %v10080
        %v10853 = vpop.f32.mrf.mxu0
        %v10854 = vadd.f32 %v10765, %v10853
        %v10855 = vpop.f32.mrf.mxu0
        %v10856 = vadd.f32 %v10767, %v10855
        %10857 = vmatmul.bf16.gmra.mxu0 %v10089
        %v10858 = vpop.f32.mrf.mxu0
        %v10859 = vadd.f32 %v10770, %v10858
        %v10860 = vpop.f32.mrf.mxu0
        %v10861 = vadd.f32 %v10772, %v10860
        %10862 = vmatmul.bf16.gmra.mxu0 %v10098
        %v10863 = vpop.f32.mrf.mxu0
        %v10864 = vadd.f32 %v10775, %v10863
        %v10865 = vpop.f32.mrf.mxu0
        %v10866 = vadd.f32 %v10777, %v10865
        %10867 = vmatmul.bf16.gmra.mxu0 %v10107
        %v10868 = vpop.f32.mrf.mxu0
        %v10869 = vadd.f32 %v10780, %v10868
        %v10870 = vpop.f32.mrf.mxu0
        %v10871 = vadd.f32 %v10782, %v10870
        %10872 = vmatmul.bf16.gmra.mxu0 %v10116
        %v10873 = vpop.f32.mrf.mxu0
        %v10874 = vadd.f32 %v10785, %v10873
        %v10875 = vpop.f32.mrf.mxu0
        %v10876 = vadd.f32 %v10787, %v10875
        %10877 = vdwg.mxu0
        %10878 = vmatpush.bf16.msra.mxu0 %v10579
        %10879 = vmatpush.bf16.msra.mxu0 %v10578
        %10880 = vmatpush.bf16.msra.mxu0 %v10577
        %10881 = vmatpush.bf16.msra.mxu0 %v10576
        %10882 = vmatpush.bf16.msra.mxu0 %v10575
        %10883 = vmatpush.bf16.msra.mxu0 %v10574
        %10884 = vmatpush.bf16.msra.mxu0 %v10573
        %10885 = vmatpush.bf16.msra.mxu0 %v10572
        %10886 = vmatmul.bf16.gmra.mxu0 %v9982
        %v10887 = vpop.f32.mrf.mxu0
        %v10888 = vadd.f32 %v10799, %v10887
        %v10889 = vpop.f32.mrf.mxu0
        %v10890 = vadd.f32 %v10801, %v10889
        %10891 = vmatmul.bf16.gmra.mxu0 %v9991
        %v10892 = vpop.f32.mrf.mxu0
        %v10893 = vadd.f32 %v10804, %v10892
        %v10894 = vpop.f32.mrf.mxu0
        %v10895 = vadd.f32 %v10806, %v10894
        %10896 = vmatmul.bf16.gmra.mxu0 %v10000
        %v10897 = vpop.f32.mrf.mxu0
        %v10898 = vadd.f32 %v10809, %v10897
        %v10899 = vpop.f32.mrf.mxu0
        %v10900 = vadd.f32 %v10811, %v10899
        %10901 = vmatmul.bf16.gmra.mxu0 %v10009
        %v10902 = vpop.f32.mrf.mxu0
        %v10903 = vadd.f32 %v10814, %v10902
        %v10904 = vpop.f32.mrf.mxu0
        %v10905 = vadd.f32 %v10816, %v10904
        %10906 = vmatmul.bf16.gmra.mxu0 %v10018
        %v10907 = vpop.f32.mrf.mxu0
        %v10908 = vadd.f32 %v10819, %v10907
        %v10909 = vpop.f32.mrf.mxu0
        %v10910 = vadd.f32 %v10821, %v10909
        %10911 = vmatmul.bf16.gmra.mxu0 %v10027
        %v10912 = vpop.f32.mrf.mxu0
        %v10913 = vadd.f32 %v10824, %v10912
        %v10914 = vpop.f32.mrf.mxu0
        %v10915 = vadd.f32 %v10826, %v10914
        %10916 = vmatmul.bf16.gmra.mxu0 %v10036
        %v10917 = vpop.f32.mrf.mxu0
        %v10918 = vadd.f32 %v10829, %v10917
        %v10919 = vpop.f32.mrf.mxu0
        %v10920 = vadd.f32 %v10831, %v10919
        %10921 = vmatmul.bf16.gmra.mxu0 %v10045
        %v10922 = vpop.f32.mrf.mxu0
        %v10923 = vadd.f32 %v10834, %v10922
        %v10924 = vpop.f32.mrf.mxu0
        %v10925 = vadd.f32 %v10836, %v10924
        %10926 = vmatmul.bf16.gmra.mxu0 %v10054
        %v10927 = vpop.f32.mrf.mxu0
        %v10928 = vadd.f32 %v10839, %v10927
        %v10929 = vpop.f32.mrf.mxu0
        %v10930 = vadd.f32 %v10841, %v10929
        %10931 = vmatmul.bf16.gmra.mxu0 %v10063
        %v10932 = vpop.f32.mrf.mxu0
        %v10933 = vadd.f32 %v10844, %v10932
        %v10934 = vpop.f32.mrf.mxu0
        %v10935 = vadd.f32 %v10846, %v10934
        %10936 = vmatmul.bf16.gmra.mxu0 %v10072
        %v10937 = vpop.f32.mrf.mxu0
        %v10938 = vadd.f32 %v10849, %v10937
        %v10939 = vpop.f32.mrf.mxu0
        %v10940 = vadd.f32 %v10851, %v10939
        %10941 = vmatmul.bf16.gmra.mxu0 %v10081
        %v10942 = vpop.f32.mrf.mxu0
        %v10943 = vadd.f32 %v10854, %v10942
        %v10944 = vpop.f32.mrf.mxu0
        %v10945 = vadd.f32 %v10856, %v10944
        %10946 = vmatmul.bf16.gmra.mxu0 %v10090
        %v10947 = vpop.f32.mrf.mxu0
        %v10948 = vadd.f32 %v10859, %v10947
        %v10949 = vpop.f32.mrf.mxu0
        %v10950 = vadd.f32 %v10861, %v10949
        %10951 = vmatmul.bf16.gmra.mxu0 %v10099
        %v10952 = vpop.f32.mrf.mxu0
        %v10953 = vadd.f32 %v10864, %v10952
        %v10954 = vpop.f32.mrf.mxu0
        %v10955 = vadd.f32 %v10866, %v10954
        %10956 = vmatmul.bf16.gmra.mxu0 %v10108
        %v10957 = vpop.f32.mrf.mxu0
        %v10958 = vadd.f32 %v10869, %v10957
        %v10959 = vpop.f32.mrf.mxu0
        %v10960 = vadd.f32 %v10871, %v10959
        %10961 = vmatmul.bf16.gmra.mxu0 %v10117
        %v10962 = vpop.f32.mrf.mxu0
        %v10963 = vadd.f32 %v10874, %v10962
        %v10964 = vpop.f32.mrf.mxu0
        %v10965 = vadd.f32 %v10876, %v10964
        %10966 = vdwg.mxu0
        %10967 = vmatpush.bf16.msra.mxu0 %v10587
        %10968 = vmatpush.bf16.msra.mxu0 %v10586
        %10969 = vmatpush.bf16.msra.mxu0 %v10585
        %10970 = vmatpush.bf16.msra.mxu0 %v10584
        %10971 = vmatpush.bf16.msra.mxu0 %v10583
        %10972 = vmatpush.bf16.msra.mxu0 %v10582
        %10973 = vmatpush.bf16.msra.mxu0 %v10581
        %10974 = vmatpush.bf16.msra.mxu0 %v10580
        %10975 = vmatmul.bf16.gmra.mxu0 %v9983
        %v10976 = vpop.f32.mrf.mxu0
        %v10977 = vadd.f32 %v10888, %v10976
        %v10978 = vpop.f32.mrf.mxu0
        %v10979 = vadd.f32 %v10890, %v10978
        %10980 = vmatmul.bf16.gmra.mxu0 %v9992
        %v10981 = vpop.f32.mrf.mxu0
        %v10982 = vadd.f32 %v10893, %v10981
        %v10983 = vpop.f32.mrf.mxu0
        %v10984 = vadd.f32 %v10895, %v10983
        %10985 = vmatmul.bf16.gmra.mxu0 %v10001
        %v10986 = vpop.f32.mrf.mxu0
        %v10987 = vadd.f32 %v10898, %v10986
        %v10988 = vpop.f32.mrf.mxu0
        %v10989 = vadd.f32 %v10900, %v10988
        %10990 = vmatmul.bf16.gmra.mxu0 %v10010
        %v10991 = vpop.f32.mrf.mxu0
        %v10992 = vadd.f32 %v10903, %v10991
        %v10993 = vpop.f32.mrf.mxu0
        %v10994 = vadd.f32 %v10905, %v10993
        %10995 = vmatmul.bf16.gmra.mxu0 %v10019
        %v10996 = vpop.f32.mrf.mxu0
        %v10997 = vadd.f32 %v10908, %v10996
        %v10998 = vpop.f32.mrf.mxu0
        %v10999 = vadd.f32 %v10910, %v10998
        %11000 = vmatmul.bf16.gmra.mxu0 %v10028
        %v11001 = vpop.f32.mrf.mxu0
        %v11002 = vadd.f32 %v10913, %v11001
        %v11003 = vpop.f32.mrf.mxu0
        %v11004 = vadd.f32 %v10915, %v11003
        %11005 = vmatmul.bf16.gmra.mxu0 %v10037
        %v11006 = vpop.f32.mrf.mxu0
        %v11007 = vadd.f32 %v10918, %v11006
        %v11008 = vpop.f32.mrf.mxu0
        %v11009 = vadd.f32 %v10920, %v11008
        %11010 = vmatmul.bf16.gmra.mxu0 %v10046
        %v11011 = vpop.f32.mrf.mxu0
        %v11012 = vadd.f32 %v10923, %v11011
        %v11013 = vpop.f32.mrf.mxu0
        %v11014 = vadd.f32 %v10925, %v11013
        %11015 = vmatmul.bf16.gmra.mxu0 %v10055
        %v11016 = vpop.f32.mrf.mxu0
        %v11017 = vadd.f32 %v10928, %v11016
        %v11018 = vpop.f32.mrf.mxu0
        %v11019 = vadd.f32 %v10930, %v11018
        %11020 = vmatmul.bf16.gmra.mxu0 %v10064
        %v11021 = vpop.f32.mrf.mxu0
        %v11022 = vadd.f32 %v10933, %v11021
        %v11023 = vpop.f32.mrf.mxu0
        %v11024 = vadd.f32 %v10935, %v11023
        %11025 = vmatmul.bf16.gmra.mxu0 %v10073
        %v11026 = vpop.f32.mrf.mxu0
        %v11027 = vadd.f32 %v10938, %v11026
        %v11028 = vpop.f32.mrf.mxu0
        %v11029 = vadd.f32 %v10940, %v11028
        %11030 = vmatmul.bf16.gmra.mxu0 %v10082
        %v11031 = vpop.f32.mrf.mxu0
        %v11032 = vadd.f32 %v10943, %v11031
        %v11033 = vpop.f32.mrf.mxu0
        %v11034 = vadd.f32 %v10945, %v11033
        %11035 = vmatmul.bf16.gmra.mxu0 %v10091
        %v11036 = vpop.f32.mrf.mxu0
        %v11037 = vadd.f32 %v10948, %v11036
        %v11038 = vpop.f32.mrf.mxu0
        %v11039 = vadd.f32 %v10950, %v11038
        %11040 = vmatmul.bf16.gmra.mxu0 %v10100
        %v11041 = vpop.f32.mrf.mxu0
        %v11042 = vadd.f32 %v10953, %v11041
        %v11043 = vpop.f32.mrf.mxu0
        %v11044 = vadd.f32 %v10955, %v11043
        %11045 = vmatmul.bf16.gmra.mxu0 %v10109
        %v11046 = vpop.f32.mrf.mxu0
        %v11047 = vadd.f32 %v10958, %v11046
        %v11048 = vpop.f32.mrf.mxu0
        %v11049 = vadd.f32 %v10960, %v11048
        %11050 = vmatmul.bf16.gmra.mxu0 %v10118
        %v11051 = vpop.f32.mrf.mxu0
        %v11052 = vadd.f32 %v10963, %v11051
        %v11053 = vpop.f32.mrf.mxu0
        %v11054 = vadd.f32 %v10965, %v11053
        %11055 = vdwg.mxu0
        %11056 = vmatpush.bf16.msra.mxu0 %v10595
        %11057 = vmatpush.bf16.msra.mxu0 %v10594
        %11058 = vmatpush.bf16.msra.mxu0 %v10593
        %11059 = vmatpush.bf16.msra.mxu0 %v10592
        %11060 = vmatpush.bf16.msra.mxu0 %v10591
        %11061 = vmatpush.bf16.msra.mxu0 %v10590
        %11062 = vmatpush.bf16.msra.mxu0 %v10589
        %11063 = vmatpush.bf16.msra.mxu0 %v10588
        %11064 = vmatmul.bf16.gmra.mxu0 %v9984
        %v11065 = vpop.f32.mrf.mxu0
        %v11066 = vadd.f32 %v10977, %v11065
        %v11067 = vpop.f32.mrf.mxu0
        %v11068 = vadd.f32 %v10979, %v11067
        %11069 = vmatmul.bf16.gmra.mxu0 %v9993
        %v11070 = vpop.f32.mrf.mxu0
        %v11071 = vadd.f32 %v10982, %v11070
        %v11072 = vpop.f32.mrf.mxu0
        %v11073 = vadd.f32 %v10984, %v11072
        %11074 = vmatmul.bf16.gmra.mxu0 %v10002
        %v11075 = vpop.f32.mrf.mxu0
        %v11076 = vadd.f32 %v10987, %v11075
        %v11077 = vpop.f32.mrf.mxu0
        %v11078 = vadd.f32 %v10989, %v11077
        %11079 = vmatmul.bf16.gmra.mxu0 %v10011
        %v11080 = vpop.f32.mrf.mxu0
        %v11081 = vadd.f32 %v10992, %v11080
        %v11082 = vpop.f32.mrf.mxu0
        %v11083 = vadd.f32 %v10994, %v11082
        %11084 = vmatmul.bf16.gmra.mxu0 %v10020
        %v11085 = vpop.f32.mrf.mxu0
        %v11086 = vadd.f32 %v10997, %v11085
        %v11087 = vpop.f32.mrf.mxu0
        %v11088 = vadd.f32 %v10999, %v11087
        %11089 = vmatmul.bf16.gmra.mxu0 %v10029
        %v11090 = vpop.f32.mrf.mxu0
        %v11091 = vadd.f32 %v11002, %v11090
        %v11092 = vpop.f32.mrf.mxu0
        %v11093 = vadd.f32 %v11004, %v11092
        %11094 = vmatmul.bf16.gmra.mxu0 %v10038
        %v11095 = vpop.f32.mrf.mxu0
        %v11096 = vadd.f32 %v11007, %v11095
        %v11097 = vpop.f32.mrf.mxu0
        %v11098 = vadd.f32 %v11009, %v11097
        %11099 = vmatmul.bf16.gmra.mxu0 %v10047
        %v11100 = vpop.f32.mrf.mxu0
        %v11101 = vadd.f32 %v11012, %v11100
        %v11102 = vpop.f32.mrf.mxu0
        %v11103 = vadd.f32 %v11014, %v11102
        %11104 = vmatmul.bf16.gmra.mxu0 %v10056
        %v11105 = vpop.f32.mrf.mxu0
        %v11106 = vadd.f32 %v11017, %v11105
        %v11107 = vpop.f32.mrf.mxu0
        %v11108 = vadd.f32 %v11019, %v11107
        %11109 = vmatmul.bf16.gmra.mxu0 %v10065
        %v11110 = vpop.f32.mrf.mxu0
        %v11111 = vadd.f32 %v11022, %v11110
        %v11112 = vpop.f32.mrf.mxu0
        %v11113 = vadd.f32 %v11024, %v11112
        %11114 = vmatmul.bf16.gmra.mxu0 %v10074
        %v11115 = vpop.f32.mrf.mxu0
        %v11116 = vadd.f32 %v11027, %v11115
        %v11117 = vpop.f32.mrf.mxu0
        %v11118 = vadd.f32 %v11029, %v11117
        %11119 = vmatmul.bf16.gmra.mxu0 %v10083
        %v11120 = vpop.f32.mrf.mxu0
        %v11121 = vadd.f32 %v11032, %v11120
        %v11122 = vpop.f32.mrf.mxu0
        %v11123 = vadd.f32 %v11034, %v11122
        %11124 = vmatmul.bf16.gmra.mxu0 %v10092
        %v11125 = vpop.f32.mrf.mxu0
        %v11126 = vadd.f32 %v11037, %v11125
        %v11127 = vpop.f32.mrf.mxu0
        %v11128 = vadd.f32 %v11039, %v11127
        %11129 = vmatmul.bf16.gmra.mxu0 %v10101
        %v11130 = vpop.f32.mrf.mxu0
        %v11131 = vadd.f32 %v11042, %v11130
        %v11132 = vpop.f32.mrf.mxu0
        %v11133 = vadd.f32 %v11044, %v11132
        %11134 = vmatmul.bf16.gmra.mxu0 %v10110
        %v11135 = vpop.f32.mrf.mxu0
        %v11136 = vadd.f32 %v11047, %v11135
        %v11137 = vpop.f32.mrf.mxu0
        %v11138 = vadd.f32 %v11049, %v11137
        %11139 = vmatmul.bf16.gmra.mxu0 %v10119
        %v11140 = vpop.f32.mrf.mxu0
        %v11141 = vadd.f32 %v11052, %v11140
        %v11142 = vpop.f32.mrf.mxu0
        %v11143 = vadd.f32 %v11054, %v11142
        %11144 = vdwg.mxu0
        %11145 = vmatpush.bf16.msra.mxu0 %v10603
        %11146 = vmatpush.bf16.msra.mxu0 %v10602
        %11147 = vmatpush.bf16.msra.mxu0 %v10601
        %11148 = vmatpush.bf16.msra.mxu0 %v10600
        %11149 = vmatpush.bf16.msra.mxu0 %v10599
        %11150 = vmatpush.bf16.msra.mxu0 %v10598
        %11151 = vmatpush.bf16.msra.mxu0 %v10597
        %11152 = vmatpush.bf16.msra.mxu0 %v10596
        %11153 = vmatmul.bf16.gmra.mxu0 %v9985
        %v11154 = vpop.f32.mrf.mxu0
        %v11155 = vadd.f32 %v11066, %v11154
        %v11156 = vpop.f32.mrf.mxu0
        %v11157 = vadd.f32 %v11068, %v11156
        %11158 = vmatmul.bf16.gmra.mxu0 %v9994
        %v11159 = vpop.f32.mrf.mxu0
        %v11160 = vadd.f32 %v11071, %v11159
        %v11161 = vpop.f32.mrf.mxu0
        %v11162 = vadd.f32 %v11073, %v11161
        %11163 = vmatmul.bf16.gmra.mxu0 %v10003
        %v11164 = vpop.f32.mrf.mxu0
        %v11165 = vadd.f32 %v11076, %v11164
        %v11166 = vpop.f32.mrf.mxu0
        %v11167 = vadd.f32 %v11078, %v11166
        %11168 = vmatmul.bf16.gmra.mxu0 %v10012
        %v11169 = vpop.f32.mrf.mxu0
        %v11170 = vadd.f32 %v11081, %v11169
        %v11171 = vpop.f32.mrf.mxu0
        %v11172 = vadd.f32 %v11083, %v11171
        %11173 = vmatmul.bf16.gmra.mxu0 %v10021
        %v11174 = vpop.f32.mrf.mxu0
        %v11175 = vadd.f32 %v11086, %v11174
        %v11176 = vpop.f32.mrf.mxu0
        %v11177 = vadd.f32 %v11088, %v11176
        %11178 = vmatmul.bf16.gmra.mxu0 %v10030
        %v11179 = vpop.f32.mrf.mxu0
        %v11180 = vadd.f32 %v11091, %v11179
        %v11181 = vpop.f32.mrf.mxu0
        %v11182 = vadd.f32 %v11093, %v11181
        %11183 = vmatmul.bf16.gmra.mxu0 %v10039
        %v11184 = vpop.f32.mrf.mxu0
        %v11185 = vadd.f32 %v11096, %v11184
        %v11186 = vpop.f32.mrf.mxu0
        %v11187 = vadd.f32 %v11098, %v11186
        %11188 = vmatmul.bf16.gmra.mxu0 %v10048
        %v11189 = vpop.f32.mrf.mxu0
        %v11190 = vadd.f32 %v11101, %v11189
        %v11191 = vpop.f32.mrf.mxu0
        %v11192 = vadd.f32 %v11103, %v11191
        %11193 = vmatmul.bf16.gmra.mxu0 %v10057
        %v11194 = vpop.f32.mrf.mxu0
        %v11195 = vadd.f32 %v11106, %v11194
        %v11196 = vpop.f32.mrf.mxu0
        %v11197 = vadd.f32 %v11108, %v11196
        %11198 = vmatmul.bf16.gmra.mxu0 %v10066
        %v11199 = vpop.f32.mrf.mxu0
        %v11200 = vadd.f32 %v11111, %v11199
        %v11201 = vpop.f32.mrf.mxu0
        %v11202 = vadd.f32 %v11113, %v11201
        %11203 = vmatmul.bf16.gmra.mxu0 %v10075
        %v11204 = vpop.f32.mrf.mxu0
        %v11205 = vadd.f32 %v11116, %v11204
        %v11206 = vpop.f32.mrf.mxu0
        %v11207 = vadd.f32 %v11118, %v11206
        %11208 = vmatmul.bf16.gmra.mxu0 %v10084
        %v11209 = vpop.f32.mrf.mxu0
        %v11210 = vadd.f32 %v11121, %v11209
        %v11211 = vpop.f32.mrf.mxu0
        %v11212 = vadd.f32 %v11123, %v11211
        %11213 = vmatmul.bf16.gmra.mxu0 %v10093
        %v11214 = vpop.f32.mrf.mxu0
        %v11215 = vadd.f32 %v11126, %v11214
        %v11216 = vpop.f32.mrf.mxu0
        %v11217 = vadd.f32 %v11128, %v11216
        %11218 = vmatmul.bf16.gmra.mxu0 %v10102
        %v11219 = vpop.f32.mrf.mxu0
        %v11220 = vadd.f32 %v11131, %v11219
        %v11221 = vpop.f32.mrf.mxu0
        %v11222 = vadd.f32 %v11133, %v11221
        %11223 = vmatmul.bf16.gmra.mxu0 %v10111
        %v11224 = vpop.f32.mrf.mxu0
        %v11225 = vadd.f32 %v11136, %v11224
        %v11226 = vpop.f32.mrf.mxu0
        %v11227 = vadd.f32 %v11138, %v11226
        %11228 = vmatmul.bf16.gmra.mxu0 %v10120
        %v11229 = vpop.f32.mrf.mxu0
        %v11230 = vadd.f32 %v11141, %v11229
        %v11231 = vpop.f32.mrf.mxu0
        %v11232 = vadd.f32 %v11143, %v11231
        %11233 = vdwg.mxu0
        %11234 = vmatpush.bf16.msra.mxu0 %v10611
        %11235 = vmatpush.bf16.msra.mxu0 %v10610
        %11236 = vmatpush.bf16.msra.mxu0 %v10609
        %11237 = vmatpush.bf16.msra.mxu0 %v10608
        %11238 = vmatpush.bf16.msra.mxu0 %v10607
        %11239 = vmatpush.bf16.msra.mxu0 %v10606
        %11240 = vmatpush.bf16.msra.mxu0 %v10605
        %11241 = vmatpush.bf16.msra.mxu0 %v10604
        %11242 = vmatmul.bf16.gmra.mxu0 %v9986
        %v11243 = vpop.f32.mrf.mxu0
        %v11244 = vadd.f32 %v11155, %v11243
        %v11245 = vpop.f32.mrf.mxu0
        %v11246 = vadd.f32 %v11157, %v11245
        %11247 = vmatmul.bf16.gmra.mxu0 %v9995
        %v11248 = vpop.f32.mrf.mxu0
        %v11249 = vadd.f32 %v11160, %v11248
        %v11250 = vpop.f32.mrf.mxu0
        %v11251 = vadd.f32 %v11162, %v11250
        %11252 = vmatmul.bf16.gmra.mxu0 %v10004
        %v11253 = vpop.f32.mrf.mxu0
        %v11254 = vadd.f32 %v11165, %v11253
        %v11255 = vpop.f32.mrf.mxu0
        %v11256 = vadd.f32 %v11167, %v11255
        %11257 = vmatmul.bf16.gmra.mxu0 %v10013
        %v11258 = vpop.f32.mrf.mxu0
        %v11259 = vadd.f32 %v11170, %v11258
        %v11260 = vpop.f32.mrf.mxu0
        %v11261 = vadd.f32 %v11172, %v11260
        %11262 = vmatmul.bf16.gmra.mxu0 %v10022
        %v11263 = vpop.f32.mrf.mxu0
        %v11264 = vadd.f32 %v11175, %v11263
        %v11265 = vpop.f32.mrf.mxu0
        %v11266 = vadd.f32 %v11177, %v11265
        %11267 = vmatmul.bf16.gmra.mxu0 %v10031
        %v11268 = vpop.f32.mrf.mxu0
        %v11269 = vadd.f32 %v11180, %v11268
        %v11270 = vpop.f32.mrf.mxu0
        %v11271 = vadd.f32 %v11182, %v11270
        %11272 = vmatmul.bf16.gmra.mxu0 %v10040
        %v11273 = vpop.f32.mrf.mxu0
        %v11274 = vadd.f32 %v11185, %v11273
        %v11275 = vpop.f32.mrf.mxu0
        %v11276 = vadd.f32 %v11187, %v11275
        %11277 = vmatmul.bf16.gmra.mxu0 %v10049
        %v11278 = vpop.f32.mrf.mxu0
        %v11279 = vadd.f32 %v11190, %v11278
        %v11280 = vpop.f32.mrf.mxu0
        %v11281 = vadd.f32 %v11192, %v11280
        %11282 = vmatmul.bf16.gmra.mxu0 %v10058
        %v11283 = vpop.f32.mrf.mxu0
        %v11284 = vadd.f32 %v11195, %v11283
        %v11285 = vpop.f32.mrf.mxu0
        %v11286 = vadd.f32 %v11197, %v11285
        %11287 = vmatmul.bf16.gmra.mxu0 %v10067
        %v11288 = vpop.f32.mrf.mxu0
        %v11289 = vadd.f32 %v11200, %v11288
        %v11290 = vpop.f32.mrf.mxu0
        %v11291 = vadd.f32 %v11202, %v11290
        %11292 = vmatmul.bf16.gmra.mxu0 %v10076
        %v11293 = vpop.f32.mrf.mxu0
        %v11294 = vadd.f32 %v11205, %v11293
        %v11295 = vpop.f32.mrf.mxu0
        %v11296 = vadd.f32 %v11207, %v11295
        %11297 = vmatmul.bf16.gmra.mxu0 %v10085
        %v11298 = vpop.f32.mrf.mxu0
        %v11299 = vadd.f32 %v11210, %v11298
        %v11300 = vpop.f32.mrf.mxu0
        %v11301 = vadd.f32 %v11212, %v11300
        %11302 = vmatmul.bf16.gmra.mxu0 %v10094
        %v11303 = vpop.f32.mrf.mxu0
        %v11304 = vadd.f32 %v11215, %v11303
        %v11305 = vpop.f32.mrf.mxu0
        %v11306 = vadd.f32 %v11217, %v11305
        %11307 = vmatmul.bf16.gmra.mxu0 %v10103
        %v11308 = vpop.f32.mrf.mxu0
        %v11309 = vadd.f32 %v11220, %v11308
        %v11310 = vpop.f32.mrf.mxu0
        %v11311 = vadd.f32 %v11222, %v11310
        %11312 = vmatmul.bf16.gmra.mxu0 %v10112
        %v11313 = vpop.f32.mrf.mxu0
        %v11314 = vadd.f32 %v11225, %v11313
        %v11315 = vpop.f32.mrf.mxu0
        %v11316 = vadd.f32 %v11227, %v11315
        %11317 = vmatmul.bf16.gmra.mxu0 %v10121
        %v11318 = vpop.f32.mrf.mxu0
        %v11319 = vadd.f32 %v11230, %v11318
        %v11320 = vpop.f32.mrf.mxu0
        %v11321 = vadd.f32 %v11232, %v11320
        %11322 = vdwg.mxu0
        %11323 = vmatpush.bf16.msra.mxu0 %v10619
        %11324 = vmatpush.bf16.msra.mxu0 %v10618
        %11325 = vmatpush.bf16.msra.mxu0 %v10617
        %11326 = vmatpush.bf16.msra.mxu0 %v10616
        %11327 = vmatpush.bf16.msra.mxu0 %v10615
        %11328 = vmatpush.bf16.msra.mxu0 %v10614
        %11329 = vmatpush.bf16.msra.mxu0 %v10613
        %11330 = vmatpush.bf16.msra.mxu0 %v10612
        %11331 = vmatmul.bf16.gmra.mxu0 %v9987
        %v11332 = vpop.f32.mrf.mxu0
        %v11333 = vadd.f32 %v11244, %v11332
        %v11334 = vpop.f32.mrf.mxu0
        %v11335 = vadd.f32 %v11246, %v11334
        %11336 = vmatmul.bf16.gmra.mxu0 %v9996
        %v11337 = vpop.f32.mrf.mxu0
        %v11338 = vadd.f32 %v11249, %v11337
        %v11339 = vpop.f32.mrf.mxu0
        %v11340 = vadd.f32 %v11251, %v11339
        %11341 = vmatmul.bf16.gmra.mxu0 %v10005
        %v11342 = vpop.f32.mrf.mxu0
        %v11343 = vadd.f32 %v11254, %v11342
        %v11344 = vpop.f32.mrf.mxu0
        %v11345 = vadd.f32 %v11256, %v11344
        %11346 = vmatmul.bf16.gmra.mxu0 %v10014
        %v11347 = vpop.f32.mrf.mxu0
        %v11348 = vadd.f32 %v11259, %v11347
        %v11349 = vpop.f32.mrf.mxu0
        %v11350 = vadd.f32 %v11261, %v11349
        %11351 = vmatmul.bf16.gmra.mxu0 %v10023
        %v11352 = vpop.f32.mrf.mxu0
        %v11353 = vadd.f32 %v11264, %v11352
        %v11354 = vpop.f32.mrf.mxu0
        %v11355 = vadd.f32 %v11266, %v11354
        %11356 = vmatmul.bf16.gmra.mxu0 %v10032
        %v11357 = vpop.f32.mrf.mxu0
        %v11358 = vadd.f32 %v11269, %v11357
        %v11359 = vpop.f32.mrf.mxu0
        %v11360 = vadd.f32 %v11271, %v11359
        %11361 = vmatmul.bf16.gmra.mxu0 %v10041
        %v11362 = vpop.f32.mrf.mxu0
        %v11363 = vadd.f32 %v11274, %v11362
        %v11364 = vpop.f32.mrf.mxu0
        %v11365 = vadd.f32 %v11276, %v11364
        %11366 = vmatmul.bf16.gmra.mxu0 %v10050
        %v11367 = vpop.f32.mrf.mxu0
        %v11368 = vadd.f32 %v11279, %v11367
        %v11369 = vpop.f32.mrf.mxu0
        %v11370 = vadd.f32 %v11281, %v11369
        %11371 = vmatmul.bf16.gmra.mxu0 %v10059
        %v11372 = vpop.f32.mrf.mxu0
        %v11373 = vadd.f32 %v11284, %v11372
        %v11374 = vpop.f32.mrf.mxu0
        %v11375 = vadd.f32 %v11286, %v11374
        %11376 = vmatmul.bf16.gmra.mxu0 %v10068
        %v11377 = vpop.f32.mrf.mxu0
        %v11378 = vadd.f32 %v11289, %v11377
        %v11379 = vpop.f32.mrf.mxu0
        %v11380 = vadd.f32 %v11291, %v11379
        %11381 = vmatmul.bf16.gmra.mxu0 %v10077
        %v11382 = vpop.f32.mrf.mxu0
        %v11383 = vadd.f32 %v11294, %v11382
        %v11384 = vpop.f32.mrf.mxu0
        %v11385 = vadd.f32 %v11296, %v11384
        %11386 = vmatmul.bf16.gmra.mxu0 %v10086
        %v11387 = vpop.f32.mrf.mxu0
        %v11388 = vadd.f32 %v11299, %v11387
        %v11389 = vpop.f32.mrf.mxu0
        %v11390 = vadd.f32 %v11301, %v11389
        %11391 = vmatmul.bf16.gmra.mxu0 %v10095
        %v11392 = vpop.f32.mrf.mxu0
        %v11393 = vadd.f32 %v11304, %v11392
        %v11394 = vpop.f32.mrf.mxu0
        %v11395 = vadd.f32 %v11306, %v11394
        %11396 = vmatmul.bf16.gmra.mxu0 %v10104
        %v11397 = vpop.f32.mrf.mxu0
        %v11398 = vadd.f32 %v11309, %v11397
        %v11399 = vpop.f32.mrf.mxu0
        %v11400 = vadd.f32 %v11311, %v11399
        %11401 = vmatmul.bf16.gmra.mxu0 %v10113
        %v11402 = vpop.f32.mrf.mxu0
        %v11403 = vadd.f32 %v11314, %v11402
        %v11404 = vpop.f32.mrf.mxu0
        %v11405 = vadd.f32 %v11316, %v11404
        %11406 = vmatmul.bf16.gmra.mxu0 %v10122
        %v11407 = vpop.f32.mrf.mxu0
        %v11408 = vadd.f32 %v11319, %v11407
        %v11409 = vpop.f32.mrf.mxu0
        %v11410 = vadd.f32 %v11321, %v11409
        %11411 = vdwg.mxu0
        %11412 = vmatpush.bf16.msra.mxu0 %v10627
        %11413 = vmatpush.bf16.msra.mxu0 %v10626
        %11414 = vmatpush.bf16.msra.mxu0 %v10625
        %11415 = vmatpush.bf16.msra.mxu0 %v10624
        %11416 = vmatpush.bf16.msra.mxu0 %v10623
        %11417 = vmatpush.bf16.msra.mxu0 %v10622
        %11418 = vmatpush.bf16.msra.mxu0 %v10621
        %11419 = vmatpush.bf16.msra.mxu0 %v10620
        %11420 = vmatmul.bf16.gmra.mxu0 %v9988
        %v11421 = vpop.f32.mrf.mxu0
        %v11422 = vadd.f32 %v11333, %v11421
        %v11423 = vpop.f32.mrf.mxu0
        %v11424 = vadd.f32 %v11335, %v11423
        %11425 = vmatmul.bf16.gmra.mxu0 %v9997
        %v11426 = vpop.f32.mrf.mxu0
        %v11427 = vadd.f32 %v11338, %v11426
        %v11428 = vpop.f32.mrf.mxu0
        %v11429 = vadd.f32 %v11340, %v11428
        %11430 = vmatmul.bf16.gmra.mxu0 %v10006
        %v11431 = vpop.f32.mrf.mxu0
        %v11432 = vadd.f32 %v11343, %v11431
        %v11433 = vpop.f32.mrf.mxu0
        %v11434 = vadd.f32 %v11345, %v11433
        %11435 = vmatmul.bf16.gmra.mxu0 %v10015
        %v11436 = vpop.f32.mrf.mxu0
        %v11437 = vadd.f32 %v11348, %v11436
        %v11438 = vpop.f32.mrf.mxu0
        %v11439 = vadd.f32 %v11350, %v11438
        %11440 = vmatmul.bf16.gmra.mxu0 %v10024
        %v11441 = vpop.f32.mrf.mxu0
        %v11442 = vadd.f32 %v11353, %v11441
        %v11443 = vpop.f32.mrf.mxu0
        %v11444 = vadd.f32 %v11355, %v11443
        %11445 = vmatmul.bf16.gmra.mxu0 %v10033
        %v11446 = vpop.f32.mrf.mxu0
        %v11447 = vadd.f32 %v11358, %v11446
        %v11448 = vpop.f32.mrf.mxu0
        %v11449 = vadd.f32 %v11360, %v11448
        %11450 = vmatmul.bf16.gmra.mxu0 %v10042
        %v11451 = vpop.f32.mrf.mxu0
        %v11452 = vadd.f32 %v11363, %v11451
        %v11453 = vpop.f32.mrf.mxu0
        %v11454 = vadd.f32 %v11365, %v11453
        %11455 = vmatmul.bf16.gmra.mxu0 %v10051
        %v11456 = vpop.f32.mrf.mxu0
        %v11457 = vadd.f32 %v11368, %v11456
        %v11458 = vpop.f32.mrf.mxu0
        %v11459 = vadd.f32 %v11370, %v11458
        %11460 = vmatmul.bf16.gmra.mxu0 %v10060
        %v11461 = vpop.f32.mrf.mxu0
        %v11462 = vadd.f32 %v11373, %v11461
        %v11463 = vpop.f32.mrf.mxu0
        %v11464 = vadd.f32 %v11375, %v11463
        %11465 = vmatmul.bf16.gmra.mxu0 %v10069
        %v11466 = vpop.f32.mrf.mxu0
        %v11467 = vadd.f32 %v11378, %v11466
        %v11468 = vpop.f32.mrf.mxu0
        %v11469 = vadd.f32 %v11380, %v11468
        %11470 = vmatmul.bf16.gmra.mxu0 %v10078
        %v11471 = vpop.f32.mrf.mxu0
        %v11472 = vadd.f32 %v11383, %v11471
        %v11473 = vpop.f32.mrf.mxu0
        %v11474 = vadd.f32 %v11385, %v11473
        %11475 = vmatmul.bf16.gmra.mxu0 %v10087
        %v11476 = vpop.f32.mrf.mxu0
        %v11477 = vadd.f32 %v11388, %v11476
        %v11478 = vpop.f32.mrf.mxu0
        %v11479 = vadd.f32 %v11390, %v11478
        %11480 = vmatmul.bf16.gmra.mxu0 %v10096
        %v11481 = vpop.f32.mrf.mxu0
        %v11482 = vadd.f32 %v11393, %v11481
        %v11483 = vpop.f32.mrf.mxu0
        %v11484 = vadd.f32 %v11395, %v11483
        %11485 = vmatmul.bf16.gmra.mxu0 %v10105
        %v11486 = vpop.f32.mrf.mxu0
        %v11487 = vadd.f32 %v11398, %v11486
        %v11488 = vpop.f32.mrf.mxu0
        %v11489 = vadd.f32 %v11400, %v11488
        %11490 = vmatmul.bf16.gmra.mxu0 %v10114
        %v11491 = vpop.f32.mrf.mxu0
        %v11492 = vadd.f32 %v11403, %v11491
        %v11493 = vpop.f32.mrf.mxu0
        %v11494 = vadd.f32 %v11405, %v11493
        %11495 = vmatmul.bf16.gmra.mxu0 %v10123
        %v11496 = vpop.f32.mrf.mxu0
        %v11497 = vadd.f32 %v11408, %v11496
        %v11498 = vpop.f32.mrf.mxu0
        %v11499 = vadd.f32 %v11410, %v11498
        %11500 = vdwg.mxu0
        %v11501 = vmax.f32 %v11422, 0.0
        %v11502 = vmax.f32 %v11424, 0.0
        %v11503 = vmax.f32 %v11427, 0.0
        %v11504 = vmax.f32 %v11429, 0.0
        %v11505 = vmax.f32 %v11432, 0.0
        %v11506 = vmax.f32 %v11434, 0.0
        %v11507 = vmax.f32 %v11437, 0.0
        %v11508 = vmax.f32 %v11439, 0.0
        %v11509 = vmax.f32 %v11442, 0.0
        %v11510 = vmax.f32 %v11444, 0.0
        %v11511 = vmax.f32 %v11447, 0.0
        %v11512 = vmax.f32 %v11449, 0.0
        %v11513 = vmax.f32 %v11452, 0.0
        %v11514 = vmax.f32 %v11454, 0.0
        %v11515 = vmax.f32 %v11457, 0.0
        %v11516 = vmax.f32 %v11459, 0.0
        %v11517 = vmax.f32 %v11462, 0.0
        %v11518 = vmax.f32 %v11464, 0.0
        %v11519 = vmax.f32 %v11467, 0.0
        %v11520 = vmax.f32 %v11469, 0.0
        %v11521 = vmax.f32 %v11472, 0.0
        %v11522 = vmax.f32 %v11474, 0.0
        %v11523 = vmax.f32 %v11477, 0.0
        %v11524 = vmax.f32 %v11479, 0.0
        %v11525 = vmax.f32 %v11482, 0.0
        %v11526 = vmax.f32 %v11484, 0.0
        %v11527 = vmax.f32 %v11487, 0.0
        %v11528 = vmax.f32 %v11489, 0.0
        %v11529 = vmax.f32 %v11492, 0.0
        %v11530 = vmax.f32 %v11494, 0.0
        %v11531 = vmax.f32 %v11497, 0.0
        %v11532 = vmax.f32 %v11499, 0.0
        %v11533 = vpack.c.bf16 %v11502, %v11501
        %v11534 = vpack.c.bf16 %v11504, %v11503
        %v11535 = vpack.c.bf16 %v11506, %v11505
        %v11536 = vpack.c.bf16 %v11508, %v11507
        %v11537 = vpack.c.bf16 %v11510, %v11509
        %v11538 = vpack.c.bf16 %v11512, %v11511
        %v11539 = vpack.c.bf16 %v11514, %v11513
        %v11540 = vpack.c.bf16 %v11516, %v11515
        %v11541 = vpack.c.bf16 %v11518, %v11517
        %v11542 = vpack.c.bf16 %v11520, %v11519
        %v11543 = vpack.c.bf16 %v11522, %v11521
        %v11544 = vpack.c.bf16 %v11524, %v11523
        %v11545 = vpack.c.bf16 %v11526, %v11525
        %v11546 = vpack.c.bf16 %v11528, %v11527
        %v11547 = vpack.c.bf16 %v11530, %v11529
        %v11548 = vpack.c.bf16 %v11532, %v11531
        %v11549 = vld [vmem:[%s7] sm:$0xff]
        %v11550 = vld [vmem:[%s7 + $0x8] sm:$0xff]
        %v11551 = vld [vmem:[%s7 + $0x10] sm:$0xff]
        %v11552 = vld [vmem:[%s7 + $0x18] sm:$0xff]
        %v11553 = vld [vmem:[%s7 + $0x20] sm:$0xff]
        %v11554 = vld [vmem:[%s7 + $0x28] sm:$0xff]
        %v11555 = vld [vmem:[%s7 + $0x30] sm:$0xff]
        %v11556 = vld [vmem:[%s7 + $0x38] sm:$0xff]
        %v11557 = vld [vmem:[%s7 + $0x40] sm:$0xff]
        %v11558 = vld [vmem:[%s7 + $0x48] sm:$0xff]
        %v11559 = vld [vmem:[%s7 + $0x50] sm:$0xff]
        %v11560 = vld [vmem:[%s7 + $0x58] sm:$0xff]
        %v11561 = vld [vmem:[%s7 + $0x60] sm:$0xff]
        %v11562 = vld [vmem:[%s7 + $0x68] sm:$0xff]
        %v11563 = vld [vmem:[%s7 + $0x70] sm:$0xff]
        %v11564 = vld [vmem:[%s7 + $0x78] sm:$0xff]
        %v11581 = vunpack.c.l.b16 %v11549
        %v11582 = vunpack.c.h.b16 %v11549
        %v11583 = vunpack.c.l.b16 %v11550
        %v11584 = vunpack.c.h.b16 %v11550
        %v11585 = vunpack.c.l.b16 %v11551
        %v11586 = vunpack.c.h.b16 %v11551
        %v11587 = vunpack.c.l.b16 %v11552
        %v11588 = vunpack.c.h.b16 %v11552
        %v11589 = vunpack.c.l.b16 %v11553
        %v11590 = vunpack.c.h.b16 %v11553
        %v11591 = vunpack.c.l.b16 %v11554
        %v11592 = vunpack.c.h.b16 %v11554
        %v11593 = vunpack.c.l.b16 %v11555
        %v11594 = vunpack.c.h.b16 %v11555
        %v11595 = vunpack.c.l.b16 %v11556
        %v11596 = vunpack.c.h.b16 %v11556
        %v11597 = vunpack.c.l.b16 %v11557
        %v11598 = vunpack.c.h.b16 %v11557
        %v11599 = vunpack.c.l.b16 %v11558
        %v11600 = vunpack.c.h.b16 %v11558
        %v11601 = vunpack.c.l.b16 %v11559
        %v11602 = vunpack.c.h.b16 %v11559
        %v11603 = vunpack.c.l.b16 %v11560
        %v11604 = vunpack.c.h.b16 %v11560
        %v11605 = vunpack.c.l.b16 %v11561
        %v11606 = vunpack.c.h.b16 %v11561
        %v11607 = vunpack.c.l.b16 %v11562
        %v11608 = vunpack.c.h.b16 %v11562
        %v11609 = vunpack.c.l.b16 %v11563
        %v11610 = vunpack.c.h.b16 %v11563
        %v11611 = vunpack.c.l.b16 %v11564
        %v11612 = vunpack.c.h.b16 %v11564
        %v11613 = vpack.c.b16 %v11583, %v11581
        %v11614 = vpack.c.b16 %v11584, %v11582
        %v11615 = vpack.c.b16 %v11587, %v11585
        %v11616 = vpack.c.b16 %v11588, %v11586
        %v11617 = vpack.c.b16 %v11591, %v11589
        %v11618 = vpack.c.b16 %v11592, %v11590
        %v11619 = vpack.c.b16 %v11595, %v11593
        %v11620 = vpack.c.b16 %v11596, %v11594
        %v11621 = vpack.c.b16 %v11599, %v11597
        %v11622 = vpack.c.b16 %v11600, %v11598
        %v11623 = vpack.c.b16 %v11603, %v11601
        %v11624 = vpack.c.b16 %v11604, %v11602
        %v11625 = vpack.c.b16 %v11607, %v11605
        %v11626 = vpack.c.b16 %v11608, %v11606
        %v11627 = vpack.c.b16 %v11611, %v11609
        %v11628 = vpack.c.b16 %v11612, %v11610
        %11645 = vmatpush.bf16.msra.mxu0 %v11627
        %11646 = vmatpush.bf16.msra.mxu0 %v11625
        %11647 = vmatpush.bf16.msra.mxu0 %v11623
        %11648 = vmatpush.bf16.msra.mxu0 %v11621
        %11649 = vmatpush.bf16.msra.mxu0 %v11619
        %11650 = vmatpush.bf16.msra.mxu0 %v11617
        %11651 = vmatpush.bf16.msra.mxu0 %v11615
        %11652 = vmatpush.bf16.msra.mxu0 %v11613
        %11653 = vmatmul.bf16.gmra.mxu0 %v11533
        %v11654 = vpop.f32.mrf.mxu0
        %v11655 = vadd.f32 0.0, %v11654
        %v11656 = vpop.f32.mrf.mxu0
        %v11657 = vadd.f32 0.0, %v11656
        %11658 = vmatmul.bf16.gmra.mxu0 %v11534
        %v11659 = vpop.f32.mrf.mxu0
        %v11660 = vadd.f32 0.0, %v11659
        %v11661 = vpop.f32.mrf.mxu0
        %v11662 = vadd.f32 0.0, %v11661
        %11663 = vmatmul.bf16.gmra.mxu0 %v11535
        %v11664 = vpop.f32.mrf.mxu0
        %v11665 = vadd.f32 0.0, %v11664
        %v11666 = vpop.f32.mrf.mxu0
        %v11667 = vadd.f32 0.0, %v11666
        %11668 = vmatmul.bf16.gmra.mxu0 %v11536
        %v11669 = vpop.f32.mrf.mxu0
        %v11670 = vadd.f32 0.0, %v11669
        %v11671 = vpop.f32.mrf.mxu0
        %v11672 = vadd.f32 0.0, %v11671
        %11673 = vmatmul.bf16.gmra.mxu0 %v11537
        %v11674 = vpop.f32.mrf.mxu0
        %v11675 = vadd.f32 0.0, %v11674
        %v11676 = vpop.f32.mrf.mxu0
        %v11677 = vadd.f32 0.0, %v11676
        %11678 = vmatmul.bf16.gmra.mxu0 %v11538
        %v11679 = vpop.f32.mrf.mxu0
        %v11680 = vadd.f32 0.0, %v11679
        %v11681 = vpop.f32.mrf.mxu0
        %v11682 = vadd.f32 0.0, %v11681
        %11683 = vmatmul.bf16.gmra.mxu0 %v11539
        %v11684 = vpop.f32.mrf.mxu0
        %v11685 = vadd.f32 0.0, %v11684
        %v11686 = vpop.f32.mrf.mxu0
        %v11687 = vadd.f32 0.0, %v11686
        %11688 = vmatmul.bf16.gmra.mxu0 %v11540
        %v11689 = vpop.f32.mrf.mxu0
        %v11690 = vadd.f32 0.0, %v11689
        %v11691 = vpop.f32.mrf.mxu0
        %v11692 = vadd.f32 0.0, %v11691
        %11693 = vmatmul.bf16.gmra.mxu0 %v11541
        %v11694 = vpop.f32.mrf.mxu0
        %v11695 = vadd.f32 0.0, %v11694
        %v11696 = vpop.f32.mrf.mxu0
        %v11697 = vadd.f32 0.0, %v11696
        %11698 = vmatmul.bf16.gmra.mxu0 %v11542
        %v11699 = vpop.f32.mrf.mxu0
        %v11700 = vadd.f32 0.0, %v11699
        %v11701 = vpop.f32.mrf.mxu0
        %v11702 = vadd.f32 0.0, %v11701
        %11703 = vmatmul.bf16.gmra.mxu0 %v11543
        %v11704 = vpop.f32.mrf.mxu0
        %v11705 = vadd.f32 0.0, %v11704
        %v11706 = vpop.f32.mrf.mxu0
        %v11707 = vadd.f32 0.0, %v11706
        %11708 = vmatmul.bf16.gmra.mxu0 %v11544
        %v11709 = vpop.f32.mrf.mxu0
        %v11710 = vadd.f32 0.0, %v11709
        %v11711 = vpop.f32.mrf.mxu0
        %v11712 = vadd.f32 0.0, %v11711
        %11713 = vmatmul.bf16.gmra.mxu0 %v11545
        %v11714 = vpop.f32.mrf.mxu0
        %v11715 = vadd.f32 0.0, %v11714
        %v11716 = vpop.f32.mrf.mxu0
        %v11717 = vadd.f32 0.0, %v11716
        %11718 = vmatmul.bf16.gmra.mxu0 %v11546
        %v11719 = vpop.f32.mrf.mxu0
        %v11720 = vadd.f32 0.0, %v11719
        %v11721 = vpop.f32.mrf.mxu0
        %v11722 = vadd.f32 0.0, %v11721
        %11723 = vmatmul.bf16.gmra.mxu0 %v11547
        %v11724 = vpop.f32.mrf.mxu0
        %v11725 = vadd.f32 0.0, %v11724
        %v11726 = vpop.f32.mrf.mxu0
        %v11727 = vadd.f32 0.0, %v11726
        %11728 = vmatmul.bf16.gmra.mxu0 %v11548
        %v11729 = vpop.f32.mrf.mxu0
        %v11730 = vadd.f32 0.0, %v11729
        %v11731 = vpop.f32.mrf.mxu0
        %v11732 = vadd.f32 0.0, %v11731
        %11733 = vdwg.mxu0
        %11734 = vmatpush.bf16.msra.mxu0 %v11628
        %11735 = vmatpush.bf16.msra.mxu0 %v11626
        %11736 = vmatpush.bf16.msra.mxu0 %v11624
        %11737 = vmatpush.bf16.msra.mxu0 %v11622
        %11738 = vmatpush.bf16.msra.mxu0 %v11620
        %11739 = vmatpush.bf16.msra.mxu0 %v11618
        %11740 = vmatpush.bf16.msra.mxu0 %v11616
        %11741 = vmatpush.bf16.msra.mxu0 %v11614
        %11742 = vmatmul.bf16.gmra.mxu0 %v11533
        %v11743 = vpop.f32.mrf.mxu0
        %v11744 = vadd.f32 0.0, %v11743
        %v11745 = vpop.f32.mrf.mxu0
        %v11746 = vadd.f32 0.0, %v11745
        %11747 = vmatmul.bf16.gmra.mxu0 %v11534
        %v11748 = vpop.f32.mrf.mxu0
        %v11749 = vadd.f32 0.0, %v11748
        %v11750 = vpop.f32.mrf.mxu0
        %v11751 = vadd.f32 0.0, %v11750
        %11752 = vmatmul.bf16.gmra.mxu0 %v11535
        %v11753 = vpop.f32.mrf.mxu0
        %v11754 = vadd.f32 0.0, %v11753
        %v11755 = vpop.f32.mrf.mxu0
        %v11756 = vadd.f32 0.0, %v11755
        %11757 = vmatmul.bf16.gmra.mxu0 %v11536
        %v11758 = vpop.f32.mrf.mxu0
        %v11759 = vadd.f32 0.0, %v11758
        %v11760 = vpop.f32.mrf.mxu0
        %v11761 = vadd.f32 0.0, %v11760
        %11762 = vmatmul.bf16.gmra.mxu0 %v11537
        %v11763 = vpop.f32.mrf.mxu0
        %v11764 = vadd.f32 0.0, %v11763
        %v11765 = vpop.f32.mrf.mxu0
        %v11766 = vadd.f32 0.0, %v11765
        %11767 = vmatmul.bf16.gmra.mxu0 %v11538
        %v11768 = vpop.f32.mrf.mxu0
        %v11769 = vadd.f32 0.0, %v11768
        %v11770 = vpop.f32.mrf.mxu0
        %v11771 = vadd.f32 0.0, %v11770
        %11772 = vmatmul.bf16.gmra.mxu0 %v11539
        %v11773 = vpop.f32.mrf.mxu0
        %v11774 = vadd.f32 0.0, %v11773
        %v11775 = vpop.f32.mrf.mxu0
        %v11776 = vadd.f32 0.0, %v11775
        %11777 = vmatmul.bf16.gmra.mxu0 %v11540
        %v11778 = vpop.f32.mrf.mxu0
        %v11779 = vadd.f32 0.0, %v11778
        %v11780 = vpop.f32.mrf.mxu0
        %v11781 = vadd.f32 0.0, %v11780
        %11782 = vmatmul.bf16.gmra.mxu0 %v11541
        %v11783 = vpop.f32.mrf.mxu0
        %v11784 = vadd.f32 0.0, %v11783
        %v11785 = vpop.f32.mrf.mxu0
        %v11786 = vadd.f32 0.0, %v11785
        %11787 = vmatmul.bf16.gmra.mxu0 %v11542
        %v11788 = vpop.f32.mrf.mxu0
        %v11789 = vadd.f32 0.0, %v11788
        %v11790 = vpop.f32.mrf.mxu0
        %v11791 = vadd.f32 0.0, %v11790
        %11792 = vmatmul.bf16.gmra.mxu0 %v11543
        %v11793 = vpop.f32.mrf.mxu0
        %v11794 = vadd.f32 0.0, %v11793
        %v11795 = vpop.f32.mrf.mxu0
        %v11796 = vadd.f32 0.0, %v11795
        %11797 = vmatmul.bf16.gmra.mxu0 %v11544
        %v11798 = vpop.f32.mrf.mxu0
        %v11799 = vadd.f32 0.0, %v11798
        %v11800 = vpop.f32.mrf.mxu0
        %v11801 = vadd.f32 0.0, %v11800
        %11802 = vmatmul.bf16.gmra.mxu0 %v11545
        %v11803 = vpop.f32.mrf.mxu0
        %v11804 = vadd.f32 0.0, %v11803
        %v11805 = vpop.f32.mrf.mxu0
        %v11806 = vadd.f32 0.0, %v11805
        %11807 = vmatmul.bf16.gmra.mxu0 %v11546
        %v11808 = vpop.f32.mrf.mxu0
        %v11809 = vadd.f32 0.0, %v11808
        %v11810 = vpop.f32.mrf.mxu0
        %v11811 = vadd.f32 0.0, %v11810
        %11812 = vmatmul.bf16.gmra.mxu0 %v11547
        %v11813 = vpop.f32.mrf.mxu0
        %v11814 = vadd.f32 0.0, %v11813
        %v11815 = vpop.f32.mrf.mxu0
        %v11816 = vadd.f32 0.0, %v11815
        %11817 = vmatmul.bf16.gmra.mxu0 %v11548
        %v11818 = vpop.f32.mrf.mxu0
        %v11819 = vadd.f32 0.0, %v11818
        %v11820 = vpop.f32.mrf.mxu0
        %v11821 = vadd.f32 0.0, %v11820
        %11822 = vdwg.mxu0
        %11823 = vst [vmem:[#allocation5] sm:$0xff] %v11655
        %11824 = vst [vmem:[#allocation5 + $0x8] sm:$0xff] %v11744
        %11825 = vst [vmem:[#allocation5 + $0x10] sm:$0xff] %v11657
        %11826 = vst [vmem:[#allocation5 + $0x18] sm:$0xff] %v11746
        %11827 = vst [vmem:[#allocation5 + $0x20] sm:$0xff] %v11660
        %11828 = vst [vmem:[#allocation5 + $0x28] sm:$0xff] %v11749
        %11829 = vst [vmem:[#allocation5 + $0x30] sm:$0xff] %v11662
        %11830 = vst [vmem:[#allocation5 + $0x38] sm:$0xff] %v11751
        %11831 = vst [vmem:[#allocation5 + $0x40] sm:$0xff] %v11665
        %11832 = vst [vmem:[#allocation5 + $0x48] sm:$0xff] %v11754
        %11833 = vst [vmem:[#allocation5 + $0x50] sm:$0xff] %v11667
        %11834 = vst [vmem:[#allocation5 + $0x58] sm:$0xff] %v11756
        %11835 = vst [vmem:[#allocation5 + $0x60] sm:$0xff] %v11670
        %11836 = vst [vmem:[#allocation5 + $0x68] sm:$0xff] %v11759
        %11837 = vst [vmem:[#allocation5 + $0x70] sm:$0xff] %v11672
        %11838 = vst [vmem:[#allocation5 + $0x78] sm:$0xff] %v11761
        %11839 = vst [vmem:[#allocation5 + $0x80] sm:$0xff] %v11675
        %11840 = vst [vmem:[#allocation5 + $0x88] sm:$0xff] %v11764
        %11841 = vst [vmem:[#allocation5 + $0x90] sm:$0xff] %v11677
        %11842 = vst [vmem:[#allocation5 + $0x98] sm:$0xff] %v11766
        %11843 = vst [vmem:[#allocation5 + $0xa0] sm:$0xff] %v11680
        %11844 = vst [vmem:[#allocation5 + $0xa8] sm:$0xff] %v11769
        %11845 = vst [vmem:[#allocation5 + $0xb0] sm:$0xff] %v11682
        %11846 = vst [vmem:[#allocation5 + $0xb8] sm:$0xff] %v11771
        %11847 = vst [vmem:[#allocation5 + $0xc0] sm:$0xff] %v11685
        %11848 = vst [vmem:[#allocation5 + $0xc8] sm:$0xff] %v11774
        %11849 = vst [vmem:[#allocation5 + $0xd0] sm:$0xff] %v11687
        %11850 = vst [vmem:[#allocation5 + $0xd8] sm:$0xff] %v11776
        %11851 = vst [vmem:[#allocation5 + $0xe0] sm:$0xff] %v11690
        %11852 = vst [vmem:[#allocation5 + $0xe8] sm:$0xff] %v11779
        %11853 = vst [vmem:[#allocation5 + $0xf0] sm:$0xff] %v11692
        %11854 = vst [vmem:[#allocation5 + $0xf8] sm:$0xff] %v11781
        %11855 = vst [vmem:[#allocation5 + $0x100] sm:$0xff] %v11695
        %11856 = vst [vmem:[#allocation5 + $0x108] sm:$0xff] %v11784
        %11857 = vst [vmem:[#allocation5 + $0x110] sm:$0xff] %v11697
        %11858 = vst [vmem:[#allocation5 + $0x118] sm:$0xff] %v11786
        %11859 = vst [vmem:[#allocation5 + $0x120] sm:$0xff] %v11700
        %11860 = vst [vmem:[#allocation5 + $0x128] sm:$0xff] %v11789
        %11861 = vst [vmem:[#allocation5 + $0x130] sm:$0xff] %v11702
        %11862 = vst [vmem:[#allocation5 + $0x138] sm:$0xff] %v11791
        %11863 = vst [vmem:[#allocation5 + $0x140] sm:$0xff] %v11705
        %11864 = vst [vmem:[#allocation5 + $0x148] sm:$0xff] %v11794
        %11865 = vst [vmem:[#allocation5 + $0x150] sm:$0xff] %v11707
        %11866 = vst [vmem:[#allocation5 + $0x158] sm:$0xff] %v11796
        %11867 = vst [vmem:[#allocation5 + $0x160] sm:$0xff] %v11710
        %11868 = vst [vmem:[#allocation5 + $0x168] sm:$0xff] %v11799
        %11869 = vst [vmem:[#allocation5 + $0x170] sm:$0xff] %v11712
        %11870 = vst [vmem:[#allocation5 + $0x178] sm:$0xff] %v11801
        %11871 = vst [vmem:[#allocation5 + $0x180] sm:$0xff] %v11715
        %11872 = vst [vmem:[#allocation5 + $0x188] sm:$0xff] %v11804
        %11873 = vst [vmem:[#allocation5 + $0x190] sm:$0xff] %v11717
        %11874 = vst [vmem:[#allocation5 + $0x198] sm:$0xff] %v11806
        %11875 = vst [vmem:[#allocation5 + $0x1a0] sm:$0xff] %v11720
        %11876 = vst [vmem:[#allocation5 + $0x1a8] sm:$0xff] %v11809
        %11877 = vst [vmem:[#allocation5 + $0x1b0] sm:$0xff] %v11722
        %11878 = vst [vmem:[#allocation5 + $0x1b8] sm:$0xff] %v11811
        %11879 = vst [vmem:[#allocation5 + $0x1c0] sm:$0xff] %v11725
        %11880 = vst [vmem:[#allocation5 + $0x1c8] sm:$0xff] %v11814
        %11881 = vst [vmem:[#allocation5 + $0x1d0] sm:$0xff] %v11727
        %11882 = vst [vmem:[#allocation5 + $0x1d8] sm:$0xff] %v11816
        %11883 = vst [vmem:[#allocation5 + $0x1e0] sm:$0xff] %v11730
        %11884 = vst [vmem:[#allocation5 + $0x1e8] sm:$0xff] %v11819
        %11885 = vst [vmem:[#allocation5 + $0x1f0] sm:$0xff] %v11732
        %11886 = vst [vmem:[#allocation5 + $0x1f8] sm:$0xff] %v11821
        %v11887 = vld [vmem:[#allocation5] sm:$0xff]
        %v11888 = vld [vmem:[#allocation5 + $0x8] sm:$0xff]
        %v11889 = vld [vmem:[#allocation5 + $0x10] sm:$0xff]
        %v11890 = vld [vmem:[#allocation5 + $0x18] sm:$0xff]
        %v11891 = vld [vmem:[#allocation5 + $0x20] sm:$0xff]
        %v11892 = vld [vmem:[#allocation5 + $0x28] sm:$0xff]
        %v11893 = vld [vmem:[#allocation5 + $0x30] sm:$0xff]
        %v11894 = vld [vmem:[#allocation5 + $0x38] sm:$0xff]
        %v11895 = vld [vmem:[#allocation5 + $0x40] sm:$0xff]
        %v11896 = vld [vmem:[#allocation5 + $0x48] sm:$0xff]
        %v11897 = vld [vmem:[#allocation5 + $0x50] sm:$0xff]
        %v11898 = vld [vmem:[#allocation5 + $0x58] sm:$0xff]
        %v11899 = vld [vmem:[#allocation5 + $0x60] sm:$0xff]
        %v11900 = vld [vmem:[#allocation5 + $0x68] sm:$0xff]
        %v11901 = vld [vmem:[#allocation5 + $0x70] sm:$0xff]
        %v11902 = vld [vmem:[#allocation5 + $0x78] sm:$0xff]
        %v11903 = vld [vmem:[#allocation5 + $0x80] sm:$0xff]
        %v11904 = vld [vmem:[#allocation5 + $0x88] sm:$0xff]
        %v11905 = vld [vmem:[#allocation5 + $0x90] sm:$0xff]
        %v11906 = vld [vmem:[#allocation5 + $0x98] sm:$0xff]
        %v11907 = vld [vmem:[#allocation5 + $0xa0] sm:$0xff]
        %v11908 = vld [vmem:[#allocation5 + $0xa8] sm:$0xff]
        %v11909 = vld [vmem:[#allocation5 + $0xb0] sm:$0xff]
        %v11910 = vld [vmem:[#allocation5 + $0xb8] sm:$0xff]
        %v11911 = vld [vmem:[#allocation5 + $0xc0] sm:$0xff]
        %v11912 = vld [vmem:[#allocation5 + $0xc8] sm:$0xff]
        %v11913 = vld [vmem:[#allocation5 + $0xd0] sm:$0xff]
        %v11914 = vld [vmem:[#allocation5 + $0xd8] sm:$0xff]
        %v11915 = vld [vmem:[#allocation5 + $0xe0] sm:$0xff]
        %v11916 = vld [vmem:[#allocation5 + $0xe8] sm:$0xff]
        %v11917 = vld [vmem:[#allocation5 + $0xf0] sm:$0xff]
        %v11918 = vld [vmem:[#allocation5 + $0xf8] sm:$0xff]
        %v11919 = vld [vmem:[#allocation5 + $0x100] sm:$0xff]
        %v11920 = vld [vmem:[#allocation5 + $0x108] sm:$0xff]
        %v11921 = vld [vmem:[#allocation5 + $0x110] sm:$0xff]
        %v11922 = vld [vmem:[#allocation5 + $0x118] sm:$0xff]
        %v11923 = vld [vmem:[#allocation5 + $0x120] sm:$0xff]
        %v11924 = vld [vmem:[#allocation5 + $0x128] sm:$0xff]
        %v11925 = vld [vmem:[#allocation5 + $0x130] sm:$0xff]
        %v11926 = vld [vmem:[#allocation5 + $0x138] sm:$0xff]
        %v11927 = vld [vmem:[#allocation5 + $0x140] sm:$0xff]
        %v11928 = vld [vmem:[#allocation5 + $0x148] sm:$0xff]
        %v11929 = vld [vmem:[#allocation5 + $0x150] sm:$0xff]
        %v11930 = vld [vmem:[#allocation5 + $0x158] sm:$0xff]
        %v11931 = vld [vmem:[#allocation5 + $0x160] sm:$0xff]
        %v11932 = vld [vmem:[#allocation5 + $0x168] sm:$0xff]
        %v11933 = vld [vmem:[#allocation5 + $0x170] sm:$0xff]
        %v11934 = vld [vmem:[#allocation5 + $0x178] sm:$0xff]
        %v11935 = vld [vmem:[#allocation5 + $0x180] sm:$0xff]
        %v11936 = vld [vmem:[#allocation5 + $0x188] sm:$0xff]
        %v11937 = vld [vmem:[#allocation5 + $0x190] sm:$0xff]
        %v11938 = vld [vmem:[#allocation5 + $0x198] sm:$0xff]
        %v11939 = vld [vmem:[#allocation5 + $0x1a0] sm:$0xff]
        %v11940 = vld [vmem:[#allocation5 + $0x1a8] sm:$0xff]
        %v11941 = vld [vmem:[#allocation5 + $0x1b0] sm:$0xff]
        %v11942 = vld [vmem:[#allocation5 + $0x1b8] sm:$0xff]
        %v11943 = vld [vmem:[#allocation5 + $0x1c0] sm:$0xff]
        %v11944 = vld [vmem:[#allocation5 + $0x1c8] sm:$0xff]
        %v11945 = vld [vmem:[#allocation5 + $0x1d0] sm:$0xff]
        %v11946 = vld [vmem:[#allocation5 + $0x1d8] sm:$0xff]
        %v11947 = vld [vmem:[#allocation5 + $0x1e0] sm:$0xff]
        %v11948 = vld [vmem:[#allocation5 + $0x1e8] sm:$0xff]
        %v11949 = vld [vmem:[#allocation5 + $0x1f0] sm:$0xff]
        %v11950 = vld [vmem:[#allocation5 + $0x1f8] sm:$0xff]
        %v11951 = vld [vmem:[#allocation4] sm:$0xf]
        %v11952 = vld [vmem:[#allocation4 + $0x4] sm:$0xf]
        %v11953 = vld [vmem:[#allocation4 + $0x8] sm:$0xf]
        %v11954 = vld [vmem:[#allocation4 + $0xc] sm:$0xf]
        %v11955 = vld [vmem:[#allocation4 + $0x10] sm:$0xf]
        %v11956 = vld [vmem:[#allocation4 + $0x14] sm:$0xf]
        %v11957 = vld [vmem:[#allocation4 + $0x18] sm:$0xf]
        %v11958 = vld [vmem:[#allocation4 + $0x1c] sm:$0xf]
        %v11959 = vld [vmem:[#allocation4 + $0x20] sm:$0xf]
        %v11960 = vld [vmem:[#allocation4 + $0x24] sm:$0xf]
        %v11961 = vld [vmem:[#allocation4 + $0x28] sm:$0xf]
        %v11962 = vld [vmem:[#allocation4 + $0x2c] sm:$0xf]
        %v11963 = vld [vmem:[#allocation4 + $0x30] sm:$0xf]
        %v11964 = vld [vmem:[#allocation4 + $0x34] sm:$0xf]
        %v11965 = vld [vmem:[#allocation4 + $0x38] sm:$0xf]
        %v11966 = vld [vmem:[#allocation4 + $0x3c] sm:$0xf]
        %v11967 = vld [vmem:[#allocation4 + $0x40] sm:$0xf]
        %v11968 = vld [vmem:[#allocation4 + $0x44] sm:$0xf]
        %v11969 = vld [vmem:[#allocation4 + $0x48] sm:$0xf]
        %v11970 = vld [vmem:[#allocation4 + $0x4c] sm:$0xf]
        %v11971 = vld [vmem:[#allocation4 + $0x50] sm:$0xf]
        %v11972 = vld [vmem:[#allocation4 + $0x54] sm:$0xf]
        %v11973 = vld [vmem:[#allocation4 + $0x58] sm:$0xf]
        %v11974 = vld [vmem:[#allocation4 + $0x5c] sm:$0xf]
        %v11975 = vld [vmem:[#allocation4 + $0x60] sm:$0xf]
        %v11976 = vld [vmem:[#allocation4 + $0x64] sm:$0xf]
        %v11977 = vld [vmem:[#allocation4 + $0x68] sm:$0xf]
        %v11978 = vld [vmem:[#allocation4 + $0x6c] sm:$0xf]
        %v11979 = vld [vmem:[#allocation4 + $0x70] sm:$0xf]
        %v11980 = vld [vmem:[#allocation4 + $0x74] sm:$0xf]
        %v11981 = vld [vmem:[#allocation4 + $0x78] sm:$0xf]
        %v11982 = vld [vmem:[#allocation4 + $0x7c] sm:$0xf]
        %v11983 = vld [vmem:[%s9] sm:$0xff]
        %v11984 = vld [vmem:[%s9 + $0x8] sm:$0xff]
        %v11985 = vld [vmem:[%s9 + $0x10] sm:$0xff]
        %v11986 = vld [vmem:[%s9 + $0x18] sm:$0xff]
        %v11987 = vld [vmem:[%s9 + $0x20] sm:$0xff]
        %v11988 = vld [vmem:[%s9 + $0x28] sm:$0xff]
        %v11989 = vld [vmem:[%s9 + $0x30] sm:$0xff]
        %v11990 = vld [vmem:[%s9 + $0x38] sm:$0xff]
        %v11991 = vld [vmem:[%s9 + $0x40] sm:$0xff]
        %v11992 = vld [vmem:[%s9 + $0x48] sm:$0xff]
        %v11993 = vld [vmem:[%s9 + $0x50] sm:$0xff]
        %v11994 = vld [vmem:[%s9 + $0x58] sm:$0xff]
        %v11995 = vld [vmem:[%s9 + $0x60] sm:$0xff]
        %v11996 = vld [vmem:[%s9 + $0x68] sm:$0xff]
        %v11997 = vld [vmem:[%s9 + $0x70] sm:$0xff]
        %v11998 = vld [vmem:[%s9 + $0x78] sm:$0xff]
        %v12031 = vunpack.c.l.b16 %v11951
        %v12032 = vunpack.c.l.b16 %v11952
        %v12033 = vunpack.c.l.b16 %v11953
        %v12034 = vunpack.c.l.b16 %v11954
        %v12035 = vunpack.c.l.b16 %v11955
        %v12036 = vunpack.c.l.b16 %v11956
        %v12037 = vunpack.c.l.b16 %v11957
        %v12038 = vunpack.c.l.b16 %v11958
        %v12039 = vunpack.c.l.b16 %v11959
        %v12040 = vunpack.c.l.b16 %v11960
        %v12041 = vunpack.c.l.b16 %v11961
        %v12042 = vunpack.c.l.b16 %v11962
        %v12043 = vunpack.c.l.b16 %v11963
        %v12044 = vunpack.c.l.b16 %v11964
        %v12045 = vunpack.c.l.b16 %v11965
        %v12046 = vunpack.c.l.b16 %v11966
        %v12047 = vunpack.c.l.b16 %v11967
        %v12048 = vunpack.c.l.b16 %v11968
        %v12049 = vunpack.c.l.b16 %v11969
        %v12050 = vunpack.c.l.b16 %v11970
        %v12051 = vunpack.c.l.b16 %v11971
        %v12052 = vunpack.c.l.b16 %v11972
        %v12053 = vunpack.c.l.b16 %v11973
        %v12054 = vunpack.c.l.b16 %v11974
        %v12055 = vunpack.c.l.b16 %v11975
        %v12056 = vunpack.c.l.b16 %v11976
        %v12057 = vunpack.c.l.b16 %v11977
        %v12058 = vunpack.c.l.b16 %v11978
        %v12059 = vunpack.c.l.b16 %v11979
        %v12060 = vunpack.c.l.b16 %v11980
        %v12061 = vunpack.c.l.b16 %v11981
        %v12062 = vunpack.c.l.b16 %v11982
        %v12063 = vpack.c.b16 %v12032, %v12031
        %v12064 = vpack.c.b16 %v12034, %v12033
        %v12065 = vpack.c.b16 %v12036, %v12035
        %v12066 = vpack.c.b16 %v12038, %v12037
        %v12067 = vpack.c.b16 %v12040, %v12039
        %v12068 = vpack.c.b16 %v12042, %v12041
        %v12069 = vpack.c.b16 %v12044, %v12043
        %v12070 = vpack.c.b16 %v12046, %v12045
        %v12071 = vpack.c.b16 %v12048, %v12047
        %v12072 = vpack.c.b16 %v12050, %v12049
        %v12073 = vpack.c.b16 %v12052, %v12051
        %v12074 = vpack.c.b16 %v12054, %v12053
        %v12075 = vpack.c.b16 %v12056, %v12055
        %v12076 = vpack.c.b16 %v12058, %v12057
        %v12077 = vpack.c.b16 %v12060, %v12059
        %v12078 = vpack.c.b16 %v12062, %v12061
        %v12111 = vunpack.c.l.b16 %v11983
        %v12112 = vunpack.c.h.b16 %v11983
        %v12113 = vunpack.c.l.b16 %v11984
        %v12114 = vunpack.c.h.b16 %v11984
        %v12115 = vunpack.c.l.b16 %v11985
        %v12116 = vunpack.c.h.b16 %v11985
        %v12117 = vunpack.c.l.b16 %v11986
        %v12118 = vunpack.c.h.b16 %v11986
        %v12119 = vunpack.c.l.b16 %v11987
        %v12120 = vunpack.c.h.b16 %v11987
        %v12121 = vunpack.c.l.b16 %v11988
        %v12122 = vunpack.c.h.b16 %v11988
        %v12123 = vunpack.c.l.b16 %v11989
        %v12124 = vunpack.c.h.b16 %v11989
        %v12125 = vunpack.c.l.b16 %v11990
        %v12126 = vunpack.c.h.b16 %v11990
        %v12127 = vunpack.c.l.b16 %v11991
        %v12128 = vunpack.c.h.b16 %v11991
        %v12129 = vunpack.c.l.b16 %v11992
        %v12130 = vunpack.c.h.b16 %v11992
        %v12131 = vunpack.c.l.b16 %v11993
        %v12132 = vunpack.c.h.b16 %v11993
        %v12133 = vunpack.c.l.b16 %v11994
        %v12134 = vunpack.c.h.b16 %v11994
        %v12135 = vunpack.c.l.b16 %v11995
        %v12136 = vunpack.c.h.b16 %v11995
        %v12137 = vunpack.c.l.b16 %v11996
        %v12138 = vunpack.c.h.b16 %v11996
        %v12139 = vunpack.c.l.b16 %v11997
        %v12140 = vunpack.c.h.b16 %v11997
        %v12141 = vunpack.c.l.b16 %v11998
        %v12142 = vunpack.c.h.b16 %v11998
        %v12143 = vpack.c.b16 %v12113, %v12111
        %v12144 = vpack.c.b16 %v12114, %v12112
        %v12145 = vpack.c.b16 %v12117, %v12115
        %v12146 = vpack.c.b16 %v12118, %v12116
        %v12147 = vpack.c.b16 %v12121, %v12119
        %v12148 = vpack.c.b16 %v12122, %v12120
        %v12149 = vpack.c.b16 %v12125, %v12123
        %v12150 = vpack.c.b16 %v12126, %v12124
        %v12151 = vpack.c.b16 %v12129, %v12127
        %v12152 = vpack.c.b16 %v12130, %v12128
        %v12153 = vpack.c.b16 %v12133, %v12131
        %v12154 = vpack.c.b16 %v12134, %v12132
        %v12155 = vpack.c.b16 %v12137, %v12135
        %v12156 = vpack.c.b16 %v12138, %v12136
        %v12157 = vpack.c.b16 %v12141, %v12139
        %v12158 = vpack.c.b16 %v12142, %v12140
        %12175 = vmatpush.bf16.msra.mxu0 %v12157
        %12176 = vmatpush.bf16.msra.mxu0 %v12155
        %12177 = vmatpush.bf16.msra.mxu0 %v12153
        %12178 = vmatpush.bf16.msra.mxu0 %v12151
        %12179 = vmatpush.bf16.msra.mxu0 %v12149
        %12180 = vmatpush.bf16.msra.mxu0 %v12147
        %12181 = vmatpush.bf16.msra.mxu0 %v12145
        %12182 = vmatpush.bf16.msra.mxu0 %v12143
        %12183 = vmatmul.bf16.gmra.mxu0 %v12063
        %v12184 = vpop.f32.mrf.mxu0
        %v12185 = vadd.f32 0.0, %v12184
        %v12186 = vpop.f32.mrf.mxu0
        %v12187 = vadd.f32 0.0, %v12186
        %12188 = vmatmul.bf16.gmra.mxu0 %v12064
        %v12189 = vpop.f32.mrf.mxu0
        %v12190 = vadd.f32 0.0, %v12189
        %v12191 = vpop.f32.mrf.mxu0
        %v12192 = vadd.f32 0.0, %v12191
        %12193 = vmatmul.bf16.gmra.mxu0 %v12065
        %v12194 = vpop.f32.mrf.mxu0
        %v12195 = vadd.f32 0.0, %v12194
        %v12196 = vpop.f32.mrf.mxu0
        %v12197 = vadd.f32 0.0, %v12196
        %12198 = vmatmul.bf16.gmra.mxu0 %v12066
        %v12199 = vpop.f32.mrf.mxu0
        %v12200 = vadd.f32 0.0, %v12199
        %v12201 = vpop.f32.mrf.mxu0
        %v12202 = vadd.f32 0.0, %v12201
        %12203 = vmatmul.bf16.gmra.mxu0 %v12067
        %v12204 = vpop.f32.mrf.mxu0
        %v12205 = vadd.f32 0.0, %v12204
        %v12206 = vpop.f32.mrf.mxu0
        %v12207 = vadd.f32 0.0, %v12206
        %12208 = vmatmul.bf16.gmra.mxu0 %v12068
        %v12209 = vpop.f32.mrf.mxu0
        %v12210 = vadd.f32 0.0, %v12209
        %v12211 = vpop.f32.mrf.mxu0
        %v12212 = vadd.f32 0.0, %v12211
        %12213 = vmatmul.bf16.gmra.mxu0 %v12069
        %v12214 = vpop.f32.mrf.mxu0
        %v12215 = vadd.f32 0.0, %v12214
        %v12216 = vpop.f32.mrf.mxu0
        %v12217 = vadd.f32 0.0, %v12216
        %12218 = vmatmul.bf16.gmra.mxu0 %v12070
        %v12219 = vpop.f32.mrf.mxu0
        %v12220 = vadd.f32 0.0, %v12219
        %v12221 = vpop.f32.mrf.mxu0
        %v12222 = vadd.f32 0.0, %v12221
        %12223 = vmatmul.bf16.gmra.mxu0 %v12071
        %v12224 = vpop.f32.mrf.mxu0
        %v12225 = vadd.f32 0.0, %v12224
        %v12226 = vpop.f32.mrf.mxu0
        %v12227 = vadd.f32 0.0, %v12226
        %12228 = vmatmul.bf16.gmra.mxu0 %v12072
        %v12229 = vpop.f32.mrf.mxu0
        %v12230 = vadd.f32 0.0, %v12229
        %v12231 = vpop.f32.mrf.mxu0
        %v12232 = vadd.f32 0.0, %v12231
        %12233 = vmatmul.bf16.gmra.mxu0 %v12073
        %v12234 = vpop.f32.mrf.mxu0
        %v12235 = vadd.f32 0.0, %v12234
        %v12236 = vpop.f32.mrf.mxu0
        %v12237 = vadd.f32 0.0, %v12236
        %12238 = vmatmul.bf16.gmra.mxu0 %v12074
        %v12239 = vpop.f32.mrf.mxu0
        %v12240 = vadd.f32 0.0, %v12239
        %v12241 = vpop.f32.mrf.mxu0
        %v12242 = vadd.f32 0.0, %v12241
        %12243 = vmatmul.bf16.gmra.mxu0 %v12075
        %v12244 = vpop.f32.mrf.mxu0
        %v12245 = vadd.f32 0.0, %v12244
        %v12246 = vpop.f32.mrf.mxu0
        %v12247 = vadd.f32 0.0, %v12246
        %12248 = vmatmul.bf16.gmra.mxu0 %v12076
        %v12249 = vpop.f32.mrf.mxu0
        %v12250 = vadd.f32 0.0, %v12249
        %v12251 = vpop.f32.mrf.mxu0
        %v12252 = vadd.f32 0.0, %v12251
        %12253 = vmatmul.bf16.gmra.mxu0 %v12077
        %v12254 = vpop.f32.mrf.mxu0
        %v12255 = vadd.f32 0.0, %v12254
        %v12256 = vpop.f32.mrf.mxu0
        %v12257 = vadd.f32 0.0, %v12256
        %12258 = vmatmul.bf16.gmra.mxu0 %v12078
        %v12259 = vpop.f32.mrf.mxu0
        %v12260 = vadd.f32 0.0, %v12259
        %v12261 = vpop.f32.mrf.mxu0
        %v12262 = vadd.f32 0.0, %v12261
        %12263 = vdwg.mxu0
        %12264 = vmatpush.bf16.msra.mxu0 %v12158
        %12265 = vmatpush.bf16.msra.mxu0 %v12156
        %12266 = vmatpush.bf16.msra.mxu0 %v12154
        %12267 = vmatpush.bf16.msra.mxu0 %v12152
        %12268 = vmatpush.bf16.msra.mxu0 %v12150
        %12269 = vmatpush.bf16.msra.mxu0 %v12148
        %12270 = vmatpush.bf16.msra.mxu0 %v12146
        %12271 = vmatpush.bf16.msra.mxu0 %v12144
        %12272 = vmatmul.bf16.gmra.mxu0 %v12063
        %v12273 = vpop.f32.mrf.mxu0
        %v12274 = vadd.f32 0.0, %v12273
        %v12275 = vpop.f32.mrf.mxu0
        %v12276 = vadd.f32 0.0, %v12275
        %12277 = vmatmul.bf16.gmra.mxu0 %v12064
        %v12278 = vpop.f32.mrf.mxu0
        %v12279 = vadd.f32 0.0, %v12278
        %v12280 = vpop.f32.mrf.mxu0
        %v12281 = vadd.f32 0.0, %v12280
        %12282 = vmatmul.bf16.gmra.mxu0 %v12065
        %v12283 = vpop.f32.mrf.mxu0
        %v12284 = vadd.f32 0.0, %v12283
        %v12285 = vpop.f32.mrf.mxu0
        %v12286 = vadd.f32 0.0, %v12285
        %12287 = vmatmul.bf16.gmra.mxu0 %v12066
        %v12288 = vpop.f32.mrf.mxu0
        %v12289 = vadd.f32 0.0, %v12288
        %v12290 = vpop.f32.mrf.mxu0
        %v12291 = vadd.f32 0.0, %v12290
        %12292 = vmatmul.bf16.gmra.mxu0 %v12067
        %v12293 = vpop.f32.mrf.mxu0
        %v12294 = vadd.f32 0.0, %v12293
        %v12295 = vpop.f32.mrf.mxu0
        %v12296 = vadd.f32 0.0, %v12295
        %12297 = vmatmul.bf16.gmra.mxu0 %v12068
        %v12298 = vpop.f32.mrf.mxu0
        %v12299 = vadd.f32 0.0, %v12298
        %v12300 = vpop.f32.mrf.mxu0
        %v12301 = vadd.f32 0.0, %v12300
        %12302 = vmatmul.bf16.gmra.mxu0 %v12069
        %v12303 = vpop.f32.mrf.mxu0
        %v12304 = vadd.f32 0.0, %v12303
        %v12305 = vpop.f32.mrf.mxu0
        %v12306 = vadd.f32 0.0, %v12305
        %12307 = vmatmul.bf16.gmra.mxu0 %v12070
        %v12308 = vpop.f32.mrf.mxu0
        %v12309 = vadd.f32 0.0, %v12308
        %v12310 = vpop.f32.mrf.mxu0
        %v12311 = vadd.f32 0.0, %v12310
        %12312 = vmatmul.bf16.gmra.mxu0 %v12071
        %v12313 = vpop.f32.mrf.mxu0
        %v12314 = vadd.f32 0.0, %v12313
        %v12315 = vpop.f32.mrf.mxu0
        %v12316 = vadd.f32 0.0, %v12315
        %12317 = vmatmul.bf16.gmra.mxu0 %v12072
        %v12318 = vpop.f32.mrf.mxu0
        %v12319 = vadd.f32 0.0, %v12318
        %v12320 = vpop.f32.mrf.mxu0
        %v12321 = vadd.f32 0.0, %v12320
        %12322 = vmatmul.bf16.gmra.mxu0 %v12073
        %v12323 = vpop.f32.mrf.mxu0
        %v12324 = vadd.f32 0.0, %v12323
        %v12325 = vpop.f32.mrf.mxu0
        %v12326 = vadd.f32 0.0, %v12325
        %12327 = vmatmul.bf16.gmra.mxu0 %v12074
        %v12328 = vpop.f32.mrf.mxu0
        %v12329 = vadd.f32 0.0, %v12328
        %v12330 = vpop.f32.mrf.mxu0
        %v12331 = vadd.f32 0.0, %v12330
        %12332 = vmatmul.bf16.gmra.mxu0 %v12075
        %v12333 = vpop.f32.mrf.mxu0
        %v12334 = vadd.f32 0.0, %v12333
        %v12335 = vpop.f32.mrf.mxu0
        %v12336 = vadd.f32 0.0, %v12335
        %12337 = vmatmul.bf16.gmra.mxu0 %v12076
        %v12338 = vpop.f32.mrf.mxu0
        %v12339 = vadd.f32 0.0, %v12338
        %v12340 = vpop.f32.mrf.mxu0
        %v12341 = vadd.f32 0.0, %v12340
        %12342 = vmatmul.bf16.gmra.mxu0 %v12077
        %v12343 = vpop.f32.mrf.mxu0
        %v12344 = vadd.f32 0.0, %v12343
        %v12345 = vpop.f32.mrf.mxu0
        %v12346 = vadd.f32 0.0, %v12345
        %12347 = vmatmul.bf16.gmra.mxu0 %v12078
        %v12348 = vpop.f32.mrf.mxu0
        %v12349 = vadd.f32 0.0, %v12348
        %v12350 = vpop.f32.mrf.mxu0
        %v12351 = vadd.f32 0.0, %v12350
        %12352 = vdwg.mxu0
        %v12353 = vadd.f32 %v11887, %v12185
        %v12354 = vadd.f32 %v11888, %v12274
        %v12355 = vadd.f32 %v11889, %v12187
        %v12356 = vadd.f32 %v11890, %v12276
        %v12357 = vadd.f32 %v11891, %v12190
        %v12358 = vadd.f32 %v11892, %v12279
        %v12359 = vadd.f32 %v11893, %v12192
        %v12360 = vadd.f32 %v11894, %v12281
        %v12361 = vadd.f32 %v11895, %v12195
        %v12362 = vadd.f32 %v11896, %v12284
        %v12363 = vadd.f32 %v11897, %v12197
        %v12364 = vadd.f32 %v11898, %v12286
        %v12365 = vadd.f32 %v11899, %v12200
        %v12366 = vadd.f32 %v11900, %v12289
        %v12367 = vadd.f32 %v11901, %v12202
        %v12368 = vadd.f32 %v11902, %v12291
        %v12369 = vadd.f32 %v11903, %v12205
        %v12370 = vadd.f32 %v11904, %v12294
        %v12371 = vadd.f32 %v11905, %v12207
        %v12372 = vadd.f32 %v11906, %v12296
        %v12373 = vadd.f32 %v11907, %v12210
        %v12374 = vadd.f32 %v11908, %v12299
        %v12375 = vadd.f32 %v11909, %v12212
        %v12376 = vadd.f32 %v11910, %v12301
        %v12377 = vadd.f32 %v11911, %v12215
        %v12378 = vadd.f32 %v11912, %v12304
        %v12379 = vadd.f32 %v11913, %v12217
        %v12380 = vadd.f32 %v11914, %v12306
        %v12381 = vadd.f32 %v11915, %v12220
        %v12382 = vadd.f32 %v11916, %v12309
        %v12383 = vadd.f32 %v11917, %v12222
        %v12384 = vadd.f32 %v11918, %v12311
        %v12385 = vadd.f32 %v11919, %v12225
        %v12386 = vadd.f32 %v11920, %v12314
        %v12387 = vadd.f32 %v11921, %v12227
        %v12388 = vadd.f32 %v11922, %v12316
        %v12389 = vadd.f32 %v11923, %v12230
        %v12390 = vadd.f32 %v11924, %v12319
        %v12391 = vadd.f32 %v11925, %v12232
        %v12392 = vadd.f32 %v11926, %v12321
        %v12393 = vadd.f32 %v11927, %v12235
        %v12394 = vadd.f32 %v11928, %v12324
        %v12395 = vadd.f32 %v11929, %v12237
        %v12396 = vadd.f32 %v11930, %v12326
        %v12397 = vadd.f32 %v11931, %v12240
        %v12398 = vadd.f32 %v11932, %v12329
        %v12399 = vadd.f32 %v11933, %v12242
        %v12400 = vadd.f32 %v11934, %v12331
        %v12401 = vadd.f32 %v11935, %v12245
        %v12402 = vadd.f32 %v11936, %v12334
        %v12403 = vadd.f32 %v11937, %v12247
        %v12404 = vadd.f32 %v11938, %v12336
        %v12405 = vadd.f32 %v11939, %v12250
        %v12406 = vadd.f32 %v11940, %v12339
        %v12407 = vadd.f32 %v11941, %v12252
        %v12408 = vadd.f32 %v11942, %v12341
        %v12409 = vadd.f32 %v11943, %v12255
        %v12410 = vadd.f32 %v11944, %v12344
        %v12411 = vadd.f32 %v11945, %v12257
        %v12412 = vadd.f32 %v11946, %v12346
        %v12413 = vadd.f32 %v11947, %v12260
        %v12414 = vadd.f32 %v11948, %v12349
        %v12415 = vadd.f32 %v11949, %v12262
        %v12416 = vadd.f32 %v11950, %v12351
        %12417 = vst [vmem:[#allocation5] sm:$0xff] %v12353
        %12418 = vst [vmem:[#allocation5 + $0x8] sm:$0xff] %v12354
        %12419 = vst [vmem:[#allocation5 + $0x10] sm:$0xff] %v12355
        %12420 = vst [vmem:[#allocation5 + $0x18] sm:$0xff] %v12356
        %12421 = vst [vmem:[#allocation5 + $0x20] sm:$0xff] %v12357
        %12422 = vst [vmem:[#allocation5 + $0x28] sm:$0xff] %v12358
        %12423 = vst [vmem:[#allocation5 + $0x30] sm:$0xff] %v12359
        %12424 = vst [vmem:[#allocation5 + $0x38] sm:$0xff] %v12360
        %12425 = vst [vmem:[#allocation5 + $0x40] sm:$0xff] %v12361
        %12426 = vst [vmem:[#allocation5 + $0x48] sm:$0xff] %v12362
        %12427 = vst [vmem:[#allocation5 + $0x50] sm:$0xff] %v12363
        %12428 = vst [vmem:[#allocation5 + $0x58] sm:$0xff] %v12364
        %12429 = vst [vmem:[#allocation5 + $0x60] sm:$0xff] %v12365
        %12430 = vst [vmem:[#allocation5 + $0x68] sm:$0xff] %v12366
        %12431 = vst [vmem:[#allocation5 + $0x70] sm:$0xff] %v12367
        %12432 = vst [vmem:[#allocation5 + $0x78] sm:$0xff] %v12368
        %12433 = vst [vmem:[#allocation5 + $0x80] sm:$0xff] %v12369
        %12434 = vst [vmem:[#allocation5 + $0x88] sm:$0xff] %v12370
        %12435 = vst [vmem:[#allocation5 + $0x90] sm:$0xff] %v12371
        %12436 = vst [vmem:[#allocation5 + $0x98] sm:$0xff] %v12372
        %12437 = vst [vmem:[#allocation5 + $0xa0] sm:$0xff] %v12373
        %12438 = vst [vmem:[#allocation5 + $0xa8] sm:$0xff] %v12374
        %12439 = vst [vmem:[#allocation5 + $0xb0] sm:$0xff] %v12375
        %12440 = vst [vmem:[#allocation5 + $0xb8] sm:$0xff] %v12376
        %12441 = vst [vmem:[#allocation5 + $0xc0] sm:$0xff] %v12377
        %12442 = vst [vmem:[#allocation5 + $0xc8] sm:$0xff] %v12378
        %12443 = vst [vmem:[#allocation5 + $0xd0] sm:$0xff] %v12379
        %12444 = vst [vmem:[#allocation5 + $0xd8] sm:$0xff] %v12380
        %12445 = vst [vmem:[#allocation5 + $0xe0] sm:$0xff] %v12381
        %12446 = vst [vmem:[#allocation5 + $0xe8] sm:$0xff] %v12382
        %12447 = vst [vmem:[#allocation5 + $0xf0] sm:$0xff] %v12383
        %12448 = vst [vmem:[#allocation5 + $0xf8] sm:$0xff] %v12384
        %12449 = vst [vmem:[#allocation5 + $0x100] sm:$0xff] %v12385
        %12450 = vst [vmem:[#allocation5 + $0x108] sm:$0xff] %v12386
        %12451 = vst [vmem:[#allocation5 + $0x110] sm:$0xff] %v12387
        %12452 = vst [vmem:[#allocation5 + $0x118] sm:$0xff] %v12388
        %12453 = vst [vmem:[#allocation5 + $0x120] sm:$0xff] %v12389
        %12454 = vst [vmem:[#allocation5 + $0x128] sm:$0xff] %v12390
        %12455 = vst [vmem:[#allocation5 + $0x130] sm:$0xff] %v12391
        %12456 = vst [vmem:[#allocation5 + $0x138] sm:$0xff] %v12392
        %12457 = vst [vmem:[#allocation5 + $0x140] sm:$0xff] %v12393
        %12458 = vst [vmem:[#allocation5 + $0x148] sm:$0xff] %v12394
        %12459 = vst [vmem:[#allocation5 + $0x150] sm:$0xff] %v12395
        %12460 = vst [vmem:[#allocation5 + $0x158] sm:$0xff] %v12396
        %12461 = vst [vmem:[#allocation5 + $0x160] sm:$0xff] %v12397
        %12462 = vst [vmem:[#allocation5 + $0x168] sm:$0xff] %v12398
        %12463 = vst [vmem:[#allocation5 + $0x170] sm:$0xff] %v12399
        %12464 = vst [vmem:[#allocation5 + $0x178] sm:$0xff] %v12400
        %12465 = vst [vmem:[#allocation5 + $0x180] sm:$0xff] %v12401
        %12466 = vst [vmem:[#allocation5 + $0x188] sm:$0xff] %v12402
        %12467 = vst [vmem:[#allocation5 + $0x190] sm:$0xff] %v12403
        %12468 = vst [vmem:[#allocation5 + $0x198] sm:$0xff] %v12404
        %12469 = vst [vmem:[#allocation5 + $0x1a0] sm:$0xff] %v12405
        %12470 = vst [vmem:[#allocation5 + $0x1a8] sm:$0xff] %v12406
        %12471 = vst [vmem:[#allocation5 + $0x1b0] sm:$0xff] %v12407
        %12472 = vst [vmem:[#allocation5 + $0x1b8] sm:$0xff] %v12408
        %12473 = vst [vmem:[#allocation5 + $0x1c0] sm:$0xff] %v12409
        %12474 = vst [vmem:[#allocation5 + $0x1c8] sm:$0xff] %v12410
        %12475 = vst [vmem:[#allocation5 + $0x1d0] sm:$0xff] %v12411
        %12476 = vst [vmem:[#allocation5 + $0x1d8] sm:$0xff] %v12412
        %12477 = vst [vmem:[#allocation5 + $0x1e0] sm:$0xff] %v12413
        %12478 = vst [vmem:[#allocation5 + $0x1e8] sm:$0xff] %v12414
        %12479 = vst [vmem:[#allocation5 + $0x1f0] sm:$0xff] %v12415
        %12480 = vst [vmem:[#allocation5 + $0x1f8] sm:$0xff] %v12416
        %v12481 = vld [vmem:[#allocation5] sm:$0xff]
        %v12482 = vld [vmem:[#allocation5 + $0x8] sm:$0xff]
        %v12483 = vld [vmem:[#allocation5 + $0x10] sm:$0xff]
        %v12484 = vld [vmem:[#allocation5 + $0x18] sm:$0xff]
        %v12485 = vld [vmem:[#allocation5 + $0x20] sm:$0xff]
        %v12486 = vld [vmem:[#allocation5 + $0x28] sm:$0xff]
        %v12487 = vld [vmem:[#allocation5 + $0x30] sm:$0xff]
        %v12488 = vld [vmem:[#allocation5 + $0x38] sm:$0xff]
        %v12489 = vld [vmem:[#allocation5 + $0x40] sm:$0xff]
        %v12490 = vld [vmem:[#allocation5 + $0x48] sm:$0xff]
        %v12491 = vld [vmem:[#allocation5 + $0x50] sm:$0xff]
        %v12492 = vld [vmem:[#allocation5 + $0x58] sm:$0xff]
        %v12493 = vld [vmem:[#allocation5 + $0x60] sm:$0xff]
        %v12494 = vld [vmem:[#allocation5 + $0x68] sm:$0xff]
        %v12495 = vld [vmem:[#allocation5 + $0x70] sm:$0xff]
        %v12496 = vld [vmem:[#allocation5 + $0x78] sm:$0xff]
        %v12497 = vld [vmem:[#allocation5 + $0x80] sm:$0xff]
        %v12498 = vld [vmem:[#allocation5 + $0x88] sm:$0xff]
        %v12499 = vld [vmem:[#allocation5 + $0x90] sm:$0xff]
        %v12500 = vld [vmem:[#allocation5 + $0x98] sm:$0xff]
        %v12501 = vld [vmem:[#allocation5 + $0xa0] sm:$0xff]
        %v12502 = vld [vmem:[#allocation5 + $0xa8] sm:$0xff]
        %v12503 = vld [vmem:[#allocation5 + $0xb0] sm:$0xff]
        %v12504 = vld [vmem:[#allocation5 + $0xb8] sm:$0xff]
        %v12505 = vld [vmem:[#allocation5 + $0xc0] sm:$0xff]
        %v12506 = vld [vmem:[#allocation5 + $0xc8] sm:$0xff]
        %v12507 = vld [vmem:[#allocation5 + $0xd0] sm:$0xff]
        %v12508 = vld [vmem:[#allocation5 + $0xd8] sm:$0xff]
        %v12509 = vld [vmem:[#allocation5 + $0xe0] sm:$0xff]
        %v12510 = vld [vmem:[#allocation5 + $0xe8] sm:$0xff]
        %v12511 = vld [vmem:[#allocation5 + $0xf0] sm:$0xff]
        %v12512 = vld [vmem:[#allocation5 + $0xf8] sm:$0xff]
        %v12513 = vld [vmem:[#allocation5 + $0x100] sm:$0xff]
        %v12514 = vld [vmem:[#allocation5 + $0x108] sm:$0xff]
        %v12515 = vld [vmem:[#allocation5 + $0x110] sm:$0xff]
        %v12516 = vld [vmem:[#allocation5 + $0x118] sm:$0xff]
        %v12517 = vld [vmem:[#allocation5 + $0x120] sm:$0xff]
        %v12518 = vld [vmem:[#allocation5 + $0x128] sm:$0xff]
        %v12519 = vld [vmem:[#allocation5 + $0x130] sm:$0xff]
        %v12520 = vld [vmem:[#allocation5 + $0x138] sm:$0xff]
        %v12521 = vld [vmem:[#allocation5 + $0x140] sm:$0xff]
        %v12522 = vld [vmem:[#allocation5 + $0x148] sm:$0xff]
        %v12523 = vld [vmem:[#allocation5 + $0x150] sm:$0xff]
        %v12524 = vld [vmem:[#allocation5 + $0x158] sm:$0xff]
        %v12525 = vld [vmem:[#allocation5 + $0x160] sm:$0xff]
        %v12526 = vld [vmem:[#allocation5 + $0x168] sm:$0xff]
        %v12527 = vld [vmem:[#allocation5 + $0x170] sm:$0xff]
        %v12528 = vld [vmem:[#allocation5 + $0x178] sm:$0xff]
        %v12529 = vld [vmem:[#allocation5 + $0x180] sm:$0xff]
        %v12530 = vld [vmem:[#allocation5 + $0x188] sm:$0xff]
        %v12531 = vld [vmem:[#allocation5 + $0x190] sm:$0xff]
        %v12532 = vld [vmem:[#allocation5 + $0x198] sm:$0xff]
        %v12533 = vld [vmem:[#allocation5 + $0x1a0] sm:$0xff]
        %v12534 = vld [vmem:[#allocation5 + $0x1a8] sm:$0xff]
        %v12535 = vld [vmem:[#allocation5 + $0x1b0] sm:$0xff]
        %v12536 = vld [vmem:[#allocation5 + $0x1b8] sm:$0xff]
        %v12537 = vld [vmem:[#allocation5 + $0x1c0] sm:$0xff]
        %v12538 = vld [vmem:[#allocation5 + $0x1c8] sm:$0xff]
        %v12539 = vld [vmem:[#allocation5 + $0x1d0] sm:$0xff]
        %v12540 = vld [vmem:[#allocation5 + $0x1d8] sm:$0xff]
        %v12541 = vld [vmem:[#allocation5 + $0x1e0] sm:$0xff]
        %v12542 = vld [vmem:[#allocation5 + $0x1e8] sm:$0xff]
        %v12543 = vld [vmem:[#allocation5 + $0x1f0] sm:$0xff]
        %v12544 = vld [vmem:[#allocation5 + $0x1f8] sm:$0xff]
        %v12545 = vld [vmem:[%s8] sm:$0x3]
        %v12546 = vld [vmem:[%s10] sm:$0x3]
        %v12547 = vadd.f32 %v12545, %v12546
        %v12549 = vperm.slane %v12547, 0
        %v12550 = vperm.slane %v12547, 1
        %v12553 = vadd.f32 %v12481, %v12549
        %v12554 = vadd.f32 %v12482, %v12550
        %v12555 = vadd.f32 %v12483, %v12549
        %v12556 = vadd.f32 %v12484, %v12550
        %v12557 = vadd.f32 %v12485, %v12549
        %v12558 = vadd.f32 %v12486, %v12550
        %v12559 = vadd.f32 %v12487, %v12549
        %v12560 = vadd.f32 %v12488, %v12550
        %v12561 = vadd.f32 %v12489, %v12549
        %v12562 = vadd.f32 %v12490, %v12550
        %v12563 = vadd.f32 %v12491, %v12549
        %v12564 = vadd.f32 %v12492, %v12550
        %v12565 = vadd.f32 %v12493, %v12549
        %v12566 = vadd.f32 %v12494, %v12550
        %v12567 = vadd.f32 %v12495, %v12549
        %v12568 = vadd.f32 %v12496, %v12550
        %v12569 = vadd.f32 %v12497, %v12549
        %v12570 = vadd.f32 %v12498, %v12550
        %v12571 = vadd.f32 %v12499, %v12549
        %v12572 = vadd.f32 %v12500, %v12550
        %v12573 = vadd.f32 %v12501, %v12549
        %v12574 = vadd.f32 %v12502, %v12550
        %v12575 = vadd.f32 %v12503, %v12549
        %v12576 = vadd.f32 %v12504, %v12550
        %v12577 = vadd.f32 %v12505, %v12549
        %v12578 = vadd.f32 %v12506, %v12550
        %v12579 = vadd.f32 %v12507, %v12549
        %v12580 = vadd.f32 %v12508, %v12550
        %v12581 = vadd.f32 %v12509, %v12549
        %v12582 = vadd.f32 %v12510, %v12550
        %v12583 = vadd.f32 %v12511, %v12549
        %v12584 = vadd.f32 %v12512, %v12550
        %v12585 = vadd.f32 %v12513, %v12549
        %v12586 = vadd.f32 %v12514, %v12550
        %v12587 = vadd.f32 %v12515, %v12549
        %v12588 = vadd.f32 %v12516, %v12550
        %v12589 = vadd.f32 %v12517, %v12549
        %v12590 = vadd.f32 %v12518, %v12550
        %v12591 = vadd.f32 %v12519, %v12549
        %v12592 = vadd.f32 %v12520, %v12550
        %v12593 = vadd.f32 %v12521, %v12549
        %v12594 = vadd.f32 %v12522, %v12550
        %v12595 = vadd.f32 %v12523, %v12549
        %v12596 = vadd.f32 %v12524, %v12550
        %v12597 = vadd.f32 %v12525, %v12549
        %v12598 = vadd.f32 %v12526, %v12550
        %v12599 = vadd.f32 %v12527, %v12549
        %v12600 = vadd.f32 %v12528, %v12550
        %v12601 = vadd.f32 %v12529, %v12549
        %v12602 = vadd.f32 %v12530, %v12550
        %v12603 = vadd.f32 %v12531, %v12549
        %v12604 = vadd.f32 %v12532, %v12550
        %v12605 = vadd.f32 %v12533, %v12549
        %v12606 = vadd.f32 %v12534, %v12550
        %v12607 = vadd.f32 %v12535, %v12549
        %v12608 = vadd.f32 %v12536, %v12550
        %v12609 = vadd.f32 %v12537, %v12549
        %v12610 = vadd.f32 %v12538, %v12550
        %v12611 = vadd.f32 %v12539, %v12549
        %v12612 = vadd.f32 %v12540, %v12550
        %v12613 = vadd.f32 %v12541, %v12549
        %v12614 = vadd.f32 %v12542, %v12550
        %v12615 = vadd.f32 %v12543, %v12549
        %v12616 = vadd.f32 %v12544, %v12550
        %v12617 = vmax.f32 %v12553, 0.0
        %v12618 = vmax.f32 %v12554, 0.0
        %v12619 = vmax.f32 %v12555, 0.0
        %v12620 = vmax.f32 %v12556, 0.0
        %v12621 = vmax.f32 %v12557, 0.0
        %v12622 = vmax.f32 %v12558, 0.0
        %v12623 = vmax.f32 %v12559, 0.0
        %v12624 = vmax.f32 %v12560, 0.0
        %v12625 = vmax.f32 %v12561, 0.0
        %v12626 = vmax.f32 %v12562, 0.0
        %v12627 = vmax.f32 %v12563, 0.0
        %v12628 = vmax.f32 %v12564, 0.0
        %v12629 = vmax.f32 %v12565, 0.0
        %v12630 = vmax.f32 %v12566, 0.0
        %v12631 = vmax.f32 %v12567, 0.0
        %v12632 = vmax.f32 %v12568, 0.0
        %v12633 = vmax.f32 %v12569, 0.0
        %v12634 = vmax.f32 %v12570, 0.0
        %v12635 = vmax.f32 %v12571, 0.0
        %v12636 = vmax.f32 %v12572, 0.0
        %v12637 = vmax.f32 %v12573, 0.0
        %v12638 = vmax.f32 %v12574, 0.0
        %v12639 = vmax.f32 %v12575, 0.0
        %v12640 = vmax.f32 %v12576, 0.0
        %v12641 = vmax.f32 %v12577, 0.0
        %v12642 = vmax.f32 %v12578, 0.0
        %v12643 = vmax.f32 %v12579, 0.0
        %v12644 = vmax.f32 %v12580, 0.0
        %v12645 = vmax.f32 %v12581, 0.0
        %v12646 = vmax.f32 %v12582, 0.0
        %v12647 = vmax.f32 %v12583, 0.0
        %v12648 = vmax.f32 %v12584, 0.0
        %v12649 = vmax.f32 %v12585, 0.0
        %v12650 = vmax.f32 %v12586, 0.0
        %v12651 = vmax.f32 %v12587, 0.0
        %v12652 = vmax.f32 %v12588, 0.0
        %v12653 = vmax.f32 %v12589, 0.0
        %v12654 = vmax.f32 %v12590, 0.0
        %v12655 = vmax.f32 %v12591, 0.0
        %v12656 = vmax.f32 %v12592, 0.0
        %v12657 = vmax.f32 %v12593, 0.0
        %v12658 = vmax.f32 %v12594, 0.0
        %v12659 = vmax.f32 %v12595, 0.0
        %v12660 = vmax.f32 %v12596, 0.0
        %v12661 = vmax.f32 %v12597, 0.0
        %v12662 = vmax.f32 %v12598, 0.0
        %v12663 = vmax.f32 %v12599, 0.0
        %v12664 = vmax.f32 %v12600, 0.0
        %v12665 = vmax.f32 %v12601, 0.0
        %v12666 = vmax.f32 %v12602, 0.0
        %v12667 = vmax.f32 %v12603, 0.0
        %v12668 = vmax.f32 %v12604, 0.0
        %v12669 = vmax.f32 %v12605, 0.0
        %v12670 = vmax.f32 %v12606, 0.0
        %v12671 = vmax.f32 %v12607, 0.0
        %v12672 = vmax.f32 %v12608, 0.0
        %v12673 = vmax.f32 %v12609, 0.0
        %v12674 = vmax.f32 %v12610, 0.0
        %v12675 = vmax.f32 %v12611, 0.0
        %v12676 = vmax.f32 %v12612, 0.0
        %v12677 = vmax.f32 %v12613, 0.0
        %v12678 = vmax.f32 %v12614, 0.0
        %v12679 = vmax.f32 %v12615, 0.0
        %v12680 = vmax.f32 %v12616, 0.0
        %v12681 = vadd.f32 %v12617, %v12619
        %v12682 = vadd.f32 %v12681, %v12621
        %v12683 = vadd.f32 %v12682, %v12623
        %v12684 = vadd.f32 %v12683, %v12625
        %v12685 = vadd.f32 %v12684, %v12627
        %v12686 = vadd.f32 %v12685, %v12629
        %v12687 = vadd.f32 %v12686, %v12631
        %v12688 = vadd.f32 %v12687, %v12633
        %v12689 = vadd.f32 %v12688, %v12635
        %v12690 = vadd.f32 %v12689, %v12637
        %v12691 = vadd.f32 %v12690, %v12639
        %v12692 = vadd.f32 %v12691, %v12641
        %v12693 = vadd.f32 %v12692, %v12643
        %v12694 = vadd.f32 %v12693, %v12645
        %v12695 = vadd.f32 %v12694, %v12647
        %v12696 = vadd.f32 %v12695, %v12649
        %v12697 = vadd.f32 %v12696, %v12651
        %v12698 = vadd.f32 %v12697, %v12653
        %v12699 = vadd.f32 %v12698, %v12655
        %v12700 = vadd.f32 %v12699, %v12657
        %v12701 = vadd.f32 %v12700, %v12659
        %v12702 = vadd.f32 %v12701, %v12661
        %v12703 = vadd.f32 %v12702, %v12663
        %v12704 = vadd.f32 %v12703, %v12665
        %v12705 = vadd.f32 %v12704, %v12667
        %v12706 = vadd.f32 %v12705, %v12669
        %v12707 = vadd.f32 %v12706, %v12671
        %v12708 = vadd.f32 %v12707, %v12673
        %v12709 = vadd.f32 %v12708, %v12675
        %v12710 = vadd.f32 %v12709, %v12677
        %v12711 = vadd.f32 %v12710, %v12679
        %v12712 = vrot.slane %v12711, 4
        %v12713 = vadd.f32 %v12711, %v12712
        %v12714 = vrot.slane %v12713, 2
        %v12715 = vadd.f32 %v12713, %v12714
        %v12716 = vrot.slane %v12715, 1
        %v12717 = vadd.f32 %v12715, %v12716
        %v12718 = vadd.f32 %v12618, %v12620
        %v12719 = vadd.f32 %v12718, %v12622
        %v12720 = vadd.f32 %v12719, %v12624
        %v12721 = vadd.f32 %v12720, %v12626
        %v12722 = vadd.f32 %v12721, %v12628
        %v12723 = vadd.f32 %v12722, %v12630
        %v12724 = vadd.f32 %v12723, %v12632
        %v12725 = vadd.f32 %v12724, %v12634
        %v12726 = vadd.f32 %v12725, %v12636
        %v12727 = vadd.f32 %v12726, %v12638
        %v12728 = vadd.f32 %v12727, %v12640
        %v12729 = vadd.f32 %v12728, %v12642
        %v12730 = vadd.f32 %v12729, %v12644
        %v12731 = vadd.f32 %v12730, %v12646
        %v12732 = vadd.f32 %v12731, %v12648
        %v12733 = vadd.f32 %v12732, %v12650
        %v12734 = vadd.f32 %v12733, %v12652
        %v12735 = vadd.f32 %v12734, %v12654
        %v12736 = vadd.f32 %v12735, %v12656
        %v12737 = vadd.f32 %v12736, %v12658
        %v12738 = vadd.f32 %v12737, %v12660
        %v12739 = vadd.f32 %v12738, %v12662
        %v12740 = vadd.f32 %v12739, %v12664
        %v12741 = vadd.f32 %v12740, %v12666
        %v12742 = vadd.f32 %v12741, %v12668
        %v12743 = vadd.f32 %v12742, %v12670
        %v12744 = vadd.f32 %v12743, %v12672
        %v12745 = vadd.f32 %v12744, %v12674
        %v12746 = vadd.f32 %v12745, %v12676
        %v12747 = vadd.f32 %v12746, %v12678
        %v12748 = vadd.f32 %v12747, %v12680
        %v12749 = vrot.slane %v12748, 4
        %v12750 = vadd.f32 %v12748, %v12749
        %v12751 = vrot.slane %v12750, 2
        %v12752 = vadd.f32 %v12750, %v12751
        %v12753 = vrot.slane %v12752, 1
        %v12754 = vadd.f32 %v12752, %v12753
        %v12755 = vrcp.pop 256.0
        %v12756 = vmul.f32 256.0, %v12755
        %v12757 = vsub.f32 1.0, %v12756
        %v12758 = vmul.f32 %v12755, %v12757
        %v12759 = vadd.f32 %v12755, %v12758
        %vm12760 = vweird.f32 %v12755
        %v12761 = vsel %vm12760, %v12755, %v12759
        %v12762 = vmul.f32 %v12717, %v12761
        %v12763 = vmul.f32 %v12754, %v12761
        %v12764 = vpack.c.bf16 %v12762, %v12762
        %v12765 = vpack.c.bf16 %v12763, %v12763
        %v12766 = vld [vmem:[%s11] sm:$0xf]
        %v12767 = vld [vmem:[%s11 + $0x4] sm:$0xf]
        %v12768 = vld [vmem:[%s11 + $0x8] sm:$0xf]
        %v12769 = vld [vmem:[%s11 + $0xc] sm:$0xf]
        %v12770 = vld [vmem:[%s11 + $0x10] sm:$0xf]
        %v12771 = vld [vmem:[%s11 + $0x14] sm:$0xf]
        %v12772 = vld [vmem:[%s11 + $0x18] sm:$0xf]
        %v12773 = vld [vmem:[%s11 + $0x1c] sm:$0xf]
        %v12774 = vld [vmem:[%s11 + $0x20] sm:$0xf]
        %v12775 = vld [vmem:[%s11 + $0x24] sm:$0xf]
        %v12776 = vld [vmem:[%s11 + $0x28] sm:$0xf]
        %v12777 = vld [vmem:[%s11 + $0x2c] sm:$0xf]
        %v12778 = vld [vmem:[%s11 + $0x30] sm:$0xf]
        %v12779 = vld [vmem:[%s11 + $0x34] sm:$0xf]
        %v12780 = vld [vmem:[%s11 + $0x38] sm:$0xf]
        %v12781 = vld [vmem:[%s11 + $0x3c] sm:$0xf]
        %v12782 = vld [vmem:[%s11 + $0x40] sm:$0xf]
        %v12783 = vld [vmem:[%s11 + $0x44] sm:$0xf]
        %v12784 = vld [vmem:[%s11 + $0x48] sm:$0xf]
        %v12785 = vld [vmem:[%s11 + $0x4c] sm:$0xf]
        %v12786 = vld [vmem:[%s11 + $0x50] sm:$0xf]
        %v12787 = vld [vmem:[%s11 + $0x54] sm:$0xf]
        %v12788 = vld [vmem:[%s11 + $0x58] sm:$0xf]
        %v12789 = vld [vmem:[%s11 + $0x5c] sm:$0xf]
        %v12790 = vld [vmem:[%s11 + $0x60] sm:$0xf]
        %v12791 = vld [vmem:[%s11 + $0x64] sm:$0xf]
        %v12792 = vld [vmem:[%s11 + $0x68] sm:$0xf]
        %v12793 = vld [vmem:[%s11 + $0x6c] sm:$0xf]
        %v12794 = vld [vmem:[%s11 + $0x70] sm:$0xf]
        %v12795 = vld [vmem:[%s11 + $0x74] sm:$0xf]
        %v12796 = vld [vmem:[%s11 + $0x78] sm:$0xf]
        %v12797 = vld [vmem:[%s11 + $0x7c] sm:$0xf]
        %v12798 = vld [vmem:[%s12] sm:$0x1]
        %v12831 = vunpack.c.l.b16 %v12766
        %v12832 = vunpack.c.l.b16 %v12767
        %v12833 = vunpack.c.l.b16 %v12768
        %v12834 = vunpack.c.l.b16 %v12769
        %v12835 = vunpack.c.l.b16 %v12770
        %v12836 = vunpack.c.l.b16 %v12771
        %v12837 = vunpack.c.l.b16 %v12772
        %v12838 = vunpack.c.l.b16 %v12773
        %v12839 = vunpack.c.l.b16 %v12774
        %v12840 = vunpack.c.l.b16 %v12775
        %v12841 = vunpack.c.l.b16 %v12776
        %v12842 = vunpack.c.l.b16 %v12777
        %v12843 = vunpack.c.l.b16 %v12778
        %v12844 = vunpack.c.l.b16 %v12779
        %v12845 = vunpack.c.l.b16 %v12780
        %v12846 = vunpack.c.l.b16 %v12781
        %v12847 = vunpack.c.l.b16 %v12782
        %v12848 = vunpack.c.l.b16 %v12783
        %v12849 = vunpack.c.l.b16 %v12784
        %v12850 = vunpack.c.l.b16 %v12785
        %v12851 = vunpack.c.l.b16 %v12786
        %v12852 = vunpack.c.l.b16 %v12787
        %v12853 = vunpack.c.l.b16 %v12788
        %v12854 = vunpack.c.l.b16 %v12789
        %v12855 = vunpack.c.l.b16 %v12790
        %v12856 = vunpack.c.l.b16 %v12791
        %v12857 = vunpack.c.l.b16 %v12792
        %v12858 = vunpack.c.l.b16 %v12793
        %v12859 = vunpack.c.l.b16 %v12794
        %v12860 = vunpack.c.l.b16 %v12795
        %v12861 = vunpack.c.l.b16 %v12796
        %v12862 = vunpack.c.l.b16 %v12797
        %v12863 = vpack.c.b16 %v12832, %v12831
        %v12864 = vpack.c.b16 %v12834, %v12833
        %v12865 = vpack.c.b16 %v12836, %v12835
        %v12866 = vpack.c.b16 %v12838, %v12837
        %v12867 = vpack.c.b16 %v12840, %v12839
        %v12868 = vpack.c.b16 %v12842, %v12841
        %v12869 = vpack.c.b16 %v12844, %v12843
        %v12870 = vpack.c.b16 %v12846, %v12845
        %v12871 = vpack.c.b16 %v12848, %v12847
        %v12872 = vpack.c.b16 %v12850, %v12849
        %v12873 = vpack.c.b16 %v12852, %v12851
        %v12874 = vpack.c.b16 %v12854, %v12853
        %v12875 = vpack.c.b16 %v12856, %v12855
        %v12876 = vpack.c.b16 %v12858, %v12857
        %v12877 = vpack.c.b16 %v12860, %v12859
        %v12878 = vpack.c.b16 %v12862, %v12861
        %12895 = vmatpush.bf16.msra.mxu0 %v12870
        %12896 = vmatpush.bf16.msra.mxu0 %v12869
        %12897 = vmatpush.bf16.msra.mxu0 %v12868
        %12898 = vmatpush.bf16.msra.mxu0 %v12867
        %12899 = vmatpush.bf16.msra.mxu0 %v12866
        %12900 = vmatpush.bf16.msra.mxu0 %v12865
        %12901 = vmatpush.bf16.msra.mxu0 %v12864
        %12902 = vmatpush.bf16.msra.mxu0 %v12863
        %12903 = vmatmul.bf16.gmra.mxu0 %v12764
        %v12904 = vpop.f32.mrf.mxu0
        %v12905 = vadd.f32 %v12798, %v12904
        %v12906 = vpop.f32.mrf.mxu0
        %12907 = vdwg.mxu0
        %12908 = vmatpush.bf16.msra.mxu0 %v12878
        %12909 = vmatpush.bf16.msra.mxu0 %v12877
        %12910 = vmatpush.bf16.msra.mxu0 %v12876
        %12911 = vmatpush.bf16.msra.mxu0 %v12875
        %12912 = vmatpush.bf16.msra.mxu0 %v12874
        %12913 = vmatpush.bf16.msra.mxu0 %v12873
        %12914 = vmatpush.bf16.msra.mxu0 %v12872
        %12915 = vmatpush.bf16.msra.mxu0 %v12871
        %12916 = vmatmul.bf16.gmra.mxu0 %v12765
        %v12917 = vpop.f32.mrf.mxu0
        %v12918 = vadd.f32 %v12905, %v12917
        %v12919 = vpop.f32.mrf.mxu0
        %12920 = vdwg.mxu0
        %12921 = vst [vmem:[%s466] sm:$0x1] %v12918
        %s12922 = sand.u32 %s315, 1
        %s12923 = scalar_lea.sflag [#allocation8], %s12922
        %s12924 = sand.u32 %s315, 1
        %s12925 = scalar_lea.vmem [#allocation11], %s12924
        // Predicated region
        $region81: #{encoder_cnn_forward.1} parent=71 // pred_check
          %p12926 = pneg %p325
        $region82: #{encoder_cnn_forward.1} parent=71 // pred_check_branch
          %12928 = sbr.rel (%p12926) target = $region84
        $region83: #{encoder_cnn_forward.1} parent=71 // pred_region
          %12930 = vsyncadd %s12923, 0
          %s12931 = scalar_lea.hbm %s13, %s29
          %s12933 = sshll.u32 %s12925, 4
          %s12934 = int_to_ptr.vmem [resolvable:$true] %s12933
          %s12935 = sshll.u32 %s12931, 4
          %s12936 = int_to_ptr.hbm [resolvable:$true] %s12935
          %12938 = dma.vmem_to_hbm [thread:$0]  %s12934, 16, %s12936, %s12923
        $region84: #{encoder_cnn_forward.1} parent=71 // pred_fallthru
          _
      $region72: #{encoder_cnn_forward.1} parent=5 // pred_fallthru
        _
      %p12939 = scmp.le.s32.totalorder 2, %s24
      // Predicated region
      $region85: #{encoder_cnn_forward.1} parent=5 // pred_check
        %p12940 = pneg %p12939
      $region86: #{encoder_cnn_forward.1} parent=5 // pred_check_branch
        %12942 = sbr.rel (%p12940) target = $region88
      $region87: #{encoder_cnn_forward.1} parent=5 // pred_region
        %s12943 = ssub.s32 %s24, 2
        // Predicated region
        $region89: #{encoder_cnn_forward.1} parent=87 // pred_check
          %p12944 = pneg %p331
        $region90: #{encoder_cnn_forward.1} parent=87 // pred_check_branch
          %12946 = sbr.rel (%p12944) target = $region92
        $region91: #{encoder_cnn_forward.1} parent=87 // pred_region
          %s12947 = sand.u32 %s316, 1
          %s12948 = scalar_lea.sflag [#allocation8], %s12947
          %s12949 = sand.u32 %s316, 1
          %s12950 = scalar_lea.vmem [#allocation11], %s12949
          %12952 = dma.done %s12948, 16
        $region92: #{encoder_cnn_forward.1} parent=87 // pred_fallthru
          _
      $region88: #{encoder_cnn_forward.1} parent=5 // pred_fallthru
        _
    $region6: #{encoder_cnn_forward.1} parent=1 // loop_footer
      %s28 = sadd.s32 1, %s24
    $region7: #{encoder_cnn_forward.1} parent=1 // loop_footer_branch
      %23 = sbr.rel target = $region3
    $region8: #{encoder_cnn_forward.1} parent=1 // loop_exit
      _
    %12953 = vsyncpa [#allocation7], 1
    %s12954 = scalar_lea.sflag [#allocation7], 1
    %12955 = vsyncpa %s12954, 1
    %12956 = vsyncpa [#allocation10], 1
    %12957 = vsyncpa [#allocation8], 1
    %s12958 = scalar_lea.sflag [#allocation8], 1
    %12959 = vsyncpa %s12958, 1

</llo_original>
